<compile_context>
chip_gen: v7x
topology: tpu7x:2x2x1
jax: 0.10.0
libtpu: 0.0.40
codegen_flags: <defaults>
</compile_context>

<pallas_src>
import numpy as np
import jax
import jax.numpy as jnp
from jax.experimental import pallas as pl
from jax.experimental.pallas import tpu as pltpu

PAD_ID, UNK_ID, SOS_ID, EOS_ID = 0, 1, 2, 3


def _round_up(x, m):
    return (x + m - 1) // m * m


# ----------------------------------------------------------------------------
# Pallas kernel: TT decode steps per grid iteration (time axis is sequential)
# ----------------------------------------------------------------------------
def nqg_decoder_kernel(xemb_ref, enc_ref, mask_ref, encproj_ref, s0_ref,
                       wih_ref, whh_ref, bih_ref, bhh_ref,
                       wdec_ref, v_ref, wcopy_ref, bcopy_ref,
                       wread_ref, bread_ref, wo_ref,
                       out_ref,
                       s_scr, ctx_scr):
    tg = pl.program_id(1)                      # time-tile index (sequential)
    TT = xemb_ref.shape[0]
    Bblk, S, He = enc_ref.shape
    E = xemb_ref.shape[2]
    H = s0_ref.shape[1]
    A = encproj_ref.shape[2]
    Vv = wo_ref.shape[1]
    Vpad = out_ref.shape[2]

    @pl.when(tg == 0)
    def _init():
        s_scr[...] = s0_ref[...]
        ctx_scr[...] = jnp.zeros_like(ctx_scr)

    # hoisted loop-invariant loads & broadcasts (JAX does not CSE broadcasts)
    enc_v = enc_ref[...]                       # (Bblk, S, He) bf16
    encproj_v = encproj_ref[...]               # (Bblk, S, A)  f32
    mask_v = mask_ref[...]                     # (Bblk, S)     f32
    v_b = jnp.broadcast_to(v_ref[...].reshape(1, 1, A), (Bblk, S, A))
    wih_v, whh_v = wih_ref[...], whh_ref[...]
    bih_b = jnp.broadcast_to(bih_ref[...], (Bblk, 3 * H))
    bhh_b = jnp.broadcast_to(bhh_ref[...], (Bblk, 3 * H))
    wdec_v = wdec_ref[...]
    wcopy_v = wcopy_ref[...]
    bcopy_b = jnp.broadcast_to(bcopy_ref[...], (Bblk, 1))
    wread_v = wread_ref[...]
    bread_b = jnp.broadcast_to(bread_ref[...], (Bblk, H))
    wo_v = wo_ref[...]

    npad = Vpad - (Vv + S)
    pad_block = jnp.zeros((Bblk, npad), jnp.float32) if npad > 0 else None

    def step(tt, carry):
        s_prev, ctx_prev = carry
        x = xemb_ref[tt]                                            # (Bblk, E)

        # --- GRU cell (nn.GRUCell gate order r,z,n), fused input matmul -----
        xc = jnp.concatenate([x, ctx_prev], axis=1).astype(jnp.bfloat16)
        gi = jnp.dot(xc, wih_v, preferred_element_type=jnp.float32) + bih_b
        gh = jnp.dot(s_prev.astype(jnp.bfloat16), whh_v,
                     preferred_element_type=jnp.float32) + bhh_b
        r = jax.nn.sigmoid(gi[:, 0:H] + gh[:, 0:H])
        z = jax.nn.sigmoid(gi[:, H:2 * H] + gh[:, H:2 * H])
        n = jnp.tanh(gi[:, 2 * H:3 * H] + r * gh[:, 2 * H:3 * H])
        s_new = (1.0 - z) * n + z * s_prev                          # (Bblk, H)

        # --- Bahdanau attention (encoder projection precomputed in wrapper) -
        dec_proj = jnp.dot(s_new.astype(jnp.bfloat16), wdec_v,
                           preferred_element_type=jnp.float32)      # (Bblk, A)
        scores = jnp.tanh(encproj_v + dec_proj[:, None, :])         # (Bblk,S,A)
        e = jnp.sum(scores * v_b, axis=-1) + mask_v                 # (Bblk, S)
        e = e - jnp.max(e, axis=-1, keepdims=True)
        pe = jnp.exp(e)
        attn = pe * pl.reciprocal(jnp.sum(pe, axis=-1, keepdims=True),
                                  approx=True)                      # (Bblk, S)

        # --- context = bmm(attn, enc_outputs) on the MXU ---------------------
        ctx_new = jnp.einsum(
            "bqs,bsh->bqh", attn[:, None, :].astype(jnp.bfloat16), enc_v,
            preferred_element_type=jnp.float32)[:, 0, :]            # (Bblk, He)

        # --- copy switch + readout share one fused activation concat --------
        xcs = jnp.concatenate([x, ctx_new, s_new], axis=1).astype(jnp.bfloat16)
        p_copy = jax.nn.sigmoid(
            jnp.dot(xcs, wcopy_v, preferred_element_type=jnp.float32) + bcopy_b)
        rr = jnp.dot(xcs, wread_v, preferred_element_type=jnp.float32) + bread_b
        # wread columns are permuted so max-of-halves == PyTorch max-of-pairs.
        m = jnp.maximum(rr[:, 0:H // 2], rr[:, H // 2:H])           # (Bblk,H//2)
        # TODO(synk): nn.Dropout is treated as eval-mode identity (no mask).
        energy = jnp.dot(m.astype(jnp.bfloat16), wo_v,
                         preferred_element_type=jnp.float32)        # (Bblk, Vv)
        energy = energy - jnp.max(energy, axis=-1, keepdims=True)
        pv = jnp.exp(energy)
        p_vocab = pv * pl.reciprocal(jnp.sum(pv, axis=-1, keepdims=True),
                                     approx=True)

        # --- p_out = cat([(1-pc)*p_vocab, pc*attn]) + 1e-12 ; lane-dense log -
        parts = [(1.0 - p_copy) * p_vocab, p_copy * attn]
        if pad_block is not None:
            parts.append(pad_block)
        row = jnp.log(jnp.concatenate(parts, axis=-1) + 1e-12)      # (Bblk,Vpad)
        out_ref[:, pl.ds(tt, 1), :] = row[:, None, :]
        return s_new, ctx_new

    s_fin, ctx_fin = jax.lax.fori_loop(
        0, TT, step, (s_scr[...], ctx_scr[...]), unroll=True)
    s_scr[...] = s_fin
    ctx_scr[...] = ctx_fin


# ----------------------------------------------------------------------------
# Wrapper (glue): embedding gathers, padding, weight layout, pallas_call
# ----------------------------------------------------------------------------
def nqg_decoder_forward(params, enc_outputs, s0, source_ids, target_ids,
                        vocab_size, *, time_tile=8, batch_blocks=1):
    B, S = source_ids.shape
    T = target_ids.shape[1]
    E = params["embed"].shape[1]
    He = enc_outputs.shape[2]
    H = s0.shape[1]
    A = params["wenc"].shape[1]
    Vv = vocab_size
    Vtot = Vv + S
    Vpad = _round_up(Vtot, 128)

    f32, bf16 = jnp.float32, jnp.bfloat16

    # pad batch to a sublane-friendly multiple of 8 per batch block, and the
    # decode length to a multiple of the time tile (extra steps trail the real
    # ones so they never pollute real outputs).
    Bblk = _round_up(pl.cdiv(B, batch_blocks), 8)
    Bp = Bblk * batch_blocks
    Tp = _round_up(T, time_tile)

    # teacher forcing: step 0 uses SOS, step i uses target[:, i-1] (OOV -> UNK)
    prev = jnp.concatenate(
        [jnp.full((B, 1), SOS_ID, dtype=jnp.int32), target_ids[:, :-1]], axis=1)
    prev = jnp.where(prev >= vocab_size, UNK_ID, prev)
    prev_p = jnp.full((Bp, Tp), SOS_ID, dtype=jnp.int32).at[:B, :T].set(prev)
    dec_embeds = params["embed"][prev_p.T].astype(f32)          # (Tp, Bp, E)

    src_p = jnp.full((Bp, S), PAD_ID, dtype=jnp.int32).at[:B, :].set(source_ids)
    add_mask = jnp.where(src_p == PAD_ID, -1e9, 0.0).astype(f32)  # (Bp, S)

    enc_p = jnp.zeros((Bp, S, He), f32).at[:B].set(enc_outputs.astype(f32))
    s0_p = jnp.zeros((Bp, H), f32).at[:B].set(s0.astype(f32))

    # loop-invariant encoder attention projection hoisted out of the kernel
    encproj = jnp.einsum("bsh,ha->bsa", enc_p, params["wenc"],
                         precision=jax.lax.Precision.HIGHEST).astype(f32)

    # maxout(pool=2) permutation: pairs (0,1),(2,3),... -> halves
    perm = np.concatenate([np.arange(0, H, 2), np.arange(1, H, 2)])
    wread_t = params["w_read"].T[:, perm].astype(bf16)          # (E+He+H, H)
    bread_p = params["b_read"][perm][None, :].astype(f32)       # (1, H)

    # copy-switch weight laid out for the fused [x, context, s] activation
    wc = params["w_copy"]                                       # (1, H+He)
    wcopy_full = jnp.concatenate(
        [jnp.zeros((E, 1), f32),
         wc[0, H:H + He].reshape(He, 1),
         wc[0, 0:H].reshape(H, 1)], axis=0).astype(bf16)        # (E+He+H, 1)

    kernel_inputs = [
        dec_embeds,                                  # (Tp, Bp, E)  f32
        enc_p.astype(bf16),                          # (Bp, S, He)  bf16
        add_mask,                                    # (Bp, S)      f32
        encproj,                                     # (Bp, S, A)   f32
        s0_p,                                        # (Bp, H)      f32
        params["w_ih"].T.astype(bf16),               # (E+He, 3H)
        params["w_hh"].T.astype(bf16),               # (H, 3H)
        params["b_ih"][None, :].astype(f32),         # (1, 3H)
        params["b_hh"][None, :].astype(f32),         # (1, 3H)
        params["wdec"].astype(bf16),                 # (H, A)
        params["v"][None, :].astype(f32),            # (1, A)
        wcopy_full,                                  # (E+He+H, 1)
        params["b_copy"].reshape(1, 1).astype(f32),  # (1, 1)
        wread_t,                                     # (E+He+H, H)
        bread_p,                                     # (1, H)
        params["w_o"].T.astype(bf16),                # (H//2, Vv)
    ]

    def const_spec(arr):
        nd = arr.ndim
        return pl.BlockSpec(arr.shape, lambda bb, tg, _nd=nd: (0,) * _nd,
                            pipeline_mode=pl.Buffered(1))

    in_specs = [
        pl.BlockSpec((time_tile, Bblk, E), lambda bb, tg: (tg, bb, 0)),
        pl.BlockSpec((Bblk, S, He), lambda bb, tg: (bb, 0, 0),
                     pipeline_mode=pl.Buffered(1)),
        pl.BlockSpec((Bblk, S), lambda bb, tg: (bb, 0),
                     pipeline_mode=pl.Buffered(1)),
        pl.BlockSpec((Bblk, S, A), lambda bb, tg: (bb, 0, 0),
                     pipeline_mode=pl.Buffered(1)),
        pl.BlockSpec((Bblk, H), lambda bb, tg: (bb, 0),
                     pipeline_mode=pl.Buffered(1)),
    ] + [const_spec(a) for a in kernel_inputs[5:]]

    out_spec = pl.BlockSpec((Bblk, time_tile, Vpad), lambda bb, tg: (bb, tg, 0))

    log_p = pl.pallas_call(
        nqg_decoder_kernel,
        out_shape=jax.ShapeDtypeStruct((Bp, Tp, Vpad), f32),
        grid_spec=pltpu.PrefetchScalarGridSpec(
            num_scalar_prefetch=0,
            grid=(batch_blocks, Tp // time_tile),
            in_specs=in_specs,
            out_specs=out_spec,
            scratch_shapes=[
                pltpu.VMEM((Bblk, H), f32),      # GRU hidden-state carry
                pltpu.VMEM((Bblk, He), f32),     # attention context carry
            ]),
        compiler_params=pltpu.CompilerParams(
            dimension_semantics=("parallel", "arbitrary"),
            vmem_limit_bytes=64 * 1024 * 1024),
    )(*kernel_inputs)

    return log_p[:B, :T, :Vtot]                  # (B, T, vocab_size + S)


# ----------------------------------------------------------------------------
# Pure-JAX reference mirroring the PyTorch forward (train=True, GRU, tie=False)
# ----------------------------------------------------------------------------
def reference_forward(params, enc_outputs, s0, source_ids, target_ids, vocab_size):
    P = jax.lax.Precision.HIGHEST
    B, S = source_ids.shape
    T = target_ids.shape[1]
    H = s0.shape[1]
    He = enc_outputs.shape[2]
    pad_mask = source_ids == PAD_ID
    s = s0
    context = jnp.zeros((B, He), jnp.float32)
    dec_word = jnp.full((B,), SOS_ID, jnp.int32)
    outs = []
    for i in range(T):
        x = params["embed"][dec_word]
        dec_in = jnp.concatenate([x, context], axis=1)
        gi = jnp.dot(dec_in, params["w_ih"].T, precision=P) + params["b_ih"]
        gh = jnp.dot(s, params["w_hh"].T, precision=P) + params["b_hh"]
        r = jax.nn.sigmoid(gi[:, :H] + gh[:, :H])
        z = jax.nn.sigmoid(gi[:, H:2 * H] + gh[:, H:2 * H])
        n = jnp.tanh(gi[:, 2 * H:] + r * gh[:, 2 * H:])
        s = (1.0 - z) * n + z * s
        e = jnp.einsum(
            "bsa,a->bs",
            jnp.tanh(jnp.einsum("bsh,ha->bsa", enc_outputs, params["wenc"],
                                precision=P)
                     + jnp.dot(s, params["wdec"], precision=P)[:, None, :]),
            params["v"], precision=P)
        e = jnp.where(pad_mask, -1e9, e)
        attn = jax.nn.softmax(e, axis=1)
        context = jnp.einsum("bs,bsh->bh", attn, enc_outputs, precision=P)
        p_copy = jax.nn.sigmoid(
            jnp.dot(jnp.concatenate([s, context], axis=1), params["w_copy"].T,
                    precision=P) + params["b_copy"])
        rr = jnp.dot(jnp.concatenate([x, context, s], axis=1),
                     params["w_read"].T, precision=P) + params["b_read"]
        m = rr.reshape(B, H // 2, 2).max(axis=-1)
        p_vocab = jax.nn.softmax(jnp.dot(m, params["w_o"].T, precision=P), axis=1)
        p_out = jnp.concatenate([(1.0 - p_copy) * p_vocab, p_copy * attn],
                                axis=1) + 1e-12
        outs.append(jnp.log(p_out))
        nxt = target_ids[:, i]
        dec_word = jnp.where(nxt >= vocab_size, UNK_ID, nxt)
    return jnp.stack(outs, axis=1)


# ----------------------------------------------------------------------------
if __name__ == "__main__":
    B, S, T = 2, 8, 6
    E, He, H, A = 32, 32, 32, 32
    VOCAB = 64

    key = jax.random.PRNGKey(0)
    ks = jax.random.split(key, 16)

    def rnd(k, shape, scale=0.2):
        return scale * jax.random.normal(k, shape, dtype=jnp.float32)

    params = {
        "embed": rnd(ks[0], (VOCAB, E)),
        "w_ih": rnd(ks[1], (3 * H, E + He)),
        "b_ih": rnd(ks[2], (3 * H,)),
        "w_hh": rnd(ks[3], (3 * H, H)),
        "b_hh": rnd(ks[4], (3 * H,)),
        "wenc": rnd(ks[5], (He, A)),
        "wdec": rnd(ks[6], (H, A)),
        "v":    rnd(ks[7], (A,)),
        "w_copy": rnd(ks[8], (1, H + He)),
        "b_copy": rnd(ks[9], (1,)),
        "w_read": rnd(ks[10], (H, E + He + H)),
        "b_read": rnd(ks[11], (H,)),
        "w_o": rnd(ks[12], (VOCAB, H // 2)),
    }

    enc_outputs = rnd(ks[13], (B, S, He), scale=0.5)
    s0 = rnd(ks[14], (B, H), scale=0.5)

    source_ids = jax.random.randint(ks[15], (B, S), 4, VOCAB).astype(jnp.int32)
    source_ids = source_ids.at[1, S - 2:].set(PAD_ID)          # some padding
    target_ids = jax.random.randint(
        jax.random.fold_in(key, 99), (B, T), 4, VOCAB + S).astype(jnp.int32)

    out = nqg_decoder_forward(params, enc_outputs, s0, source_ids, target_ids, VOCAB)
    out = jax.block_until_ready(out)

    ref = reference_forward(params, enc_outputs, s0, source_ids, target_ids, VOCAB)
    ref = jax.block_until_ready(ref)

    assert out.shape == (B, T, VOCAB + S)
    assert bool(jnp.all(jnp.isfinite(out)))
    # Tolerance accounts for bf16 MXU operands (default precision) and
    # approximate reciprocals in the kernel vs the highest-precision f32 ref.
    np.testing.assert_allclose(np.asarray(out), np.asarray(ref),
                               rtol=2e-3, atol=5e-3)

    print("KERNEL_OK")
</pallas_src>

<mosaic_0001>
module attributes {stable_mosaic.version = 11 : i64} {
  func.func @nqg_decoder_kernel(%arg0: i32, %arg1: i32, %arg2: memref<8x8x32xf32, #tpu.memory_space<vmem>>, %arg3: memref<8x8x32xbf16, #tpu.memory_space<vmem>>, %arg4: memref<8x8xf32, #tpu.memory_space<vmem>>, %arg5: memref<8x8x32xf32, #tpu.memory_space<vmem>>, %arg6: memref<8x32xf32, #tpu.memory_space<vmem>>, %arg7: memref<64x96xbf16, #tpu.memory_space<vmem>>, %arg8: memref<32x96xbf16, #tpu.memory_space<vmem>>, %arg9: memref<1x96xf32, #tpu.memory_space<vmem>>, %arg10: memref<1x96xf32, #tpu.memory_space<vmem>>, %arg11: memref<32x32xbf16, #tpu.memory_space<vmem>>, %arg12: memref<1x32xf32, #tpu.memory_space<vmem>>, %arg13: memref<96x1xbf16, #tpu.memory_space<vmem>>, %arg14: memref<1x1xf32, #tpu.memory_space<vmem>>, %arg15: memref<96x32xbf16, #tpu.memory_space<vmem>>, %arg16: memref<1x32xf32, #tpu.memory_space<vmem>>, %arg17: memref<16x64xbf16, #tpu.memory_space<vmem>>, %arg18: memref<8x8x128xf32, #tpu.memory_space<vmem>>, %arg19: memref<8x32xf32, #tpu.memory_space<vmem>>, %arg20: memref<8x32xf32, #tpu.memory_space<vmem>>) attributes {dimension_semantics = [#tpu.dimension_semantics<parallel>, #tpu.dimension_semantics<arbitrary>], iteration_bounds = array<i64: 1, 1>, scalar_prefetch = 0 : i64, scratch_operands = 2 : i64, tpu.core_type = #tpu.core_type<tc>, window_params = [{transform_indices = @transform_0, window_bounds = array<i64: 8, 8, 32>}, {pipeline_mode = #tpu.pipeline_mode<synchronous>, transform_indices = @transform_1, window_bounds = array<i64: 8, 8, 32>}, {pipeline_mode = #tpu.pipeline_mode<synchronous>, transform_indices = @transform_2, window_bounds = array<i64: 8, 8>}, {pipeline_mode = #tpu.pipeline_mode<synchronous>, transform_indices = @transform_3, window_bounds = array<i64: 8, 8, 32>}, {pipeline_mode = #tpu.pipeline_mode<synchronous>, transform_indices = @transform_4, window_bounds = array<i64: 8, 32>}, {pipeline_mode = #tpu.pipeline_mode<synchronous>, transform_indices = @transform_5, window_bounds = array<i64: 64, 96>}, {pipeline_mode = #tpu.pipeline_mode<synchronous>, transform_indices = @transform_6, window_bounds = array<i64: 32, 96>}, {pipeline_mode = #tpu.pipeline_mode<synchronous>, transform_indices = @transform_7, window_bounds = array<i64: 1, 96>}, {pipeline_mode = #tpu.pipeline_mode<synchronous>, transform_indices = @transform_8, window_bounds = array<i64: 1, 96>}, {pipeline_mode = #tpu.pipeline_mode<synchronous>, transform_indices = @transform_9, window_bounds = array<i64: 32, 32>}, {pipeline_mode = #tpu.pipeline_mode<synchronous>, transform_indices = @transform_10, window_bounds = array<i64: 1, 32>}, {pipeline_mode = #tpu.pipeline_mode<synchronous>, transform_indices = @transform_11, window_bounds = array<i64: 96, 1>}, {pipeline_mode = #tpu.pipeline_mode<synchronous>, transform_indices = @transform_12, window_bounds = array<i64: 1, 1>}, {pipeline_mode = #tpu.pipeline_mode<synchronous>, transform_indices = @transform_13, window_bounds = array<i64: 96, 32>}, {pipeline_mode = #tpu.pipeline_mode<synchronous>, transform_indices = @transform_14, window_bounds = array<i64: 1, 32>}, {pipeline_mode = #tpu.pipeline_mode<synchronous>, transform_indices = @transform_15, window_bounds = array<i64: 16, 64>}, {transform_indices = @transform_16, window_bounds = array<i64: 8, 8, 128>}]} {
    %c0_i32 = arith.constant 0 : i32
    %0 = arith.cmpi eq, %arg1, %c0_i32 : i32
    %1 = arith.extui %0 : i1 to i32
    %c0_i32_0 = arith.constant 0 : i32
    %2 = arith.cmpi ne, %1, %c0_i32_0 : i32
    scf.if %2 {
      %c0_215 = arith.constant 0 : index
      %c0_216 = arith.constant 0 : index
      %817 = vector.load %arg6[%c0_215, %c0_216] : memref<8x32xf32, #tpu.memory_space<vmem>>, vector<8x32xf32>
      %c0_217 = arith.constant 0 : index
      %c0_218 = arith.constant 0 : index
      %818 = vector.load %arg19[%c0_217, %c0_218] : memref<8x32xf32, #tpu.memory_space<vmem>>, vector<8x32xf32>
      tpu.vector_store %arg19[%c0_217, %c0_218], %817 {strides = array<i32>} : memref<8x32xf32, #tpu.memory_space<vmem>>, vector<8x32xf32>,
      %cst_219 = arith.constant 0.000000e+00 : f32
      %819 = vector.broadcast %cst_219 : f32 to vector<8x32xf32>
      %c0_220 = arith.constant 0 : index
      %c0_221 = arith.constant 0 : index
      %820 = vector.load %arg20[%c0_220, %c0_221] : memref<8x32xf32, #tpu.memory_space<vmem>>, vector<8x32xf32>
      tpu.vector_store %arg20[%c0_220, %c0_221], %819 {strides = array<i32>} : memref<8x32xf32, #tpu.memory_space<vmem>>, vector<8x32xf32>,
    } else {
    }
    %c0 = arith.constant 0 : index
    %c0_1 = arith.constant 0 : index
    %c0_2 = arith.constant 0 : index
    %3 = vector.load %arg3[%c0, %c0_1, %c0_2] : memref<8x8x32xbf16, #tpu.memory_space<vmem>>, vector<8x8x32xbf16>
    %c0_3 = arith.constant 0 : index
    %c0_4 = arith.constant 0 : index
    %c0_5 = arith.constant 0 : index
    %4 = vector.load %arg5[%c0_3, %c0_4, %c0_5] : memref<8x8x32xf32, #tpu.memory_space<vmem>>, vector<8x8x32xf32>
    %c0_6 = arith.constant 0 : index
    %c0_7 = arith.constant 0 : index
    %5 = vector.load %arg4[%c0_6, %c0_7] : memref<8x8xf32, #tpu.memory_space<vmem>>, vector<8x8xf32>
    %c0_8 = arith.constant 0 : index
    %c0_9 = arith.constant 0 : index
    %6 = vector.load %arg12[%c0_8, %c0_9] : memref<1x32xf32, #tpu.memory_space<vmem>>, vector<1x32xf32>
    %7 = vector.shape_cast %6 : vector<1x32xf32> to vector<1x1x32xf32>
    %8 = vector.shape_cast %7 : vector<1x1x32xf32> to vector<1x1x32xf32>
    %9 = vector.broadcast %8 : vector<1x1x32xf32> to vector<8x8x32xf32>
    %c0_10 = arith.constant 0 : index
    %c0_11 = arith.constant 0 : index
    %10 = vector.load %arg7[%c0_10, %c0_11] : memref<64x96xbf16, #tpu.memory_space<vmem>>, vector<64x96xbf16>
    %c0_12 = arith.constant 0 : index
    %c0_13 = arith.constant 0 : index
    %11 = vector.load %arg8[%c0_12, %c0_13] : memref<32x96xbf16, #tpu.memory_space<vmem>>, vector<32x96xbf16>
    %c0_14 = arith.constant 0 : index
    %c0_15 = arith.constant 0 : index
    %12 = vector.load %arg9[%c0_14, %c0_15] : memref<1x96xf32, #tpu.memory_space<vmem>>, vector<1x96xf32>
    %13 = vector.shape_cast %12 : vector<1x96xf32> to vector<1x96xf32>
    %14 = vector.broadcast %13 : vector<1x96xf32> to vector<8x96xf32>
    %c0_16 = arith.constant 0 : index
    %c0_17 = arith.constant 0 : index
    %15 = vector.load %arg10[%c0_16, %c0_17] : memref<1x96xf32, #tpu.memory_space<vmem>>, vector<1x96xf32>
    %16 = vector.shape_cast %15 : vector<1x96xf32> to vector<1x96xf32>
    %17 = vector.broadcast %16 : vector<1x96xf32> to vector<8x96xf32>
    %c0_18 = arith.constant 0 : index
    %c0_19 = arith.constant 0 : index
    %18 = vector.load %arg11[%c0_18, %c0_19] : memref<32x32xbf16, #tpu.memory_space<vmem>>, vector<32x32xbf16>
    %c0_20 = arith.constant 0 : index
    %c0_21 = arith.constant 0 : index
    %19 = vector.load %arg13[%c0_20, %c0_21] : memref<96x1xbf16, #tpu.memory_space<vmem>>, vector<96x1xbf16>
    %c0_22 = arith.constant 0 : index
    %c0_23 = arith.constant 0 : index
    %20 = vector.load %arg14[%c0_22, %c0_23] : memref<1x1xf32, #tpu.memory_space<vmem>>, vector<1x1xf32>
    %21 = vector.shape_cast %20 : vector<1x1xf32> to vector<1x1xf32>
    %22 = vector.broadcast %21 : vector<1x1xf32> to vector<8x1xf32>
    %c0_24 = arith.constant 0 : index
    %c0_25 = arith.constant 0 : index
    %23 = vector.load %arg15[%c0_24, %c0_25] : memref<96x32xbf16, #tpu.memory_space<vmem>>, vector<96x32xbf16>
    %c0_26 = arith.constant 0 : index
    %c0_27 = arith.constant 0 : index
    %24 = vector.load %arg16[%c0_26, %c0_27] : memref<1x32xf32, #tpu.memory_space<vmem>>, vector<1x32xf32>
    %25 = vector.shape_cast %24 : vector<1x32xf32> to vector<1x32xf32>
    %26 = vector.broadcast %25 : vector<1x32xf32> to vector<8x32xf32>
    %c0_28 = arith.constant 0 : index
    %c0_29 = arith.constant 0 : index
    %27 = vector.load %arg17[%c0_28, %c0_29] : memref<16x64xbf16, #tpu.memory_space<vmem>>, vector<16x64xbf16>
    %cst = arith.constant 0.000000e+00 : f32
    %28 = vector.broadcast %cst : f32 to vector<8x56xf32>
    %c0_30 = arith.constant 0 : index
    %c0_31 = arith.constant 0 : index
    %29 = vector.load %arg19[%c0_30, %c0_31] : memref<8x32xf32, #tpu.memory_space<vmem>>, vector<8x32xf32>
    %c0_32 = arith.constant 0 : index
    %c0_33 = arith.constant 0 : index
    %30 = vector.load %arg20[%c0_32, %c0_33] : memref<8x32xf32, #tpu.memory_space<vmem>>, vector<8x32xf32>
    %c0_i32_34 = arith.constant 0 : i32
    %31 = arith.index_cast %c0_i32_34 : i32 to index
    %c0_35 = arith.constant 0 : index
    %c0_36 = arith.constant 0 : index
    %32 = vector.load %arg2[%31, %c0_35, %c0_36] : memref<8x8x32xf32, #tpu.memory_space<vmem>>, vector<1x8x32xf32>
    %33 = vector.shape_cast %32 : vector<1x8x32xf32> to vector<8x32xf32>
    %34 = tpu.concatenate %33, %30 in 1 : vector<8x32xf32>, vector<8x32xf32> -> vector<8x64xf32>
    %35 = arith.truncf %34 : vector<8x64xf32> to vector<8x64xbf16>
    %cst_37 = arith.constant dense<0.000000e+00> : vector<8x96xf32>
    %36 = tpu.matmul %35, %10, %cst_37 {dimension_numbers = #tpu.dot_dimension_numbers<[1], [0], [0], [1], [0, 0, 1, 1], [], []>} : vector<8x64xbf16>, vector<64x96xbf16>, vector<8x96xf32> -> vector<8x96xf32>
    %37 = arith.addf %36, %14 : vector<8x96xf32>
    %38 = arith.truncf %29 : vector<8x32xf32> to vector<8x32xbf16>
    %cst_38 = arith.constant dense<0.000000e+00> : vector<8x96xf32>
    %39 = tpu.matmul %38, %11, %cst_38 {dimension_numbers = #tpu.dot_dimension_numbers<[1], [0], [0], [1], [0, 0, 1, 1], [], []>} : vector<8x32xbf16>, vector<32x96xbf16>, vector<8x96xf32> -> vector<8x96xf32>
    %40 = arith.addf %39, %17 : vector<8x96xf32>
    %41 = vector.extract_strided_slice %37 {offsets = [0, 0], sizes = [8, 32], strides = [1, 1]} : vector<8x96xf32> to vector<8x32xf32>
    %42 = vector.extract_strided_slice %40 {offsets = [0, 0], sizes = [8, 32], strides = [1, 1]} : vector<8x96xf32> to vector<8x32xf32>
    %43 = arith.addf %41, %42 : vector<8x32xf32>
    %44 = arith.negf %43 : vector<8x32xf32>
    %45 = math.exp %44 : vector<8x32xf32>
    %cst_39 = arith.constant 1.000000e+00 : f32
    %46 = vector.broadcast %cst_39 : f32 to vector<8x32xf32>
    %47 = arith.addf %46, %45 : vector<8x32xf32>
    %48 = arith.divf %46, %47 : vector<8x32xf32>
    %49 = vector.extract_strided_slice %37 {offsets = [0, 32], sizes = [8, 32], strides = [1, 1]} : vector<8x96xf32> to vector<8x32xf32>
    %50 = vector.extract_strided_slice %40 {offsets = [0, 32], sizes = [8, 32], strides = [1, 1]} : vector<8x96xf32> to vector<8x32xf32>
    %51 = arith.addf %49, %50 : vector<8x32xf32>
    %52 = arith.negf %51 : vector<8x32xf32>
    %53 = math.exp %52 : vector<8x32xf32>
    %cst_40 = arith.constant 1.000000e+00 : f32
    %54 = vector.broadcast %cst_40 : f32 to vector<8x32xf32>
    %55 = arith.addf %54, %53 : vector<8x32xf32>
    %56 = arith.divf %54, %55 : vector<8x32xf32>
    %57 = vector.extract_strided_slice %37 {offsets = [0, 64], sizes = [8, 32], strides = [1, 1]} : vector<8x96xf32> to vector<8x32xf32>
    %58 = vector.extract_strided_slice %40 {offsets = [0, 64], sizes = [8, 32], strides = [1, 1]} : vector<8x96xf32> to vector<8x32xf32>
    %59 = arith.mulf %48, %58 : vector<8x32xf32>
    %60 = arith.addf %57, %59 : vector<8x32xf32>
    %61 = math.tanh %60 : vector<8x32xf32>
    %cst_41 = arith.constant 1.000000e+00 : f32
    %62 = vector.broadcast %cst_41 : f32 to vector<8x32xf32>
    %63 = arith.subf %62, %56 : vector<8x32xf32>
    %64 = arith.mulf %63, %61 : vector<8x32xf32>
    %65 = arith.mulf %56, %29 : vector<8x32xf32>
    %66 = arith.addf %64, %65 : vector<8x32xf32>
    %67 = arith.truncf %66 : vector<8x32xf32> to vector<8x32xbf16>
    %cst_42 = arith.constant dense<0.000000e+00> : vector<8x32xf32>
    %68 = tpu.matmul %67, %18, %cst_42 {dimension_numbers = #tpu.dot_dimension_numbers<[1], [0], [0], [1], [0, 0, 1, 1], [], []>} : vector<8x32xbf16>, vector<32x32xbf16>, vector<8x32xf32> -> vector<8x32xf32>
    %69 = vector.shape_cast %68 : vector<8x32xf32> to vector<8x1x32xf32>
    %70 = vector.broadcast %69 : vector<8x1x32xf32> to vector<8x8x32xf32>
    %71 = arith.addf %4, %70 : vector<8x8x32xf32>
    %72 = math.tanh %71 : vector<8x8x32xf32>
    %73 = arith.mulf %72, %9 : vector<8x8x32xf32>
    %cst_43 = arith.constant dense<0.000000e+00> : vector<8x8xf32>
    %74 = vector.multi_reduction <add>, %73, %cst_43 [2] : vector<8x8x32xf32> to vector<8x8xf32>
    %75 = arith.addf %74, %5 : vector<8x8xf32>
    %cst_44 = arith.constant dense<0xFF800000> : vector<8xf32>
    %76 = vector.multi_reduction <maximumf>, %75, %cst_44 [1] : vector<8x8xf32> to vector<8xf32>
    %77 = vector.shape_cast %76 : vector<8xf32> to vector<8x1xf32>
    %78 = vector.broadcast %77 : vector<8x1xf32> to vector<8x8xf32>
    %79 = arith.subf %75, %78 : vector<8x8xf32>
    %80 = math.exp %79 : vector<8x8xf32>
    %cst_45 = arith.constant dense<0.000000e+00> : vector<8xf32>
    %81 = vector.multi_reduction <add>, %80, %cst_45 [1] : vector<8x8xf32> to vector<8xf32>
    %82 = vector.shape_cast %81 : vector<8xf32> to vector<8x1xf32>
    %83 = tpu.reciprocal %82 {approx = true} : vector<8x1xf32> -> vector<8x1xf32>
    %84 = vector.broadcast %83 : vector<8x1xf32> to vector<8x8xf32>
    %85 = arith.mulf %80, %84 : vector<8x8xf32>
    %86 = vector.shape_cast %85 : vector<8x8xf32> to vector<8x1x8xf32>
    %87 = arith.truncf %86 : vector<8x1x8xf32> to vector<8x1x8xbf16>
    "tpu.trace_start"() <{level = 10 : i32, message = "bqs,bsh->bqh"}> : () -> ()
    %cst_46 = arith.constant dense<0.000000e+00> : vector<8x1x32xf32>
    %88 = tpu.matmul %87, %3, %cst_46 {dimension_numbers = #tpu.dot_dimension_numbers<[2], [1], [1], [2], [0, 0, 0, 1, 1, 2], [0], [0]>} : vector<8x1x8xbf16>, vector<8x8x32xbf16>, vector<8x1x32xf32> -> vector<8x1x32xf32>
    "tpu.trace_stop"() : () -> ()
    %89 = vector.shape_cast %88 : vector<8x1x32xf32> to vector<8x32xf32>
    %90 = tpu.concatenate %33, %89, %66 in 1 : vector<8x32xf32>, vector<8x32xf32>, vector<8x32xf32> -> vector<8x96xf32>
    %91 = arith.truncf %90 : vector<8x96xf32> to vector<8x96xbf16>
    %cst_47 = arith.constant dense<0.000000e+00> : vector<8x1xf32>
    %92 = tpu.matmul %91, %19, %cst_47 {dimension_numbers = #tpu.dot_dimension_numbers<[1], [0], [0], [1], [0, 0, 1, 1], [], []>} : vector<8x96xbf16>, vector<96x1xbf16>, vector<8x1xf32> -> vector<8x1xf32>
    %93 = arith.addf %92, %22 : vector<8x1xf32>
    %94 = arith.negf %93 : vector<8x1xf32>
    %95 = math.exp %94 : vector<8x1xf32>
    %cst_48 = arith.constant 1.000000e+00 : f32
    %96 = vector.broadcast %cst_48 : f32 to vector<8x1xf32>
    %97 = arith.addf %96, %95 : vector<8x1xf32>
    %98 = arith.divf %96, %97 : vector<8x1xf32>
    %cst_49 = arith.constant dense<0.000000e+00> : vector<8x32xf32>
    %99 = tpu.matmul %91, %23, %cst_49 {dimension_numbers = #tpu.dot_dimension_numbers<[1], [0], [0], [1], [0, 0, 1, 1], [], []>} : vector<8x96xbf16>, vector<96x32xbf16>, vector<8x32xf32> -> vector<8x32xf32>
    %100 = arith.addf %99, %26 : vector<8x32xf32>
    %101 = vector.extract_strided_slice %100 {offsets = [0, 0], sizes = [8, 16], strides = [1, 1]} : vector<8x32xf32> to vector<8x16xf32>
    %102 = vector.extract_strided_slice %100 {offsets = [0, 16], sizes = [8, 16], strides = [1, 1]} : vector<8x32xf32> to vector<8x16xf32>
    %103 = arith.maximumf %101, %102 : vector<8x16xf32>
    %104 = arith.truncf %103 : vector<8x16xf32> to vector<8x16xbf16>
    %cst_50 = arith.constant dense<0.000000e+00> : vector<8x64xf32>
    %105 = tpu.matmul %104, %27, %cst_50 {dimension_numbers = #tpu.dot_dimension_numbers<[1], [0], [0], [1], [0, 0, 1, 1], [], []>} : vector<8x16xbf16>, vector<16x64xbf16>, vector<8x64xf32> -> vector<8x64xf32>
    %cst_51 = arith.constant dense<0xFF800000> : vector<8xf32>
    %106 = vector.multi_reduction <maximumf>, %105, %cst_51 [1] : vector<8x64xf32> to vector<8xf32>
    %107 = vector.shape_cast %106 : vector<8xf32> to vector<8x1xf32>
    %108 = vector.broadcast %107 : vector<8x1xf32> to vector<8x64xf32>
    %109 = arith.subf %105, %108 : vector<8x64xf32>
    %110 = math.exp %109 : vector<8x64xf32>
    %cst_52 = arith.constant dense<0.000000e+00> : vector<8xf32>
    %111 = vector.multi_reduction <add>, %110, %cst_52 [1] : vector<8x64xf32> to vector<8xf32>
    %112 = vector.shape_cast %111 : vector<8xf32> to vector<8x1xf32>
    %113 = tpu.reciprocal %112 {approx = true} : vector<8x1xf32> -> vector<8x1xf32>
    %114 = vector.broadcast %113 : vector<8x1xf32> to vector<8x64xf32>
    %115 = arith.mulf %110, %114 : vector<8x64xf32>
    %cst_53 = arith.constant 1.000000e+00 : f32
    %116 = vector.broadcast %cst_53 : f32 to vector<8x1xf32>
    %117 = arith.subf %116, %98 : vector<8x1xf32>
    %118 = vector.broadcast %117 : vector<8x1xf32> to vector<8x64xf32>
    %119 = arith.mulf %118, %115 : vector<8x64xf32>
    %120 = vector.broadcast %98 : vector<8x1xf32> to vector<8x8xf32>
    %121 = arith.mulf %120, %85 : vector<8x8xf32>
    %122 = tpu.concatenate %119, %121, %28 in 1 : vector<8x64xf32>, vector<8x8xf32>, vector<8x56xf32> -> vector<8x128xf32>
    %cst_54 = arith.constant 9.99999996E-13 : f32
    %123 = vector.broadcast %cst_54 : f32 to vector<8x128xf32>
    %124 = arith.addf %122, %123 : vector<8x128xf32>
    %125 = math.log %124 : vector<8x128xf32>
    %126 = vector.shape_cast %125 : vector<8x128xf32> to vector<8x1x128xf32>
    %c0_55 = arith.constant 0 : index
    %127 = arith.index_cast %c0_i32_34 : i32 to index
    %c0_56 = arith.constant 0 : index
    %128 = vector.load %arg18[%c0_55, %127, %c0_56] : memref<8x8x128xf32, #tpu.memory_space<vmem>>, vector<8x1x128xf32>
    tpu.vector_store %arg18[%c0_55, %127, %c0_56], %126 {strides = array<i32>} : memref<8x8x128xf32, #tpu.memory_space<vmem>>, vector<8x1x128xf32>,
    %c1_i32 = arith.constant 1 : i32
    %129 = arith.index_cast %c1_i32 : i32 to index
    %c0_57 = arith.constant 0 : index
    %c0_58 = arith.constant 0 : index
    %130 = vector.load %arg2[%129, %c0_57, %c0_58] : memref<8x8x32xf32, #tpu.memory_space<vmem>>, vector<1x8x32xf32>
    %131 = vector.shape_cast %130 : vector<1x8x32xf32> to vector<8x32xf32>
    %132 = tpu.concatenate %131, %89 in 1 : vector<8x32xf32>, vector<8x32xf32> -> vector<8x64xf32>
    %133 = arith.truncf %132 : vector<8x64xf32> to vector<8x64xbf16>
    %cst_59 = arith.constant dense<0.000000e+00> : vector<8x96xf32>
    %134 = tpu.matmul %133, %10, %cst_59 {dimension_numbers = #tpu.dot_dimension_numbers<[1], [0], [0], [1], [0, 0, 1, 1], [], []>} : vector<8x64xbf16>, vector<64x96xbf16>, vector<8x96xf32> -> vector<8x96xf32>
    %135 = arith.addf %134, %14 : vector<8x96xf32>
    %136 = arith.truncf %66 : vector<8x32xf32> to vector<8x32xbf16>
    %cst_60 = arith.constant dense<0.000000e+00> : vector<8x96xf32>
    %137 = tpu.matmul %136, %11, %cst_60 {dimension_numbers = #tpu.dot_dimension_numbers<[1], [0], [0], [1], [0, 0, 1, 1], [], []>} : vector<8x32xbf16>, vector<32x96xbf16>, vector<8x96xf32> -> vector<8x96xf32>
    %138 = arith.addf %137, %17 : vector<8x96xf32>
    %139 = vector.extract_strided_slice %135 {offsets = [0, 0], sizes = [8, 32], strides = [1, 1]} : vector<8x96xf32> to vector<8x32xf32>
    %140 = vector.extract_strided_slice %138 {offsets = [0, 0], sizes = [8, 32], strides = [1, 1]} : vector<8x96xf32> to vector<8x32xf32>
    %141 = arith.addf %139, %140 : vector<8x32xf32>
    %142 = arith.negf %141 : vector<8x32xf32>
    %143 = math.exp %142 : vector<8x32xf32>
    %cst_61 = arith.constant 1.000000e+00 : f32
    %144 = vector.broadcast %cst_61 : f32 to vector<8x32xf32>
    %145 = arith.addf %144, %143 : vector<8x32xf32>
    %146 = arith.divf %144, %145 : vector<8x32xf32>
    %147 = vector.extract_strided_slice %135 {offsets = [0, 32], sizes = [8, 32], strides = [1, 1]} : vector<8x96xf32> to vector<8x32xf32>
    %148 = vector.extract_strided_slice %138 {offsets = [0, 32], sizes = [8, 32], strides = [1, 1]} : vector<8x96xf32> to vector<8x32xf32>
    %149 = arith.addf %147, %148 : vector<8x32xf32>
    %150 = arith.negf %149 : vector<8x32xf32>
    %151 = math.exp %150 : vector<8x32xf32>
    %cst_62 = arith.constant 1.000000e+00 : f32
    %152 = vector.broadcast %cst_62 : f32 to vector<8x32xf32>
    %153 = arith.addf %152, %151 : vector<8x32xf32>
    %154 = arith.divf %152, %153 : vector<8x32xf32>
    %155 = vector.extract_strided_slice %135 {offsets = [0, 64], sizes = [8, 32], strides = [1, 1]} : vector<8x96xf32> to vector<8x32xf32>
    %156 = vector.extract_strided_slice %138 {offsets = [0, 64], sizes = [8, 32], strides = [1, 1]} : vector<8x96xf32> to vector<8x32xf32>
    %157 = arith.mulf %146, %156 : vector<8x32xf32>
    %158 = arith.addf %155, %157 : vector<8x32xf32>
    %159 = math.tanh %158 : vector<8x32xf32>
    %cst_63 = arith.constant 1.000000e+00 : f32
    %160 = vector.broadcast %cst_63 : f32 to vector<8x32xf32>
    %161 = arith.subf %160, %154 : vector<8x32xf32>
    %162 = arith.mulf %161, %159 : vector<8x32xf32>
    %163 = arith.mulf %154, %66 : vector<8x32xf32>
    %164 = arith.addf %162, %163 : vector<8x32xf32>
    %165 = arith.truncf %164 : vector<8x32xf32> to vector<8x32xbf16>
    %cst_64 = arith.constant dense<0.000000e+00> : vector<8x32xf32>
    %166 = tpu.matmul %165, %18, %cst_64 {dimension_numbers = #tpu.dot_dimension_numbers<[1], [0], [0], [1], [0, 0, 1, 1], [], []>} : vector<8x32xbf16>, vector<32x32xbf16>, vector<8x32xf32> -> vector<8x32xf32>
    %167 = vector.shape_cast %166 : vector<8x32xf32> to vector<8x1x32xf32>
    %168 = vector.broadcast %167 : vector<8x1x32xf32> to vector<8x8x32xf32>
    %169 = arith.addf %4, %168 : vector<8x8x32xf32>
    %170 = math.tanh %169 : vector<8x8x32xf32>
    %171 = arith.mulf %170, %9 : vector<8x8x32xf32>
    %cst_65 = arith.constant dense<0.000000e+00> : vector<8x8xf32>
    %172 = vector.multi_reduction <add>, %171, %cst_65 [2] : vector<8x8x32xf32> to vector<8x8xf32>
    %173 = arith.addf %172, %5 : vector<8x8xf32>
    %cst_66 = arith.constant dense<0xFF800000> : vector<8xf32>
    %174 = vector.multi_reduction <maximumf>, %173, %cst_66 [1] : vector<8x8xf32> to vector<8xf32>
    %175 = vector.shape_cast %174 : vector<8xf32> to vector<8x1xf32>
    %176 = vector.broadcast %175 : vector<8x1xf32> to vector<8x8xf32>
    %177 = arith.subf %173, %176 : vector<8x8xf32>
    %178 = math.exp %177 : vector<8x8xf32>
    %cst_67 = arith.constant dense<0.000000e+00> : vector<8xf32>
    %179 = vector.multi_reduction <add>, %178, %cst_67 [1] : vector<8x8xf32> to vector<8xf32>
    %180 = vector.shape_cast %179 : vector<8xf32> to vector<8x1xf32>
    %181 = tpu.reciprocal %180 {approx = true} : vector<8x1xf32> -> vector<8x1xf32>
    %182 = vector.broadcast %181 : vector<8x1xf32> to vector<8x8xf32>
    %183 = arith.mulf %178, %182 : vector<8x8xf32>
    %184 = vector.shape_cast %183 : vector<8x8xf32> to vector<8x1x8xf32>
    %185 = arith.truncf %184 : vector<8x1x8xf32> to vector<8x1x8xbf16>
    "tpu.trace_start"() <{level = 10 : i32, message = "bqs,bsh->bqh"}> : () -> ()
    %cst_68 = arith.constant dense<0.000000e+00> : vector<8x1x32xf32>
    %186 = tpu.matmul %185, %3, %cst_68 {dimension_numbers = #tpu.dot_dimension_numbers<[2], [1], [1], [2], [0, 0, 0, 1, 1, 2], [0], [0]>} : vector<8x1x8xbf16>, vector<8x8x32xbf16>, vector<8x1x32xf32> -> vector<8x1x32xf32>
    "tpu.trace_stop"() : () -> ()
    %187 = vector.shape_cast %186 : vector<8x1x32xf32> to vector<8x32xf32>
    %188 = tpu.concatenate %131, %187, %164 in 1 : vector<8x32xf32>, vector<8x32xf32>, vector<8x32xf32> -> vector<8x96xf32>
    %189 = arith.truncf %188 : vector<8x96xf32> to vector<8x96xbf16>
    %cst_69 = arith.constant dense<0.000000e+00> : vector<8x1xf32>
    %190 = tpu.matmul %189, %19, %cst_69 {dimension_numbers = #tpu.dot_dimension_numbers<[1], [0], [0], [1], [0, 0, 1, 1], [], []>} : vector<8x96xbf16>, vector<96x1xbf16>, vector<8x1xf32> -> vector<8x1xf32>
    %191 = arith.addf %190, %22 : vector<8x1xf32>
    %192 = arith.negf %191 : vector<8x1xf32>
    %193 = math.exp %192 : vector<8x1xf32>
    %cst_70 = arith.constant 1.000000e+00 : f32
    %194 = vector.broadcast %cst_70 : f32 to vector<8x1xf32>
    %195 = arith.addf %194, %193 : vector<8x1xf32>
    %196 = arith.divf %194, %195 : vector<8x1xf32>
    %cst_71 = arith.constant dense<0.000000e+00> : vector<8x32xf32>
    %197 = tpu.matmul %189, %23, %cst_71 {dimension_numbers = #tpu.dot_dimension_numbers<[1], [0], [0], [1], [0, 0, 1, 1], [], []>} : vector<8x96xbf16>, vector<96x32xbf16>, vector<8x32xf32> -> vector<8x32xf32>
    %198 = arith.addf %197, %26 : vector<8x32xf32>
    %199 = vector.extract_strided_slice %198 {offsets = [0, 0], sizes = [8, 16], strides = [1, 1]} : vector<8x32xf32> to vector<8x16xf32>
    %200 = vector.extract_strided_slice %198 {offsets = [0, 16], sizes = [8, 16], strides = [1, 1]} : vector<8x32xf32> to vector<8x16xf32>
    %201 = arith.maximumf %199, %200 : vector<8x16xf32>
    %202 = arith.truncf %201 : vector<8x16xf32> to vector<8x16xbf16>
    %cst_72 = arith.constant dense<0.000000e+00> : vector<8x64xf32>
    %203 = tpu.matmul %202, %27, %cst_72 {dimension_numbers = #tpu.dot_dimension_numbers<[1], [0], [0], [1], [0, 0, 1, 1], [], []>} : vector<8x16xbf16>, vector<16x64xbf16>, vector<8x64xf32> -> vector<8x64xf32>
    %cst_73 = arith.constant dense<0xFF800000> : vector<8xf32>
    %204 = vector.multi_reduction <maximumf>, %203, %cst_73 [1] : vector<8x64xf32> to vector<8xf32>
    %205 = vector.shape_cast %204 : vector<8xf32> to vector<8x1xf32>
    %206 = vector.broadcast %205 : vector<8x1xf32> to vector<8x64xf32>
    %207 = arith.subf %203, %206 : vector<8x64xf32>
    %208 = math.exp %207 : vector<8x64xf32>
    %cst_74 = arith.constant dense<0.000000e+00> : vector<8xf32>
    %209 = vector.multi_reduction <add>, %208, %cst_74 [1] : vector<8x64xf32> to vector<8xf32>
    %210 = vector.shape_cast %209 : vector<8xf32> to vector<8x1xf32>
    %211 = tpu.reciprocal %210 {approx = true} : vector<8x1xf32> -> vector<8x1xf32>
    %212 = vector.broadcast %211 : vector<8x1xf32> to vector<8x64xf32>
    %213 = arith.mulf %208, %212 : vector<8x64xf32>
    %cst_75 = arith.constant 1.000000e+00 : f32
    %214 = vector.broadcast %cst_75 : f32 to vector<8x1xf32>
    %215 = arith.subf %214, %196 : vector<8x1xf32>
    %216 = vector.broadcast %215 : vector<8x1xf32> to vector<8x64xf32>
    %217 = arith.mulf %216, %213 : vector<8x64xf32>
    %218 = vector.broadcast %196 : vector<8x1xf32> to vector<8x8xf32>
    %219 = arith.mulf %218, %183 : vector<8x8xf32>
    %220 = tpu.concatenate %217, %219, %28 in 1 : vector<8x64xf32>, vector<8x8xf32>, vector<8x56xf32> -> vector<8x128xf32>
    %cst_76 = arith.constant 9.99999996E-13 : f32
    %221 = vector.broadcast %cst_76 : f32 to vector<8x128xf32>
    %222 = arith.addf %220, %221 : vector<8x128xf32>
    %223 = math.log %222 : vector<8x128xf32>
    %224 = vector.shape_cast %223 : vector<8x128xf32> to vector<8x1x128xf32>
    %c0_77 = arith.constant 0 : index
    %225 = arith.index_cast %c1_i32 : i32 to index
    %c0_78 = arith.constant 0 : index
    %226 = vector.load %arg18[%c0_77, %225, %c0_78] : memref<8x8x128xf32, #tpu.memory_space<vmem>>, vector<8x1x128xf32>
    tpu.vector_store %arg18[%c0_77, %225, %c0_78], %224 {strides = array<i32>} : memref<8x8x128xf32, #tpu.memory_space<vmem>>, vector<8x1x128xf32>,
    %c2_i32 = arith.constant 2 : i32
    %227 = arith.index_cast %c2_i32 : i32 to index
    %c0_79 = arith.constant 0 : index
    %c0_80 = arith.constant 0 : index
    %228 = vector.load %arg2[%227, %c0_79, %c0_80] : memref<8x8x32xf32, #tpu.memory_space<vmem>>, vector<1x8x32xf32>
    %229 = vector.shape_cast %228 : vector<1x8x32xf32> to vector<8x32xf32>
    %230 = tpu.concatenate %229, %187 in 1 : vector<8x32xf32>, vector<8x32xf32> -> vector<8x64xf32>
    %231 = arith.truncf %230 : vector<8x64xf32> to vector<8x64xbf16>
    %cst_81 = arith.constant dense<0.000000e+00> : vector<8x96xf32>
    %232 = tpu.matmul %231, %10, %cst_81 {dimension_numbers = #tpu.dot_dimension_numbers<[1], [0], [0], [1], [0, 0, 1, 1], [], []>} : vector<8x64xbf16>, vector<64x96xbf16>, vector<8x96xf32> -> vector<8x96xf32>
    %233 = arith.addf %232, %14 : vector<8x96xf32>
    %234 = arith.truncf %164 : vector<8x32xf32> to vector<8x32xbf16>
    %cst_82 = arith.constant dense<0.000000e+00> : vector<8x96xf32>
    %235 = tpu.matmul %234, %11, %cst_82 {dimension_numbers = #tpu.dot_dimension_numbers<[1], [0], [0], [1], [0, 0, 1, 1], [], []>} : vector<8x32xbf16>, vector<32x96xbf16>, vector<8x96xf32> -> vector<8x96xf32>
    %236 = arith.addf %235, %17 : vector<8x96xf32>
    %237 = vector.extract_strided_slice %233 {offsets = [0, 0], sizes = [8, 32], strides = [1, 1]} : vector<8x96xf32> to vector<8x32xf32>
    %238 = vector.extract_strided_slice %236 {offsets = [0, 0], sizes = [8, 32], strides = [1, 1]} : vector<8x96xf32> to vector<8x32xf32>
    %239 = arith.addf %237, %238 : vector<8x32xf32>
    %240 = arith.negf %239 : vector<8x32xf32>
    %241 = math.exp %240 : vector<8x32xf32>
    %cst_83 = arith.constant 1.000000e+00 : f32
    %242 = vector.broadcast %cst_83 : f32 to vector<8x32xf32>
    %243 = arith.addf %242, %241 : vector<8x32xf32>
    %244 = arith.divf %242, %243 : vector<8x32xf32>
    %245 = vector.extract_strided_slice %233 {offsets = [0, 32], sizes = [8, 32], strides = [1, 1]} : vector<8x96xf32> to vector<8x32xf32>
    %246 = vector.extract_strided_slice %236 {offsets = [0, 32], sizes = [8, 32], strides = [1, 1]} : vector<8x96xf32> to vector<8x32xf32>
    %247 = arith.addf %245, %246 : vector<8x32xf32>
    %248 = arith.negf %247 : vector<8x32xf32>
    %249 = math.exp %248 : vector<8x32xf32>
    %cst_84 = arith.constant 1.000000e+00 : f32
    %250 = vector.broadcast %cst_84 : f32 to vector<8x32xf32>
    %251 = arith.addf %250, %249 : vector<8x32xf32>
    %252 = arith.divf %250, %251 : vector<8x32xf32>
    %253 = vector.extract_strided_slice %233 {offsets = [0, 64], sizes = [8, 32], strides = [1, 1]} : vector<8x96xf32> to vector<8x32xf32>
    %254 = vector.extract_strided_slice %236 {offsets = [0, 64], sizes = [8, 32], strides = [1, 1]} : vector<8x96xf32> to vector<8x32xf32>
    %255 = arith.mulf %244, %254 : vector<8x32xf32>
    %256 = arith.addf %253, %255 : vector<8x32xf32>
    %257 = math.tanh %256 : vector<8x32xf32>
    %cst_85 = arith.constant 1.000000e+00 : f32
    %258 = vector.broadcast %cst_85 : f32 to vector<8x32xf32>
    %259 = arith.subf %258, %252 : vector<8x32xf32>
    %260 = arith.mulf %259, %257 : vector<8x32xf32>
    %261 = arith.mulf %252, %164 : vector<8x32xf32>
    %262 = arith.addf %260, %261 : vector<8x32xf32>
    %263 = arith.truncf %262 : vector<8x32xf32> to vector<8x32xbf16>
    %cst_86 = arith.constant dense<0.000000e+00> : vector<8x32xf32>
    %264 = tpu.matmul %263, %18, %cst_86 {dimension_numbers = #tpu.dot_dimension_numbers<[1], [0], [0], [1], [0, 0, 1, 1], [], []>} : vector<8x32xbf16>, vector<32x32xbf16>, vector<8x32xf32> -> vector<8x32xf32>
    %265 = vector.shape_cast %264 : vector<8x32xf32> to vector<8x1x32xf32>
    %266 = vector.broadcast %265 : vector<8x1x32xf32> to vector<8x8x32xf32>
    %267 = arith.addf %4, %266 : vector<8x8x32xf32>
    %268 = math.tanh %267 : vector<8x8x32xf32>
    %269 = arith.mulf %268, %9 : vector<8x8x32xf32>
    %cst_87 = arith.constant dense<0.000000e+00> : vector<8x8xf32>
    %270 = vector.multi_reduction <add>, %269, %cst_87 [2] : vector<8x8x32xf32> to vector<8x8xf32>
    %271 = arith.addf %270, %5 : vector<8x8xf32>
    %cst_88 = arith.constant dense<0xFF800000> : vector<8xf32>
    %272 = vector.multi_reduction <maximumf>, %271, %cst_88 [1] : vector<8x8xf32> to vector<8xf32>
    %273 = vector.shape_cast %272 : vector<8xf32> to vector<8x1xf32>
    %274 = vector.broadcast %273 : vector<8x1xf32> to vector<8x8xf32>
    %275 = arith.subf %271, %274 : vector<8x8xf32>
    %276 = math.exp %275 : vector<8x8xf32>
    %cst_89 = arith.constant dense<0.000000e+00> : vector<8xf32>
    %277 = vector.multi_reduction <add>, %276, %cst_89 [1] : vector<8x8xf32> to vector<8xf32>
    %278 = vector.shape_cast %277 : vector<8xf32> to vector<8x1xf32>
    %279 = tpu.reciprocal %278 {approx = true} : vector<8x1xf32> -> vector<8x1xf32>
    %280 = vector.broadcast %279 : vector<8x1xf32> to vector<8x8xf32>
    %281 = arith.mulf %276, %280 : vector<8x8xf32>
    %282 = vector.shape_cast %281 : vector<8x8xf32> to vector<8x1x8xf32>
    %283 = arith.truncf %282 : vector<8x1x8xf32> to vector<8x1x8xbf16>
    "tpu.trace_start"() <{level = 10 : i32, message = "bqs,bsh->bqh"}> : () -> ()
    %cst_90 = arith.constant dense<0.000000e+00> : vector<8x1x32xf32>
    %284 = tpu.matmul %283, %3, %cst_90 {dimension_numbers = #tpu.dot_dimension_numbers<[2], [1], [1], [2], [0, 0, 0, 1, 1, 2], [0], [0]>} : vector<8x1x8xbf16>, vector<8x8x32xbf16>, vector<8x1x32xf32> -> vector<8x1x32xf32>
    "tpu.trace_stop"() : () -> ()
    %285 = vector.shape_cast %284 : vector<8x1x32xf32> to vector<8x32xf32>
    %286 = tpu.concatenate %229, %285, %262 in 1 : vector<8x32xf32>, vector<8x32xf32>, vector<8x32xf32> -> vector<8x96xf32>
    %287 = arith.truncf %286 : vector<8x96xf32> to vector<8x96xbf16>
    %cst_91 = arith.constant dense<0.000000e+00> : vector<8x1xf32>
    %288 = tpu.matmul %287, %19, %cst_91 {dimension_numbers = #tpu.dot_dimension_numbers<[1], [0], [0], [1], [0, 0, 1, 1], [], []>} : vector<8x96xbf16>, vector<96x1xbf16>, vector<8x1xf32> -> vector<8x1xf32>
    %289 = arith.addf %288, %22 : vector<8x1xf32>
    %290 = arith.negf %289 : vector<8x1xf32>
    %291 = math.exp %290 : vector<8x1xf32>
    %cst_92 = arith.constant 1.000000e+00 : f32
    %292 = vector.broadcast %cst_92 : f32 to vector<8x1xf32>
    %293 = arith.addf %292, %291 : vector<8x1xf32>
    %294 = arith.divf %292, %293 : vector<8x1xf32>
    %cst_93 = arith.constant dense<0.000000e+00> : vector<8x32xf32>
    %295 = tpu.matmul %287, %23, %cst_93 {dimension_numbers = #tpu.dot_dimension_numbers<[1], [0], [0], [1], [0, 0, 1, 1], [], []>} : vector<8x96xbf16>, vector<96x32xbf16>, vector<8x32xf32> -> vector<8x32xf32>
    %296 = arith.addf %295, %26 : vector<8x32xf32>
    %297 = vector.extract_strided_slice %296 {offsets = [0, 0], sizes = [8, 16], strides = [1, 1]} : vector<8x32xf32> to vector<8x16xf32>
    %298 = vector.extract_strided_slice %296 {offsets = [0, 16], sizes = [8, 16], strides = [1, 1]} : vector<8x32xf32> to vector<8x16xf32>
    %299 = arith.maximumf %297, %298 : vector<8x16xf32>
    %300 = arith.truncf %299 : vector<8x16xf32> to vector<8x16xbf16>
    %cst_94 = arith.constant dense<0.000000e+00> : vector<8x64xf32>
    %301 = tpu.matmul %300, %27, %cst_94 {dimension_numbers = #tpu.dot_dimension_numbers<[1], [0], [0], [1], [0, 0, 1, 1], [], []>} : vector<8x16xbf16>, vector<16x64xbf16>, vector<8x64xf32> -> vector<8x64xf32>
    %cst_95 = arith.constant dense<0xFF800000> : vector<8xf32>
    %302 = vector.multi_reduction <maximumf>, %301, %cst_95 [1] : vector<8x64xf32> to vector<8xf32>
    %303 = vector.shape_cast %302 : vector<8xf32> to vector<8x1xf32>
    %304 = vector.broadcast %303 : vector<8x1xf32> to vector<8x64xf32>
    %305 = arith.subf %301, %304 : vector<8x64xf32>
    %306 = math.exp %305 : vector<8x64xf32>
    %cst_96 = arith.constant dense<0.000000e+00> : vector<8xf32>
    %307 = vector.multi_reduction <add>, %306, %cst_96 [1] : vector<8x64xf32> to vector<8xf32>
    %308 = vector.shape_cast %307 : vector<8xf32> to vector<8x1xf32>
    %309 = tpu.reciprocal %308 {approx = true} : vector<8x1xf32> -> vector<8x1xf32>
    %310 = vector.broadcast %309 : vector<8x1xf32> to vector<8x64xf32>
    %311 = arith.mulf %306, %310 : vector<8x64xf32>
    %cst_97 = arith.constant 1.000000e+00 : f32
    %312 = vector.broadcast %cst_97 : f32 to vector<8x1xf32>
    %313 = arith.subf %312, %294 : vector<8x1xf32>
    %314 = vector.broadcast %313 : vector<8x1xf32> to vector<8x64xf32>
    %315 = arith.mulf %314, %311 : vector<8x64xf32>
    %316 = vector.broadcast %294 : vector<8x1xf32> to vector<8x8xf32>
    %317 = arith.mulf %316, %281 : vector<8x8xf32>
    %318 = tpu.concatenate %315, %317, %28 in 1 : vector<8x64xf32>, vector<8x8xf32>, vector<8x56xf32> -> vector<8x128xf32>
    %cst_98 = arith.constant 9.99999996E-13 : f32
    %319 = vector.broadcast %cst_98 : f32 to vector<8x128xf32>
    %320 = arith.addf %318, %319 : vector<8x128xf32>
    %321 = math.log %320 : vector<8x128xf32>
    %322 = vector.shape_cast %321 : vector<8x128xf32> to vector<8x1x128xf32>
    %c0_99 = arith.constant 0 : index
    %323 = arith.index_cast %c2_i32 : i32 to index
    %c0_100 = arith.constant 0 : index
    %324 = vector.load %arg18[%c0_99, %323, %c0_100] : memref<8x8x128xf32, #tpu.memory_space<vmem>>, vector<8x1x128xf32>
    tpu.vector_store %arg18[%c0_99, %323, %c0_100], %322 {strides = array<i32>} : memref<8x8x128xf32, #tpu.memory_space<vmem>>, vector<8x1x128xf32>,
    %c3_i32 = arith.constant 3 : i32
    %325 = arith.index_cast %c3_i32 : i32 to index
    %c0_101 = arith.constant 0 : index
    %c0_102 = arith.constant 0 : index
    %326 = vector.load %arg2[%325, %c0_101, %c0_102] : memref<8x8x32xf32, #tpu.memory_space<vmem>>, vector<1x8x32xf32>
    %327 = vector.shape_cast %326 : vector<1x8x32xf32> to vector<8x32xf32>
    %328 = tpu.concatenate %327, %285 in 1 : vector<8x32xf32>, vector<8x32xf32> -> vector<8x64xf32>
    %329 = arith.truncf %328 : vector<8x64xf32> to vector<8x64xbf16>
    %cst_103 = arith.constant dense<0.000000e+00> : vector<8x96xf32>
    %330 = tpu.matmul %329, %10, %cst_103 {dimension_numbers = #tpu.dot_dimension_numbers<[1], [0], [0], [1], [0, 0, 1, 1], [], []>} : vector<8x64xbf16>, vector<64x96xbf16>, vector<8x96xf32> -> vector<8x96xf32>
    %331 = arith.addf %330, %14 : vector<8x96xf32>
    %332 = arith.truncf %262 : vector<8x32xf32> to vector<8x32xbf16>
    %cst_104 = arith.constant dense<0.000000e+00> : vector<8x96xf32>
    %333 = tpu.matmul %332, %11, %cst_104 {dimension_numbers = #tpu.dot_dimension_numbers<[1], [0], [0], [1], [0, 0, 1, 1], [], []>} : vector<8x32xbf16>, vector<32x96xbf16>, vector<8x96xf32> -> vector<8x96xf32>
    %334 = arith.addf %333, %17 : vector<8x96xf32>
    %335 = vector.extract_strided_slice %331 {offsets = [0, 0], sizes = [8, 32], strides = [1, 1]} : vector<8x96xf32> to vector<8x32xf32>
    %336 = vector.extract_strided_slice %334 {offsets = [0, 0], sizes = [8, 32], strides = [1, 1]} : vector<8x96xf32> to vector<8x32xf32>
    %337 = arith.addf %335, %336 : vector<8x32xf32>
    %338 = arith.negf %337 : vector<8x32xf32>
    %339 = math.exp %338 : vector<8x32xf32>
    %cst_105 = arith.constant 1.000000e+00 : f32
    %340 = vector.broadcast %cst_105 : f32 to vector<8x32xf32>
    %341 = arith.addf %340, %339 : vector<8x32xf32>
    %342 = arith.divf %340, %341 : vector<8x32xf32>
    %343 = vector.extract_strided_slice %331 {offsets = [0, 32], sizes = [8, 32], strides = [1, 1]} : vector<8x96xf32> to vector<8x32xf32>
    %344 = vector.extract_strided_slice %334 {offsets = [0, 32], sizes = [8, 32], strides = [1, 1]} : vector<8x96xf32> to vector<8x32xf32>
    %345 = arith.addf %343, %344 : vector<8x32xf32>
    %346 = arith.negf %345 : vector<8x32xf32>
    %347 = math.exp %346 : vector<8x32xf32>
    %cst_106 = arith.constant 1.000000e+00 : f32
    %348 = vector.broadcast %cst_106 : f32 to vector<8x32xf32>
    %349 = arith.addf %348, %347 : vector<8x32xf32>
    %350 = arith.divf %348, %349 : vector<8x32xf32>
    %351 = vector.extract_strided_slice %331 {offsets = [0, 64], sizes = [8, 32], strides = [1, 1]} : vector<8x96xf32> to vector<8x32xf32>
    %352 = vector.extract_strided_slice %334 {offsets = [0, 64], sizes = [8, 32], strides = [1, 1]} : vector<8x96xf32> to vector<8x32xf32>
    %353 = arith.mulf %342, %352 : vector<8x32xf32>
    %354 = arith.addf %351, %353 : vector<8x32xf32>
    %355 = math.tanh %354 : vector<8x32xf32>
    %cst_107 = arith.constant 1.000000e+00 : f32
    %356 = vector.broadcast %cst_107 : f32 to vector<8x32xf32>
    %357 = arith.subf %356, %350 : vector<8x32xf32>
    %358 = arith.mulf %357, %355 : vector<8x32xf32>
    %359 = arith.mulf %350, %262 : vector<8x32xf32>
    %360 = arith.addf %358, %359 : vector<8x32xf32>
    %361 = arith.truncf %360 : vector<8x32xf32> to vector<8x32xbf16>
    %cst_108 = arith.constant dense<0.000000e+00> : vector<8x32xf32>
    %362 = tpu.matmul %361, %18, %cst_108 {dimension_numbers = #tpu.dot_dimension_numbers<[1], [0], [0], [1], [0, 0, 1, 1], [], []>} : vector<8x32xbf16>, vector<32x32xbf16>, vector<8x32xf32> -> vector<8x32xf32>
    %363 = vector.shape_cast %362 : vector<8x32xf32> to vector<8x1x32xf32>
    %364 = vector.broadcast %363 : vector<8x1x32xf32> to vector<8x8x32xf32>
    %365 = arith.addf %4, %364 : vector<8x8x32xf32>
    %366 = math.tanh %365 : vector<8x8x32xf32>
    %367 = arith.mulf %366, %9 : vector<8x8x32xf32>
    %cst_109 = arith.constant dense<0.000000e+00> : vector<8x8xf32>
    %368 = vector.multi_reduction <add>, %367, %cst_109 [2] : vector<8x8x32xf32> to vector<8x8xf32>
    %369 = arith.addf %368, %5 : vector<8x8xf32>
    %cst_110 = arith.constant dense<0xFF800000> : vector<8xf32>
    %370 = vector.multi_reduction <maximumf>, %369, %cst_110 [1] : vector<8x8xf32> to vector<8xf32>
    %371 = vector.shape_cast %370 : vector<8xf32> to vector<8x1xf32>
    %372 = vector.broadcast %371 : vector<8x1xf32> to vector<8x8xf32>
    %373 = arith.subf %369, %372 : vector<8x8xf32>
    %374 = math.exp %373 : vector<8x8xf32>
    %cst_111 = arith.constant dense<0.000000e+00> : vector<8xf32>
    %375 = vector.multi_reduction <add>, %374, %cst_111 [1] : vector<8x8xf32> to vector<8xf32>
    %376 = vector.shape_cast %375 : vector<8xf32> to vector<8x1xf32>
    %377 = tpu.reciprocal %376 {approx = true} : vector<8x1xf32> -> vector<8x1xf32>
    %378 = vector.broadcast %377 : vector<8x1xf32> to vector<8x8xf32>
    %379 = arith.mulf %374, %378 : vector<8x8xf32>
    %380 = vector.shape_cast %379 : vector<8x8xf32> to vector<8x1x8xf32>
    %381 = arith.truncf %380 : vector<8x1x8xf32> to vector<8x1x8xbf16>
    "tpu.trace_start"() <{level = 10 : i32, message = "bqs,bsh->bqh"}> : () -> ()
    %cst_112 = arith.constant dense<0.000000e+00> : vector<8x1x32xf32>
    %382 = tpu.matmul %381, %3, %cst_112 {dimension_numbers = #tpu.dot_dimension_numbers<[2], [1], [1], [2], [0, 0, 0, 1, 1, 2], [0], [0]>} : vector<8x1x8xbf16>, vector<8x8x32xbf16>, vector<8x1x32xf32> -> vector<8x1x32xf32>
    "tpu.trace_stop"() : () -> ()
    %383 = vector.shape_cast %382 : vector<8x1x32xf32> to vector<8x32xf32>
    %384 = tpu.concatenate %327, %383, %360 in 1 : vector<8x32xf32>, vector<8x32xf32>, vector<8x32xf32> -> vector<8x96xf32>
    %385 = arith.truncf %384 : vector<8x96xf32> to vector<8x96xbf16>
    %cst_113 = arith.constant dense<0.000000e+00> : vector<8x1xf32>
    %386 = tpu.matmul %385, %19, %cst_113 {dimension_numbers = #tpu.dot_dimension_numbers<[1], [0], [0], [1], [0, 0, 1, 1], [], []>} : vector<8x96xbf16>, vector<96x1xbf16>, vector<8x1xf32> -> vector<8x1xf32>
    %387 = arith.addf %386, %22 : vector<8x1xf32>
    %388 = arith.negf %387 : vector<8x1xf32>
    %389 = math.exp %388 : vector<8x1xf32>
    %cst_114 = arith.constant 1.000000e+00 : f32
    %390 = vector.broadcast %cst_114 : f32 to vector<8x1xf32>
    %391 = arith.addf %390, %389 : vector<8x1xf32>
    %392 = arith.divf %390, %391 : vector<8x1xf32>
    %cst_115 = arith.constant dense<0.000000e+00> : vector<8x32xf32>
    %393 = tpu.matmul %385, %23, %cst_115 {dimension_numbers = #tpu.dot_dimension_numbers<[1], [0], [0], [1], [0, 0, 1, 1], [], []>} : vector<8x96xbf16>, vector<96x32xbf16>, vector<8x32xf32> -> vector<8x32xf32>
    %394 = arith.addf %393, %26 : vector<8x32xf32>
    %395 = vector.extract_strided_slice %394 {offsets = [0, 0], sizes = [8, 16], strides = [1, 1]} : vector<8x32xf32> to vector<8x16xf32>
    %396 = vector.extract_strided_slice %394 {offsets = [0, 16], sizes = [8, 16], strides = [1, 1]} : vector<8x32xf32> to vector<8x16xf32>
    %397 = arith.maximumf %395, %396 : vector<8x16xf32>
    %398 = arith.truncf %397 : vector<8x16xf32> to vector<8x16xbf16>
    %cst_116 = arith.constant dense<0.000000e+00> : vector<8x64xf32>
    %399 = tpu.matmul %398, %27, %cst_116 {dimension_numbers = #tpu.dot_dimension_numbers<[1], [0], [0], [1], [0, 0, 1, 1], [], []>} : vector<8x16xbf16>, vector<16x64xbf16>, vector<8x64xf32> -> vector<8x64xf32>
    %cst_117 = arith.constant dense<0xFF800000> : vector<8xf32>
    %400 = vector.multi_reduction <maximumf>, %399, %cst_117 [1] : vector<8x64xf32> to vector<8xf32>
    %401 = vector.shape_cast %400 : vector<8xf32> to vector<8x1xf32>
    %402 = vector.broadcast %401 : vector<8x1xf32> to vector<8x64xf32>
    %403 = arith.subf %399, %402 : vector<8x64xf32>
    %404 = math.exp %403 : vector<8x64xf32>
    %cst_118 = arith.constant dense<0.000000e+00> : vector<8xf32>
    %405 = vector.multi_reduction <add>, %404, %cst_118 [1] : vector<8x64xf32> to vector<8xf32>
    %406 = vector.shape_cast %405 : vector<8xf32> to vector<8x1xf32>
    %407 = tpu.reciprocal %406 {approx = true} : vector<8x1xf32> -> vector<8x1xf32>
    %408 = vector.broadcast %407 : vector<8x1xf32> to vector<8x64xf32>
    %409 = arith.mulf %404, %408 : vector<8x64xf32>
    %cst_119 = arith.constant 1.000000e+00 : f32
    %410 = vector.broadcast %cst_119 : f32 to vector<8x1xf32>
    %411 = arith.subf %410, %392 : vector<8x1xf32>
    %412 = vector.broadcast %411 : vector<8x1xf32> to vector<8x64xf32>
    %413 = arith.mulf %412, %409 : vector<8x64xf32>
    %414 = vector.broadcast %392 : vector<8x1xf32> to vector<8x8xf32>
    %415 = arith.mulf %414, %379 : vector<8x8xf32>
    %416 = tpu.concatenate %413, %415, %28 in 1 : vector<8x64xf32>, vector<8x8xf32>, vector<8x56xf32> -> vector<8x128xf32>
    %cst_120 = arith.constant 9.99999996E-13 : f32
    %417 = vector.broadcast %cst_120 : f32 to vector<8x128xf32>
    %418 = arith.addf %416, %417 : vector<8x128xf32>
    %419 = math.log %418 : vector<8x128xf32>
    %420 = vector.shape_cast %419 : vector<8x128xf32> to vector<8x1x128xf32>
    %c0_121 = arith.constant 0 : index
    %421 = arith.index_cast %c3_i32 : i32 to index
    %c0_122 = arith.constant 0 : index
    %422 = vector.load %arg18[%c0_121, %421, %c0_122] : memref<8x8x128xf32, #tpu.memory_space<vmem>>, vector<8x1x128xf32>
    tpu.vector_store %arg18[%c0_121, %421, %c0_122], %420 {strides = array<i32>} : memref<8x8x128xf32, #tpu.memory_space<vmem>>, vector<8x1x128xf32>,
    %c4_i32 = arith.constant 4 : i32
    %423 = arith.index_cast %c4_i32 : i32 to index
    %c0_123 = arith.constant 0 : index
    %c0_124 = arith.constant 0 : index
    %424 = vector.load %arg2[%423, %c0_123, %c0_124] : memref<8x8x32xf32, #tpu.memory_space<vmem>>, vector<1x8x32xf32>
    %425 = vector.shape_cast %424 : vector<1x8x32xf32> to vector<8x32xf32>
    %426 = tpu.concatenate %425, %383 in 1 : vector<8x32xf32>, vector<8x32xf32> -> vector<8x64xf32>
    %427 = arith.truncf %426 : vector<8x64xf32> to vector<8x64xbf16>
    %cst_125 = arith.constant dense<0.000000e+00> : vector<8x96xf32>
    %428 = tpu.matmul %427, %10, %cst_125 {dimension_numbers = #tpu.dot_dimension_numbers<[1], [0], [0], [1], [0, 0, 1, 1], [], []>} : vector<8x64xbf16>, vector<64x96xbf16>, vector<8x96xf32> -> vector<8x96xf32>
    %429 = arith.addf %428, %14 : vector<8x96xf32>
    %430 = arith.truncf %360 : vector<8x32xf32> to vector<8x32xbf16>
    %cst_126 = arith.constant dense<0.000000e+00> : vector<8x96xf32>
    %431 = tpu.matmul %430, %11, %cst_126 {dimension_numbers = #tpu.dot_dimension_numbers<[1], [0], [0], [1], [0, 0, 1, 1], [], []>} : vector<8x32xbf16>, vector<32x96xbf16>, vector<8x96xf32> -> vector<8x96xf32>
    %432 = arith.addf %431, %17 : vector<8x96xf32>
    %433 = vector.extract_strided_slice %429 {offsets = [0, 0], sizes = [8, 32], strides = [1, 1]} : vector<8x96xf32> to vector<8x32xf32>
    %434 = vector.extract_strided_slice %432 {offsets = [0, 0], sizes = [8, 32], strides = [1, 1]} : vector<8x96xf32> to vector<8x32xf32>
    %435 = arith.addf %433, %434 : vector<8x32xf32>
    %436 = arith.negf %435 : vector<8x32xf32>
    %437 = math.exp %436 : vector<8x32xf32>
    %cst_127 = arith.constant 1.000000e+00 : f32
    %438 = vector.broadcast %cst_127 : f32 to vector<8x32xf32>
    %439 = arith.addf %438, %437 : vector<8x32xf32>
    %440 = arith.divf %438, %439 : vector<8x32xf32>
    %441 = vector.extract_strided_slice %429 {offsets = [0, 32], sizes = [8, 32], strides = [1, 1]} : vector<8x96xf32> to vector<8x32xf32>
    %442 = vector.extract_strided_slice %432 {offsets = [0, 32], sizes = [8, 32], strides = [1, 1]} : vector<8x96xf32> to vector<8x32xf32>
    %443 = arith.addf %441, %442 : vector<8x32xf32>
    %444 = arith.negf %443 : vector<8x32xf32>
    %445 = math.exp %444 : vector<8x32xf32>
    %cst_128 = arith.constant 1.000000e+00 : f32
    %446 = vector.broadcast %cst_128 : f32 to vector<8x32xf32>
    %447 = arith.addf %446, %445 : vector<8x32xf32>
    %448 = arith.divf %446, %447 : vector<8x32xf32>
    %449 = vector.extract_strided_slice %429 {offsets = [0, 64], sizes = [8, 32], strides = [1, 1]} : vector<8x96xf32> to vector<8x32xf32>
    %450 = vector.extract_strided_slice %432 {offsets = [0, 64], sizes = [8, 32], strides = [1, 1]} : vector<8x96xf32> to vector<8x32xf32>
    %451 = arith.mulf %440, %450 : vector<8x32xf32>
    %452 = arith.addf %449, %451 : vector<8x32xf32>
    %453 = math.tanh %452 : vector<8x32xf32>
    %cst_129 = arith.constant 1.000000e+00 : f32
    %454 = vector.broadcast %cst_129 : f32 to vector<8x32xf32>
    %455 = arith.subf %454, %448 : vector<8x32xf32>
    %456 = arith.mulf %455, %453 : vector<8x32xf32>
    %457 = arith.mulf %448, %360 : vector<8x32xf32>
    %458 = arith.addf %456, %457 : vector<8x32xf32>
    %459 = arith.truncf %458 : vector<8x32xf32> to vector<8x32xbf16>
    %cst_130 = arith.constant dense<0.000000e+00> : vector<8x32xf32>
    %460 = tpu.matmul %459, %18, %cst_130 {dimension_numbers = #tpu.dot_dimension_numbers<[1], [0], [0], [1], [0, 0, 1, 1], [], []>} : vector<8x32xbf16>, vector<32x32xbf16>, vector<8x32xf32> -> vector<8x32xf32>
    %461 = vector.shape_cast %460 : vector<8x32xf32> to vector<8x1x32xf32>
    %462 = vector.broadcast %461 : vector<8x1x32xf32> to vector<8x8x32xf32>
    %463 = arith.addf %4, %462 : vector<8x8x32xf32>
    %464 = math.tanh %463 : vector<8x8x32xf32>
    %465 = arith.mulf %464, %9 : vector<8x8x32xf32>
    %cst_131 = arith.constant dense<0.000000e+00> : vector<8x8xf32>
    %466 = vector.multi_reduction <add>, %465, %cst_131 [2] : vector<8x8x32xf32> to vector<8x8xf32>
    %467 = arith.addf %466, %5 : vector<8x8xf32>
    %cst_132 = arith.constant dense<0xFF800000> : vector<8xf32>
    %468 = vector.multi_reduction <maximumf>, %467, %cst_132 [1] : vector<8x8xf32> to vector<8xf32>
    %469 = vector.shape_cast %468 : vector<8xf32> to vector<8x1xf32>
    %470 = vector.broadcast %469 : vector<8x1xf32> to vector<8x8xf32>
    %471 = arith.subf %467, %470 : vector<8x8xf32>
    %472 = math.exp %471 : vector<8x8xf32>
    %cst_133 = arith.constant dense<0.000000e+00> : vector<8xf32>
    %473 = vector.multi_reduction <add>, %472, %cst_133 [1] : vector<8x8xf32> to vector<8xf32>
    %474 = vector.shape_cast %473 : vector<8xf32> to vector<8x1xf32>
    %475 = tpu.reciprocal %474 {approx = true} : vector<8x1xf32> -> vector<8x1xf32>
    %476 = vector.broadcast %475 : vector<8x1xf32> to vector<8x8xf32>
    %477 = arith.mulf %472, %476 : vector<8x8xf32>
    %478 = vector.shape_cast %477 : vector<8x8xf32> to vector<8x1x8xf32>
    %479 = arith.truncf %478 : vector<8x1x8xf32> to vector<8x1x8xbf16>
    "tpu.trace_start"() <{level = 10 : i32, message = "bqs,bsh->bqh"}> : () -> ()
    %cst_134 = arith.constant dense<0.000000e+00> : vector<8x1x32xf32>
    %480 = tpu.matmul %479, %3, %cst_134 {dimension_numbers = #tpu.dot_dimension_numbers<[2], [1], [1], [2], [0, 0, 0, 1, 1, 2], [0], [0]>} : vector<8x1x8xbf16>, vector<8x8x32xbf16>, vector<8x1x32xf32> -> vector<8x1x32xf32>
    "tpu.trace_stop"() : () -> ()
    %481 = vector.shape_cast %480 : vector<8x1x32xf32> to vector<8x32xf32>
    %482 = tpu.concatenate %425, %481, %458 in 1 : vector<8x32xf32>, vector<8x32xf32>, vector<8x32xf32> -> vector<8x96xf32>
    %483 = arith.truncf %482 : vector<8x96xf32> to vector<8x96xbf16>
    %cst_135 = arith.constant dense<0.000000e+00> : vector<8x1xf32>
    %484 = tpu.matmul %483, %19, %cst_135 {dimension_numbers = #tpu.dot_dimension_numbers<[1], [0], [0], [1], [0, 0, 1, 1], [], []>} : vector<8x96xbf16>, vector<96x1xbf16>, vector<8x1xf32> -> vector<8x1xf32>
    %485 = arith.addf %484, %22 : vector<8x1xf32>
    %486 = arith.negf %485 : vector<8x1xf32>
    %487 = math.exp %486 : vector<8x1xf32>
    %cst_136 = arith.constant 1.000000e+00 : f32
    %488 = vector.broadcast %cst_136 : f32 to vector<8x1xf32>
    %489 = arith.addf %488, %487 : vector<8x1xf32>
    %490 = arith.divf %488, %489 : vector<8x1xf32>
    %cst_137 = arith.constant dense<0.000000e+00> : vector<8x32xf32>
    %491 = tpu.matmul %483, %23, %cst_137 {dimension_numbers = #tpu.dot_dimension_numbers<[1], [0], [0], [1], [0, 0, 1, 1], [], []>} : vector<8x96xbf16>, vector<96x32xbf16>, vector<8x32xf32> -> vector<8x32xf32>
    %492 = arith.addf %491, %26 : vector<8x32xf32>
    %493 = vector.extract_strided_slice %492 {offsets = [0, 0], sizes = [8, 16], strides = [1, 1]} : vector<8x32xf32> to vector<8x16xf32>
    %494 = vector.extract_strided_slice %492 {offsets = [0, 16], sizes = [8, 16], strides = [1, 1]} : vector<8x32xf32> to vector<8x16xf32>
    %495 = arith.maximumf %493, %494 : vector<8x16xf32>
    %496 = arith.truncf %495 : vector<8x16xf32> to vector<8x16xbf16>
    %cst_138 = arith.constant dense<0.000000e+00> : vector<8x64xf32>
    %497 = tpu.matmul %496, %27, %cst_138 {dimension_numbers = #tpu.dot_dimension_numbers<[1], [0], [0], [1], [0, 0, 1, 1], [], []>} : vector<8x16xbf16>, vector<16x64xbf16>, vector<8x64xf32> -> vector<8x64xf32>
    %cst_139 = arith.constant dense<0xFF800000> : vector<8xf32>
    %498 = vector.multi_reduction <maximumf>, %497, %cst_139 [1] : vector<8x64xf32> to vector<8xf32>
    %499 = vector.shape_cast %498 : vector<8xf32> to vector<8x1xf32>
    %500 = vector.broadcast %499 : vector<8x1xf32> to vector<8x64xf32>
    %501 = arith.subf %497, %500 : vector<8x64xf32>
    %502 = math.exp %501 : vector<8x64xf32>
    %cst_140 = arith.constant dense<0.000000e+00> : vector<8xf32>
    %503 = vector.multi_reduction <add>, %502, %cst_140 [1] : vector<8x64xf32> to vector<8xf32>
    %504 = vector.shape_cast %503 : vector<8xf32> to vector<8x1xf32>
    %505 = tpu.reciprocal %504 {approx = true} : vector<8x1xf32> -> vector<8x1xf32>
    %506 = vector.broadcast %505 : vector<8x1xf32> to vector<8x64xf32>
    %507 = arith.mulf %502, %506 : vector<8x64xf32>
    %cst_141 = arith.constant 1.000000e+00 : f32
    %508 = vector.broadcast %cst_141 : f32 to vector<8x1xf32>
    %509 = arith.subf %508, %490 : vector<8x1xf32>
    %510 = vector.broadcast %509 : vector<8x1xf32> to vector<8x64xf32>
    %511 = arith.mulf %510, %507 : vector<8x64xf32>
    %512 = vector.broadcast %490 : vector<8x1xf32> to vector<8x8xf32>
    %513 = arith.mulf %512, %477 : vector<8x8xf32>
    %514 = tpu.concatenate %511, %513, %28 in 1 : vector<8x64xf32>, vector<8x8xf32>, vector<8x56xf32> -> vector<8x128xf32>
    %cst_142 = arith.constant 9.99999996E-13 : f32
    %515 = vector.broadcast %cst_142 : f32 to vector<8x128xf32>
    %516 = arith.addf %514, %515 : vector<8x128xf32>
    %517 = math.log %516 : vector<8x128xf32>
    %518 = vector.shape_cast %517 : vector<8x128xf32> to vector<8x1x128xf32>
    %c0_143 = arith.constant 0 : index
    %519 = arith.index_cast %c4_i32 : i32 to index
    %c0_144 = arith.constant 0 : index
    %520 = vector.load %arg18[%c0_143, %519, %c0_144] : memref<8x8x128xf32, #tpu.memory_space<vmem>>, vector<8x1x128xf32>
    tpu.vector_store %arg18[%c0_143, %519, %c0_144], %518 {strides = array<i32>} : memref<8x8x128xf32, #tpu.memory_space<vmem>>, vector<8x1x128xf32>,
    %c5_i32 = arith.constant 5 : i32
    %521 = arith.index_cast %c5_i32 : i32 to index
    %c0_145 = arith.constant 0 : index
    %c0_146 = arith.constant 0 : index
    %522 = vector.load %arg2[%521, %c0_145, %c0_146] : memref<8x8x32xf32, #tpu.memory_space<vmem>>, vector<1x8x32xf32>
    %523 = vector.shape_cast %522 : vector<1x8x32xf32> to vector<8x32xf32>
    %524 = tpu.concatenate %523, %481 in 1 : vector<8x32xf32>, vector<8x32xf32> -> vector<8x64xf32>
    %525 = arith.truncf %524 : vector<8x64xf32> to vector<8x64xbf16>
    %cst_147 = arith.constant dense<0.000000e+00> : vector<8x96xf32>
    %526 = tpu.matmul %525, %10, %cst_147 {dimension_numbers = #tpu.dot_dimension_numbers<[1], [0], [0], [1], [0, 0, 1, 1], [], []>} : vector<8x64xbf16>, vector<64x96xbf16>, vector<8x96xf32> -> vector<8x96xf32>
    %527 = arith.addf %526, %14 : vector<8x96xf32>
    %528 = arith.truncf %458 : vector<8x32xf32> to vector<8x32xbf16>
    %cst_148 = arith.constant dense<0.000000e+00> : vector<8x96xf32>
    %529 = tpu.matmul %528, %11, %cst_148 {dimension_numbers = #tpu.dot_dimension_numbers<[1], [0], [0], [1], [0, 0, 1, 1], [], []>} : vector<8x32xbf16>, vector<32x96xbf16>, vector<8x96xf32> -> vector<8x96xf32>
    %530 = arith.addf %529, %17 : vector<8x96xf32>
    %531 = vector.extract_strided_slice %527 {offsets = [0, 0], sizes = [8, 32], strides = [1, 1]} : vector<8x96xf32> to vector<8x32xf32>
    %532 = vector.extract_strided_slice %530 {offsets = [0, 0], sizes = [8, 32], strides = [1, 1]} : vector<8x96xf32> to vector<8x32xf32>
    %533 = arith.addf %531, %532 : vector<8x32xf32>
    %534 = arith.negf %533 : vector<8x32xf32>
    %535 = math.exp %534 : vector<8x32xf32>
    %cst_149 = arith.constant 1.000000e+00 : f32
    %536 = vector.broadcast %cst_149 : f32 to vector<8x32xf32>
    %537 = arith.addf %536, %535 : vector<8x32xf32>
    %538 = arith.divf %536, %537 : vector<8x32xf32>
    %539 = vector.extract_strided_slice %527 {offsets = [0, 32], sizes = [8, 32], strides = [1, 1]} : vector<8x96xf32> to vector<8x32xf32>
    %540 = vector.extract_strided_slice %530 {offsets = [0, 32], sizes = [8, 32], strides = [1, 1]} : vector<8x96xf32> to vector<8x32xf32>
    %541 = arith.addf %539, %540 : vector<8x32xf32>
    %542 = arith.negf %541 : vector<8x32xf32>
    %543 = math.exp %542 : vector<8x32xf32>
    %cst_150 = arith.constant 1.000000e+00 : f32
    %544 = vector.broadcast %cst_150 : f32 to vector<8x32xf32>
    %545 = arith.addf %544, %543 : vector<8x32xf32>
    %546 = arith.divf %544, %545 : vector<8x32xf32>
    %547 = vector.extract_strided_slice %527 {offsets = [0, 64], sizes = [8, 32], strides = [1, 1]} : vector<8x96xf32> to vector<8x32xf32>
    %548 = vector.extract_strided_slice %530 {offsets = [0, 64], sizes = [8, 32], strides = [1, 1]} : vector<8x96xf32> to vector<8x32xf32>
    %549 = arith.mulf %538, %548 : vector<8x32xf32>
    %550 = arith.addf %547, %549 : vector<8x32xf32>
    %551 = math.tanh %550 : vector<8x32xf32>
    %cst_151 = arith.constant 1.000000e+00 : f32
    %552 = vector.broadcast %cst_151 : f32 to vector<8x32xf32>
    %553 = arith.subf %552, %546 : vector<8x32xf32>
    %554 = arith.mulf %553, %551 : vector<8x32xf32>
    %555 = arith.mulf %546, %458 : vector<8x32xf32>
    %556 = arith.addf %554, %555 : vector<8x32xf32>
    %557 = arith.truncf %556 : vector<8x32xf32> to vector<8x32xbf16>
    %cst_152 = arith.constant dense<0.000000e+00> : vector<8x32xf32>
    %558 = tpu.matmul %557, %18, %cst_152 {dimension_numbers = #tpu.dot_dimension_numbers<[1], [0], [0], [1], [0, 0, 1, 1], [], []>} : vector<8x32xbf16>, vector<32x32xbf16>, vector<8x32xf32> -> vector<8x32xf32>
    %559 = vector.shape_cast %558 : vector<8x32xf32> to vector<8x1x32xf32>
    %560 = vector.broadcast %559 : vector<8x1x32xf32> to vector<8x8x32xf32>
    %561 = arith.addf %4, %560 : vector<8x8x32xf32>
    %562 = math.tanh %561 : vector<8x8x32xf32>
    %563 = arith.mulf %562, %9 : vector<8x8x32xf32>
    %cst_153 = arith.constant dense<0.000000e+00> : vector<8x8xf32>
    %564 = vector.multi_reduction <add>, %563, %cst_153 [2] : vector<8x8x32xf32> to vector<8x8xf32>
    %565 = arith.addf %564, %5 : vector<8x8xf32>
    %cst_154 = arith.constant dense<0xFF800000> : vector<8xf32>
    %566 = vector.multi_reduction <maximumf>, %565, %cst_154 [1] : vector<8x8xf32> to vector<8xf32>
    %567 = vector.shape_cast %566 : vector<8xf32> to vector<8x1xf32>
    %568 = vector.broadcast %567 : vector<8x1xf32> to vector<8x8xf32>
    %569 = arith.subf %565, %568 : vector<8x8xf32>
    %570 = math.exp %569 : vector<8x8xf32>
    %cst_155 = arith.constant dense<0.000000e+00> : vector<8xf32>
    %571 = vector.multi_reduction <add>, %570, %cst_155 [1] : vector<8x8xf32> to vector<8xf32>
    %572 = vector.shape_cast %571 : vector<8xf32> to vector<8x1xf32>
    %573 = tpu.reciprocal %572 {approx = true} : vector<8x1xf32> -> vector<8x1xf32>
    %574 = vector.broadcast %573 : vector<8x1xf32> to vector<8x8xf32>
    %575 = arith.mulf %570, %574 : vector<8x8xf32>
    %576 = vector.shape_cast %575 : vector<8x8xf32> to vector<8x1x8xf32>
    %577 = arith.truncf %576 : vector<8x1x8xf32> to vector<8x1x8xbf16>
    "tpu.trace_start"() <{level = 10 : i32, message = "bqs,bsh->bqh"}> : () -> ()
    %cst_156 = arith.constant dense<0.000000e+00> : vector<8x1x32xf32>
    %578 = tpu.matmul %577, %3, %cst_156 {dimension_numbers = #tpu.dot_dimension_numbers<[2], [1], [1], [2], [0, 0, 0, 1, 1, 2], [0], [0]>} : vector<8x1x8xbf16>, vector<8x8x32xbf16>, vector<8x1x32xf32> -> vector<8x1x32xf32>
    "tpu.trace_stop"() : () -> ()
    %579 = vector.shape_cast %578 : vector<8x1x32xf32> to vector<8x32xf32>
    %580 = tpu.concatenate %523, %579, %556 in 1 : vector<8x32xf32>, vector<8x32xf32>, vector<8x32xf32> -> vector<8x96xf32>
    %581 = arith.truncf %580 : vector<8x96xf32> to vector<8x96xbf16>
    %cst_157 = arith.constant dense<0.000000e+00> : vector<8x1xf32>
    %582 = tpu.matmul %581, %19, %cst_157 {dimension_numbers = #tpu.dot_dimension_numbers<[1], [0], [0], [1], [0, 0, 1, 1], [], []>} : vector<8x96xbf16>, vector<96x1xbf16>, vector<8x1xf32> -> vector<8x1xf32>
    %583 = arith.addf %582, %22 : vector<8x1xf32>
    %584 = arith.negf %583 : vector<8x1xf32>
    %585 = math.exp %584 : vector<8x1xf32>
    %cst_158 = arith.constant 1.000000e+00 : f32
    %586 = vector.broadcast %cst_158 : f32 to vector<8x1xf32>
    %587 = arith.addf %586, %585 : vector<8x1xf32>
    %588 = arith.divf %586, %587 : vector<8x1xf32>
    %cst_159 = arith.constant dense<0.000000e+00> : vector<8x32xf32>
    %589 = tpu.matmul %581, %23, %cst_159 {dimension_numbers = #tpu.dot_dimension_numbers<[1], [0], [0], [1], [0, 0, 1, 1], [], []>} : vector<8x96xbf16>, vector<96x32xbf16>, vector<8x32xf32> -> vector<8x32xf32>
    %590 = arith.addf %589, %26 : vector<8x32xf32>
    %591 = vector.extract_strided_slice %590 {offsets = [0, 0], sizes = [8, 16], strides = [1, 1]} : vector<8x32xf32> to vector<8x16xf32>
    %592 = vector.extract_strided_slice %590 {offsets = [0, 16], sizes = [8, 16], strides = [1, 1]} : vector<8x32xf32> to vector<8x16xf32>
    %593 = arith.maximumf %591, %592 : vector<8x16xf32>
    %594 = arith.truncf %593 : vector<8x16xf32> to vector<8x16xbf16>
    %cst_160 = arith.constant dense<0.000000e+00> : vector<8x64xf32>
    %595 = tpu.matmul %594, %27, %cst_160 {dimension_numbers = #tpu.dot_dimension_numbers<[1], [0], [0], [1], [0, 0, 1, 1], [], []>} : vector<8x16xbf16>, vector<16x64xbf16>, vector<8x64xf32> -> vector<8x64xf32>
    %cst_161 = arith.constant dense<0xFF800000> : vector<8xf32>
    %596 = vector.multi_reduction <maximumf>, %595, %cst_161 [1] : vector<8x64xf32> to vector<8xf32>
    %597 = vector.shape_cast %596 : vector<8xf32> to vector<8x1xf32>
    %598 = vector.broadcast %597 : vector<8x1xf32> to vector<8x64xf32>
    %599 = arith.subf %595, %598 : vector<8x64xf32>
    %600 = math.exp %599 : vector<8x64xf32>
    %cst_162 = arith.constant dense<0.000000e+00> : vector<8xf32>
    %601 = vector.multi_reduction <add>, %600, %cst_162 [1] : vector<8x64xf32> to vector<8xf32>
    %602 = vector.shape_cast %601 : vector<8xf32> to vector<8x1xf32>
    %603 = tpu.reciprocal %602 {approx = true} : vector<8x1xf32> -> vector<8x1xf32>
    %604 = vector.broadcast %603 : vector<8x1xf32> to vector<8x64xf32>
    %605 = arith.mulf %600, %604 : vector<8x64xf32>
    %cst_163 = arith.constant 1.000000e+00 : f32
    %606 = vector.broadcast %cst_163 : f32 to vector<8x1xf32>
    %607 = arith.subf %606, %588 : vector<8x1xf32>
    %608 = vector.broadcast %607 : vector<8x1xf32> to vector<8x64xf32>
    %609 = arith.mulf %608, %605 : vector<8x64xf32>
    %610 = vector.broadcast %588 : vector<8x1xf32> to vector<8x8xf32>
    %611 = arith.mulf %610, %575 : vector<8x8xf32>
    %612 = tpu.concatenate %609, %611, %28 in 1 : vector<8x64xf32>, vector<8x8xf32>, vector<8x56xf32> -> vector<8x128xf32>
    %cst_164 = arith.constant 9.99999996E-13 : f32
    %613 = vector.broadcast %cst_164 : f32 to vector<8x128xf32>
    %614 = arith.addf %612, %613 : vector<8x128xf32>
    %615 = math.log %614 : vector<8x128xf32>
    %616 = vector.shape_cast %615 : vector<8x128xf32> to vector<8x1x128xf32>
    %c0_165 = arith.constant 0 : index
    %617 = arith.index_cast %c5_i32 : i32 to index
    %c0_166 = arith.constant 0 : index
    %618 = vector.load %arg18[%c0_165, %617, %c0_166] : memref<8x8x128xf32, #tpu.memory_space<vmem>>, vector<8x1x128xf32>
    tpu.vector_store %arg18[%c0_165, %617, %c0_166], %616 {strides = array<i32>} : memref<8x8x128xf32, #tpu.memory_space<vmem>>, vector<8x1x128xf32>,
    %c6_i32 = arith.constant 6 : i32
    %619 = arith.index_cast %c6_i32 : i32 to index
    %c0_167 = arith.constant 0 : index
    %c0_168 = arith.constant 0 : index
    %620 = vector.load %arg2[%619, %c0_167, %c0_168] : memref<8x8x32xf32, #tpu.memory_space<vmem>>, vector<1x8x32xf32>
    %621 = vector.shape_cast %620 : vector<1x8x32xf32> to vector<8x32xf32>
    %622 = tpu.concatenate %621, %579 in 1 : vector<8x32xf32>, vector<8x32xf32> -> vector<8x64xf32>
    %623 = arith.truncf %622 : vector<8x64xf32> to vector<8x64xbf16>
    %cst_169 = arith.constant dense<0.000000e+00> : vector<8x96xf32>
    %624 = tpu.matmul %623, %10, %cst_169 {dimension_numbers = #tpu.dot_dimension_numbers<[1], [0], [0], [1], [0, 0, 1, 1], [], []>} : vector<8x64xbf16>, vector<64x96xbf16>, vector<8x96xf32> -> vector<8x96xf32>
    %625 = arith.addf %624, %14 : vector<8x96xf32>
    %626 = arith.truncf %556 : vector<8x32xf32> to vector<8x32xbf16>
    %cst_170 = arith.constant dense<0.000000e+00> : vector<8x96xf32>
    %627 = tpu.matmul %626, %11, %cst_170 {dimension_numbers = #tpu.dot_dimension_numbers<[1], [0], [0], [1], [0, 0, 1, 1], [], []>} : vector<8x32xbf16>, vector<32x96xbf16>, vector<8x96xf32> -> vector<8x96xf32>
    %628 = arith.addf %627, %17 : vector<8x96xf32>
    %629 = vector.extract_strided_slice %625 {offsets = [0, 0], sizes = [8, 32], strides = [1, 1]} : vector<8x96xf32> to vector<8x32xf32>
    %630 = vector.extract_strided_slice %628 {offsets = [0, 0], sizes = [8, 32], strides = [1, 1]} : vector<8x96xf32> to vector<8x32xf32>
    %631 = arith.addf %629, %630 : vector<8x32xf32>
    %632 = arith.negf %631 : vector<8x32xf32>
    %633 = math.exp %632 : vector<8x32xf32>
    %cst_171 = arith.constant 1.000000e+00 : f32
    %634 = vector.broadcast %cst_171 : f32 to vector<8x32xf32>
    %635 = arith.addf %634, %633 : vector<8x32xf32>
    %636 = arith.divf %634, %635 : vector<8x32xf32>
    %637 = vector.extract_strided_slice %625 {offsets = [0, 32], sizes = [8, 32], strides = [1, 1]} : vector<8x96xf32> to vector<8x32xf32>
    %638 = vector.extract_strided_slice %628 {offsets = [0, 32], sizes = [8, 32], strides = [1, 1]} : vector<8x96xf32> to vector<8x32xf32>
    %639 = arith.addf %637, %638 : vector<8x32xf32>
    %640 = arith.negf %639 : vector<8x32xf32>
    %641 = math.exp %640 : vector<8x32xf32>
    %cst_172 = arith.constant 1.000000e+00 : f32
    %642 = vector.broadcast %cst_172 : f32 to vector<8x32xf32>
    %643 = arith.addf %642, %641 : vector<8x32xf32>
    %644 = arith.divf %642, %643 : vector<8x32xf32>
    %645 = vector.extract_strided_slice %625 {offsets = [0, 64], sizes = [8, 32], strides = [1, 1]} : vector<8x96xf32> to vector<8x32xf32>
    %646 = vector.extract_strided_slice %628 {offsets = [0, 64], sizes = [8, 32], strides = [1, 1]} : vector<8x96xf32> to vector<8x32xf32>
    %647 = arith.mulf %636, %646 : vector<8x32xf32>
    %648 = arith.addf %645, %647 : vector<8x32xf32>
    %649 = math.tanh %648 : vector<8x32xf32>
    %cst_173 = arith.constant 1.000000e+00 : f32
    %650 = vector.broadcast %cst_173 : f32 to vector<8x32xf32>
    %651 = arith.subf %650, %644 : vector<8x32xf32>
    %652 = arith.mulf %651, %649 : vector<8x32xf32>
    %653 = arith.mulf %644, %556 : vector<8x32xf32>
    %654 = arith.addf %652, %653 : vector<8x32xf32>
    %655 = arith.truncf %654 : vector<8x32xf32> to vector<8x32xbf16>
    %cst_174 = arith.constant dense<0.000000e+00> : vector<8x32xf32>
    %656 = tpu.matmul %655, %18, %cst_174 {dimension_numbers = #tpu.dot_dimension_numbers<[1], [0], [0], [1], [0, 0, 1, 1], [], []>} : vector<8x32xbf16>, vector<32x32xbf16>, vector<8x32xf32> -> vector<8x32xf32>
    %657 = vector.shape_cast %656 : vector<8x32xf32> to vector<8x1x32xf32>
    %658 = vector.broadcast %657 : vector<8x1x32xf32> to vector<8x8x32xf32>
    %659 = arith.addf %4, %658 : vector<8x8x32xf32>
    %660 = math.tanh %659 : vector<8x8x32xf32>
    %661 = arith.mulf %660, %9 : vector<8x8x32xf32>
    %cst_175 = arith.constant dense<0.000000e+00> : vector<8x8xf32>
    %662 = vector.multi_reduction <add>, %661, %cst_175 [2] : vector<8x8x32xf32> to vector<8x8xf32>
    %663 = arith.addf %662, %5 : vector<8x8xf32>
    %cst_176 = arith.constant dense<0xFF800000> : vector<8xf32>
    %664 = vector.multi_reduction <maximumf>, %663, %cst_176 [1] : vector<8x8xf32> to vector<8xf32>
    %665 = vector.shape_cast %664 : vector<8xf32> to vector<8x1xf32>
    %666 = vector.broadcast %665 : vector<8x1xf32> to vector<8x8xf32>
    %667 = arith.subf %663, %666 : vector<8x8xf32>
    %668 = math.exp %667 : vector<8x8xf32>
    %cst_177 = arith.constant dense<0.000000e+00> : vector<8xf32>
    %669 = vector.multi_reduction <add>, %668, %cst_177 [1] : vector<8x8xf32> to vector<8xf32>
    %670 = vector.shape_cast %669 : vector<8xf32> to vector<8x1xf32>
    %671 = tpu.reciprocal %670 {approx = true} : vector<8x1xf32> -> vector<8x1xf32>
    %672 = vector.broadcast %671 : vector<8x1xf32> to vector<8x8xf32>
    %673 = arith.mulf %668, %672 : vector<8x8xf32>
    %674 = vector.shape_cast %673 : vector<8x8xf32> to vector<8x1x8xf32>
    %675 = arith.truncf %674 : vector<8x1x8xf32> to vector<8x1x8xbf16>
    "tpu.trace_start"() <{level = 10 : i32, message = "bqs,bsh->bqh"}> : () -> ()
    %cst_178 = arith.constant dense<0.000000e+00> : vector<8x1x32xf32>
    %676 = tpu.matmul %675, %3, %cst_178 {dimension_numbers = #tpu.dot_dimension_numbers<[2], [1], [1], [2], [0, 0, 0, 1, 1, 2], [0], [0]>} : vector<8x1x8xbf16>, vector<8x8x32xbf16>, vector<8x1x32xf32> -> vector<8x1x32xf32>
    "tpu.trace_stop"() : () -> ()
    %677 = vector.shape_cast %676 : vector<8x1x32xf32> to vector<8x32xf32>
    %678 = tpu.concatenate %621, %677, %654 in 1 : vector<8x32xf32>, vector<8x32xf32>, vector<8x32xf32> -> vector<8x96xf32>
    %679 = arith.truncf %678 : vector<8x96xf32> to vector<8x96xbf16>
    %cst_179 = arith.constant dense<0.000000e+00> : vector<8x1xf32>
    %680 = tpu.matmul %679, %19, %cst_179 {dimension_numbers = #tpu.dot_dimension_numbers<[1], [0], [0], [1], [0, 0, 1, 1], [], []>} : vector<8x96xbf16>, vector<96x1xbf16>, vector<8x1xf32> -> vector<8x1xf32>
    %681 = arith.addf %680, %22 : vector<8x1xf32>
    %682 = arith.negf %681 : vector<8x1xf32>
    %683 = math.exp %682 : vector<8x1xf32>
    %cst_180 = arith.constant 1.000000e+00 : f32
    %684 = vector.broadcast %cst_180 : f32 to vector<8x1xf32>
    %685 = arith.addf %684, %683 : vector<8x1xf32>
    %686 = arith.divf %684, %685 : vector<8x1xf32>
    %cst_181 = arith.constant dense<0.000000e+00> : vector<8x32xf32>
    %687 = tpu.matmul %679, %23, %cst_181 {dimension_numbers = #tpu.dot_dimension_numbers<[1], [0], [0], [1], [0, 0, 1, 1], [], []>} : vector<8x96xbf16>, vector<96x32xbf16>, vector<8x32xf32> -> vector<8x32xf32>
    %688 = arith.addf %687, %26 : vector<8x32xf32>
    %689 = vector.extract_strided_slice %688 {offsets = [0, 0], sizes = [8, 16], strides = [1, 1]} : vector<8x32xf32> to vector<8x16xf32>
    %690 = vector.extract_strided_slice %688 {offsets = [0, 16], sizes = [8, 16], strides = [1, 1]} : vector<8x32xf32> to vector<8x16xf32>
    %691 = arith.maximumf %689, %690 : vector<8x16xf32>
    %692 = arith.truncf %691 : vector<8x16xf32> to vector<8x16xbf16>
    %cst_182 = arith.constant dense<0.000000e+00> : vector<8x64xf32>
    %693 = tpu.matmul %692, %27, %cst_182 {dimension_numbers = #tpu.dot_dimension_numbers<[1], [0], [0], [1], [0, 0, 1, 1], [], []>} : vector<8x16xbf16>, vector<16x64xbf16>, vector<8x64xf32> -> vector<8x64xf32>
    %cst_183 = arith.constant dense<0xFF800000> : vector<8xf32>
    %694 = vector.multi_reduction <maximumf>, %693, %cst_183 [1] : vector<8x64xf32> to vector<8xf32>
    %695 = vector.shape_cast %694 : vector<8xf32> to vector<8x1xf32>
    %696 = vector.broadcast %695 : vector<8x1xf32> to vector<8x64xf32>
    %697 = arith.subf %693, %696 : vector<8x64xf32>
    %698 = math.exp %697 : vector<8x64xf32>
    %cst_184 = arith.constant dense<0.000000e+00> : vector<8xf32>
    %699 = vector.multi_reduction <add>, %698, %cst_184 [1] : vector<8x64xf32> to vector<8xf32>
    %700 = vector.shape_cast %699 : vector<8xf32> to vector<8x1xf32>
    %701 = tpu.reciprocal %700 {approx = true} : vector<8x1xf32> -> vector<8x1xf32>
    %702 = vector.broadcast %701 : vector<8x1xf32> to vector<8x64xf32>
    %703 = arith.mulf %698, %702 : vector<8x64xf32>
    %cst_185 = arith.constant 1.000000e+00 : f32
    %704 = vector.broadcast %cst_185 : f32 to vector<8x1xf32>
    %705 = arith.subf %704, %686 : vector<8x1xf32>
    %706 = vector.broadcast %705 : vector<8x1xf32> to vector<8x64xf32>
    %707 = arith.mulf %706, %703 : vector<8x64xf32>
    %708 = vector.broadcast %686 : vector<8x1xf32> to vector<8x8xf32>
    %709 = arith.mulf %708, %673 : vector<8x8xf32>
    %710 = tpu.concatenate %707, %709, %28 in 1 : vector<8x64xf32>, vector<8x8xf32>, vector<8x56xf32> -> vector<8x128xf32>
    %cst_186 = arith.constant 9.99999996E-13 : f32
    %711 = vector.broadcast %cst_186 : f32 to vector<8x128xf32>
    %712 = arith.addf %710, %711 : vector<8x128xf32>
    %713 = math.log %712 : vector<8x128xf32>
    %714 = vector.shape_cast %713 : vector<8x128xf32> to vector<8x1x128xf32>
    %c0_187 = arith.constant 0 : index
    %715 = arith.index_cast %c6_i32 : i32 to index
    %c0_188 = arith.constant 0 : index
    %716 = vector.load %arg18[%c0_187, %715, %c0_188] : memref<8x8x128xf32, #tpu.memory_space<vmem>>, vector<8x1x128xf32>
    tpu.vector_store %arg18[%c0_187, %715, %c0_188], %714 {strides = array<i32>} : memref<8x8x128xf32, #tpu.memory_space<vmem>>, vector<8x1x128xf32>,
    %c7_i32 = arith.constant 7 : i32
    %717 = arith.index_cast %c7_i32 : i32 to index
    %c0_189 = arith.constant 0 : index
    %c0_190 = arith.constant 0 : index
    %718 = vector.load %arg2[%717, %c0_189, %c0_190] : memref<8x8x32xf32, #tpu.memory_space<vmem>>, vector<1x8x32xf32>
    %719 = vector.shape_cast %718 : vector<1x8x32xf32> to vector<8x32xf32>
    %720 = tpu.concatenate %719, %677 in 1 : vector<8x32xf32>, vector<8x32xf32> -> vector<8x64xf32>
    %721 = arith.truncf %720 : vector<8x64xf32> to vector<8x64xbf16>
    %cst_191 = arith.constant dense<0.000000e+00> : vector<8x96xf32>
    %722 = tpu.matmul %721, %10, %cst_191 {dimension_numbers = #tpu.dot_dimension_numbers<[1], [0], [0], [1], [0, 0, 1, 1], [], []>} : vector<8x64xbf16>, vector<64x96xbf16>, vector<8x96xf32> -> vector<8x96xf32>
    %723 = arith.addf %722, %14 : vector<8x96xf32>
    %724 = arith.truncf %654 : vector<8x32xf32> to vector<8x32xbf16>
    %cst_192 = arith.constant dense<0.000000e+00> : vector<8x96xf32>
    %725 = tpu.matmul %724, %11, %cst_192 {dimension_numbers = #tpu.dot_dimension_numbers<[1], [0], [0], [1], [0, 0, 1, 1], [], []>} : vector<8x32xbf16>, vector<32x96xbf16>, vector<8x96xf32> -> vector<8x96xf32>
    %726 = arith.addf %725, %17 : vector<8x96xf32>
    %727 = vector.extract_strided_slice %723 {offsets = [0, 0], sizes = [8, 32], strides = [1, 1]} : vector<8x96xf32> to vector<8x32xf32>
    %728 = vector.extract_strided_slice %726 {offsets = [0, 0], sizes = [8, 32], strides = [1, 1]} : vector<8x96xf32> to vector<8x32xf32>
    %729 = arith.addf %727, %728 : vector<8x32xf32>
    %730 = arith.negf %729 : vector<8x32xf32>
    %731 = math.exp %730 : vector<8x32xf32>
    %cst_193 = arith.constant 1.000000e+00 : f32
    %732 = vector.broadcast %cst_193 : f32 to vector<8x32xf32>
    %733 = arith.addf %732, %731 : vector<8x32xf32>
    %734 = arith.divf %732, %733 : vector<8x32xf32>
    %735 = vector.extract_strided_slice %723 {offsets = [0, 32], sizes = [8, 32], strides = [1, 1]} : vector<8x96xf32> to vector<8x32xf32>
    %736 = vector.extract_strided_slice %726 {offsets = [0, 32], sizes = [8, 32], strides = [1, 1]} : vector<8x96xf32> to vector<8x32xf32>
    %737 = arith.addf %735, %736 : vector<8x32xf32>
    %738 = arith.negf %737 : vector<8x32xf32>
    %739 = math.exp %738 : vector<8x32xf32>
    %cst_194 = arith.constant 1.000000e+00 : f32
    %740 = vector.broadcast %cst_194 : f32 to vector<8x32xf32>
    %741 = arith.addf %740, %739 : vector<8x32xf32>
    %742 = arith.divf %740, %741 : vector<8x32xf32>
    %743 = vector.extract_strided_slice %723 {offsets = [0, 64], sizes = [8, 32], strides = [1, 1]} : vector<8x96xf32> to vector<8x32xf32>
    %744 = vector.extract_strided_slice %726 {offsets = [0, 64], sizes = [8, 32], strides = [1, 1]} : vector<8x96xf32> to vector<8x32xf32>
    %745 = arith.mulf %734, %744 : vector<8x32xf32>
    %746 = arith.addf %743, %745 : vector<8x32xf32>
    %747 = math.tanh %746 : vector<8x32xf32>
    %cst_195 = arith.constant 1.000000e+00 : f32
    %748 = vector.broadcast %cst_195 : f32 to vector<8x32xf32>
    %749 = arith.subf %748, %742 : vector<8x32xf32>
    %750 = arith.mulf %749, %747 : vector<8x32xf32>
    %751 = arith.mulf %742, %654 : vector<8x32xf32>
    %752 = arith.addf %750, %751 : vector<8x32xf32>
    %753 = arith.truncf %752 : vector<8x32xf32> to vector<8x32xbf16>
    %cst_196 = arith.constant dense<0.000000e+00> : vector<8x32xf32>
    %754 = tpu.matmul %753, %18, %cst_196 {dimension_numbers = #tpu.dot_dimension_numbers<[1], [0], [0], [1], [0, 0, 1, 1], [], []>} : vector<8x32xbf16>, vector<32x32xbf16>, vector<8x32xf32> -> vector<8x32xf32>
    %755 = vector.shape_cast %754 : vector<8x32xf32> to vector<8x1x32xf32>
    %756 = vector.broadcast %755 : vector<8x1x32xf32> to vector<8x8x32xf32>
    %757 = arith.addf %4, %756 : vector<8x8x32xf32>
    %758 = math.tanh %757 : vector<8x8x32xf32>
    %759 = arith.mulf %758, %9 : vector<8x8x32xf32>
    %cst_197 = arith.constant dense<0.000000e+00> : vector<8x8xf32>
    %760 = vector.multi_reduction <add>, %759, %cst_197 [2] : vector<8x8x32xf32> to vector<8x8xf32>
    %761 = arith.addf %760, %5 : vector<8x8xf32>
    %cst_198 = arith.constant dense<0xFF800000> : vector<8xf32>
    %762 = vector.multi_reduction <maximumf>, %761, %cst_198 [1] : vector<8x8xf32> to vector<8xf32>
    %763 = vector.shape_cast %762 : vector<8xf32> to vector<8x1xf32>
    %764 = vector.broadcast %763 : vector<8x1xf32> to vector<8x8xf32>
    %765 = arith.subf %761, %764 : vector<8x8xf32>
    %766 = math.exp %765 : vector<8x8xf32>
    %cst_199 = arith.constant dense<0.000000e+00> : vector<8xf32>
    %767 = vector.multi_reduction <add>, %766, %cst_199 [1] : vector<8x8xf32> to vector<8xf32>
    %768 = vector.shape_cast %767 : vector<8xf32> to vector<8x1xf32>
    %769 = tpu.reciprocal %768 {approx = true} : vector<8x1xf32> -> vector<8x1xf32>
    %770 = vector.broadcast %769 : vector<8x1xf32> to vector<8x8xf32>
    %771 = arith.mulf %766, %770 : vector<8x8xf32>
    %772 = vector.shape_cast %771 : vector<8x8xf32> to vector<8x1x8xf32>
    %773 = arith.truncf %772 : vector<8x1x8xf32> to vector<8x1x8xbf16>
    "tpu.trace_start"() <{level = 10 : i32, message = "bqs,bsh->bqh"}> : () -> ()
    %cst_200 = arith.constant dense<0.000000e+00> : vector<8x1x32xf32>
    %774 = tpu.matmul %773, %3, %cst_200 {dimension_numbers = #tpu.dot_dimension_numbers<[2], [1], [1], [2], [0, 0, 0, 1, 1, 2], [0], [0]>} : vector<8x1x8xbf16>, vector<8x8x32xbf16>, vector<8x1x32xf32> -> vector<8x1x32xf32>
    "tpu.trace_stop"() : () -> ()
    %775 = vector.shape_cast %774 : vector<8x1x32xf32> to vector<8x32xf32>
    %776 = tpu.concatenate %719, %775, %752 in 1 : vector<8x32xf32>, vector<8x32xf32>, vector<8x32xf32> -> vector<8x96xf32>
    %777 = arith.truncf %776 : vector<8x96xf32> to vector<8x96xbf16>
    %cst_201 = arith.constant dense<0.000000e+00> : vector<8x1xf32>
    %778 = tpu.matmul %777, %19, %cst_201 {dimension_numbers = #tpu.dot_dimension_numbers<[1], [0], [0], [1], [0, 0, 1, 1], [], []>} : vector<8x96xbf16>, vector<96x1xbf16>, vector<8x1xf32> -> vector<8x1xf32>
    %779 = arith.addf %778, %22 : vector<8x1xf32>
    %780 = arith.negf %779 : vector<8x1xf32>
    %781 = math.exp %780 : vector<8x1xf32>
    %cst_202 = arith.constant 1.000000e+00 : f32
    %782 = vector.broadcast %cst_202 : f32 to vector<8x1xf32>
    %783 = arith.addf %782, %781 : vector<8x1xf32>
    %784 = arith.divf %782, %783 : vector<8x1xf32>
    %cst_203 = arith.constant dense<0.000000e+00> : vector<8x32xf32>
    %785 = tpu.matmul %777, %23, %cst_203 {dimension_numbers = #tpu.dot_dimension_numbers<[1], [0], [0], [1], [0, 0, 1, 1], [], []>} : vector<8x96xbf16>, vector<96x32xbf16>, vector<8x32xf32> -> vector<8x32xf32>
    %786 = arith.addf %785, %26 : vector<8x32xf32>
    %787 = vector.extract_strided_slice %786 {offsets = [0, 0], sizes = [8, 16], strides = [1, 1]} : vector<8x32xf32> to vector<8x16xf32>
    %788 = vector.extract_strided_slice %786 {offsets = [0, 16], sizes = [8, 16], strides = [1, 1]} : vector<8x32xf32> to vector<8x16xf32>
    %789 = arith.maximumf %787, %788 : vector<8x16xf32>
    %790 = arith.truncf %789 : vector<8x16xf32> to vector<8x16xbf16>
    %cst_204 = arith.constant dense<0.000000e+00> : vector<8x64xf32>
    %791 = tpu.matmul %790, %27, %cst_204 {dimension_numbers = #tpu.dot_dimension_numbers<[1], [0], [0], [1], [0, 0, 1, 1], [], []>} : vector<8x16xbf16>, vector<16x64xbf16>, vector<8x64xf32> -> vector<8x64xf32>
    %cst_205 = arith.constant dense<0xFF800000> : vector<8xf32>
    %792 = vector.multi_reduction <maximumf>, %791, %cst_205 [1] : vector<8x64xf32> to vector<8xf32>
    %793 = vector.shape_cast %792 : vector<8xf32> to vector<8x1xf32>
    %794 = vector.broadcast %793 : vector<8x1xf32> to vector<8x64xf32>
    %795 = arith.subf %791, %794 : vector<8x64xf32>
    %796 = math.exp %795 : vector<8x64xf32>
    %cst_206 = arith.constant dense<0.000000e+00> : vector<8xf32>
    %797 = vector.multi_reduction <add>, %796, %cst_206 [1] : vector<8x64xf32> to vector<8xf32>
    %798 = vector.shape_cast %797 : vector<8xf32> to vector<8x1xf32>
    %799 = tpu.reciprocal %798 {approx = true} : vector<8x1xf32> -> vector<8x1xf32>
    %800 = vector.broadcast %799 : vector<8x1xf32> to vector<8x64xf32>
    %801 = arith.mulf %796, %800 : vector<8x64xf32>
    %cst_207 = arith.constant 1.000000e+00 : f32
    %802 = vector.broadcast %cst_207 : f32 to vector<8x1xf32>
    %803 = arith.subf %802, %784 : vector<8x1xf32>
    %804 = vector.broadcast %803 : vector<8x1xf32> to vector<8x64xf32>
    %805 = arith.mulf %804, %801 : vector<8x64xf32>
    %806 = vector.broadcast %784 : vector<8x1xf32> to vector<8x8xf32>
    %807 = arith.mulf %806, %771 : vector<8x8xf32>
    %808 = tpu.concatenate %805, %807, %28 in 1 : vector<8x64xf32>, vector<8x8xf32>, vector<8x56xf32> -> vector<8x128xf32>
    %cst_208 = arith.constant 9.99999996E-13 : f32
    %809 = vector.broadcast %cst_208 : f32 to vector<8x128xf32>
    %810 = arith.addf %808, %809 : vector<8x128xf32>
    %811 = math.log %810 : vector<8x128xf32>
    %812 = vector.shape_cast %811 : vector<8x128xf32> to vector<8x1x128xf32>
    %c0_209 = arith.constant 0 : index
    %813 = arith.index_cast %c7_i32 : i32 to index
    %c0_210 = arith.constant 0 : index
    %814 = vector.load %arg18[%c0_209, %813, %c0_210] : memref<8x8x128xf32, #tpu.memory_space<vmem>>, vector<8x1x128xf32>
    tpu.vector_store %arg18[%c0_209, %813, %c0_210], %812 {strides = array<i32>} : memref<8x8x128xf32, #tpu.memory_space<vmem>>, vector<8x1x128xf32>,
    %c8_i32 = arith.constant 8 : i32
    %c0_211 = arith.constant 0 : index
    %c0_212 = arith.constant 0 : index
    %815 = vector.load %arg19[%c0_211, %c0_212] : memref<8x32xf32, #tpu.memory_space<vmem>>, vector<8x32xf32>
    tpu.vector_store %arg19[%c0_211, %c0_212], %752 {strides = array<i32>} : memref<8x32xf32, #tpu.memory_space<vmem>>, vector<8x32xf32>,
    %c0_213 = arith.constant 0 : index
    %c0_214 = arith.constant 0 : index
    %816 = vector.load %arg20[%c0_213, %c0_214] : memref<8x32xf32, #tpu.memory_space<vmem>>, vector<8x32xf32>
    tpu.vector_store %arg20[%c0_213, %c0_214], %775 {strides = array<i32>} : memref<8x32xf32, #tpu.memory_space<vmem>>, vector<8x32xf32>,
    return
  }
  func.func @transform_0(%arg0: i32, %arg1: i32) -> (i32, i32, i32) {
    %c0_i32 = arith.constant 0 : i32
    %c0_i32_0 = arith.constant 0 : i32
    return %arg1, %arg0, %c0_i32 : i32, i32, i32
  }
  func.func @transform_1(%arg0: i32, %arg1: i32) -> (i32, i32, i32) {
    %c0_i32 = arith.constant 0 : i32
    %c0_i32_0 = arith.constant 0 : i32
    %c0_i32_1 = arith.constant 0 : i32
    return %arg0, %c0_i32, %c0_i32_0 : i32, i32, i32
  }
  func.func @transform_2(%arg0: i32, %arg1: i32) -> (i32, i32) {
    %c0_i32 = arith.constant 0 : i32
    %c0_i32_0 = arith.constant 0 : i32
    return %arg0, %c0_i32 : i32, i32
  }
  func.func @transform_3(%arg0: i32, %arg1: i32) -> (i32, i32, i32) {
    %c0_i32 = arith.constant 0 : i32
    %c0_i32_0 = arith.constant 0 : i32
    %c0_i32_1 = arith.constant 0 : i32
    return %arg0, %c0_i32, %c0_i32_0 : i32, i32, i32
  }
  func.func @transform_4(%arg0: i32, %arg1: i32) -> (i32, i32) {
    %c0_i32 = arith.constant 0 : i32
    %c0_i32_0 = arith.constant 0 : i32
    return %arg0, %c0_i32 : i32, i32
  }
  func.func @transform_5(%arg0: i32, %arg1: i32) -> (i32, i32) {
    %c0_i32 = arith.constant 0 : i32
    %c0_i32_0 = arith.constant 0 : i32
    %c0_i32_1 = arith.constant 0 : i32
    return %c0_i32, %c0_i32_0 : i32, i32
  }
  func.func @transform_6(%arg0: i32, %arg1: i32) -> (i32, i32) {
    %c0_i32 = arith.constant 0 : i32
    %c0_i32_0 = arith.constant 0 : i32
    %c0_i32_1 = arith.constant 0 : i32
    return %c0_i32, %c0_i32_0 : i32, i32
  }
  func.func @transform_7(%arg0: i32, %arg1: i32) -> (i32, i32) {
    %c0_i32 = arith.constant 0 : i32
    %c0_i32_0 = arith.constant 0 : i32
    %c0_i32_1 = arith.constant 0 : i32
    return %c0_i32, %c0_i32_0 : i32, i32
  }
  func.func @transform_8(%arg0: i32, %arg1: i32) -> (i32, i32) {
    %c0_i32 = arith.constant 0 : i32
    %c0_i32_0 = arith.constant 0 : i32
    %c0_i32_1 = arith.constant 0 : i32
    return %c0_i32, %c0_i32_0 : i32, i32
  }
  func.func @transform_9(%arg0: i32, %arg1: i32) -> (i32, i32) {
    %c0_i32 = arith.constant 0 : i32
    %c0_i32_0 = arith.constant 0 : i32
    %c0_i32_1 = arith.constant 0 : i32
    return %c0_i32, %c0_i32_0 : i32, i32
  }
  func.func @transform_10(%arg0: i32, %arg1: i32) -> (i32, i32) {
    %c0_i32 = arith.constant 0 : i32
    %c0_i32_0 = arith.constant 0 : i32
    %c0_i32_1 = arith.constant 0 : i32
    return %c0_i32, %c0_i32_0 : i32, i32
  }
  func.func @transform_11(%arg0: i32, %arg1: i32) -> (i32, i32) {
    %c0_i32 = arith.constant 0 : i32
    %c0_i32_0 = arith.constant 0 : i32
    %c0_i32_1 = arith.constant 0 : i32
    return %c0_i32, %c0_i32_0 : i32, i32
  }
  func.func @transform_12(%arg0: i32, %arg1: i32) -> (i32, i32) {
    %c0_i32 = arith.constant 0 : i32
    %c0_i32_0 = arith.constant 0 : i32
    %c0_i32_1 = arith.constant 0 : i32
    return %c0_i32, %c0_i32_0 : i32, i32
  }
  func.func @transform_13(%arg0: i32, %arg1: i32) -> (i32, i32) {
    %c0_i32 = arith.constant 0 : i32
    %c0_i32_0 = arith.constant 0 : i32
    %c0_i32_1 = arith.constant 0 : i32
    return %c0_i32, %c0_i32_0 : i32, i32
  }
  func.func @transform_14(%arg0: i32, %arg1: i32) -> (i32, i32) {
    %c0_i32 = arith.constant 0 : i32
    %c0_i32_0 = arith.constant 0 : i32
    %c0_i32_1 = arith.constant 0 : i32
    return %c0_i32, %c0_i32_0 : i32, i32
  }
  func.func @transform_15(%arg0: i32, %arg1: i32) -> (i32, i32) {
    %c0_i32 = arith.constant 0 : i32
    %c0_i32_0 = arith.constant 0 : i32
    %c0_i32_1 = arith.constant 0 : i32
    return %c0_i32, %c0_i32_0 : i32, i32
  }
  func.func @transform_16(%arg0: i32, %arg1: i32) -> (i32, i32, i32) {
    %c0_i32 = arith.constant 0 : i32
    %c0_i32_0 = arith.constant 0 : i32
    return %arg0, %arg1, %c0_i32 : i32, i32, i32
  }
}

</mosaic_0001>

<llo_original>
// kernel: tpu_custom_call.1
$region0: #{tpu_custom_call.1}
  #allocation0 [shape = 'u32[]', space=smem, size = 0x4, offset = 0x4, fixed_abs, tag = 'smem constant byte address 0x4 - core index']
  #allocation1 [shape = 'u32[144,128]{1,0:T(1,128)}', space=vmem, size = 0x12000, scoped, tag = 'internal scratch']
  #allocation2 [shape = 'f32[8,32]{1,0:T(8,128)}', space=vmem, size = 0x1000, scoped, tag = 'scratch operand']
  #allocation3 [shape = 'f32[8,32]{1,0:T(8,128)}', space=vmem, size = 0x1000, scoped, tag = 'scratch operand']
  #allocation4 [shape = 'f32[1,1]{1,0:T(1,128)S(1)}', space=vmem, size = 0x200, scoped, tag = 'scoped memory for tpu_custom_call.1']
  %s0 = inlined_call_operand.hbm [shape: f32[8,8,32], index: 0, kind: input, shape index: {}]
  %s1 = inlined_call_operand.hbm [shape: bf16[8,8,32], index: 1, kind: input, shape index: {}]
  %s2 = inlined_call_operand.hbm [shape: f32[8,8], index: 2, kind: input, shape index: {}]
  %s3 = inlined_call_operand.hbm [shape: f32[8,8,32], index: 3, kind: input, shape index: {}]
  %s4 = inlined_call_operand.hbm [shape: f32[8,32], index: 4, kind: input, shape index: {}]
  %s5 = inlined_call_operand.hbm [shape: bf16[64,96], index: 5, kind: input, shape index: {}]
  %s6 = inlined_call_operand.hbm [shape: bf16[32,96], index: 6, kind: input, shape index: {}]
  %s7 = inlined_call_operand.hbm [shape: f32[1,96], index: 7, kind: input, shape index: {}]
  %s8 = inlined_call_operand.hbm [shape: f32[1,96], index: 8, kind: input, shape index: {}]
  %s9 = inlined_call_operand.hbm [shape: bf16[32,32], index: 9, kind: input, shape index: {}]
  %s10 = inlined_call_operand.hbm [shape: f32[1,32], index: 10, kind: input, shape index: {}]
  %s11 = inlined_call_operand.hbm [shape: bf16[96,1], index: 11, kind: input, shape index: {}]
  %s12 = inlined_call_operand.<no memory space> [shape: f32[1,1], index: 12, kind: input, shape index: {}]
  %s13 = inlined_call_operand.hbm [shape: bf16[96,32], index: 13, kind: input, shape index: {}]
  %s14 = inlined_call_operand.hbm [shape: f32[1,32], index: 14, kind: input, shape index: {}]
  %s15 = inlined_call_operand.hbm [shape: bf16[16,64], index: 15, kind: input, shape index: {}]
  %s16 = inlined_call_operand.hbm [shape: f32[8,8,128], index: 16, kind: output, shape index: {}]
  %s17 = sld [smem:[#allocation0]]
  $region138: #{tpu_custom_call.1} parent=0
    _
  %s19 = ssub.s32 1, %s17
  %s20 = scalar_select 0, %s19, %s17
  %v21 = vstv %s12
  %22 = vst [vmem:[#allocation4] sm:$0x1] %v21
  $region1: #{tpu_custom_call.1} parent=0
    #allocation5 [shape = 'u8[32768]{0}', space=vmem, size = 0x8000, scoped, tag = 'input window, operand 0, single buffered']
    #allocation6 [shape = 's32[1]{0}', space=sflag, size = 0x4, scoped, tag = 'scoped memory for tpu_custom_call.1']
    #allocation7 [shape = 's32[1]{0}', space=sflag, size = 0x4, scoped, tag = 'scoped memory for tpu_custom_call.1']
    #allocation8 [shape = 'u8[16384]{0}', space=vmem, size = 0x4000, scoped, tag = 'input window, operand 1, single buffered']
    #allocation9 [shape = 's32[1]{0}', space=sflag, size = 0x4, scoped, tag = 'scoped memory for tpu_custom_call.1']
    #allocation10 [shape = 'u8[4096]{0}', space=vmem, size = 0x1000, scoped, tag = 'input window, operand 2, single buffered']
    #allocation11 [shape = 'u8[32768]{0}', space=vmem, size = 0x8000, scoped, tag = 'input window, operand 3, single buffered']
    #allocation12 [shape = 's32[1]{0}', space=sflag, size = 0x4, scoped, tag = 'scoped memory for tpu_custom_call.1']
    #allocation13 [shape = 'u8[4096]{0}', space=vmem, size = 0x1000, scoped, tag = 'input window, operand 4, single buffered']
    #allocation14 [shape = 'u8[16384]{0}', space=vmem, size = 0x4000, scoped, tag = 'input window, operand 5, single buffered']
    #allocation15 [shape = 's32[1]{0}', space=sflag, size = 0x4, scoped, tag = 'scoped memory for tpu_custom_call.1']
    #allocation16 [shape = 'u8[8192]{0}', space=vmem, size = 0x2000, scoped, tag = 'input window, operand 6, single buffered']
    #allocation17 [shape = 'u8[512]{0}', space=vmem, size = 0x400, scoped, tag = 'input window, operand 7, single buffered']
    #allocation18 [shape = 's32[1]{0}', space=sflag, size = 0x4, scoped, tag = 'scoped memory for tpu_custom_call.1']
    #allocation19 [shape = 'u8[512]{0}', space=vmem, size = 0x400, scoped, tag = 'input window, operand 8, single buffered']
    #allocation20 [shape = 'u8[8192]{0}', space=vmem, size = 0x2000, scoped, tag = 'input window, operand 9, single buffered']
    #allocation21 [shape = 's32[1]{0}', space=sflag, size = 0x4, scoped, tag = 'scoped memory for tpu_custom_call.1']
    #allocation22 [shape = 'u8[512]{0}', space=vmem, size = 0x400, scoped, tag = 'input window, operand 10, single buffered']
    #allocation23 [shape = 'u8[24576]{0}', space=vmem, size = 0x6000, scoped, tag = 'input window, operand 11, single buffered']
    #allocation24 [shape = 's32[1]{0}', space=sflag, size = 0x4, scoped, tag = 'scoped memory for tpu_custom_call.1']
    #allocation25 [shape = 'u8[24576]{0}', space=vmem, size = 0x6000, scoped, tag = 'input window, operand 13, single buffered']
    #allocation26 [shape = 'u8[512]{0}', space=vmem, size = 0x400, scoped, tag = 'input window, operand 14, single buffered']
    #allocation27 [shape = 's32[1]{0}', space=sflag, size = 0x4, scoped, tag = 'scoped memory for tpu_custom_call.1']
    #allocation28 [shape = 'u8[4096]{0}', space=vmem, size = 0x1000, scoped, tag = 'input window, operand 15, single buffered']
    #allocation29 [shape = 'u8[32768]{0}', space=vmem, size = 0x8000, scoped, tag = 'output window, operand 0, single buffered']
    %23 = vsyncpa [#allocation6], 0
    %24 = vsyncpa [#allocation9], 0
    %25 = vsyncpa [#allocation12], 0
    %26 = vsyncpa [#allocation15], 0
    %27 = vsyncpa [#allocation18], 0
    %28 = vsyncpa [#allocation21], 0
    %29 = vsyncpa [#allocation24], 0
    %30 = vsyncpa [#allocation27], 0
    %31 = vsyncpa [#allocation7], 0
    // Predicated region
    $region2: #{tpu_custom_call.1} parent=1 // pred_check
      _
    $region3: #{tpu_custom_call.1} parent=1 // pred_check_branch
      %33 = sbr.rel (0) target = $region5
    $region4: #{tpu_custom_call.1} parent=1 // pred_region
      %s35 = ssub.s32 1024, 1024
      %36 = vsyncadd [#allocation6], %s35
      %s37 = sshll.u32 [#allocation5], 4
      %s38 = int_to_ptr.vmem [resolvable:$true] %s37
      %43 = dma.hbm_to_vmem [thread:$0]  %s0, 1024, %s38, [#allocation6], 128, 128, 8
    $region5: #{tpu_custom_call.1} parent=1 // pred_fallthru
      _
    // Predicated region
    $region6: #{tpu_custom_call.1} parent=1 // pred_check
      _
    $region7: #{tpu_custom_call.1} parent=1 // pred_check_branch
      %45 = sbr.rel (0) target = $region9
    $region8: #{tpu_custom_call.1} parent=1 // pred_region
      %s47 = ssub.s32 512, 512
      %48 = vsyncadd [#allocation9], %s47
      %s49 = sshll.u32 [#allocation8], 4
      %s50 = int_to_ptr.vmem [resolvable:$true] %s49
      %55 = dma.hbm_to_vmem [thread:$0]  %s1, 512, %s50, [#allocation9], 64, 64, 4
    $region9: #{tpu_custom_call.1} parent=1 // pred_fallthru
      _
    // Predicated region
    $region10: #{tpu_custom_call.1} parent=1 // pred_check
      _
    $region11: #{tpu_custom_call.1} parent=1 // pred_check_branch
      %57 = sbr.rel (0) target = $region13
    $region12: #{tpu_custom_call.1} parent=1 // pred_region
      %s59 = ssub.s32 128, 128
      %60 = vsyncadd [#allocation9], %s59
      %s62 = sshll.u32 [#allocation10], 4
      %s63 = int_to_ptr.vmem [resolvable:$true] %s62
      %65 = dma.hbm_to_vmem [thread:$0]  %s2, 128, %s63, [#allocation9]
    $region13: #{tpu_custom_call.1} parent=1 // pred_fallthru
      _
    // Predicated region
    $region14: #{tpu_custom_call.1} parent=1 // pred_check
      _
    $region15: #{tpu_custom_call.1} parent=1 // pred_check_branch
      %67 = sbr.rel (0) target = $region17
    $region16: #{tpu_custom_call.1} parent=1 // pred_region
      %s69 = ssub.s32 1024, 1024
      %70 = vsyncadd [#allocation12], %s69
      %s71 = sshll.u32 [#allocation11], 4
      %s72 = int_to_ptr.vmem [resolvable:$true] %s71
      %77 = dma.hbm_to_vmem [thread:$0]  %s3, 1024, %s72, [#allocation12], 128, 128, 8
    $region17: #{tpu_custom_call.1} parent=1 // pred_fallthru
      _
    // Predicated region
    $region18: #{tpu_custom_call.1} parent=1 // pred_check
      _
    $region19: #{tpu_custom_call.1} parent=1 // pred_check_branch
      %79 = sbr.rel (0) target = $region21
    $region20: #{tpu_custom_call.1} parent=1 // pred_region
      %s81 = ssub.s32 128, 128
      %82 = vsyncadd [#allocation12], %s81
      %s84 = sshll.u32 [#allocation13], 4
      %s85 = int_to_ptr.vmem [resolvable:$true] %s84
      %87 = dma.hbm_to_vmem [thread:$0]  %s4, 128, %s85, [#allocation12]
    $region21: #{tpu_custom_call.1} parent=1 // pred_fallthru
      _
    // Predicated region
    $region22: #{tpu_custom_call.1} parent=1 // pred_check
      _
    $region23: #{tpu_custom_call.1} parent=1 // pred_check_branch
      %89 = sbr.rel (0) target = $region25
    $region24: #{tpu_custom_call.1} parent=1 // pred_region
      %s91 = ssub.s32 512, 512
      %92 = vsyncadd [#allocation15], %s91
      %s93 = sshll.u32 [#allocation14], 4
      %s94 = int_to_ptr.vmem [resolvable:$true] %s93
      %99 = dma.hbm_to_vmem [thread:$0]  %s5, 512, %s94, [#allocation15], 64, 64, 4
    $region25: #{tpu_custom_call.1} parent=1 // pred_fallthru
      _
    // Predicated region
    $region26: #{tpu_custom_call.1} parent=1 // pred_check
      _
    $region27: #{tpu_custom_call.1} parent=1 // pred_check_branch
      %101 = sbr.rel (0) target = $region29
    $region28: #{tpu_custom_call.1} parent=1 // pred_region
      %s103 = ssub.s32 256, 256
      %104 = vsyncadd [#allocation15], %s103
      %s105 = sshll.u32 [#allocation16], 4
      %s106 = int_to_ptr.vmem [resolvable:$true] %s105
      %111 = dma.hbm_to_vmem [thread:$0]  %s6, 256, %s106, [#allocation15], 64, 64, 4
    $region29: #{tpu_custom_call.1} parent=1 // pred_fallthru
      _
    // Predicated region
    $region30: #{tpu_custom_call.1} parent=1 // pred_check
      _
    $region31: #{tpu_custom_call.1} parent=1 // pred_check_branch
      %113 = sbr.rel (0) target = $region33
    $region32: #{tpu_custom_call.1} parent=1 // pred_region
      %s115 = ssub.s32 16, 16
      %116 = vsyncadd [#allocation18], %s115
      %s118 = sshll.u32 [#allocation17], 4
      %s119 = int_to_ptr.vmem [resolvable:$true] %s118
      %121 = dma.hbm_to_vmem [thread:$0]  %s7, 16, %s119, [#allocation18]
    $region33: #{tpu_custom_call.1} parent=1 // pred_fallthru
      _
    // Predicated region
    $region34: #{tpu_custom_call.1} parent=1 // pred_check
      _
    $region35: #{tpu_custom_call.1} parent=1 // pred_check_branch
      %123 = sbr.rel (0) target = $region37
    $region36: #{tpu_custom_call.1} parent=1 // pred_region
      %s125 = ssub.s32 16, 16
      %126 = vsyncadd [#allocation18], %s125
      %s128 = sshll.u32 [#allocation19], 4
      %s129 = int_to_ptr.vmem [resolvable:$true] %s128
      %131 = dma.hbm_to_vmem [thread:$0]  %s8, 16, %s129, [#allocation18]
    $region37: #{tpu_custom_call.1} parent=1 // pred_fallthru
      _
    // Predicated region
    $region38: #{tpu_custom_call.1} parent=1 // pred_check
      _
    $region39: #{tpu_custom_call.1} parent=1 // pred_check_branch
      %133 = sbr.rel (0) target = $region41
    $region40: #{tpu_custom_call.1} parent=1 // pred_region
      %s135 = ssub.s32 256, 256
      %136 = vsyncadd [#allocation21], %s135
      %s137 = sshll.u32 [#allocation20], 4
      %s138 = int_to_ptr.vmem [resolvable:$true] %s137
      %143 = dma.hbm_to_vmem [thread:$0]  %s9, 256, %s138, [#allocation21], 64, 64, 4
    $region41: #{tpu_custom_call.1} parent=1 // pred_fallthru
      _
    // Predicated region
    $region42: #{tpu_custom_call.1} parent=1 // pred_check
      _
    $region43: #{tpu_custom_call.1} parent=1 // pred_check_branch
      %145 = sbr.rel (0) target = $region45
    $region44: #{tpu_custom_call.1} parent=1 // pred_region
      %s147 = ssub.s32 16, 16
      %148 = vsyncadd [#allocation21], %s147
      %s150 = sshll.u32 [#allocation22], 4
      %s151 = int_to_ptr.vmem [resolvable:$true] %s150
      %153 = dma.hbm_to_vmem [thread:$0]  %s10, 16, %s151, [#allocation21]
    $region45: #{tpu_custom_call.1} parent=1 // pred_fallthru
      _
    // Predicated region
    $region46: #{tpu_custom_call.1} parent=1 // pred_check
      _
    $region47: #{tpu_custom_call.1} parent=1 // pred_check_branch
      %155 = sbr.rel (0) target = $region49
    $region48: #{tpu_custom_call.1} parent=1 // pred_region
      %s157 = ssub.s32 768, 768
      %158 = vsyncadd [#allocation24], %s157
      %s159 = sshll.u32 [#allocation23], 4
      %s160 = int_to_ptr.vmem [resolvable:$true] %s159
      %165 = dma.hbm_to_vmem [thread:$0]  %s11, 768, %s160, [#allocation24], 64, 64, 4
    $region49: #{tpu_custom_call.1} parent=1 // pred_fallthru
      _
    // Predicated region
    $region50: #{tpu_custom_call.1} parent=1 // pred_check
      _
    $region51: #{tpu_custom_call.1} parent=1 // pred_check_branch
      %167 = sbr.rel (0) target = $region53
    $region52: #{tpu_custom_call.1} parent=1 // pred_region
      _
    $region53: #{tpu_custom_call.1} parent=1 // pred_fallthru
      _
    // Predicated region
    $region54: #{tpu_custom_call.1} parent=1 // pred_check
      _
    $region55: #{tpu_custom_call.1} parent=1 // pred_check_branch
      %169 = sbr.rel (0) target = $region57
    $region56: #{tpu_custom_call.1} parent=1 // pred_region
      %s171 = ssub.s32 768, 768
      %172 = vsyncadd [#allocation24], %s171
      %s173 = sshll.u32 [#allocation25], 4
      %s174 = int_to_ptr.vmem [resolvable:$true] %s173
      %179 = dma.hbm_to_vmem [thread:$0]  %s13, 768, %s174, [#allocation24], 64, 64, 4
    $region57: #{tpu_custom_call.1} parent=1 // pred_fallthru
      _
    // Predicated region
    $region58: #{tpu_custom_call.1} parent=1 // pred_check
      _
    $region59: #{tpu_custom_call.1} parent=1 // pred_check_branch
      %181 = sbr.rel (0) target = $region61
    $region60: #{tpu_custom_call.1} parent=1 // pred_region
      %s183 = ssub.s32 16, 16
      %184 = vsyncadd [#allocation27], %s183
      %s186 = sshll.u32 [#allocation26], 4
      %s187 = int_to_ptr.vmem [resolvable:$true] %s186
      %189 = dma.hbm_to_vmem [thread:$0]  %s14, 16, %s187, [#allocation27]
    $region61: #{tpu_custom_call.1} parent=1 // pred_fallthru
      _
    // Predicated region
    $region62: #{tpu_custom_call.1} parent=1 // pred_check
      _
    $region63: #{tpu_custom_call.1} parent=1 // pred_check_branch
      %191 = sbr.rel (0) target = $region65
    $region64: #{tpu_custom_call.1} parent=1 // pred_region
      %s193 = ssub.s32 128, 128
      %194 = vsyncadd [#allocation27], %s193
      %s195 = sshll.u32 [#allocation28], 4
      %s196 = int_to_ptr.vmem [resolvable:$true] %s195
      %201 = dma.hbm_to_vmem [thread:$0]  %s15, 128, %s196, [#allocation27], 64, 64, 4
    $region65: #{tpu_custom_call.1} parent=1 // pred_fallthru
      _
    // Predicated region
    $region66: #{tpu_custom_call.1} parent=1 // pred_check
      _
    $region67: #{tpu_custom_call.1} parent=1 // pred_check_branch
      %203 = sbr.rel (0) target = $region69
    $region68: #{tpu_custom_call.1} parent=1 // pred_region
      %204 = dma.done [#allocation6], 1024
    $region69: #{tpu_custom_call.1} parent=1 // pred_fallthru
      _
    // Predicated region
    $region70: #{tpu_custom_call.1} parent=1 // pred_check
      _
    $region71: #{tpu_custom_call.1} parent=1 // pred_check_branch
      %206 = sbr.rel (0) target = $region73
    $region72: #{tpu_custom_call.1} parent=1 // pred_region
      %207 = dma.done [#allocation9], 512
    $region73: #{tpu_custom_call.1} parent=1 // pred_fallthru
      _
    // Predicated region
    $region74: #{tpu_custom_call.1} parent=1 // pred_check
      _
    $region75: #{tpu_custom_call.1} parent=1 // pred_check_branch
      %209 = sbr.rel (0) target = $region77
    $region76: #{tpu_custom_call.1} parent=1 // pred_region
      %210 = dma.done [#allocation9], 128
    $region77: #{tpu_custom_call.1} parent=1 // pred_fallthru
      _
    // Predicated region
    $region78: #{tpu_custom_call.1} parent=1 // pred_check
      _
    $region79: #{tpu_custom_call.1} parent=1 // pred_check_branch
      %212 = sbr.rel (0) target = $region81
    $region80: #{tpu_custom_call.1} parent=1 // pred_region
      %213 = dma.done [#allocation12], 1024
    $region81: #{tpu_custom_call.1} parent=1 // pred_fallthru
      _
    // Predicated region
    $region82: #{tpu_custom_call.1} parent=1 // pred_check
      _
    $region83: #{tpu_custom_call.1} parent=1 // pred_check_branch
      %215 = sbr.rel (0) target = $region85
    $region84: #{tpu_custom_call.1} parent=1 // pred_region
      %216 = dma.done [#allocation12], 128
    $region85: #{tpu_custom_call.1} parent=1 // pred_fallthru
      _
    // Predicated region
    $region86: #{tpu_custom_call.1} parent=1 // pred_check
      _
    $region87: #{tpu_custom_call.1} parent=1 // pred_check_branch
      %218 = sbr.rel (0) target = $region89
    $region88: #{tpu_custom_call.1} parent=1 // pred_region
      %219 = dma.done [#allocation15], 512
    $region89: #{tpu_custom_call.1} parent=1 // pred_fallthru
      _
    // Predicated region
    $region90: #{tpu_custom_call.1} parent=1 // pred_check
      _
    $region91: #{tpu_custom_call.1} parent=1 // pred_check_branch
      %221 = sbr.rel (0) target = $region93
    $region92: #{tpu_custom_call.1} parent=1 // pred_region
      %222 = dma.done [#allocation15], 256
    $region93: #{tpu_custom_call.1} parent=1 // pred_fallthru
      _
    // Predicated region
    $region94: #{tpu_custom_call.1} parent=1 // pred_check
      _
    $region95: #{tpu_custom_call.1} parent=1 // pred_check_branch
      %224 = sbr.rel (0) target = $region97
    $region96: #{tpu_custom_call.1} parent=1 // pred_region
      %225 = dma.done [#allocation18], 16
    $region97: #{tpu_custom_call.1} parent=1 // pred_fallthru
      _
    // Predicated region
    $region98: #{tpu_custom_call.1} parent=1 // pred_check
      _
    $region99: #{tpu_custom_call.1} parent=1 // pred_check_branch
      %227 = sbr.rel (0) target = $region101
    $region100: #{tpu_custom_call.1} parent=1 // pred_region
      %228 = dma.done [#allocation18], 16
    $region101: #{tpu_custom_call.1} parent=1 // pred_fallthru
      _
    // Predicated region
    $region102: #{tpu_custom_call.1} parent=1 // pred_check
      _
    $region103: #{tpu_custom_call.1} parent=1 // pred_check_branch
      %230 = sbr.rel (0) target = $region105
    $region104: #{tpu_custom_call.1} parent=1 // pred_region
      %231 = dma.done [#allocation21], 256
    $region105: #{tpu_custom_call.1} parent=1 // pred_fallthru
      _
    // Predicated region
    $region106: #{tpu_custom_call.1} parent=1 // pred_check
      _
    $region107: #{tpu_custom_call.1} parent=1 // pred_check_branch
      %233 = sbr.rel (0) target = $region109
    $region108: #{tpu_custom_call.1} parent=1 // pred_region
      %234 = dma.done [#allocation21], 16
    $region109: #{tpu_custom_call.1} parent=1 // pred_fallthru
      _
    // Predicated region
    $region110: #{tpu_custom_call.1} parent=1 // pred_check
      _
    $region111: #{tpu_custom_call.1} parent=1 // pred_check_branch
      %236 = sbr.rel (0) target = $region113
    $region112: #{tpu_custom_call.1} parent=1 // pred_region
      %237 = dma.done [#allocation24], 768
    $region113: #{tpu_custom_call.1} parent=1 // pred_fallthru
      _
    // Predicated region
    $region114: #{tpu_custom_call.1} parent=1 // pred_check
      _
    $region115: #{tpu_custom_call.1} parent=1 // pred_check_branch
      %239 = sbr.rel (0) target = $region117
    $region116: #{tpu_custom_call.1} parent=1 // pred_region
      %240 = dma.done [#allocation24], 768
    $region117: #{tpu_custom_call.1} parent=1 // pred_fallthru
      _
    // Predicated region
    $region118: #{tpu_custom_call.1} parent=1 // pred_check
      _
    $region119: #{tpu_custom_call.1} parent=1 // pred_check_branch
      %242 = sbr.rel (0) target = $region121
    $region120: #{tpu_custom_call.1} parent=1 // pred_region
      %243 = dma.done [#allocation27], 16
    $region121: #{tpu_custom_call.1} parent=1 // pred_fallthru
      _
    // Predicated region
    $region122: #{tpu_custom_call.1} parent=1 // pred_check
      _
    $region123: #{tpu_custom_call.1} parent=1 // pred_check_branch
      %245 = sbr.rel (0) target = $region125
    $region124: #{tpu_custom_call.1} parent=1 // pred_region
      %246 = dma.done [#allocation27], 128
    $region125: #{tpu_custom_call.1} parent=1 // pred_fallthru
      _
    %p248 = scmp.eq.s32.totalorder 0, 0
    // Predicated region
    $region126: #{tpu_custom_call.1} parent=1 // pred_check
      %p249 = pneg %p248
    $region127: #{tpu_custom_call.1} parent=1 // pred_check_branch
      %251 = sbr.rel (%p249) target = $region129
    $region128: #{tpu_custom_call.1} parent=1 // pred_region
      %v252 = vld [vmem:[#allocation13] sm:$0xff]
      %vm253 = vcmask 261120
      %254 = vst.msk [vmem:[#allocation2] sm:$0xff] %vm253, %v252
      %255 = vst.msk [vmem:[#allocation3] sm:$0xff] %vm253, 0.0
    $region129: #{tpu_custom_call.1} parent=1 // pred_fallthru
      _
    %v256 = vld [vmem:[#allocation8] sm:$0xf]
    %v257 = vld [vmem:[#allocation8 + $0x4] sm:$0xf]
    %v258 = vld [vmem:[#allocation8 + $0x8] sm:$0xf]
    %v259 = vld [vmem:[#allocation8 + $0xc] sm:$0xf]
    %v260 = vld [vmem:[#allocation8 + $0x10] sm:$0xf]
    %v261 = vld [vmem:[#allocation8 + $0x14] sm:$0xf]
    %v262 = vld [vmem:[#allocation8 + $0x18] sm:$0xf]
    %v263 = vld [vmem:[#allocation8 + $0x1c] sm:$0xf]
    %v264 = vld [vmem:[#allocation11] sm:$0xff]
    %v265 = vld [vmem:[#allocation11 + $0x8] sm:$0xff]
    %v266 = vld [vmem:[#allocation11 + $0x10] sm:$0xff]
    %v267 = vld [vmem:[#allocation11 + $0x18] sm:$0xff]
    %v268 = vld [vmem:[#allocation11 + $0x20] sm:$0xff]
    %v269 = vld [vmem:[#allocation11 + $0x28] sm:$0xff]
    %v270 = vld [vmem:[#allocation11 + $0x30] sm:$0xff]
    %v271 = vld [vmem:[#allocation11 + $0x38] sm:$0xff]
    %v272 = vld [vmem:[#allocation10] sm:$0xff]
    %v273 = vld [vmem:[#allocation22] sm:$0x1]
    %v275 = vlaneseq
    %v276 = vshrl.u32 %v275, 7
    %v277 = vsub.s32 0, %v276
    %v278 = vrot.slane %v273, %v277
    %v280 = vld [vmem:[#allocation14] sm:$0xf]
    %v281 = vld [vmem:[#allocation14 + $0x4] sm:$0xf]
    %v282 = vld [vmem:[#allocation14 + $0x8] sm:$0xf]
    %v283 = vld [vmem:[#allocation14 + $0xc] sm:$0xf]
    %v284 = vld [vmem:[#allocation14 + $0x10] sm:$0xf]
    %v285 = vld [vmem:[#allocation14 + $0x14] sm:$0xf]
    %v286 = vld [vmem:[#allocation14 + $0x18] sm:$0xf]
    %v287 = vld [vmem:[#allocation14 + $0x1c] sm:$0xf]
    %v288 = vld [vmem:[#allocation16] sm:$0xf]
    %v289 = vld [vmem:[#allocation16 + $0x4] sm:$0xf]
    %v290 = vld [vmem:[#allocation16 + $0x8] sm:$0xf]
    %v291 = vld [vmem:[#allocation16 + $0xc] sm:$0xf]
    %v292 = vld [vmem:[#allocation17] sm:$0x1]
    %v294 = vlaneseq
    %v295 = vshrl.u32 %v294, 7
    %v296 = vsub.s32 0, %v295
    %v297 = vrot.slane %v292, %v296
    %v299 = vld [vmem:[#allocation19] sm:$0x1]
    %v301 = vlaneseq
    %v302 = vshrl.u32 %v301, 7
    %v303 = vsub.s32 0, %v302
    %v304 = vrot.slane %v299, %v303
    %v306 = vld [vmem:[#allocation20] sm:$0xf]
    %v307 = vld [vmem:[#allocation20 + $0x4] sm:$0xf]
    %v308 = vld [vmem:[#allocation20 + $0x8] sm:$0xf]
    %v309 = vld [vmem:[#allocation20 + $0xc] sm:$0xf]
    %v310 = vld [vmem:[#allocation23] sm:$0xf]
    %v311 = vld [vmem:[#allocation23 + $0x4] sm:$0xf]
    %v312 = vld [vmem:[#allocation23 + $0x8] sm:$0xf]
    %v313 = vld [vmem:[#allocation23 + $0xc] sm:$0xf]
    %v314 = vld [vmem:[#allocation23 + $0x10] sm:$0xf]
    %v315 = vld [vmem:[#allocation23 + $0x14] sm:$0xf]
    %v316 = vld [vmem:[#allocation23 + $0x18] sm:$0xf]
    %v317 = vld [vmem:[#allocation23 + $0x1c] sm:$0xf]
    %v318 = vld [vmem:[#allocation23 + $0x20] sm:$0xf]
    %v319 = vld [vmem:[#allocation23 + $0x24] sm:$0xf]
    %v320 = vld [vmem:[#allocation23 + $0x28] sm:$0xf]
    %v321 = vld [vmem:[#allocation23 + $0x2c] sm:$0xf]
    %v322 = vld [vmem:[#allocation4] sm:$0x1]
    %v324 = vlaneseq
    %v325 = vshrl.u32 %v324, 7
    %v326 = vsub.s32 0, %v325
    %v327 = vrot.slane %v322, %v326
    %v329 = vld [vmem:[#allocation25] sm:$0xf]
    %v330 = vld [vmem:[#allocation25 + $0x4] sm:$0xf]
    %v331 = vld [vmem:[#allocation25 + $0x8] sm:$0xf]
    %v332 = vld [vmem:[#allocation25 + $0xc] sm:$0xf]
    %v333 = vld [vmem:[#allocation25 + $0x10] sm:$0xf]
    %v334 = vld [vmem:[#allocation25 + $0x14] sm:$0xf]
    %v335 = vld [vmem:[#allocation25 + $0x18] sm:$0xf]
    %v336 = vld [vmem:[#allocation25 + $0x1c] sm:$0xf]
    %v337 = vld [vmem:[#allocation25 + $0x20] sm:$0xf]
    %v338 = vld [vmem:[#allocation25 + $0x24] sm:$0xf]
    %v339 = vld [vmem:[#allocation25 + $0x28] sm:$0xf]
    %v340 = vld [vmem:[#allocation25 + $0x2c] sm:$0xf]
    %v341 = vld [vmem:[#allocation26] sm:$0x1]
    %v343 = vlaneseq
    %v344 = vshrl.u32 %v343, 7
    %v345 = vsub.s32 0, %v344
    %v346 = vrot.slane %v341, %v345
    %v348 = vld [vmem:[#allocation28] sm:$0xf]
    %v349 = vld [vmem:[#allocation28 + $0x4] sm:$0xf]
    %v350 = vld [vmem:[#allocation2] sm:$0xff]
    %v351 = vld [vmem:[#allocation3] sm:$0xff]
    %v352 = vld [vmem:[#allocation5] sm:$0xff]
    %354 = vrot.lane.b32.xlu0 %v351, 32
    %v355 = vpop.permute.xlu0 %354
    %vm357 = vcmask 261120
    %v358 = vsel %vm357, %v352, %v355
    %v359 = vpack.c.bf16 %v358, %v358
    %v368 = vunpack.c.l.b16 %v280
    %v369 = vunpack.c.l.b16 %v281
    %v370 = vunpack.c.l.b16 %v282
    %v371 = vunpack.c.l.b16 %v283
    %v372 = vunpack.c.l.b16 %v284
    %v373 = vunpack.c.l.b16 %v285
    %v374 = vunpack.c.l.b16 %v286
    %v375 = vunpack.c.l.b16 %v287
    %v376 = vpack.c.b16 %v369, %v368
    %v377 = vpack.c.b16 %v371, %v370
    %v378 = vpack.c.b16 %v373, %v372
    %v379 = vpack.c.b16 %v375, %v374
    %vm384 = vcmask 523264
    %v386 = vsel %vm384, %v359, 0
    %388 = vmatprep.subr.bf16.mxu0 0
    %389 = vmatpush1.bf16.msra.mxu0 %v376
    %390 = vmatprep.subr.bf16.mxu0 0
    %391 = vmatpush1.bf16.msra.mxu0 %v377
    %392 = vmatprep.subr.bf16.mxu0 0
    %393 = vmatpush1.bf16.msra.mxu0 %v378
    %394 = vmatprep.subr.bf16.mxu0 0
    %395 = vmatpush1.bf16.msra.mxu0 %v379
    %396 = vmatprep.subr.bf16.mxu0 0
    %397 = vmatpush1.bf16.msra.mxu0 0
    %398 = vmatprep.subr.bf16.mxu0 0
    %399 = vmatpush1.bf16.msra.mxu0 0
    %400 = vmatprep.subr.bf16.mxu0 0
    %401 = vmatpush1.bf16.msra.mxu0 0
    %402 = vmatprep.subr.bf16.mxu0 0
    %403 = vmatpush1.bf16.msra.mxu0 0
    %404 = vmatprep.subr.bf16.mxu0 0
    %405 = vmatpush1.bf16.msra.mxu0 0
    %406 = vmatprep.subr.bf16.mxu0 0
    %407 = vmatpush1.bf16.msra.mxu0 0
    %408 = vmatprep.subr.bf16.mxu0 0
    %409 = vmatpush1.bf16.msra.mxu0 0
    %410 = vmatprep.subr.bf16.mxu0 0
    %411 = vmatpush1.bf16.msra.mxu0 0
    %412 = vmatprep.subr.bf16.mxu0 0
    %413 = vmatpush1.bf16.msra.mxu0 0
    %414 = vmatprep.subr.bf16.mxu0 0
    %415 = vmatpush1.bf16.msra.mxu0 0
    %416 = vmatprep.subr.bf16.mxu0 0
    %417 = vmatpush1.bf16.msra.mxu0 0
    %418 = vmatprep.subr.bf16.mxu0 0
    %419 = vmatpush1.bf16.msra.mxu0 0
    %420 = vmatprep.mubr.bf16.mxu0 0
    %421 = vmatmul.mubr.bf16.gmra.mrb[0].mxu0 %v386
    %v422 = vpop.f32.mrb[0].mxu0
    %v423 = vadd.f32 %v297, %v422
    %v424 = vpop.f32.mrb[0].mxu0
    %v425 = vpop.f32.mrb[0].mxu0
    %v426 = vpop.f32.mrb[0].mxu0
    %427 = vdwg.mxu0
    %v428 = vpack.c.bf16 %v350, %v350
    %v433 = vunpack.c.l.b16 %v288
    %v434 = vunpack.c.l.b16 %v289
    %v435 = vunpack.c.l.b16 %v290
    %v436 = vunpack.c.l.b16 %v291
    %v437 = vpack.c.b16 %v434, %v433
    %v438 = vpack.c.b16 %v436, %v435
    %v442 = vsel %vm357, %v428, 0
    %444 = vmatprep.subr.bf16.mxu0 0
    %445 = vmatpush1.bf16.msra.mxu0 %v437
    %446 = vmatprep.subr.bf16.mxu0 0
    %447 = vmatpush1.bf16.msra.mxu0 %v438
    %448 = vmatprep.subr.bf16.mxu0 0
    %449 = vmatpush1.bf16.msra.mxu0 0
    %450 = vmatprep.subr.bf16.mxu0 0
    %451 = vmatpush1.bf16.msra.mxu0 0
    %452 = vmatprep.subr.bf16.mxu0 0
    %453 = vmatpush1.bf16.msra.mxu0 0
    %454 = vmatprep.subr.bf16.mxu0 0
    %455 = vmatpush1.bf16.msra.mxu0 0
    %456 = vmatprep.subr.bf16.mxu0 0
    %457 = vmatpush1.bf16.msra.mxu0 0
    %458 = vmatprep.subr.bf16.mxu0 0
    %459 = vmatpush1.bf16.msra.mxu0 0
    %460 = vmatprep.subr.bf16.mxu0 0
    %461 = vmatpush1.bf16.msra.mxu0 0
    %462 = vmatprep.subr.bf16.mxu0 0
    %463 = vmatpush1.bf16.msra.mxu0 0
    %464 = vmatprep.subr.bf16.mxu0 0
    %465 = vmatpush1.bf16.msra.mxu0 0
    %466 = vmatprep.subr.bf16.mxu0 0
    %467 = vmatpush1.bf16.msra.mxu0 0
    %468 = vmatprep.subr.bf16.mxu0 0
    %469 = vmatpush1.bf16.msra.mxu0 0
    %470 = vmatprep.subr.bf16.mxu0 0
    %471 = vmatpush1.bf16.msra.mxu0 0
    %472 = vmatprep.subr.bf16.mxu0 0
    %473 = vmatpush1.bf16.msra.mxu0 0
    %474 = vmatprep.subr.bf16.mxu0 0
    %475 = vmatpush1.bf16.msra.mxu0 0
    %476 = vmatprep.mubr.bf16.mxu0 0
    %477 = vmatmul.mubr.bf16.gmra.mrb[0].mxu0 %v442
    %v478 = vpop.f32.mrb[0].mxu0
    %v479 = vadd.f32 %v304, %v478
    %v480 = vpop.f32.mrb[0].mxu0
    %v481 = vpop.f32.mrb[0].mxu0
    %v482 = vpop.f32.mrb[0].mxu0
    %483 = vdwg.mxu0
    %v484 = vadd.f32 %v423, %v479
    %v485 = vxor.u32 %v484, 2147483648
    %v486 = vmul.f32 %v485, 1.442695
    %v487 = vpow.pop %v486
    %v488 = vadd.f32 %v487, 1.0
    %v489 = vrcp.pop %v488
    %v490 = vmul.f32 1.0, %v489
    %492 = vrot.lane.b32.xlu0 %v479, 64
    %v493 = vpop.permute.xlu0 %492
    %v495 = vmul.f32 %v490, %v493
    %497 = vrot.lane.b32.xlu0 %v495, 64
    %v498 = vpop.permute.xlu0 %497
    %v500 = vadd.f32 %v423, %v498
    %v501 = vtanh.pop %v500
    %v502 = vsub.f32 1.0, %v490
    %504 = vrot.lane.b32.xlu0 %v501, 96
    %v505 = vpop.permute.xlu0 %504
    %v507 = vmul.f32 %v502, %v505
    %509 = vrot.lane.b32.xlu0 %v350, 32
    %v510 = vpop.permute.xlu0 %509
    %v512 = vmul.f32 %v490, %v510
    %v513 = vadd.f32 %v507, %v512
    %v514 = vpack.c.bf16 %v513, %v513
    %516 = vrot.lane.b32.xlu0 %v514, 96
    %v517 = vpop.permute.xlu0 %516
    %v522 = vunpack.c.l.b16 %v306
    %v523 = vunpack.c.l.b16 %v307
    %v524 = vunpack.c.l.b16 %v308
    %v525 = vunpack.c.l.b16 %v309
    %v526 = vpack.c.b16 %v523, %v522
    %v527 = vpack.c.b16 %v525, %v524
    %v531 = vsel %vm357, %v517, 0
    %533 = vmatprep.subr.bf16.mxu0 0
    %534 = vmatpush1.bf16.msra.mxu0 %v526
    %535 = vmatprep.subr.bf16.mxu0 0
    %536 = vmatpush1.bf16.msra.mxu0 %v527
    %537 = vmatprep.subr.bf16.mxu0 0
    %538 = vmatpush1.bf16.msra.mxu0 0
    %539 = vmatprep.subr.bf16.mxu0 0
    %540 = vmatpush1.bf16.msra.mxu0 0
    %541 = vmatprep.subr.bf16.mxu0 0
    %542 = vmatpush1.bf16.msra.mxu0 0
    %543 = vmatprep.subr.bf16.mxu0 0
    %544 = vmatpush1.bf16.msra.mxu0 0
    %545 = vmatprep.subr.bf16.mxu0 0
    %546 = vmatpush1.bf16.msra.mxu0 0
    %547 = vmatprep.subr.bf16.mxu0 0
    %548 = vmatpush1.bf16.msra.mxu0 0
    %549 = vmatprep.subr.bf16.mxu0 0
    %550 = vmatpush1.bf16.msra.mxu0 0
    %551 = vmatprep.subr.bf16.mxu0 0
    %552 = vmatpush1.bf16.msra.mxu0 0
    %553 = vmatprep.subr.bf16.mxu0 0
    %554 = vmatpush1.bf16.msra.mxu0 0
    %555 = vmatprep.subr.bf16.mxu0 0
    %556 = vmatpush1.bf16.msra.mxu0 0
    %557 = vmatprep.subr.bf16.mxu0 0
    %558 = vmatpush1.bf16.msra.mxu0 0
    %559 = vmatprep.subr.bf16.mxu0 0
    %560 = vmatpush1.bf16.msra.mxu0 0
    %561 = vmatprep.subr.bf16.mxu0 0
    %562 = vmatpush1.bf16.msra.mxu0 0
    %563 = vmatprep.subr.bf16.mxu0 0
    %564 = vmatpush1.bf16.msra.mxu0 0
    %565 = vmatprep.mubr.bf16.mxu0 0
    %566 = vmatmul.mubr.bf16.gmra.mrb[0].mxu0 %v531
    %v567 = vpop.f32.mrb[0].mxu0
    %v568 = vadd.f32 0.0, %v567
    %v569 = vpop.f32.mrb[0].mxu0
    %v570 = vpop.f32.mrb[0].mxu0
    %v571 = vpop.f32.mrb[0].mxu0
    %572 = vdwg.mxu0
    %v574 = vcombine.high %v568, %v568
    %v576 = vunpack.c.l.s4 1966171168
    %v577 = vunpack.c.0.s8 %v576
    %v578 = vlaneseq
    %v579 = vshrl.u32 %v578, 7
    %v580 = vsub.s32 %v577, %v579
    %v581 = vrot.slane %v568, %v580
    %v583 = vunpack.c.l.s4 1966171168
    %v584 = vunpack.c.0.s8 %v583
    %v585 = vlaneseq
    %v586 = vshrl.u32 %v585, 7
    %v587 = vsub.s32 %v584, %v586
    %v588 = vrot.slane %v574, %v587
    %v589 = vcombine.high %v581, %v581
    %v590 = vcombine.high %v588, %v588
    %v592 = vunpack.c.l.s4 1966171168
    %v593 = vunpack.c.0.s8 %v592
    %v594 = vlaneseq
    %v595 = vshrl.u32 %v594, 7
    %v596 = vsub.s32 %v593, %v595
    %v597 = vrot.slane %v581, %v596
    %v599 = vunpack.c.l.s4 1966171168
    %v600 = vunpack.c.0.s8 %v599
    %v601 = vlaneseq
    %v602 = vshrl.u32 %v601, 7
    %v603 = vsub.s32 %v600, %v602
    %v604 = vrot.slane %v588, %v603
    %v606 = vunpack.c.l.s4 1966171168
    %v607 = vunpack.c.0.s8 %v606
    %v608 = vlaneseq
    %v609 = vshrl.u32 %v608, 7
    %v610 = vsub.s32 %v607, %v609
    %v611 = vrot.slane %v589, %v610
    %v613 = vunpack.c.l.s4 1966171168
    %v614 = vunpack.c.0.s8 %v613
    %v615 = vlaneseq
    %v616 = vshrl.u32 %v615, 7
    %v617 = vsub.s32 %v614, %v616
    %v618 = vrot.slane %v590, %v617
    %v619 = vcombine.high %v597, %v597
    %v620 = vcombine.high %v604, %v604
    %v621 = vcombine.high %v611, %v611
    %v622 = vcombine.high %v618, %v618
    %v623 = vlaneseq
    %v624 = vshrl.u32 %v623, 7
    %v625 = vsub.s32 0, %v624
    %v626 = vrot.slane %v597, %v625
    %v627 = vlaneseq
    %v628 = vshrl.u32 %v627, 7
    %v629 = vsub.s32 0, %v628
    %v630 = vrot.slane %v611, %v629
    %v631 = vlaneseq
    %v632 = vshrl.u32 %v631, 7
    %v633 = vsub.s32 0, %v632
    %v634 = vrot.slane %v619, %v633
    %v635 = vlaneseq
    %v636 = vshrl.u32 %v635, 7
    %v637 = vsub.s32 0, %v636
    %v638 = vrot.slane %v621, %v637
    %v639 = vlaneseq
    %v640 = vshrl.u32 %v639, 7
    %v641 = vsub.s32 0, %v640
    %v642 = vrot.slane %v604, %v641
    %v643 = vlaneseq
    %v644 = vshrl.u32 %v643, 7
    %v645 = vsub.s32 0, %v644
    %v646 = vrot.slane %v618, %v645
    %v647 = vlaneseq
    %v648 = vshrl.u32 %v647, 7
    %v649 = vsub.s32 0, %v648
    %v650 = vrot.slane %v620, %v649
    %v651 = vlaneseq
    %v652 = vshrl.u32 %v651, 7
    %v653 = vsub.s32 0, %v652
    %v654 = vrot.slane %v622, %v653
    %v663 = vadd.f32 %v264, %v626
    %v664 = vadd.f32 %v265, %v630
    %v665 = vadd.f32 %v266, %v634
    %v666 = vadd.f32 %v267, %v638
    %v667 = vadd.f32 %v268, %v642
    %v668 = vadd.f32 %v269, %v646
    %v669 = vadd.f32 %v270, %v650
    %v670 = vadd.f32 %v271, %v654
    %v671 = vtanh.pop %v663
    %v672 = vtanh.pop %v664
    %v673 = vtanh.pop %v665
    %v674 = vtanh.pop %v666
    %v675 = vtanh.pop %v667
    %v676 = vtanh.pop %v668
    %v677 = vtanh.pop %v669
    %v678 = vtanh.pop %v670
    %v679 = vmul.f32 %v671, %v278
    %v680 = vmul.f32 %v672, %v278
    %v681 = vmul.f32 %v673, %v278
    %v682 = vmul.f32 %v674, %v278
    %v683 = vmul.f32 %v675, %v278
    %v684 = vmul.f32 %v676, %v278
    %v685 = vmul.f32 %v677, %v278
    %v686 = vmul.f32 %v678, %v278
    %v687 = vsel %vm357, %v679, 0.0
    %688 = vadd.xlane.f32.xlu0 %v687
    %v689 = vpop.xlane.xlu0 %688
    %v690 = vsel %vm357, %v680, 0.0
    %691 = vadd.xlane.f32.xlu0 %v690
    %v692 = vpop.xlane.xlu0 %691
    %v693 = vsel %vm357, %v681, 0.0
    %694 = vadd.xlane.f32.xlu0 %v693
    %v695 = vpop.xlane.xlu0 %694
    %v696 = vsel %vm357, %v682, 0.0
    %697 = vadd.xlane.f32.xlu0 %v696
    %v698 = vpop.xlane.xlu0 %697
    %v699 = vsel %vm357, %v683, 0.0
    %700 = vadd.xlane.f32.xlu0 %v699
    %v701 = vpop.xlane.xlu0 %700
    %v702 = vsel %vm357, %v684, 0.0
    %703 = vadd.xlane.f32.xlu0 %v702
    %v704 = vpop.xlane.xlu0 %703
    %v705 = vsel %vm357, %v685, 0.0
    %706 = vadd.xlane.f32.xlu0 %v705
    %v707 = vpop.xlane.xlu0 %706
    %v708 = vsel %vm357, %v686, 0.0
    %709 = vadd.xlane.f32.xlu0 %v708
    %v710 = vpop.xlane.xlu0 %709
    %v712 = vlaneseq
    %v713 = vshrl.u32 %v712, 7
    %v714 = vsub.s32 0, %v713
    %v715 = vrot.slane %v272, %v714
    %717 = vbcast.lane.b32.xlu0 %v715, 256
    %v718 = vpop.permute.xlu0 %717
    %v719 = vlaneseq
    %v720 = vshrl.u32 %v719, 7
    %v721 = vsub.s32 1, %v720
    %v722 = vrot.slane %v272, %v721
    %724 = vbcast.lane.b32.xlu0 %v722, 256
    %v725 = vpop.permute.xlu0 %724
    %v726 = vlaneseq
    %v727 = vshrl.u32 %v726, 7
    %v728 = vsub.s32 2, %v727
    %v729 = vrot.slane %v272, %v728
    %731 = vbcast.lane.b32.xlu0 %v729, 256
    %v732 = vpop.permute.xlu0 %731
    %v733 = vlaneseq
    %v734 = vshrl.u32 %v733, 7
    %v735 = vsub.s32 3, %v734
    %v736 = vrot.slane %v272, %v735
    %738 = vbcast.lane.b32.xlu0 %v736, 256
    %v739 = vpop.permute.xlu0 %738
    %v740 = vlaneseq
    %v741 = vshrl.u32 %v740, 7
    %v742 = vsub.s32 4, %v741
    %v743 = vrot.slane %v272, %v742
    %745 = vbcast.lane.b32.xlu0 %v743, 256
    %v746 = vpop.permute.xlu0 %745
    %v747 = vlaneseq
    %v748 = vshrl.u32 %v747, 7
    %v749 = vsub.s32 5, %v748
    %v750 = vrot.slane %v272, %v749
    %752 = vbcast.lane.b32.xlu0 %v750, 256
    %v753 = vpop.permute.xlu0 %752
    %v754 = vlaneseq
    %v755 = vshrl.u32 %v754, 7
    %v756 = vsub.s32 6, %v755
    %v757 = vrot.slane %v272, %v756
    %759 = vbcast.lane.b32.xlu0 %v757, 256
    %v760 = vpop.permute.xlu0 %759
    %v761 = vlaneseq
    %v762 = vshrl.u32 %v761, 7
    %v763 = vsub.s32 7, %v762
    %v764 = vrot.slane %v272, %v763
    %766 = vbcast.lane.b32.xlu0 %v764, 256
    %v767 = vpop.permute.xlu0 %766
    %v776 = vadd.f32 %v689, %v718
    %v777 = vadd.f32 %v692, %v725
    %v778 = vadd.f32 %v695, %v732
    %v779 = vadd.f32 %v698, %v739
    %v780 = vadd.f32 %v701, %v746
    %v781 = vadd.f32 %v704, %v753
    %v782 = vadd.f32 %v707, %v760
    %v783 = vadd.f32 %v710, %v767
    %792 = vset.pattern.permute.xlu0 0
    %793 = vperm.xlu0 %792, %v776
    %v794 = vpop.permute.xlu0 %793
    %795 = vset.pattern.permute.xlu0 0
    %796 = vperm.xlu0 %795, %v777
    %v797 = vpop.permute.xlu0 %796
    %798 = vset.pattern.permute.xlu0 0
    %799 = vperm.xlu0 %798, %v778
    %v800 = vpop.permute.xlu0 %799
    %801 = vset.pattern.permute.xlu0 0
    %802 = vperm.xlu0 %801, %v779
    %v803 = vpop.permute.xlu0 %802
    %804 = vset.pattern.permute.xlu0 0
    %805 = vperm.xlu0 %804, %v780
    %v806 = vpop.permute.xlu0 %805
    %807 = vset.pattern.permute.xlu0 0
    %808 = vperm.xlu0 %807, %v781
    %v809 = vpop.permute.xlu0 %808
    %810 = vset.pattern.permute.xlu0 0
    %811 = vperm.xlu0 %810, %v782
    %v812 = vpop.permute.xlu0 %811
    %813 = vset.pattern.permute.xlu0 0
    %814 = vperm.xlu0 %813, %v783
    %v815 = vpop.permute.xlu0 %814
    %v816 = vlaneseq
    %v817 = vand.u32 %v816, 127
    %v818 = vlaneseq
    %v819 = vshrl.u32 %v818, 7
    %v820 = vsub.s32 %v817, %v819
    %v821 = vrot.slane %v794, %v820
    %v822 = vlaneseq
    %v823 = vshrl.u32 %v822, 7
    %v824 = vsub.s32 %v817, %v823
    %v825 = vrot.slane %v797, %v824
    %v826 = vlaneseq
    %v827 = vshrl.u32 %v826, 7
    %v828 = vsub.s32 %v817, %v827
    %v829 = vrot.slane %v800, %v828
    %v830 = vlaneseq
    %v831 = vshrl.u32 %v830, 7
    %v832 = vsub.s32 %v817, %v831
    %v833 = vrot.slane %v803, %v832
    %v834 = vlaneseq
    %v835 = vshrl.u32 %v834, 7
    %v836 = vsub.s32 %v817, %v835
    %v837 = vrot.slane %v806, %v836
    %v838 = vlaneseq
    %v839 = vshrl.u32 %v838, 7
    %v840 = vsub.s32 %v817, %v839
    %v841 = vrot.slane %v809, %v840
    %v842 = vlaneseq
    %v843 = vshrl.u32 %v842, 7
    %v844 = vsub.s32 %v817, %v843
    %v845 = vrot.slane %v812, %v844
    %v846 = vlaneseq
    %v847 = vshrl.u32 %v846, 7
    %v848 = vsub.s32 %v817, %v847
    %v849 = vrot.slane %v815, %v848
    %vm850 = vcmask 1041409
    %v851 = vsel %vm850, %v825, %v821
    %vm852 = vcmask 1042434
    %v853 = vsel %vm852, %v829, %v851
    %vm854 = vcmask 1043459
    %v855 = vsel %vm854, %v833, %v853
    %vm856 = vcmask 1044484
    %v857 = vsel %vm856, %v837, %v855
    %vm858 = vcmask 1045509
    %v859 = vsel %vm858, %v841, %v857
    %vm860 = vcmask 1046534
    %v861 = vsel %vm860, %v845, %v859
    %vm862 = vcmask 1047559
    %v863 = vsel %vm862, %v849, %v861
    %vm865 = vcmask 64512
    %v866 = vsel %vm865, %v863, -inf
    %867 = vmax.xlane.f32.xlu0 %v866
    %v868 = vpop.xlane.xlu0 %867
    %v870 = vlaneseq
    %v871 = vshrl.u32 %v870, 7
    %v872 = vsub.s32 0, %v871
    %v873 = vrot.slane %v868, %v872
    %v874 = vlaneseq
    %v875 = vshrl.u32 %v874, 7
    %v876 = vsub.s32 1, %v875
    %v877 = vrot.slane %v868, %v876
    %v878 = vlaneseq
    %v879 = vshrl.u32 %v878, 7
    %v880 = vsub.s32 2, %v879
    %v881 = vrot.slane %v868, %v880
    %v882 = vlaneseq
    %v883 = vshrl.u32 %v882, 7
    %v884 = vsub.s32 3, %v883
    %v885 = vrot.slane %v868, %v884
    %v886 = vlaneseq
    %v887 = vshrl.u32 %v886, 7
    %v888 = vsub.s32 4, %v887
    %v889 = vrot.slane %v868, %v888
    %v890 = vlaneseq
    %v891 = vshrl.u32 %v890, 7
    %v892 = vsub.s32 5, %v891
    %v893 = vrot.slane %v868, %v892
    %v894 = vlaneseq
    %v895 = vshrl.u32 %v894, 7
    %v896 = vsub.s32 6, %v895
    %v897 = vrot.slane %v868, %v896
    %v898 = vlaneseq
    %v899 = vshrl.u32 %v898, 7
    %v900 = vsub.s32 7, %v899
    %v901 = vrot.slane %v868, %v900
    %v910 = vsub.f32 %v776, %v873
    %v911 = vsub.f32 %v777, %v877
    %v912 = vsub.f32 %v778, %v881
    %v913 = vsub.f32 %v779, %v885
    %v914 = vsub.f32 %v780, %v889
    %v915 = vsub.f32 %v781, %v893
    %v916 = vsub.f32 %v782, %v897
    %v917 = vsub.f32 %v783, %v901
    %v918 = vmul.f32 %v910, 1.442695
    %v919 = vpow.pop %v918
    %v920 = vmul.f32 %v911, 1.442695
    %v921 = vpow.pop %v920
    %v922 = vmul.f32 %v912, 1.442695
    %v923 = vpow.pop %v922
    %v924 = vmul.f32 %v913, 1.442695
    %v925 = vpow.pop %v924
    %v926 = vmul.f32 %v914, 1.442695
    %v927 = vpow.pop %v926
    %v928 = vmul.f32 %v915, 1.442695
    %v929 = vpow.pop %v928
    %v930 = vmul.f32 %v916, 1.442695
    %v931 = vpow.pop %v930
    %v932 = vmul.f32 %v917, 1.442695
    %v933 = vpow.pop %v932
    %942 = vset.pattern.permute.xlu0 0
    %943 = vperm.xlu0 %942, %v919
    %v944 = vpop.permute.xlu0 %943
    %945 = vset.pattern.permute.xlu0 0
    %946 = vperm.xlu0 %945, %v921
    %v947 = vpop.permute.xlu0 %946
    %948 = vset.pattern.permute.xlu0 0
    %949 = vperm.xlu0 %948, %v923
    %v950 = vpop.permute.xlu0 %949
    %951 = vset.pattern.permute.xlu0 0
    %952 = vperm.xlu0 %951, %v925
    %v953 = vpop.permute.xlu0 %952
    %954 = vset.pattern.permute.xlu0 0
    %955 = vperm.xlu0 %954, %v927
    %v956 = vpop.permute.xlu0 %955
    %957 = vset.pattern.permute.xlu0 0
    %958 = vperm.xlu0 %957, %v929
    %v959 = vpop.permute.xlu0 %958
    %960 = vset.pattern.permute.xlu0 0
    %961 = vperm.xlu0 %960, %v931
    %v962 = vpop.permute.xlu0 %961
    %963 = vset.pattern.permute.xlu0 0
    %964 = vperm.xlu0 %963, %v933
    %v965 = vpop.permute.xlu0 %964
    %v966 = vlaneseq
    %v967 = vshrl.u32 %v966, 7
    %v968 = vsub.s32 %v817, %v967
    %v969 = vrot.slane %v944, %v968
    %v970 = vlaneseq
    %v971 = vshrl.u32 %v970, 7
    %v972 = vsub.s32 %v817, %v971
    %v973 = vrot.slane %v947, %v972
    %v974 = vlaneseq
    %v975 = vshrl.u32 %v974, 7
    %v976 = vsub.s32 %v817, %v975
    %v977 = vrot.slane %v950, %v976
    %v978 = vlaneseq
    %v979 = vshrl.u32 %v978, 7
    %v980 = vsub.s32 %v817, %v979
    %v981 = vrot.slane %v953, %v980
    %v982 = vlaneseq
    %v983 = vshrl.u32 %v982, 7
    %v984 = vsub.s32 %v817, %v983
    %v985 = vrot.slane %v956, %v984
    %v986 = vlaneseq
    %v987 = vshrl.u32 %v986, 7
    %v988 = vsub.s32 %v817, %v987
    %v989 = vrot.slane %v959, %v988
    %v990 = vlaneseq
    %v991 = vshrl.u32 %v990, 7
    %v992 = vsub.s32 %v817, %v991
    %v993 = vrot.slane %v962, %v992
    %v994 = vlaneseq
    %v995 = vshrl.u32 %v994, 7
    %v996 = vsub.s32 %v817, %v995
    %v997 = vrot.slane %v965, %v996
    %v998 = vsel %vm850, %v973, %v969
    %v999 = vsel %vm852, %v977, %v998
    %v1000 = vsel %vm854, %v981, %v999
    %v1001 = vsel %vm856, %v985, %v1000
    %v1002 = vsel %vm858, %v989, %v1001
    %v1003 = vsel %vm860, %v993, %v1002
    %v1004 = vsel %vm862, %v997, %v1003
    %v1006 = vsel %vm865, %v1004, 0.0
    %1007 = vadd.xlane.f32.xlu0 %v1006
    %v1008 = vpop.xlane.xlu0 %1007
    %v1009 = vrcp.pop %v1008
    %v1011 = vlaneseq
    %v1012 = vshrl.u32 %v1011, 7
    %v1013 = vsub.s32 0, %v1012
    %v1014 = vrot.slane %v1009, %v1013
    %v1015 = vlaneseq
    %v1016 = vshrl.u32 %v1015, 7
    %v1017 = vsub.s32 1, %v1016
    %v1018 = vrot.slane %v1009, %v1017
    %v1019 = vlaneseq
    %v1020 = vshrl.u32 %v1019, 7
    %v1021 = vsub.s32 2, %v1020
    %v1022 = vrot.slane %v1009, %v1021
    %v1023 = vlaneseq
    %v1024 = vshrl.u32 %v1023, 7
    %v1025 = vsub.s32 3, %v1024
    %v1026 = vrot.slane %v1009, %v1025
    %v1027 = vlaneseq
    %v1028 = vshrl.u32 %v1027, 7
    %v1029 = vsub.s32 4, %v1028
    %v1030 = vrot.slane %v1009, %v1029
    %v1031 = vlaneseq
    %v1032 = vshrl.u32 %v1031, 7
    %v1033 = vsub.s32 5, %v1032
    %v1034 = vrot.slane %v1009, %v1033
    %v1035 = vlaneseq
    %v1036 = vshrl.u32 %v1035, 7
    %v1037 = vsub.s32 6, %v1036
    %v1038 = vrot.slane %v1009, %v1037
    %v1039 = vlaneseq
    %v1040 = vshrl.u32 %v1039, 7
    %v1041 = vsub.s32 7, %v1040
    %v1042 = vrot.slane %v1009, %v1041
    %v1051 = vmul.f32 %v919, %v1014
    %v1052 = vmul.f32 %v921, %v1018
    %v1053 = vmul.f32 %v923, %v1022
    %v1054 = vmul.f32 %v925, %v1026
    %v1055 = vmul.f32 %v927, %v1030
    %v1056 = vmul.f32 %v929, %v1034
    %v1057 = vmul.f32 %v931, %v1038
    %v1058 = vmul.f32 %v933, %v1042
    %v1059 = vpack.c.bf16 %v1051, %v1051
    %v1060 = vpack.c.bf16 %v1052, %v1052
    %v1061 = vpack.c.bf16 %v1053, %v1053
    %v1062 = vpack.c.bf16 %v1054, %v1054
    %v1063 = vpack.c.bf16 %v1055, %v1055
    %v1064 = vpack.c.bf16 %v1056, %v1056
    %v1065 = vpack.c.bf16 %v1057, %v1057
    %v1066 = vpack.c.bf16 %v1058, %v1058
    %v1068 = vunpack.c.l.b16 %v1059
    %1069 = vset.pattern.permute.xlu0 0
    %1070 = vperm.xlu0 %1069, %v1068
    %v1071 = vpop.permute.xlu0 %1070
    %v1072 = vlaneseq
    %v1073 = vshrl.u32 %v1072, 7
    %v1074 = vsub.s32 %v817, %v1073
    %v1075 = vrot.slane %v1071, %v1074
    %v1076 = vpack.c.b16 %v1075, %v1075
    %v1078 = vsel %vm865, %v1076, 0
    %vm1080 = vcmask 1043456
    %v1082 = vsel %vm1080, %v256, 0
    %1084 = vmatprep.subr.bf16.mxu0 0
    %1085 = vmatpush1.bf16.msra.mxu0 %v1082
    %1086 = vmatprep.subr.bf16.mxu0 0
    %1087 = vmatpush1.bf16.msra.mxu0 0
    %1088 = vmatprep.subr.bf16.mxu0 0
    %1089 = vmatpush1.bf16.msra.mxu0 0
    %1090 = vmatprep.subr.bf16.mxu0 0
    %1091 = vmatpush1.bf16.msra.mxu0 0
    %1092 = vmatprep.subr.bf16.mxu0 0
    %1093 = vmatpush1.bf16.msra.mxu0 0
    %1094 = vmatprep.subr.bf16.mxu0 0
    %1095 = vmatpush1.bf16.msra.mxu0 0
    %1096 = vmatprep.subr.bf16.mxu0 0
    %1097 = vmatpush1.bf16.msra.mxu0 0
    %1098 = vmatprep.subr.bf16.mxu0 0
    %1099 = vmatpush1.bf16.msra.mxu0 0
    %1100 = vmatprep.subr.bf16.mxu0 0
    %1101 = vmatpush1.bf16.msra.mxu0 0
    %1102 = vmatprep.subr.bf16.mxu0 0
    %1103 = vmatpush1.bf16.msra.mxu0 0
    %1104 = vmatprep.subr.bf16.mxu0 0
    %1105 = vmatpush1.bf16.msra.mxu0 0
    %1106 = vmatprep.subr.bf16.mxu0 0
    %1107 = vmatpush1.bf16.msra.mxu0 0
    %1108 = vmatprep.subr.bf16.mxu0 0
    %1109 = vmatpush1.bf16.msra.mxu0 0
    %1110 = vmatprep.subr.bf16.mxu0 0
    %1111 = vmatpush1.bf16.msra.mxu0 0
    %1112 = vmatprep.subr.bf16.mxu0 0
    %1113 = vmatpush1.bf16.msra.mxu0 0
    %1114 = vmatprep.subr.bf16.mxu0 0
    %1115 = vmatpush1.bf16.msra.mxu0 0
    %1116 = vmatprep.mubr.bf16.mxu0 0
    %1117 = vmatmul.mubr.bf16.gmra.mrb[0].mxu0 %v1078
    %v1118 = vpop.f32.mrb[0].mxu0
    %v1119 = vadd.f32 0.0, %v1118
    %v1120 = vpop.f32.mrb[0].mxu0
    %v1121 = vpop.f32.mrb[0].mxu0
    %v1122 = vpop.f32.mrb[0].mxu0
    %1123 = vdwg.mxu0
    %v1125 = vunpack.c.l.b16 %v1060
    %1126 = vset.pattern.permute.xlu0 0
    %1127 = vperm.xlu0 %1126, %v1125
    %v1128 = vpop.permute.xlu0 %1127
    %v1129 = vlaneseq
    %v1130 = vshrl.u32 %v1129, 7
    %v1131 = vsub.s32 %v817, %v1130
    %v1132 = vrot.slane %v1128, %v1131
    %v1133 = vpack.c.b16 %v1132, %v1132
    %v1135 = vsel %vm865, %v1133, 0
    %v1138 = vsel %vm1080, %v257, 0
    %1140 = vmatprep.subr.bf16.mxu0 0
    %1141 = vmatpush1.bf16.msra.mxu0 %v1138
    %1142 = vmatprep.subr.bf16.mxu0 0
    %1143 = vmatpush1.bf16.msra.mxu0 0
    %1144 = vmatprep.subr.bf16.mxu0 0
    %1145 = vmatpush1.bf16.msra.mxu0 0
    %1146 = vmatprep.subr.bf16.mxu0 0
    %1147 = vmatpush1.bf16.msra.mxu0 0
    %1148 = vmatprep.subr.bf16.mxu0 0
    %1149 = vmatpush1.bf16.msra.mxu0 0
    %1150 = vmatprep.subr.bf16.mxu0 0
    %1151 = vmatpush1.bf16.msra.mxu0 0
    %1152 = vmatprep.subr.bf16.mxu0 0
    %1153 = vmatpush1.bf16.msra.mxu0 0
    %1154 = vmatprep.subr.bf16.mxu0 0
    %1155 = vmatpush1.bf16.msra.mxu0 0
    %1156 = vmatprep.subr.bf16.mxu0 0
    %1157 = vmatpush1.bf16.msra.mxu0 0
    %1158 = vmatprep.subr.bf16.mxu0 0
    %1159 = vmatpush1.bf16.msra.mxu0 0
    %1160 = vmatprep.subr.bf16.mxu0 0
    %1161 = vmatpush1.bf16.msra.mxu0 0
    %1162 = vmatprep.subr.bf16.mxu0 0
    %1163 = vmatpush1.bf16.msra.mxu0 0
    %1164 = vmatprep.subr.bf16.mxu0 0
    %1165 = vmatpush1.bf16.msra.mxu0 0
    %1166 = vmatprep.subr.bf16.mxu0 0
    %1167 = vmatpush1.bf16.msra.mxu0 0
    %1168 = vmatprep.subr.bf16.mxu0 0
    %1169 = vmatpush1.bf16.msra.mxu0 0
    %1170 = vmatprep.subr.bf16.mxu0 0
    %1171 = vmatpush1.bf16.msra.mxu0 0
    %1172 = vmatprep.mubr.bf16.mxu0 0
    %1173 = vmatmul.mubr.bf16.gmra.mrb[0].mxu0 %v1135
    %v1174 = vpop.f32.mrb[0].mxu0
    %v1175 = vadd.f32 0.0, %v1174
    %v1176 = vpop.f32.mrb[0].mxu0
    %v1177 = vpop.f32.mrb[0].mxu0
    %v1178 = vpop.f32.mrb[0].mxu0
    %1179 = vdwg.mxu0
    %v1181 = vunpack.c.l.b16 %v1061
    %1182 = vset.pattern.permute.xlu0 0
    %1183 = vperm.xlu0 %1182, %v1181
    %v1184 = vpop.permute.xlu0 %1183
    %v1185 = vlaneseq
    %v1186 = vshrl.u32 %v1185, 7
    %v1187 = vsub.s32 %v817, %v1186
    %v1188 = vrot.slane %v1184, %v1187
    %v1189 = vpack.c.b16 %v1188, %v1188
    %v1191 = vsel %vm865, %v1189, 0
    %v1194 = vsel %vm1080, %v258, 0
    %1196 = vmatprep.subr.bf16.mxu0 0
    %1197 = vmatpush1.bf16.msra.mxu0 %v1194
    %1198 = vmatprep.subr.bf16.mxu0 0
    %1199 = vmatpush1.bf16.msra.mxu0 0
    %1200 = vmatprep.subr.bf16.mxu0 0
    %1201 = vmatpush1.bf16.msra.mxu0 0
    %1202 = vmatprep.subr.bf16.mxu0 0
    %1203 = vmatpush1.bf16.msra.mxu0 0
    %1204 = vmatprep.subr.bf16.mxu0 0
    %1205 = vmatpush1.bf16.msra.mxu0 0
    %1206 = vmatprep.subr.bf16.mxu0 0
    %1207 = vmatpush1.bf16.msra.mxu0 0
    %1208 = vmatprep.subr.bf16.mxu0 0
    %1209 = vmatpush1.bf16.msra.mxu0 0
    %1210 = vmatprep.subr.bf16.mxu0 0
    %1211 = vmatpush1.bf16.msra.mxu0 0
    %1212 = vmatprep.subr.bf16.mxu0 0
    %1213 = vmatpush1.bf16.msra.mxu0 0
    %1214 = vmatprep.subr.bf16.mxu0 0
    %1215 = vmatpush1.bf16.msra.mxu0 0
    %1216 = vmatprep.subr.bf16.mxu0 0
    %1217 = vmatpush1.bf16.msra.mxu0 0
    %1218 = vmatprep.subr.bf16.mxu0 0
    %1219 = vmatpush1.bf16.msra.mxu0 0
    %1220 = vmatprep.subr.bf16.mxu0 0
    %1221 = vmatpush1.bf16.msra.mxu0 0
    %1222 = vmatprep.subr.bf16.mxu0 0
    %1223 = vmatpush1.bf16.msra.mxu0 0
    %1224 = vmatprep.subr.bf16.mxu0 0
    %1225 = vmatpush1.bf16.msra.mxu0 0
    %1226 = vmatprep.subr.bf16.mxu0 0
    %1227 = vmatpush1.bf16.msra.mxu0 0
    %1228 = vmatprep.mubr.bf16.mxu0 0
    %1229 = vmatmul.mubr.bf16.gmra.mrb[0].mxu0 %v1191
    %v1230 = vpop.f32.mrb[0].mxu0
    %v1231 = vadd.f32 0.0, %v1230
    %v1232 = vpop.f32.mrb[0].mxu0
    %v1233 = vpop.f32.mrb[0].mxu0
    %v1234 = vpop.f32.mrb[0].mxu0
    %1235 = vdwg.mxu0
    %v1237 = vunpack.c.l.b16 %v1062
    %1238 = vset.pattern.permute.xlu0 0
    %1239 = vperm.xlu0 %1238, %v1237
    %v1240 = vpop.permute.xlu0 %1239
    %v1241 = vlaneseq
    %v1242 = vshrl.u32 %v1241, 7
    %v1243 = vsub.s32 %v817, %v1242
    %v1244 = vrot.slane %v1240, %v1243
    %v1245 = vpack.c.b16 %v1244, %v1244
    %v1247 = vsel %vm865, %v1245, 0
    %v1250 = vsel %vm1080, %v259, 0
    %1252 = vmatprep.subr.bf16.mxu0 0
    %1253 = vmatpush1.bf16.msra.mxu0 %v1250
    %1254 = vmatprep.subr.bf16.mxu0 0
    %1255 = vmatpush1.bf16.msra.mxu0 0
    %1256 = vmatprep.subr.bf16.mxu0 0
    %1257 = vmatpush1.bf16.msra.mxu0 0
    %1258 = vmatprep.subr.bf16.mxu0 0
    %1259 = vmatpush1.bf16.msra.mxu0 0
    %1260 = vmatprep.subr.bf16.mxu0 0
    %1261 = vmatpush1.bf16.msra.mxu0 0
    %1262 = vmatprep.subr.bf16.mxu0 0
    %1263 = vmatpush1.bf16.msra.mxu0 0
    %1264 = vmatprep.subr.bf16.mxu0 0
    %1265 = vmatpush1.bf16.msra.mxu0 0
    %1266 = vmatprep.subr.bf16.mxu0 0
    %1267 = vmatpush1.bf16.msra.mxu0 0
    %1268 = vmatprep.subr.bf16.mxu0 0
    %1269 = vmatpush1.bf16.msra.mxu0 0
    %1270 = vmatprep.subr.bf16.mxu0 0
    %1271 = vmatpush1.bf16.msra.mxu0 0
    %1272 = vmatprep.subr.bf16.mxu0 0
    %1273 = vmatpush1.bf16.msra.mxu0 0
    %1274 = vmatprep.subr.bf16.mxu0 0
    %1275 = vmatpush1.bf16.msra.mxu0 0
    %1276 = vmatprep.subr.bf16.mxu0 0
    %1277 = vmatpush1.bf16.msra.mxu0 0
    %1278 = vmatprep.subr.bf16.mxu0 0
    %1279 = vmatpush1.bf16.msra.mxu0 0
    %1280 = vmatprep.subr.bf16.mxu0 0
    %1281 = vmatpush1.bf16.msra.mxu0 0
    %1282 = vmatprep.subr.bf16.mxu0 0
    %1283 = vmatpush1.bf16.msra.mxu0 0
    %1284 = vmatprep.mubr.bf16.mxu0 0
    %1285 = vmatmul.mubr.bf16.gmra.mrb[0].mxu0 %v1247
    %v1286 = vpop.f32.mrb[0].mxu0
    %v1287 = vadd.f32 0.0, %v1286
    %v1288 = vpop.f32.mrb[0].mxu0
    %v1289 = vpop.f32.mrb[0].mxu0
    %v1290 = vpop.f32.mrb[0].mxu0
    %1291 = vdwg.mxu0
    %v1293 = vunpack.c.l.b16 %v1063
    %1294 = vset.pattern.permute.xlu0 0
    %1295 = vperm.xlu0 %1294, %v1293
    %v1296 = vpop.permute.xlu0 %1295
    %v1297 = vlaneseq
    %v1298 = vshrl.u32 %v1297, 7
    %v1299 = vsub.s32 %v817, %v1298
    %v1300 = vrot.slane %v1296, %v1299
    %v1301 = vpack.c.b16 %v1300, %v1300
    %v1303 = vsel %vm865, %v1301, 0
    %v1306 = vsel %vm1080, %v260, 0
    %1308 = vmatprep.subr.bf16.mxu0 0
    %1309 = vmatpush1.bf16.msra.mxu0 %v1306
    %1310 = vmatprep.subr.bf16.mxu0 0
    %1311 = vmatpush1.bf16.msra.mxu0 0
    %1312 = vmatprep.subr.bf16.mxu0 0
    %1313 = vmatpush1.bf16.msra.mxu0 0
    %1314 = vmatprep.subr.bf16.mxu0 0
    %1315 = vmatpush1.bf16.msra.mxu0 0
    %1316 = vmatprep.subr.bf16.mxu0 0
    %1317 = vmatpush1.bf16.msra.mxu0 0
    %1318 = vmatprep.subr.bf16.mxu0 0
    %1319 = vmatpush1.bf16.msra.mxu0 0
    %1320 = vmatprep.subr.bf16.mxu0 0
    %1321 = vmatpush1.bf16.msra.mxu0 0
    %1322 = vmatprep.subr.bf16.mxu0 0
    %1323 = vmatpush1.bf16.msra.mxu0 0
    %1324 = vmatprep.subr.bf16.mxu0 0
    %1325 = vmatpush1.bf16.msra.mxu0 0
    %1326 = vmatprep.subr.bf16.mxu0 0
    %1327 = vmatpush1.bf16.msra.mxu0 0
    %1328 = vmatprep.subr.bf16.mxu0 0
    %1329 = vmatpush1.bf16.msra.mxu0 0
    %1330 = vmatprep.subr.bf16.mxu0 0
    %1331 = vmatpush1.bf16.msra.mxu0 0
    %1332 = vmatprep.subr.bf16.mxu0 0
    %1333 = vmatpush1.bf16.msra.mxu0 0
    %1334 = vmatprep.subr.bf16.mxu0 0
    %1335 = vmatpush1.bf16.msra.mxu0 0
    %1336 = vmatprep.subr.bf16.mxu0 0
    %1337 = vmatpush1.bf16.msra.mxu0 0
    %1338 = vmatprep.subr.bf16.mxu0 0
    %1339 = vmatpush1.bf16.msra.mxu0 0
    %1340 = vmatprep.mubr.bf16.mxu0 0
    %1341 = vmatmul.mubr.bf16.gmra.mrb[0].mxu0 %v1303
    %v1342 = vpop.f32.mrb[0].mxu0
    %v1343 = vadd.f32 0.0, %v1342
    %v1344 = vpop.f32.mrb[0].mxu0
    %v1345 = vpop.f32.mrb[0].mxu0
    %v1346 = vpop.f32.mrb[0].mxu0
    %1347 = vdwg.mxu0
    %v1349 = vunpack.c.l.b16 %v1064
    %1350 = vset.pattern.permute.xlu0 0
    %1351 = vperm.xlu0 %1350, %v1349
    %v1352 = vpop.permute.xlu0 %1351
    %v1353 = vlaneseq
    %v1354 = vshrl.u32 %v1353, 7
    %v1355 = vsub.s32 %v817, %v1354
    %v1356 = vrot.slane %v1352, %v1355
    %v1357 = vpack.c.b16 %v1356, %v1356
    %v1359 = vsel %vm865, %v1357, 0
    %v1362 = vsel %vm1080, %v261, 0
    %1364 = vmatprep.subr.bf16.mxu0 0
    %1365 = vmatpush1.bf16.msra.mxu0 %v1362
    %1366 = vmatprep.subr.bf16.mxu0 0
    %1367 = vmatpush1.bf16.msra.mxu0 0
    %1368 = vmatprep.subr.bf16.mxu0 0
    %1369 = vmatpush1.bf16.msra.mxu0 0
    %1370 = vmatprep.subr.bf16.mxu0 0
    %1371 = vmatpush1.bf16.msra.mxu0 0
    %1372 = vmatprep.subr.bf16.mxu0 0
    %1373 = vmatpush1.bf16.msra.mxu0 0
    %1374 = vmatprep.subr.bf16.mxu0 0
    %1375 = vmatpush1.bf16.msra.mxu0 0
    %1376 = vmatprep.subr.bf16.mxu0 0
    %1377 = vmatpush1.bf16.msra.mxu0 0
    %1378 = vmatprep.subr.bf16.mxu0 0
    %1379 = vmatpush1.bf16.msra.mxu0 0
    %1380 = vmatprep.subr.bf16.mxu0 0
    %1381 = vmatpush1.bf16.msra.mxu0 0
    %1382 = vmatprep.subr.bf16.mxu0 0
    %1383 = vmatpush1.bf16.msra.mxu0 0
    %1384 = vmatprep.subr.bf16.mxu0 0
    %1385 = vmatpush1.bf16.msra.mxu0 0
    %1386 = vmatprep.subr.bf16.mxu0 0
    %1387 = vmatpush1.bf16.msra.mxu0 0
    %1388 = vmatprep.subr.bf16.mxu0 0
    %1389 = vmatpush1.bf16.msra.mxu0 0
    %1390 = vmatprep.subr.bf16.mxu0 0
    %1391 = vmatpush1.bf16.msra.mxu0 0
    %1392 = vmatprep.subr.bf16.mxu0 0
    %1393 = vmatpush1.bf16.msra.mxu0 0
    %1394 = vmatprep.subr.bf16.mxu0 0
    %1395 = vmatpush1.bf16.msra.mxu0 0
    %1396 = vmatprep.mubr.bf16.mxu0 0
    %1397 = vmatmul.mubr.bf16.gmra.mrb[0].mxu0 %v1359
    %v1398 = vpop.f32.mrb[0].mxu0
    %v1399 = vadd.f32 0.0, %v1398
    %v1400 = vpop.f32.mrb[0].mxu0
    %v1401 = vpop.f32.mrb[0].mxu0
    %v1402 = vpop.f32.mrb[0].mxu0
    %1403 = vdwg.mxu0
    %v1405 = vunpack.c.l.b16 %v1065
    %1406 = vset.pattern.permute.xlu0 0
    %1407 = vperm.xlu0 %1406, %v1405
    %v1408 = vpop.permute.xlu0 %1407
    %v1409 = vlaneseq
    %v1410 = vshrl.u32 %v1409, 7
    %v1411 = vsub.s32 %v817, %v1410
    %v1412 = vrot.slane %v1408, %v1411
    %v1413 = vpack.c.b16 %v1412, %v1412
    %v1415 = vsel %vm865, %v1413, 0
    %v1418 = vsel %vm1080, %v262, 0
    %1420 = vmatprep.subr.bf16.mxu0 0
    %1421 = vmatpush1.bf16.msra.mxu0 %v1418
    %1422 = vmatprep.subr.bf16.mxu0 0
    %1423 = vmatpush1.bf16.msra.mxu0 0
    %1424 = vmatprep.subr.bf16.mxu0 0
    %1425 = vmatpush1.bf16.msra.mxu0 0
    %1426 = vmatprep.subr.bf16.mxu0 0
    %1427 = vmatpush1.bf16.msra.mxu0 0
    %1428 = vmatprep.subr.bf16.mxu0 0
    %1429 = vmatpush1.bf16.msra.mxu0 0
    %1430 = vmatprep.subr.bf16.mxu0 0
    %1431 = vmatpush1.bf16.msra.mxu0 0
    %1432 = vmatprep.subr.bf16.mxu0 0
    %1433 = vmatpush1.bf16.msra.mxu0 0
    %1434 = vmatprep.subr.bf16.mxu0 0
    %1435 = vmatpush1.bf16.msra.mxu0 0
    %1436 = vmatprep.subr.bf16.mxu0 0
    %1437 = vmatpush1.bf16.msra.mxu0 0
    %1438 = vmatprep.subr.bf16.mxu0 0
    %1439 = vmatpush1.bf16.msra.mxu0 0
    %1440 = vmatprep.subr.bf16.mxu0 0
    %1441 = vmatpush1.bf16.msra.mxu0 0
    %1442 = vmatprep.subr.bf16.mxu0 0
    %1443 = vmatpush1.bf16.msra.mxu0 0
    %1444 = vmatprep.subr.bf16.mxu0 0
    %1445 = vmatpush1.bf16.msra.mxu0 0
    %1446 = vmatprep.subr.bf16.mxu0 0
    %1447 = vmatpush1.bf16.msra.mxu0 0
    %1448 = vmatprep.subr.bf16.mxu0 0
    %1449 = vmatpush1.bf16.msra.mxu0 0
    %1450 = vmatprep.subr.bf16.mxu0 0
    %1451 = vmatpush1.bf16.msra.mxu0 0
    %1452 = vmatprep.mubr.bf16.mxu0 0
    %1453 = vmatmul.mubr.bf16.gmra.mrb[0].mxu0 %v1415
    %v1454 = vpop.f32.mrb[0].mxu0
    %v1455 = vadd.f32 0.0, %v1454
    %v1456 = vpop.f32.mrb[0].mxu0
    %v1457 = vpop.f32.mrb[0].mxu0
    %v1458 = vpop.f32.mrb[0].mxu0
    %1459 = vdwg.mxu0
    %v1461 = vunpack.c.l.b16 %v1066
    %1462 = vset.pattern.permute.xlu0 0
    %1463 = vperm.xlu0 %1462, %v1461
    %v1464 = vpop.permute.xlu0 %1463
    %v1465 = vlaneseq
    %v1466 = vshrl.u32 %v1465, 7
    %v1467 = vsub.s32 %v817, %v1466
    %v1468 = vrot.slane %v1464, %v1467
    %v1469 = vpack.c.b16 %v1468, %v1468
    %v1471 = vsel %vm865, %v1469, 0
    %v1474 = vsel %vm1080, %v263, 0
    %1476 = vmatprep.subr.bf16.mxu0 0
    %1477 = vmatpush1.bf16.msra.mxu0 %v1474
    %1478 = vmatprep.subr.bf16.mxu0 0
    %1479 = vmatpush1.bf16.msra.mxu0 0
    %1480 = vmatprep.subr.bf16.mxu0 0
    %1481 = vmatpush1.bf16.msra.mxu0 0
    %1482 = vmatprep.subr.bf16.mxu0 0
    %1483 = vmatpush1.bf16.msra.mxu0 0
    %1484 = vmatprep.subr.bf16.mxu0 0
    %1485 = vmatpush1.bf16.msra.mxu0 0
    %1486 = vmatprep.subr.bf16.mxu0 0
    %1487 = vmatpush1.bf16.msra.mxu0 0
    %1488 = vmatprep.subr.bf16.mxu0 0
    %1489 = vmatpush1.bf16.msra.mxu0 0
    %1490 = vmatprep.subr.bf16.mxu0 0
    %1491 = vmatpush1.bf16.msra.mxu0 0
    %1492 = vmatprep.subr.bf16.mxu0 0
    %1493 = vmatpush1.bf16.msra.mxu0 0
    %1494 = vmatprep.subr.bf16.mxu0 0
    %1495 = vmatpush1.bf16.msra.mxu0 0
    %1496 = vmatprep.subr.bf16.mxu0 0
    %1497 = vmatpush1.bf16.msra.mxu0 0
    %1498 = vmatprep.subr.bf16.mxu0 0
    %1499 = vmatpush1.bf16.msra.mxu0 0
    %1500 = vmatprep.subr.bf16.mxu0 0
    %1501 = vmatpush1.bf16.msra.mxu0 0
    %1502 = vmatprep.subr.bf16.mxu0 0
    %1503 = vmatpush1.bf16.msra.mxu0 0
    %1504 = vmatprep.subr.bf16.mxu0 0
    %1505 = vmatpush1.bf16.msra.mxu0 0
    %1506 = vmatprep.subr.bf16.mxu0 0
    %1507 = vmatpush1.bf16.msra.mxu0 0
    %1508 = vmatprep.mubr.bf16.mxu0 0
    %1509 = vmatmul.mubr.bf16.gmra.mrb[0].mxu0 %v1471
    %v1510 = vpop.f32.mrb[0].mxu0
    %v1511 = vadd.f32 0.0, %v1510
    %v1512 = vpop.f32.mrb[0].mxu0
    %v1513 = vpop.f32.mrb[0].mxu0
    %v1514 = vpop.f32.mrb[0].mxu0
    %1515 = vdwg.mxu0
    %v1524 = vrot.slane %v1175, 7
    %v1525 = vsel %vm850, %v1524, %v1119
    %v1526 = vrot.slane %v1231, 6
    %v1527 = vsel %vm852, %v1526, %v1525
    %v1528 = vrot.slane %v1287, 5
    %v1529 = vsel %vm854, %v1528, %v1527
    %v1530 = vrot.slane %v1343, 4
    %v1531 = vsel %vm856, %v1530, %v1529
    %v1532 = vrot.slane %v1399, 3
    %v1533 = vsel %vm858, %v1532, %v1531
    %v1534 = vrot.slane %v1455, 2
    %v1535 = vsel %vm860, %v1534, %v1533
    %v1536 = vrot.slane %v1511, 1
    %v1537 = vsel %vm862, %v1536, %v1535
    %1538 = vrot.lane.b32.xlu0 %v1537, 32
    %v1539 = vpop.permute.xlu0 %1538
    %1542 = vrot.lane.b32.xlu0 %v513, 32
    %v1543 = vpop.permute.xlu0 %1542
    %v1545 = vsel %vm357, %v352, %v1539
    %v1546 = vsel %vm384, %v1545, %v1543
    %v1547 = vpack.c.bf16 %v1546, %v1546
    %v1560 = vunpack.c.l.b16 %v310
    %v1561 = vunpack.c.l.b16 %v311
    %v1562 = vunpack.c.l.b16 %v312
    %v1563 = vunpack.c.l.b16 %v313
    %v1564 = vunpack.c.l.b16 %v314
    %v1565 = vunpack.c.l.b16 %v315
    %v1566 = vunpack.c.l.b16 %v316
    %v1567 = vunpack.c.l.b16 %v317
    %v1568 = vunpack.c.l.b16 %v318
    %v1569 = vunpack.c.l.b16 %v319
    %v1570 = vunpack.c.l.b16 %v320
    %v1571 = vunpack.c.l.b16 %v321
    %v1572 = vpack.c.b16 %v1561, %v1560
    %v1573 = vpack.c.b16 %v1563, %v1562
    %v1574 = vpack.c.b16 %v1565, %v1564
    %v1575 = vpack.c.b16 %v1567, %v1566
    %v1576 = vpack.c.b16 %v1569, %v1568
    %v1577 = vpack.c.b16 %v1571, %v1570
    %vm1584 = vcmask 785408
    %v1586 = vsel %vm1584, %v1547, 0
    %1588 = vmatprep.subr.bf16.mxu0 0
    %1589 = vmatpush1.bf16.msra.mxu0 %v1572
    %1590 = vmatprep.subr.bf16.mxu0 0
    %1591 = vmatpush1.bf16.msra.mxu0 %v1573
    %1592 = vmatprep.subr.bf16.mxu0 0
    %1593 = vmatpush1.bf16.msra.mxu0 %v1574
    %1594 = vmatprep.subr.bf16.mxu0 0
    %1595 = vmatpush1.bf16.msra.mxu0 %v1575
    %1596 = vmatprep.subr.bf16.mxu0 0
    %1597 = vmatpush1.bf16.msra.mxu0 %v1576
    %1598 = vmatprep.subr.bf16.mxu0 0
    %1599 = vmatpush1.bf16.msra.mxu0 %v1577
    %1600 = vmatprep.subr.bf16.mxu0 0
    %1601 = vmatpush1.bf16.msra.mxu0 0
    %1602 = vmatprep.subr.bf16.mxu0 0
    %1603 = vmatpush1.bf16.msra.mxu0 0
    %1604 = vmatprep.subr.bf16.mxu0 0
    %1605 = vmatpush1.bf16.msra.mxu0 0
    %1606 = vmatprep.subr.bf16.mxu0 0
    %1607 = vmatpush1.bf16.msra.mxu0 0
    %1608 = vmatprep.subr.bf16.mxu0 0
    %1609 = vmatpush1.bf16.msra.mxu0 0
    %1610 = vmatprep.subr.bf16.mxu0 0
    %1611 = vmatpush1.bf16.msra.mxu0 0
    %1612 = vmatprep.subr.bf16.mxu0 0
    %1613 = vmatpush1.bf16.msra.mxu0 0
    %1614 = vmatprep.subr.bf16.mxu0 0
    %1615 = vmatpush1.bf16.msra.mxu0 0
    %1616 = vmatprep.subr.bf16.mxu0 0
    %1617 = vmatpush1.bf16.msra.mxu0 0
    %1618 = vmatprep.subr.bf16.mxu0 0
    %1619 = vmatpush1.bf16.msra.mxu0 0
    %1620 = vmatprep.mubr.bf16.mxu0 0
    %1621 = vmatmul.mubr.bf16.gmra.mrb[0].mxu0 %v1586
    %v1622 = vpop.f32.mrb[0].mxu0
    %v1623 = vadd.f32 %v327, %v1622
    %v1624 = vpop.f32.mrb[0].mxu0
    %v1625 = vpop.f32.mrb[0].mxu0
    %v1626 = vpop.f32.mrb[0].mxu0
    %1627 = vdwg.mxu0
    %v1628 = vxor.u32 %v1623, 2147483648
    %v1629 = vmul.f32 %v1628, 1.442695
    %v1630 = vpow.pop %v1629
    %v1631 = vadd.f32 %v1630, 1.0
    %v1632 = vrcp.pop %v1631
    %v1633 = vmul.f32 1.0, %v1632
    %v1646 = vunpack.c.l.b16 %v329
    %v1647 = vunpack.c.l.b16 %v330
    %v1648 = vunpack.c.l.b16 %v331
    %v1649 = vunpack.c.l.b16 %v332
    %v1650 = vunpack.c.l.b16 %v333
    %v1651 = vunpack.c.l.b16 %v334
    %v1652 = vunpack.c.l.b16 %v335
    %v1653 = vunpack.c.l.b16 %v336
    %v1654 = vunpack.c.l.b16 %v337
    %v1655 = vunpack.c.l.b16 %v338
    %v1656 = vunpack.c.l.b16 %v339
    %v1657 = vunpack.c.l.b16 %v340
    %v1658 = vpack.c.b16 %v1647, %v1646
    %v1659 = vpack.c.b16 %v1649, %v1648
    %v1660 = vpack.c.b16 %v1651, %v1650
    %v1661 = vpack.c.b16 %v1653, %v1652
    %v1662 = vpack.c.b16 %v1655, %v1654
    %v1663 = vpack.c.b16 %v1657, %v1656
    %1670 = vmatprep.subr.bf16.mxu0 0
    %1671 = vmatpush1.bf16.msra.mxu0 %v1658
    %1672 = vmatprep.subr.bf16.mxu0 0
    %1673 = vmatpush1.bf16.msra.mxu0 %v1659
    %1674 = vmatprep.subr.bf16.mxu0 0
    %1675 = vmatpush1.bf16.msra.mxu0 %v1660
    %1676 = vmatprep.subr.bf16.mxu0 0
    %1677 = vmatpush1.bf16.msra.mxu0 %v1661
    %1678 = vmatprep.subr.bf16.mxu0 0
    %1679 = vmatpush1.bf16.msra.mxu0 %v1662
    %1680 = vmatprep.subr.bf16.mxu0 0
    %1681 = vmatpush1.bf16.msra.mxu0 %v1663
    %1682 = vmatprep.subr.bf16.mxu0 0
    %1683 = vmatpush1.bf16.msra.mxu0 0
    %1684 = vmatprep.subr.bf16.mxu0 0
    %1685 = vmatpush1.bf16.msra.mxu0 0
    %1686 = vmatprep.subr.bf16.mxu0 0
    %1687 = vmatpush1.bf16.msra.mxu0 0
    %1688 = vmatprep.subr.bf16.mxu0 0
    %1689 = vmatpush1.bf16.msra.mxu0 0
    %1690 = vmatprep.subr.bf16.mxu0 0
    %1691 = vmatpush1.bf16.msra.mxu0 0
    %1692 = vmatprep.subr.bf16.mxu0 0
    %1693 = vmatpush1.bf16.msra.mxu0 0
    %1694 = vmatprep.subr.bf16.mxu0 0
    %1695 = vmatpush1.bf16.msra.mxu0 0
    %1696 = vmatprep.subr.bf16.mxu0 0
    %1697 = vmatpush1.bf16.msra.mxu0 0
    %1698 = vmatprep.subr.bf16.mxu0 0
    %1699 = vmatpush1.bf16.msra.mxu0 0
    %1700 = vmatprep.subr.bf16.mxu0 0
    %1701 = vmatpush1.bf16.msra.mxu0 0
    %1702 = vmatprep.mubr.bf16.mxu0 0
    %1703 = vmatmul.mubr.bf16.gmra.mrb[0].mxu0 %v1586
    %v1704 = vpop.f32.mrb[0].mxu0
    %v1705 = vadd.f32 %v346, %v1704
    %v1706 = vpop.f32.mrb[0].mxu0
    %v1707 = vpop.f32.mrb[0].mxu0
    %v1708 = vpop.f32.mrb[0].mxu0
    %1709 = vdwg.mxu0
    %1711 = vrot.lane.b32.xlu0 %v1705, 112
    %v1712 = vpop.permute.xlu0 %1711
    %v1714 = vmax.f32 %v1705, %v1712
    %v1715 = vpack.c.bf16 %v1714, %v1714
    %v1718 = vunpack.c.l.b16 %v348
    %v1719 = vunpack.c.l.b16 %v349
    %v1720 = vpack.c.b16 %v1719, %v1718
    %vm1722 = vcmask 130048
    %v1724 = vsel %vm1722, %v1715, 0
    %1726 = vmatprep.subr.bf16.mxu0 0
    %1727 = vmatpush1.bf16.msra.mxu0 %v1720
    %1728 = vmatprep.subr.bf16.mxu0 0
    %1729 = vmatpush1.bf16.msra.mxu0 0
    %1730 = vmatprep.subr.bf16.mxu0 0
    %1731 = vmatpush1.bf16.msra.mxu0 0
    %1732 = vmatprep.subr.bf16.mxu0 0
    %1733 = vmatpush1.bf16.msra.mxu0 0
    %1734 = vmatprep.subr.bf16.mxu0 0
    %1735 = vmatpush1.bf16.msra.mxu0 0
    %1736 = vmatprep.subr.bf16.mxu0 0
    %1737 = vmatpush1.bf16.msra.mxu0 0
    %1738 = vmatprep.subr.bf16.mxu0 0
    %1739 = vmatpush1.bf16.msra.mxu0 0
    %1740 = vmatprep.subr.bf16.mxu0 0
    %1741 = vmatpush1.bf16.msra.mxu0 0
    %1742 = vmatprep.subr.bf16.mxu0 0
    %1743 = vmatpush1.bf16.msra.mxu0 0
    %1744 = vmatprep.subr.bf16.mxu0 0
    %1745 = vmatpush1.bf16.msra.mxu0 0
    %1746 = vmatprep.subr.bf16.mxu0 0
    %1747 = vmatpush1.bf16.msra.mxu0 0
    %1748 = vmatprep.subr.bf16.mxu0 0
    %1749 = vmatpush1.bf16.msra.mxu0 0
    %1750 = vmatprep.subr.bf16.mxu0 0
    %1751 = vmatpush1.bf16.msra.mxu0 0
    %1752 = vmatprep.subr.bf16.mxu0 0
    %1753 = vmatpush1.bf16.msra.mxu0 0
    %1754 = vmatprep.subr.bf16.mxu0 0
    %1755 = vmatpush1.bf16.msra.mxu0 0
    %1756 = vmatprep.subr.bf16.mxu0 0
    %1757 = vmatpush1.bf16.msra.mxu0 0
    %1758 = vmatprep.mubr.bf16.mxu0 0
    %1759 = vmatmul.mubr.bf16.gmra.mrb[0].mxu0 %v1724
    %v1760 = vpop.f32.mrb[0].mxu0
    %v1761 = vadd.f32 0.0, %v1760
    %v1762 = vpop.f32.mrb[0].mxu0
    %v1763 = vpop.f32.mrb[0].mxu0
    %v1764 = vpop.f32.mrb[0].mxu0
    %1765 = vdwg.mxu0
    %v1766 = vsel %vm384, %v1761, -inf
    %1767 = vmax.xlane.f32.xlu0 %v1766
    %v1768 = vpop.xlane.xlu0 %1767
    %v1769 = vsub.f32 %v1761, %v1768
    %v1770 = vmul.f32 %v1769, 1.442695
    %v1771 = vpow.pop %v1770
    %v1772 = vsel %vm384, %v1771, 0.0
    %1773 = vadd.xlane.f32.xlu0 %v1772
    %v1774 = vpop.xlane.xlu0 %1773
    %v1775 = vrcp.pop %v1774
    %v1776 = vmul.f32 %v1771, %v1775
    %v1777 = vsub.f32 1.0, %v1633
    %1779 = vset.pattern.permute.xlu0 0
    %1780 = vperm.xlu0 %1779, %v1777
    %v1781 = vpop.permute.xlu0 %1780
    %v1783 = vmul.f32 %v1781, %v1776
    %1785 = vset.pattern.permute.xlu0 0
    %1786 = vperm.xlu0 %1785, %v1633
    %v1787 = vpop.permute.xlu0 %1786
    %1797 = vset.pattern.permute.xlu0 0
    %1798 = vperm.xlu0 %1797, %v1051
    %v1799 = vpop.permute.xlu0 %1798
    %1800 = vset.pattern.permute.xlu0 0
    %1801 = vperm.xlu0 %1800, %v1052
    %v1802 = vpop.permute.xlu0 %1801
    %1803 = vset.pattern.permute.xlu0 0
    %1804 = vperm.xlu0 %1803, %v1053
    %v1805 = vpop.permute.xlu0 %1804
    %1806 = vset.pattern.permute.xlu0 0
    %1807 = vperm.xlu0 %1806, %v1054
    %v1808 = vpop.permute.xlu0 %1807
    %1809 = vset.pattern.permute.xlu0 0
    %1810 = vperm.xlu0 %1809, %v1055
    %v1811 = vpop.permute.xlu0 %1810
    %1812 = vset.pattern.permute.xlu0 0
    %1813 = vperm.xlu0 %1812, %v1056
    %v1814 = vpop.permute.xlu0 %1813
    %1815 = vset.pattern.permute.xlu0 0
    %1816 = vperm.xlu0 %1815, %v1057
    %v1817 = vpop.permute.xlu0 %1816
    %1818 = vset.pattern.permute.xlu0 0
    %1819 = vperm.xlu0 %1818, %v1058
    %v1820 = vpop.permute.xlu0 %1819
    %v1821 = vlaneseq
    %v1822 = vshrl.u32 %v1821, 7
    %v1823 = vsub.s32 %v817, %v1822
    %v1824 = vrot.slane %v1799, %v1823
    %v1825 = vlaneseq
    %v1826 = vshrl.u32 %v1825, 7
    %v1827 = vsub.s32 %v817, %v1826
    %v1828 = vrot.slane %v1802, %v1827
    %v1829 = vlaneseq
    %v1830 = vshrl.u32 %v1829, 7
    %v1831 = vsub.s32 %v817, %v1830
    %v1832 = vrot.slane %v1805, %v1831
    %v1833 = vlaneseq
    %v1834 = vshrl.u32 %v1833, 7
    %v1835 = vsub.s32 %v817, %v1834
    %v1836 = vrot.slane %v1808, %v1835
    %v1837 = vlaneseq
    %v1838 = vshrl.u32 %v1837, 7
    %v1839 = vsub.s32 %v817, %v1838
    %v1840 = vrot.slane %v1811, %v1839
    %v1841 = vlaneseq
    %v1842 = vshrl.u32 %v1841, 7
    %v1843 = vsub.s32 %v817, %v1842
    %v1844 = vrot.slane %v1814, %v1843
    %v1845 = vlaneseq
    %v1846 = vshrl.u32 %v1845, 7
    %v1847 = vsub.s32 %v817, %v1846
    %v1848 = vrot.slane %v1817, %v1847
    %v1849 = vlaneseq
    %v1850 = vshrl.u32 %v1849, 7
    %v1851 = vsub.s32 %v817, %v1850
    %v1852 = vrot.slane %v1820, %v1851
    %v1853 = vsel %vm850, %v1828, %v1824
    %v1854 = vsel %vm852, %v1832, %v1853
    %v1855 = vsel %vm854, %v1836, %v1854
    %v1856 = vsel %vm856, %v1840, %v1855
    %v1857 = vsel %vm858, %v1844, %v1856
    %v1858 = vsel %vm860, %v1848, %v1857
    %v1859 = vsel %vm862, %v1852, %v1858
    %v1861 = vmul.f32 %v1787, %v1859
    %1863 = vrot.lane.b32.xlu0 %v1861, 64
    %v1864 = vpop.permute.xlu0 %1863
    %v1866 = vsel %vm384, %v1783, %v1864
    %vm1867 = vcmask 588800
    %v1868 = vsel %vm1867, %v1866, 0.0
    %v1869 = vadd.f32 %v1868, 1e-12
    %v1870 = vlog2.pop %v1869
    %v1871 = vmul.f32 %v1870, 0.6931472
    %v1873 = vcombine.high %v1871, %v1871
    %v1875 = vunpack.c.l.s4 1966171168
    %v1876 = vunpack.c.0.s8 %v1875
    %v1877 = vlaneseq
    %v1878 = vshrl.u32 %v1877, 7
    %v1879 = vsub.s32 %v1876, %v1878
    %v1880 = vrot.slane %v1871, %v1879
    %v1882 = vunpack.c.l.s4 1966171168
    %v1883 = vunpack.c.0.s8 %v1882
    %v1884 = vlaneseq
    %v1885 = vshrl.u32 %v1884, 7
    %v1886 = vsub.s32 %v1883, %v1885
    %v1887 = vrot.slane %v1873, %v1886
    %v1888 = vcombine.high %v1880, %v1880
    %v1889 = vcombine.high %v1887, %v1887
    %v1891 = vunpack.c.l.s4 1966171168
    %v1892 = vunpack.c.0.s8 %v1891
    %v1893 = vlaneseq
    %v1894 = vshrl.u32 %v1893, 7
    %v1895 = vsub.s32 %v1892, %v1894
    %v1896 = vrot.slane %v1880, %v1895
    %v1898 = vunpack.c.l.s4 1966171168
    %v1899 = vunpack.c.0.s8 %v1898
    %v1900 = vlaneseq
    %v1901 = vshrl.u32 %v1900, 7
    %v1902 = vsub.s32 %v1899, %v1901
    %v1903 = vrot.slane %v1887, %v1902
    %v1905 = vunpack.c.l.s4 1966171168
    %v1906 = vunpack.c.0.s8 %v1905
    %v1907 = vlaneseq
    %v1908 = vshrl.u32 %v1907, 7
    %v1909 = vsub.s32 %v1906, %v1908
    %v1910 = vrot.slane %v1888, %v1909
    %v1912 = vunpack.c.l.s4 1966171168
    %v1913 = vunpack.c.0.s8 %v1912
    %v1914 = vlaneseq
    %v1915 = vshrl.u32 %v1914, 7
    %v1916 = vsub.s32 %v1913, %v1915
    %v1917 = vrot.slane %v1889, %v1916
    %v1918 = vcombine.high %v1896, %v1896
    %v1919 = vcombine.high %v1903, %v1903
    %v1920 = vcombine.high %v1910, %v1910
    %v1921 = vcombine.high %v1917, %v1917
    %1930 = vst [vmem:[#allocation29] sm:$0x1] %v1896
    %1931 = vst [vmem:[#allocation29 + $0x8] sm:$0x1] %v1910
    %1932 = vst [vmem:[#allocation29 + $0x10] sm:$0x1] %v1918
    %1933 = vst [vmem:[#allocation29 + $0x18] sm:$0x1] %v1920
    %1934 = vst [vmem:[#allocation29 + $0x20] sm:$0x1] %v1903
    %1935 = vst [vmem:[#allocation29 + $0x28] sm:$0x1] %v1917
    %1936 = vst [vmem:[#allocation29 + $0x30] sm:$0x1] %v1919
    %1937 = vst [vmem:[#allocation29 + $0x38] sm:$0x1] %v1921
    %s1938 = scalar_lea.vmem [#allocation5], 8
    %v1939 = vld [vmem:[%s1938] sm:$0xff]
    %v1940 = vsel %vm357, %v1939, %v1539
    %v1941 = vpack.c.bf16 %v1940, %v1940
    %v1943 = vsel %vm384, %v1941, 0
    %1945 = vmatprep.subr.bf16.mxu0 0
    %1946 = vmatpush1.bf16.msra.mxu0 %v376
    %1947 = vmatprep.subr.bf16.mxu0 0
    %1948 = vmatpush1.bf16.msra.mxu0 %v377
    %1949 = vmatprep.subr.bf16.mxu0 0
    %1950 = vmatpush1.bf16.msra.mxu0 %v378
    %1951 = vmatprep.subr.bf16.mxu0 0
    %1952 = vmatpush1.bf16.msra.mxu0 %v379
    %1953 = vmatprep.subr.bf16.mxu0 0
    %1954 = vmatpush1.bf16.msra.mxu0 0
    %1955 = vmatprep.subr.bf16.mxu0 0
    %1956 = vmatpush1.bf16.msra.mxu0 0
    %1957 = vmatprep.subr.bf16.mxu0 0
    %1958 = vmatpush1.bf16.msra.mxu0 0
    %1959 = vmatprep.subr.bf16.mxu0 0
    %1960 = vmatpush1.bf16.msra.mxu0 0
    %1961 = vmatprep.subr.bf16.mxu0 0
    %1962 = vmatpush1.bf16.msra.mxu0 0
    %1963 = vmatprep.subr.bf16.mxu0 0
    %1964 = vmatpush1.bf16.msra.mxu0 0
    %1965 = vmatprep.subr.bf16.mxu0 0
    %1966 = vmatpush1.bf16.msra.mxu0 0
    %1967 = vmatprep.subr.bf16.mxu0 0
    %1968 = vmatpush1.bf16.msra.mxu0 0
    %1969 = vmatprep.subr.bf16.mxu0 0
    %1970 = vmatpush1.bf16.msra.mxu0 0
    %1971 = vmatprep.subr.bf16.mxu0 0
    %1972 = vmatpush1.bf16.msra.mxu0 0
    %1973 = vmatprep.subr.bf16.mxu0 0
    %1974 = vmatpush1.bf16.msra.mxu0 0
    %1975 = vmatprep.subr.bf16.mxu0 0
    %1976 = vmatpush1.bf16.msra.mxu0 0
    %1977 = vmatprep.mubr.bf16.mxu0 0
    %1978 = vmatmul.mubr.bf16.gmra.mrb[0].mxu0 %v1943
    %v1979 = vpop.f32.mrb[0].mxu0
    %v1980 = vadd.f32 %v297, %v1979
    %v1981 = vpop.f32.mrb[0].mxu0
    %v1982 = vpop.f32.mrb[0].mxu0
    %v1983 = vpop.f32.mrb[0].mxu0
    %1984 = vdwg.mxu0
    %1985 = vmatprep.subr.bf16.mxu0 0
    %1986 = vmatpush1.bf16.msra.mxu0 %v437
    %1987 = vmatprep.subr.bf16.mxu0 0
    %1988 = vmatpush1.bf16.msra.mxu0 %v438
    %1989 = vmatprep.subr.bf16.mxu0 0
    %1990 = vmatpush1.bf16.msra.mxu0 0
    %1991 = vmatprep.subr.bf16.mxu0 0
    %1992 = vmatpush1.bf16.msra.mxu0 0
    %1993 = vmatprep.subr.bf16.mxu0 0
    %1994 = vmatpush1.bf16.msra.mxu0 0
    %1995 = vmatprep.subr.bf16.mxu0 0
    %1996 = vmatpush1.bf16.msra.mxu0 0
    %1997 = vmatprep.subr.bf16.mxu0 0
    %1998 = vmatpush1.bf16.msra.mxu0 0
    %1999 = vmatprep.subr.bf16.mxu0 0
    %2000 = vmatpush1.bf16.msra.mxu0 0
    %2001 = vmatprep.subr.bf16.mxu0 0
    %2002 = vmatpush1.bf16.msra.mxu0 0
    %2003 = vmatprep.subr.bf16.mxu0 0
    %2004 = vmatpush1.bf16.msra.mxu0 0
    %2005 = vmatprep.subr.bf16.mxu0 0
    %2006 = vmatpush1.bf16.msra.mxu0 0
    %2007 = vmatprep.subr.bf16.mxu0 0
    %2008 = vmatpush1.bf16.msra.mxu0 0
    %2009 = vmatprep.subr.bf16.mxu0 0
    %2010 = vmatpush1.bf16.msra.mxu0 0
    %2011 = vmatprep.subr.bf16.mxu0 0
    %2012 = vmatpush1.bf16.msra.mxu0 0
    %2013 = vmatprep.subr.bf16.mxu0 0
    %2014 = vmatpush1.bf16.msra.mxu0 0
    %2015 = vmatprep.subr.bf16.mxu0 0
    %2016 = vmatpush1.bf16.msra.mxu0 0
    %2017 = vmatprep.mubr.bf16.mxu0 0
    %2018 = vmatmul.mubr.bf16.gmra.mrb[0].mxu0 %v531
    %v2019 = vpop.f32.mrb[0].mxu0
    %v2020 = vadd.f32 %v304, %v2019
    %v2021 = vpop.f32.mrb[0].mxu0
    %v2022 = vpop.f32.mrb[0].mxu0
    %v2023 = vpop.f32.mrb[0].mxu0
    %2024 = vdwg.mxu0
    %v2025 = vadd.f32 %v1980, %v2020
    %v2026 = vxor.u32 %v2025, 2147483648
    %v2027 = vmul.f32 %v2026, 1.442695
    %v2028 = vpow.pop %v2027
    %v2029 = vadd.f32 %v2028, 1.0
    %v2030 = vrcp.pop %v2029
    %v2031 = vmul.f32 1.0, %v2030
    %2033 = vrot.lane.b32.xlu0 %v2020, 64
    %v2034 = vpop.permute.xlu0 %2033
    %v2036 = vmul.f32 %v2031, %v2034
    %2038 = vrot.lane.b32.xlu0 %v2036, 64
    %v2039 = vpop.permute.xlu0 %2038
    %v2041 = vadd.f32 %v1980, %v2039
    %v2042 = vtanh.pop %v2041
    %v2043 = vsub.f32 1.0, %v2031
    %2045 = vrot.lane.b32.xlu0 %v2042, 96
    %v2046 = vpop.permute.xlu0 %2045
    %v2048 = vmul.f32 %v2043, %v2046
    %v2049 = vmul.f32 %v2031, %v513
    %v2050 = vadd.f32 %v2048, %v2049
    %v2051 = vpack.c.bf16 %v2050, %v2050
    %2053 = vrot.lane.b32.xlu0 %v2051, 96
    %v2054 = vpop.permute.xlu0 %2053
    %v2056 = vsel %vm357, %v2054, 0
    %2058 = vmatprep.subr.bf16.mxu0 0
    %2059 = vmatpush1.bf16.msra.mxu0 %v526
    %2060 = vmatprep.subr.bf16.mxu0 0
    %2061 = vmatpush1.bf16.msra.mxu0 %v527
    %2062 = vmatprep.subr.bf16.mxu0 0
    %2063 = vmatpush1.bf16.msra.mxu0 0
    %2064 = vmatprep.subr.bf16.mxu0 0
    %2065 = vmatpush1.bf16.msra.mxu0 0
    %2066 = vmatprep.subr.bf16.mxu0 0
    %2067 = vmatpush1.bf16.msra.mxu0 0
    %2068 = vmatprep.subr.bf16.mxu0 0
    %2069 = vmatpush1.bf16.msra.mxu0 0
    %2070 = vmatprep.subr.bf16.mxu0 0
    %2071 = vmatpush1.bf16.msra.mxu0 0
    %2072 = vmatprep.subr.bf16.mxu0 0
    %2073 = vmatpush1.bf16.msra.mxu0 0
    %2074 = vmatprep.subr.bf16.mxu0 0
    %2075 = vmatpush1.bf16.msra.mxu0 0
    %2076 = vmatprep.subr.bf16.mxu0 0
    %2077 = vmatpush1.bf16.msra.mxu0 0
    %2078 = vmatprep.subr.bf16.mxu0 0
    %2079 = vmatpush1.bf16.msra.mxu0 0
    %2080 = vmatprep.subr.bf16.mxu0 0
    %2081 = vmatpush1.bf16.msra.mxu0 0
    %2082 = vmatprep.subr.bf16.mxu0 0
    %2083 = vmatpush1.bf16.msra.mxu0 0
    %2084 = vmatprep.subr.bf16.mxu0 0
    %2085 = vmatpush1.bf16.msra.mxu0 0
    %2086 = vmatprep.subr.bf16.mxu0 0
    %2087 = vmatpush1.bf16.msra.mxu0 0
    %2088 = vmatprep.subr.bf16.mxu0 0
    %2089 = vmatpush1.bf16.msra.mxu0 0
    %2090 = vmatprep.mubr.bf16.mxu0 0
    %2091 = vmatmul.mubr.bf16.gmra.mrb[0].mxu0 %v2056
    %v2092 = vpop.f32.mrb[0].mxu0
    %v2093 = vadd.f32 0.0, %v2092
    %v2094 = vpop.f32.mrb[0].mxu0
    %v2095 = vpop.f32.mrb[0].mxu0
    %v2096 = vpop.f32.mrb[0].mxu0
    %2097 = vdwg.mxu0
    %v2099 = vcombine.high %v2093, %v2093
    %v2101 = vunpack.c.l.s4 1966171168
    %v2102 = vunpack.c.0.s8 %v2101
    %v2103 = vlaneseq
    %v2104 = vshrl.u32 %v2103, 7
    %v2105 = vsub.s32 %v2102, %v2104
    %v2106 = vrot.slane %v2093, %v2105
    %v2108 = vunpack.c.l.s4 1966171168
    %v2109 = vunpack.c.0.s8 %v2108
    %v2110 = vlaneseq
    %v2111 = vshrl.u32 %v2110, 7
    %v2112 = vsub.s32 %v2109, %v2111
    %v2113 = vrot.slane %v2099, %v2112
    %v2114 = vcombine.high %v2106, %v2106
    %v2115 = vcombine.high %v2113, %v2113
    %v2117 = vunpack.c.l.s4 1966171168
    %v2118 = vunpack.c.0.s8 %v2117
    %v2119 = vlaneseq
    %v2120 = vshrl.u32 %v2119, 7
    %v2121 = vsub.s32 %v2118, %v2120
    %v2122 = vrot.slane %v2106, %v2121
    %v2124 = vunpack.c.l.s4 1966171168
    %v2125 = vunpack.c.0.s8 %v2124
    %v2126 = vlaneseq
    %v2127 = vshrl.u32 %v2126, 7
    %v2128 = vsub.s32 %v2125, %v2127
    %v2129 = vrot.slane %v2113, %v2128
    %v2131 = vunpack.c.l.s4 1966171168
    %v2132 = vunpack.c.0.s8 %v2131
    %v2133 = vlaneseq
    %v2134 = vshrl.u32 %v2133, 7
    %v2135 = vsub.s32 %v2132, %v2134
    %v2136 = vrot.slane %v2114, %v2135
    %v2138 = vunpack.c.l.s4 1966171168
    %v2139 = vunpack.c.0.s8 %v2138
    %v2140 = vlaneseq
    %v2141 = vshrl.u32 %v2140, 7
    %v2142 = vsub.s32 %v2139, %v2141
    %v2143 = vrot.slane %v2115, %v2142
    %v2144 = vcombine.high %v2122, %v2122
    %v2145 = vcombine.high %v2129, %v2129
    %v2146 = vcombine.high %v2136, %v2136
    %v2147 = vcombine.high %v2143, %v2143
    %v2148 = vlaneseq
    %v2149 = vshrl.u32 %v2148, 7
    %v2150 = vsub.s32 0, %v2149
    %v2151 = vrot.slane %v2122, %v2150
    %v2152 = vlaneseq
    %v2153 = vshrl.u32 %v2152, 7
    %v2154 = vsub.s32 0, %v2153
    %v2155 = vrot.slane %v2136, %v2154
    %v2156 = vlaneseq
    %v2157 = vshrl.u32 %v2156, 7
    %v2158 = vsub.s32 0, %v2157
    %v2159 = vrot.slane %v2144, %v2158
    %v2160 = vlaneseq
    %v2161 = vshrl.u32 %v2160, 7
    %v2162 = vsub.s32 0, %v2161
    %v2163 = vrot.slane %v2146, %v2162
    %v2164 = vlaneseq
    %v2165 = vshrl.u32 %v2164, 7
    %v2166 = vsub.s32 0, %v2165
    %v2167 = vrot.slane %v2129, %v2166
    %v2168 = vlaneseq
    %v2169 = vshrl.u32 %v2168, 7
    %v2170 = vsub.s32 0, %v2169
    %v2171 = vrot.slane %v2143, %v2170
    %v2172 = vlaneseq
    %v2173 = vshrl.u32 %v2172, 7
    %v2174 = vsub.s32 0, %v2173
    %v2175 = vrot.slane %v2145, %v2174
    %v2176 = vlaneseq
    %v2177 = vshrl.u32 %v2176, 7
    %v2178 = vsub.s32 0, %v2177
    %v2179 = vrot.slane %v2147, %v2178
    %v2188 = vadd.f32 %v264, %v2151
    %v2189 = vadd.f32 %v265, %v2155
    %v2190 = vadd.f32 %v266, %v2159
    %v2191 = vadd.f32 %v267, %v2163
    %v2192 = vadd.f32 %v268, %v2167
    %v2193 = vadd.f32 %v269, %v2171
    %v2194 = vadd.f32 %v270, %v2175
    %v2195 = vadd.f32 %v271, %v2179
    %v2196 = vtanh.pop %v2188
    %v2197 = vtanh.pop %v2189
    %v2198 = vtanh.pop %v2190
    %v2199 = vtanh.pop %v2191
    %v2200 = vtanh.pop %v2192
    %v2201 = vtanh.pop %v2193
    %v2202 = vtanh.pop %v2194
    %v2203 = vtanh.pop %v2195
    %v2204 = vmul.f32 %v2196, %v278
    %v2205 = vmul.f32 %v2197, %v278
    %v2206 = vmul.f32 %v2198, %v278
    %v2207 = vmul.f32 %v2199, %v278
    %v2208 = vmul.f32 %v2200, %v278
    %v2209 = vmul.f32 %v2201, %v278
    %v2210 = vmul.f32 %v2202, %v278
    %v2211 = vmul.f32 %v2203, %v278
    %v2212 = vsel %vm357, %v2204, 0.0
    %2213 = vadd.xlane.f32.xlu0 %v2212
    %v2214 = vpop.xlane.xlu0 %2213
    %v2215 = vsel %vm357, %v2205, 0.0
    %2216 = vadd.xlane.f32.xlu0 %v2215
    %v2217 = vpop.xlane.xlu0 %2216
    %v2218 = vsel %vm357, %v2206, 0.0
    %2219 = vadd.xlane.f32.xlu0 %v2218
    %v2220 = vpop.xlane.xlu0 %2219
    %v2221 = vsel %vm357, %v2207, 0.0
    %2222 = vadd.xlane.f32.xlu0 %v2221
    %v2223 = vpop.xlane.xlu0 %2222
    %v2224 = vsel %vm357, %v2208, 0.0
    %2225 = vadd.xlane.f32.xlu0 %v2224
    %v2226 = vpop.xlane.xlu0 %2225
    %v2227 = vsel %vm357, %v2209, 0.0
    %2228 = vadd.xlane.f32.xlu0 %v2227
    %v2229 = vpop.xlane.xlu0 %2228
    %v2230 = vsel %vm357, %v2210, 0.0
    %2231 = vadd.xlane.f32.xlu0 %v2230
    %v2232 = vpop.xlane.xlu0 %2231
    %v2233 = vsel %vm357, %v2211, 0.0
    %2234 = vadd.xlane.f32.xlu0 %v2233
    %v2235 = vpop.xlane.xlu0 %2234
    %v2236 = vadd.f32 %v2214, %v718
    %v2237 = vadd.f32 %v2217, %v725
    %v2238 = vadd.f32 %v2220, %v732
    %v2239 = vadd.f32 %v2223, %v739
    %v2240 = vadd.f32 %v2226, %v746
    %v2241 = vadd.f32 %v2229, %v753
    %v2242 = vadd.f32 %v2232, %v760
    %v2243 = vadd.f32 %v2235, %v767
    %2252 = vset.pattern.permute.xlu0 0
    %2253 = vperm.xlu0 %2252, %v2236
    %v2254 = vpop.permute.xlu0 %2253
    %2255 = vset.pattern.permute.xlu0 0
    %2256 = vperm.xlu0 %2255, %v2237
    %v2257 = vpop.permute.xlu0 %2256
    %2258 = vset.pattern.permute.xlu0 0
    %2259 = vperm.xlu0 %2258, %v2238
    %v2260 = vpop.permute.xlu0 %2259
    %2261 = vset.pattern.permute.xlu0 0
    %2262 = vperm.xlu0 %2261, %v2239
    %v2263 = vpop.permute.xlu0 %2262
    %2264 = vset.pattern.permute.xlu0 0
    %2265 = vperm.xlu0 %2264, %v2240
    %v2266 = vpop.permute.xlu0 %2265
    %2267 = vset.pattern.permute.xlu0 0
    %2268 = vperm.xlu0 %2267, %v2241
    %v2269 = vpop.permute.xlu0 %2268
    %2270 = vset.pattern.permute.xlu0 0
    %2271 = vperm.xlu0 %2270, %v2242
    %v2272 = vpop.permute.xlu0 %2271
    %2273 = vset.pattern.permute.xlu0 0
    %2274 = vperm.xlu0 %2273, %v2243
    %v2275 = vpop.permute.xlu0 %2274
    %v2276 = vlaneseq
    %v2277 = vshrl.u32 %v2276, 7
    %v2278 = vsub.s32 %v817, %v2277
    %v2279 = vrot.slane %v2254, %v2278
    %v2280 = vlaneseq
    %v2281 = vshrl.u32 %v2280, 7
    %v2282 = vsub.s32 %v817, %v2281
    %v2283 = vrot.slane %v2257, %v2282
    %v2284 = vlaneseq
    %v2285 = vshrl.u32 %v2284, 7
    %v2286 = vsub.s32 %v817, %v2285
    %v2287 = vrot.slane %v2260, %v2286
    %v2288 = vlaneseq
    %v2289 = vshrl.u32 %v2288, 7
    %v2290 = vsub.s32 %v817, %v2289
    %v2291 = vrot.slane %v2263, %v2290
    %v2292 = vlaneseq
    %v2293 = vshrl.u32 %v2292, 7
    %v2294 = vsub.s32 %v817, %v2293
    %v2295 = vrot.slane %v2266, %v2294
    %v2296 = vlaneseq
    %v2297 = vshrl.u32 %v2296, 7
    %v2298 = vsub.s32 %v817, %v2297
    %v2299 = vrot.slane %v2269, %v2298
    %v2300 = vlaneseq
    %v2301 = vshrl.u32 %v2300, 7
    %v2302 = vsub.s32 %v817, %v2301
    %v2303 = vrot.slane %v2272, %v2302
    %v2304 = vlaneseq
    %v2305 = vshrl.u32 %v2304, 7
    %v2306 = vsub.s32 %v817, %v2305
    %v2307 = vrot.slane %v2275, %v2306
    %v2308 = vsel %vm850, %v2283, %v2279
    %v2309 = vsel %vm852, %v2287, %v2308
    %v2310 = vsel %vm854, %v2291, %v2309
    %v2311 = vsel %vm856, %v2295, %v2310
    %v2312 = vsel %vm858, %v2299, %v2311
    %v2313 = vsel %vm860, %v2303, %v2312
    %v2314 = vsel %vm862, %v2307, %v2313
    %v2316 = vsel %vm865, %v2314, -inf
    %2317 = vmax.xlane.f32.xlu0 %v2316
    %v2318 = vpop.xlane.xlu0 %2317
    %v2320 = vlaneseq
    %v2321 = vshrl.u32 %v2320, 7
    %v2322 = vsub.s32 0, %v2321
    %v2323 = vrot.slane %v2318, %v2322
    %v2324 = vlaneseq
    %v2325 = vshrl.u32 %v2324, 7
    %v2326 = vsub.s32 1, %v2325
    %v2327 = vrot.slane %v2318, %v2326
    %v2328 = vlaneseq
    %v2329 = vshrl.u32 %v2328, 7
    %v2330 = vsub.s32 2, %v2329
    %v2331 = vrot.slane %v2318, %v2330
    %v2332 = vlaneseq
    %v2333 = vshrl.u32 %v2332, 7
    %v2334 = vsub.s32 3, %v2333
    %v2335 = vrot.slane %v2318, %v2334
    %v2336 = vlaneseq
    %v2337 = vshrl.u32 %v2336, 7
    %v2338 = vsub.s32 4, %v2337
    %v2339 = vrot.slane %v2318, %v2338
    %v2340 = vlaneseq
    %v2341 = vshrl.u32 %v2340, 7
    %v2342 = vsub.s32 5, %v2341
    %v2343 = vrot.slane %v2318, %v2342
    %v2344 = vlaneseq
    %v2345 = vshrl.u32 %v2344, 7
    %v2346 = vsub.s32 6, %v2345
    %v2347 = vrot.slane %v2318, %v2346
    %v2348 = vlaneseq
    %v2349 = vshrl.u32 %v2348, 7
    %v2350 = vsub.s32 7, %v2349
    %v2351 = vrot.slane %v2318, %v2350
    %v2360 = vsub.f32 %v2236, %v2323
    %v2361 = vsub.f32 %v2237, %v2327
    %v2362 = vsub.f32 %v2238, %v2331
    %v2363 = vsub.f32 %v2239, %v2335
    %v2364 = vsub.f32 %v2240, %v2339
    %v2365 = vsub.f32 %v2241, %v2343
    %v2366 = vsub.f32 %v2242, %v2347
    %v2367 = vsub.f32 %v2243, %v2351
    %v2368 = vmul.f32 %v2360, 1.442695
    %v2369 = vpow.pop %v2368
    %v2370 = vmul.f32 %v2361, 1.442695
    %v2371 = vpow.pop %v2370
    %v2372 = vmul.f32 %v2362, 1.442695
    %v2373 = vpow.pop %v2372
    %v2374 = vmul.f32 %v2363, 1.442695
    %v2375 = vpow.pop %v2374
    %v2376 = vmul.f32 %v2364, 1.442695
    %v2377 = vpow.pop %v2376
    %v2378 = vmul.f32 %v2365, 1.442695
    %v2379 = vpow.pop %v2378
    %v2380 = vmul.f32 %v2366, 1.442695
    %v2381 = vpow.pop %v2380
    %v2382 = vmul.f32 %v2367, 1.442695
    %v2383 = vpow.pop %v2382
    %2392 = vset.pattern.permute.xlu0 0
    %2393 = vperm.xlu0 %2392, %v2369
    %v2394 = vpop.permute.xlu0 %2393
    %2395 = vset.pattern.permute.xlu0 0
    %2396 = vperm.xlu0 %2395, %v2371
    %v2397 = vpop.permute.xlu0 %2396
    %2398 = vset.pattern.permute.xlu0 0
    %2399 = vperm.xlu0 %2398, %v2373
    %v2400 = vpop.permute.xlu0 %2399
    %2401 = vset.pattern.permute.xlu0 0
    %2402 = vperm.xlu0 %2401, %v2375
    %v2403 = vpop.permute.xlu0 %2402
    %2404 = vset.pattern.permute.xlu0 0
    %2405 = vperm.xlu0 %2404, %v2377
    %v2406 = vpop.permute.xlu0 %2405
    %2407 = vset.pattern.permute.xlu0 0
    %2408 = vperm.xlu0 %2407, %v2379
    %v2409 = vpop.permute.xlu0 %2408
    %2410 = vset.pattern.permute.xlu0 0
    %2411 = vperm.xlu0 %2410, %v2381
    %v2412 = vpop.permute.xlu0 %2411
    %2413 = vset.pattern.permute.xlu0 0
    %2414 = vperm.xlu0 %2413, %v2383
    %v2415 = vpop.permute.xlu0 %2414
    %v2416 = vlaneseq
    %v2417 = vshrl.u32 %v2416, 7
    %v2418 = vsub.s32 %v817, %v2417
    %v2419 = vrot.slane %v2394, %v2418
    %v2420 = vlaneseq
    %v2421 = vshrl.u32 %v2420, 7
    %v2422 = vsub.s32 %v817, %v2421
    %v2423 = vrot.slane %v2397, %v2422
    %v2424 = vlaneseq
    %v2425 = vshrl.u32 %v2424, 7
    %v2426 = vsub.s32 %v817, %v2425
    %v2427 = vrot.slane %v2400, %v2426
    %v2428 = vlaneseq
    %v2429 = vshrl.u32 %v2428, 7
    %v2430 = vsub.s32 %v817, %v2429
    %v2431 = vrot.slane %v2403, %v2430
    %v2432 = vlaneseq
    %v2433 = vshrl.u32 %v2432, 7
    %v2434 = vsub.s32 %v817, %v2433
    %v2435 = vrot.slane %v2406, %v2434
    %v2436 = vlaneseq
    %v2437 = vshrl.u32 %v2436, 7
    %v2438 = vsub.s32 %v817, %v2437
    %v2439 = vrot.slane %v2409, %v2438
    %v2440 = vlaneseq
    %v2441 = vshrl.u32 %v2440, 7
    %v2442 = vsub.s32 %v817, %v2441
    %v2443 = vrot.slane %v2412, %v2442
    %v2444 = vlaneseq
    %v2445 = vshrl.u32 %v2444, 7
    %v2446 = vsub.s32 %v817, %v2445
    %v2447 = vrot.slane %v2415, %v2446
    %v2448 = vsel %vm850, %v2423, %v2419
    %v2449 = vsel %vm852, %v2427, %v2448
    %v2450 = vsel %vm854, %v2431, %v2449
    %v2451 = vsel %vm856, %v2435, %v2450
    %v2452 = vsel %vm858, %v2439, %v2451
    %v2453 = vsel %vm860, %v2443, %v2452
    %v2454 = vsel %vm862, %v2447, %v2453
    %v2456 = vsel %vm865, %v2454, 0.0
    %2457 = vadd.xlane.f32.xlu0 %v2456
    %v2458 = vpop.xlane.xlu0 %2457
    %v2459 = vrcp.pop %v2458
    %v2461 = vlaneseq
    %v2462 = vshrl.u32 %v2461, 7
    %v2463 = vsub.s32 0, %v2462
    %v2464 = vrot.slane %v2459, %v2463
    %v2465 = vlaneseq
    %v2466 = vshrl.u32 %v2465, 7
    %v2467 = vsub.s32 1, %v2466
    %v2468 = vrot.slane %v2459, %v2467
    %v2469 = vlaneseq
    %v2470 = vshrl.u32 %v2469, 7
    %v2471 = vsub.s32 2, %v2470
    %v2472 = vrot.slane %v2459, %v2471
    %v2473 = vlaneseq
    %v2474 = vshrl.u32 %v2473, 7
    %v2475 = vsub.s32 3, %v2474
    %v2476 = vrot.slane %v2459, %v2475
    %v2477 = vlaneseq
    %v2478 = vshrl.u32 %v2477, 7
    %v2479 = vsub.s32 4, %v2478
    %v2480 = vrot.slane %v2459, %v2479
    %v2481 = vlaneseq
    %v2482 = vshrl.u32 %v2481, 7
    %v2483 = vsub.s32 5, %v2482
    %v2484 = vrot.slane %v2459, %v2483
    %v2485 = vlaneseq
    %v2486 = vshrl.u32 %v2485, 7
    %v2487 = vsub.s32 6, %v2486
    %v2488 = vrot.slane %v2459, %v2487
    %v2489 = vlaneseq
    %v2490 = vshrl.u32 %v2489, 7
    %v2491 = vsub.s32 7, %v2490
    %v2492 = vrot.slane %v2459, %v2491
    %v2501 = vmul.f32 %v2369, %v2464
    %v2502 = vmul.f32 %v2371, %v2468
    %v2503 = vmul.f32 %v2373, %v2472
    %v2504 = vmul.f32 %v2375, %v2476
    %v2505 = vmul.f32 %v2377, %v2480
    %v2506 = vmul.f32 %v2379, %v2484
    %v2507 = vmul.f32 %v2381, %v2488
    %v2508 = vmul.f32 %v2383, %v2492
    %v2509 = vpack.c.bf16 %v2501, %v2501
    %v2510 = vpack.c.bf16 %v2502, %v2502
    %v2511 = vpack.c.bf16 %v2503, %v2503
    %v2512 = vpack.c.bf16 %v2504, %v2504
    %v2513 = vpack.c.bf16 %v2505, %v2505
    %v2514 = vpack.c.bf16 %v2506, %v2506
    %v2515 = vpack.c.bf16 %v2507, %v2507
    %v2516 = vpack.c.bf16 %v2508, %v2508
    %v2518 = vunpack.c.l.b16 %v2509
    %2519 = vset.pattern.permute.xlu0 0
    %2520 = vperm.xlu0 %2519, %v2518
    %v2521 = vpop.permute.xlu0 %2520
    %v2522 = vlaneseq
    %v2523 = vshrl.u32 %v2522, 7
    %v2524 = vsub.s32 %v817, %v2523
    %v2525 = vrot.slane %v2521, %v2524
    %v2526 = vpack.c.b16 %v2525, %v2525
    %v2528 = vsel %vm865, %v2526, 0
    %2530 = vmatprep.subr.bf16.mxu0 0
    %2531 = vmatpush1.bf16.msra.mxu0 %v1082
    %2532 = vmatprep.subr.bf16.mxu0 0
    %2533 = vmatpush1.bf16.msra.mxu0 0
    %2534 = vmatprep.subr.bf16.mxu0 0
    %2535 = vmatpush1.bf16.msra.mxu0 0
    %2536 = vmatprep.subr.bf16.mxu0 0
    %2537 = vmatpush1.bf16.msra.mxu0 0
    %2538 = vmatprep.subr.bf16.mxu0 0
    %2539 = vmatpush1.bf16.msra.mxu0 0
    %2540 = vmatprep.subr.bf16.mxu0 0
    %2541 = vmatpush1.bf16.msra.mxu0 0
    %2542 = vmatprep.subr.bf16.mxu0 0
    %2543 = vmatpush1.bf16.msra.mxu0 0
    %2544 = vmatprep.subr.bf16.mxu0 0
    %2545 = vmatpush1.bf16.msra.mxu0 0
    %2546 = vmatprep.subr.bf16.mxu0 0
    %2547 = vmatpush1.bf16.msra.mxu0 0
    %2548 = vmatprep.subr.bf16.mxu0 0
    %2549 = vmatpush1.bf16.msra.mxu0 0
    %2550 = vmatprep.subr.bf16.mxu0 0
    %2551 = vmatpush1.bf16.msra.mxu0 0
    %2552 = vmatprep.subr.bf16.mxu0 0
    %2553 = vmatpush1.bf16.msra.mxu0 0
    %2554 = vmatprep.subr.bf16.mxu0 0
    %2555 = vmatpush1.bf16.msra.mxu0 0
    %2556 = vmatprep.subr.bf16.mxu0 0
    %2557 = vmatpush1.bf16.msra.mxu0 0
    %2558 = vmatprep.subr.bf16.mxu0 0
    %2559 = vmatpush1.bf16.msra.mxu0 0
    %2560 = vmatprep.subr.bf16.mxu0 0
    %2561 = vmatpush1.bf16.msra.mxu0 0
    %2562 = vmatprep.mubr.bf16.mxu0 0
    %2563 = vmatmul.mubr.bf16.gmra.mrb[0].mxu0 %v2528
    %v2564 = vpop.f32.mrb[0].mxu0
    %v2565 = vadd.f32 0.0, %v2564
    %v2566 = vpop.f32.mrb[0].mxu0
    %v2567 = vpop.f32.mrb[0].mxu0
    %v2568 = vpop.f32.mrb[0].mxu0
    %2569 = vdwg.mxu0
    %v2571 = vunpack.c.l.b16 %v2510
    %2572 = vset.pattern.permute.xlu0 0
    %2573 = vperm.xlu0 %2572, %v2571
    %v2574 = vpop.permute.xlu0 %2573
    %v2575 = vlaneseq
    %v2576 = vshrl.u32 %v2575, 7
    %v2577 = vsub.s32 %v817, %v2576
    %v2578 = vrot.slane %v2574, %v2577
    %v2579 = vpack.c.b16 %v2578, %v2578
    %v2581 = vsel %vm865, %v2579, 0
    %2583 = vmatprep.subr.bf16.mxu0 0
    %2584 = vmatpush1.bf16.msra.mxu0 %v1138
    %2585 = vmatprep.subr.bf16.mxu0 0
    %2586 = vmatpush1.bf16.msra.mxu0 0
    %2587 = vmatprep.subr.bf16.mxu0 0
    %2588 = vmatpush1.bf16.msra.mxu0 0
    %2589 = vmatprep.subr.bf16.mxu0 0
    %2590 = vmatpush1.bf16.msra.mxu0 0
    %2591 = vmatprep.subr.bf16.mxu0 0
    %2592 = vmatpush1.bf16.msra.mxu0 0
    %2593 = vmatprep.subr.bf16.mxu0 0
    %2594 = vmatpush1.bf16.msra.mxu0 0
    %2595 = vmatprep.subr.bf16.mxu0 0
    %2596 = vmatpush1.bf16.msra.mxu0 0
    %2597 = vmatprep.subr.bf16.mxu0 0
    %2598 = vmatpush1.bf16.msra.mxu0 0
    %2599 = vmatprep.subr.bf16.mxu0 0
    %2600 = vmatpush1.bf16.msra.mxu0 0
    %2601 = vmatprep.subr.bf16.mxu0 0
    %2602 = vmatpush1.bf16.msra.mxu0 0
    %2603 = vmatprep.subr.bf16.mxu0 0
    %2604 = vmatpush1.bf16.msra.mxu0 0
    %2605 = vmatprep.subr.bf16.mxu0 0
    %2606 = vmatpush1.bf16.msra.mxu0 0
    %2607 = vmatprep.subr.bf16.mxu0 0
    %2608 = vmatpush1.bf16.msra.mxu0 0
    %2609 = vmatprep.subr.bf16.mxu0 0
    %2610 = vmatpush1.bf16.msra.mxu0 0
    %2611 = vmatprep.subr.bf16.mxu0 0
    %2612 = vmatpush1.bf16.msra.mxu0 0
    %2613 = vmatprep.subr.bf16.mxu0 0
    %2614 = vmatpush1.bf16.msra.mxu0 0
    %2615 = vmatprep.mubr.bf16.mxu0 0
    %2616 = vmatmul.mubr.bf16.gmra.mrb[0].mxu0 %v2581
    %v2617 = vpop.f32.mrb[0].mxu0
    %v2618 = vadd.f32 0.0, %v2617
    %v2619 = vpop.f32.mrb[0].mxu0
    %v2620 = vpop.f32.mrb[0].mxu0
    %v2621 = vpop.f32.mrb[0].mxu0
    %2622 = vdwg.mxu0
    %v2624 = vunpack.c.l.b16 %v2511
    %2625 = vset.pattern.permute.xlu0 0
    %2626 = vperm.xlu0 %2625, %v2624
    %v2627 = vpop.permute.xlu0 %2626
    %v2628 = vlaneseq
    %v2629 = vshrl.u32 %v2628, 7
    %v2630 = vsub.s32 %v817, %v2629
    %v2631 = vrot.slane %v2627, %v2630
    %v2632 = vpack.c.b16 %v2631, %v2631
    %v2634 = vsel %vm865, %v2632, 0
    %2636 = vmatprep.subr.bf16.mxu0 0
    %2637 = vmatpush1.bf16.msra.mxu0 %v1194
    %2638 = vmatprep.subr.bf16.mxu0 0
    %2639 = vmatpush1.bf16.msra.mxu0 0
    %2640 = vmatprep.subr.bf16.mxu0 0
    %2641 = vmatpush1.bf16.msra.mxu0 0
    %2642 = vmatprep.subr.bf16.mxu0 0
    %2643 = vmatpush1.bf16.msra.mxu0 0
    %2644 = vmatprep.subr.bf16.mxu0 0
    %2645 = vmatpush1.bf16.msra.mxu0 0
    %2646 = vmatprep.subr.bf16.mxu0 0
    %2647 = vmatpush1.bf16.msra.mxu0 0
    %2648 = vmatprep.subr.bf16.mxu0 0
    %2649 = vmatpush1.bf16.msra.mxu0 0
    %2650 = vmatprep.subr.bf16.mxu0 0
    %2651 = vmatpush1.bf16.msra.mxu0 0
    %2652 = vmatprep.subr.bf16.mxu0 0
    %2653 = vmatpush1.bf16.msra.mxu0 0
    %2654 = vmatprep.subr.bf16.mxu0 0
    %2655 = vmatpush1.bf16.msra.mxu0 0
    %2656 = vmatprep.subr.bf16.mxu0 0
    %2657 = vmatpush1.bf16.msra.mxu0 0
    %2658 = vmatprep.subr.bf16.mxu0 0
    %2659 = vmatpush1.bf16.msra.mxu0 0
    %2660 = vmatprep.subr.bf16.mxu0 0
    %2661 = vmatpush1.bf16.msra.mxu0 0
    %2662 = vmatprep.subr.bf16.mxu0 0
    %2663 = vmatpush1.bf16.msra.mxu0 0
    %2664 = vmatprep.subr.bf16.mxu0 0
    %2665 = vmatpush1.bf16.msra.mxu0 0
    %2666 = vmatprep.subr.bf16.mxu0 0
    %2667 = vmatpush1.bf16.msra.mxu0 0
    %2668 = vmatprep.mubr.bf16.mxu0 0
    %2669 = vmatmul.mubr.bf16.gmra.mrb[0].mxu0 %v2634
    %v2670 = vpop.f32.mrb[0].mxu0
    %v2671 = vadd.f32 0.0, %v2670
    %v2672 = vpop.f32.mrb[0].mxu0
    %v2673 = vpop.f32.mrb[0].mxu0
    %v2674 = vpop.f32.mrb[0].mxu0
    %2675 = vdwg.mxu0
    %v2677 = vunpack.c.l.b16 %v2512
    %2678 = vset.pattern.permute.xlu0 0
    %2679 = vperm.xlu0 %2678, %v2677
    %v2680 = vpop.permute.xlu0 %2679
    %v2681 = vlaneseq
    %v2682 = vshrl.u32 %v2681, 7
    %v2683 = vsub.s32 %v817, %v2682
    %v2684 = vrot.slane %v2680, %v2683
    %v2685 = vpack.c.b16 %v2684, %v2684
    %v2687 = vsel %vm865, %v2685, 0
    %2689 = vmatprep.subr.bf16.mxu0 0
    %2690 = vmatpush1.bf16.msra.mxu0 %v1250
    %2691 = vmatprep.subr.bf16.mxu0 0
    %2692 = vmatpush1.bf16.msra.mxu0 0
    %2693 = vmatprep.subr.bf16.mxu0 0
    %2694 = vmatpush1.bf16.msra.mxu0 0
    %2695 = vmatprep.subr.bf16.mxu0 0
    %2696 = vmatpush1.bf16.msra.mxu0 0
    %2697 = vmatprep.subr.bf16.mxu0 0
    %2698 = vmatpush1.bf16.msra.mxu0 0
    %2699 = vmatprep.subr.bf16.mxu0 0
    %2700 = vmatpush1.bf16.msra.mxu0 0
    %2701 = vmatprep.subr.bf16.mxu0 0
    %2702 = vmatpush1.bf16.msra.mxu0 0
    %2703 = vmatprep.subr.bf16.mxu0 0
    %2704 = vmatpush1.bf16.msra.mxu0 0
    %2705 = vmatprep.subr.bf16.mxu0 0
    %2706 = vmatpush1.bf16.msra.mxu0 0
    %2707 = vmatprep.subr.bf16.mxu0 0
    %2708 = vmatpush1.bf16.msra.mxu0 0
    %2709 = vmatprep.subr.bf16.mxu0 0
    %2710 = vmatpush1.bf16.msra.mxu0 0
    %2711 = vmatprep.subr.bf16.mxu0 0
    %2712 = vmatpush1.bf16.msra.mxu0 0
    %2713 = vmatprep.subr.bf16.mxu0 0
    %2714 = vmatpush1.bf16.msra.mxu0 0
    %2715 = vmatprep.subr.bf16.mxu0 0
    %2716 = vmatpush1.bf16.msra.mxu0 0
    %2717 = vmatprep.subr.bf16.mxu0 0
    %2718 = vmatpush1.bf16.msra.mxu0 0
    %2719 = vmatprep.subr.bf16.mxu0 0
    %2720 = vmatpush1.bf16.msra.mxu0 0
    %2721 = vmatprep.mubr.bf16.mxu0 0
    %2722 = vmatmul.mubr.bf16.gmra.mrb[0].mxu0 %v2687
    %v2723 = vpop.f32.mrb[0].mxu0
    %v2724 = vadd.f32 0.0, %v2723
    %v2725 = vpop.f32.mrb[0].mxu0
    %v2726 = vpop.f32.mrb[0].mxu0
    %v2727 = vpop.f32.mrb[0].mxu0
    %2728 = vdwg.mxu0
    %v2730 = vunpack.c.l.b16 %v2513
    %2731 = vset.pattern.permute.xlu0 0
    %2732 = vperm.xlu0 %2731, %v2730
    %v2733 = vpop.permute.xlu0 %2732
    %v2734 = vlaneseq
    %v2735 = vshrl.u32 %v2734, 7
    %v2736 = vsub.s32 %v817, %v2735
    %v2737 = vrot.slane %v2733, %v2736
    %v2738 = vpack.c.b16 %v2737, %v2737
    %v2740 = vsel %vm865, %v2738, 0
    %2742 = vmatprep.subr.bf16.mxu0 0
    %2743 = vmatpush1.bf16.msra.mxu0 %v1306
    %2744 = vmatprep.subr.bf16.mxu0 0
    %2745 = vmatpush1.bf16.msra.mxu0 0
    %2746 = vmatprep.subr.bf16.mxu0 0
    %2747 = vmatpush1.bf16.msra.mxu0 0
    %2748 = vmatprep.subr.bf16.mxu0 0
    %2749 = vmatpush1.bf16.msra.mxu0 0
    %2750 = vmatprep.subr.bf16.mxu0 0
    %2751 = vmatpush1.bf16.msra.mxu0 0
    %2752 = vmatprep.subr.bf16.mxu0 0
    %2753 = vmatpush1.bf16.msra.mxu0 0
    %2754 = vmatprep.subr.bf16.mxu0 0
    %2755 = vmatpush1.bf16.msra.mxu0 0
    %2756 = vmatprep.subr.bf16.mxu0 0
    %2757 = vmatpush1.bf16.msra.mxu0 0
    %2758 = vmatprep.subr.bf16.mxu0 0
    %2759 = vmatpush1.bf16.msra.mxu0 0
    %2760 = vmatprep.subr.bf16.mxu0 0
    %2761 = vmatpush1.bf16.msra.mxu0 0
    %2762 = vmatprep.subr.bf16.mxu0 0
    %2763 = vmatpush1.bf16.msra.mxu0 0
    %2764 = vmatprep.subr.bf16.mxu0 0
    %2765 = vmatpush1.bf16.msra.mxu0 0
    %2766 = vmatprep.subr.bf16.mxu0 0
    %2767 = vmatpush1.bf16.msra.mxu0 0
    %2768 = vmatprep.subr.bf16.mxu0 0
    %2769 = vmatpush1.bf16.msra.mxu0 0
    %2770 = vmatprep.subr.bf16.mxu0 0
    %2771 = vmatpush1.bf16.msra.mxu0 0
    %2772 = vmatprep.subr.bf16.mxu0 0
    %2773 = vmatpush1.bf16.msra.mxu0 0
    %2774 = vmatprep.mubr.bf16.mxu0 0
    %2775 = vmatmul.mubr.bf16.gmra.mrb[0].mxu0 %v2740
    %v2776 = vpop.f32.mrb[0].mxu0
    %v2777 = vadd.f32 0.0, %v2776
    %v2778 = vpop.f32.mrb[0].mxu0
    %v2779 = vpop.f32.mrb[0].mxu0
    %v2780 = vpop.f32.mrb[0].mxu0
    %2781 = vdwg.mxu0
    %v2783 = vunpack.c.l.b16 %v2514
    %2784 = vset.pattern.permute.xlu0 0
    %2785 = vperm.xlu0 %2784, %v2783
    %v2786 = vpop.permute.xlu0 %2785
    %v2787 = vlaneseq
    %v2788 = vshrl.u32 %v2787, 7
    %v2789 = vsub.s32 %v817, %v2788
    %v2790 = vrot.slane %v2786, %v2789
    %v2791 = vpack.c.b16 %v2790, %v2790
    %v2793 = vsel %vm865, %v2791, 0
    %2795 = vmatprep.subr.bf16.mxu0 0
    %2796 = vmatpush1.bf16.msra.mxu0 %v1362
    %2797 = vmatprep.subr.bf16.mxu0 0
    %2798 = vmatpush1.bf16.msra.mxu0 0
    %2799 = vmatprep.subr.bf16.mxu0 0
    %2800 = vmatpush1.bf16.msra.mxu0 0
    %2801 = vmatprep.subr.bf16.mxu0 0
    %2802 = vmatpush1.bf16.msra.mxu0 0
    %2803 = vmatprep.subr.bf16.mxu0 0
    %2804 = vmatpush1.bf16.msra.mxu0 0
    %2805 = vmatprep.subr.bf16.mxu0 0
    %2806 = vmatpush1.bf16.msra.mxu0 0
    %2807 = vmatprep.subr.bf16.mxu0 0
    %2808 = vmatpush1.bf16.msra.mxu0 0
    %2809 = vmatprep.subr.bf16.mxu0 0
    %2810 = vmatpush1.bf16.msra.mxu0 0
    %2811 = vmatprep.subr.bf16.mxu0 0
    %2812 = vmatpush1.bf16.msra.mxu0 0
    %2813 = vmatprep.subr.bf16.mxu0 0
    %2814 = vmatpush1.bf16.msra.mxu0 0
    %2815 = vmatprep.subr.bf16.mxu0 0
    %2816 = vmatpush1.bf16.msra.mxu0 0
    %2817 = vmatprep.subr.bf16.mxu0 0
    %2818 = vmatpush1.bf16.msra.mxu0 0
    %2819 = vmatprep.subr.bf16.mxu0 0
    %2820 = vmatpush1.bf16.msra.mxu0 0
    %2821 = vmatprep.subr.bf16.mxu0 0
    %2822 = vmatpush1.bf16.msra.mxu0 0
    %2823 = vmatprep.subr.bf16.mxu0 0
    %2824 = vmatpush1.bf16.msra.mxu0 0
    %2825 = vmatprep.subr.bf16.mxu0 0
    %2826 = vmatpush1.bf16.msra.mxu0 0
    %2827 = vmatprep.mubr.bf16.mxu0 0
    %2828 = vmatmul.mubr.bf16.gmra.mrb[0].mxu0 %v2793
    %v2829 = vpop.f32.mrb[0].mxu0
    %v2830 = vadd.f32 0.0, %v2829
    %v2831 = vpop.f32.mrb[0].mxu0
    %v2832 = vpop.f32.mrb[0].mxu0
    %v2833 = vpop.f32.mrb[0].mxu0
    %2834 = vdwg.mxu0
    %v2836 = vunpack.c.l.b16 %v2515
    %2837 = vset.pattern.permute.xlu0 0
    %2838 = vperm.xlu0 %2837, %v2836
    %v2839 = vpop.permute.xlu0 %2838
    %v2840 = vlaneseq
    %v2841 = vshrl.u32 %v2840, 7
    %v2842 = vsub.s32 %v817, %v2841
    %v2843 = vrot.slane %v2839, %v2842
    %v2844 = vpack.c.b16 %v2843, %v2843
    %v2846 = vsel %vm865, %v2844, 0
    %2848 = vmatprep.subr.bf16.mxu0 0
    %2849 = vmatpush1.bf16.msra.mxu0 %v1418
    %2850 = vmatprep.subr.bf16.mxu0 0
    %2851 = vmatpush1.bf16.msra.mxu0 0
    %2852 = vmatprep.subr.bf16.mxu0 0
    %2853 = vmatpush1.bf16.msra.mxu0 0
    %2854 = vmatprep.subr.bf16.mxu0 0
    %2855 = vmatpush1.bf16.msra.mxu0 0
    %2856 = vmatprep.subr.bf16.mxu0 0
    %2857 = vmatpush1.bf16.msra.mxu0 0
    %2858 = vmatprep.subr.bf16.mxu0 0
    %2859 = vmatpush1.bf16.msra.mxu0 0
    %2860 = vmatprep.subr.bf16.mxu0 0
    %2861 = vmatpush1.bf16.msra.mxu0 0
    %2862 = vmatprep.subr.bf16.mxu0 0
    %2863 = vmatpush1.bf16.msra.mxu0 0
    %2864 = vmatprep.subr.bf16.mxu0 0
    %2865 = vmatpush1.bf16.msra.mxu0 0
    %2866 = vmatprep.subr.bf16.mxu0 0
    %2867 = vmatpush1.bf16.msra.mxu0 0
    %2868 = vmatprep.subr.bf16.mxu0 0
    %2869 = vmatpush1.bf16.msra.mxu0 0
    %2870 = vmatprep.subr.bf16.mxu0 0
    %2871 = vmatpush1.bf16.msra.mxu0 0
    %2872 = vmatprep.subr.bf16.mxu0 0
    %2873 = vmatpush1.bf16.msra.mxu0 0
    %2874 = vmatprep.subr.bf16.mxu0 0
    %2875 = vmatpush1.bf16.msra.mxu0 0
    %2876 = vmatprep.subr.bf16.mxu0 0
    %2877 = vmatpush1.bf16.msra.mxu0 0
    %2878 = vmatprep.subr.bf16.mxu0 0
    %2879 = vmatpush1.bf16.msra.mxu0 0
    %2880 = vmatprep.mubr.bf16.mxu0 0
    %2881 = vmatmul.mubr.bf16.gmra.mrb[0].mxu0 %v2846
    %v2882 = vpop.f32.mrb[0].mxu0
    %v2883 = vadd.f32 0.0, %v2882
    %v2884 = vpop.f32.mrb[0].mxu0
    %v2885 = vpop.f32.mrb[0].mxu0
    %v2886 = vpop.f32.mrb[0].mxu0
    %2887 = vdwg.mxu0
    %v2889 = vunpack.c.l.b16 %v2516
    %2890 = vset.pattern.permute.xlu0 0
    %2891 = vperm.xlu0 %2890, %v2889
    %v2892 = vpop.permute.xlu0 %2891
    %v2893 = vlaneseq
    %v2894 = vshrl.u32 %v2893, 7
    %v2895 = vsub.s32 %v817, %v2894
    %v2896 = vrot.slane %v2892, %v2895
    %v2897 = vpack.c.b16 %v2896, %v2896
    %v2899 = vsel %vm865, %v2897, 0
    %2901 = vmatprep.subr.bf16.mxu0 0
    %2902 = vmatpush1.bf16.msra.mxu0 %v1474
    %2903 = vmatprep.subr.bf16.mxu0 0
    %2904 = vmatpush1.bf16.msra.mxu0 0
    %2905 = vmatprep.subr.bf16.mxu0 0
    %2906 = vmatpush1.bf16.msra.mxu0 0
    %2907 = vmatprep.subr.bf16.mxu0 0
    %2908 = vmatpush1.bf16.msra.mxu0 0
    %2909 = vmatprep.subr.bf16.mxu0 0
    %2910 = vmatpush1.bf16.msra.mxu0 0
    %2911 = vmatprep.subr.bf16.mxu0 0
    %2912 = vmatpush1.bf16.msra.mxu0 0
    %2913 = vmatprep.subr.bf16.mxu0 0
    %2914 = vmatpush1.bf16.msra.mxu0 0
    %2915 = vmatprep.subr.bf16.mxu0 0
    %2916 = vmatpush1.bf16.msra.mxu0 0
    %2917 = vmatprep.subr.bf16.mxu0 0
    %2918 = vmatpush1.bf16.msra.mxu0 0
    %2919 = vmatprep.subr.bf16.mxu0 0
    %2920 = vmatpush1.bf16.msra.mxu0 0
    %2921 = vmatprep.subr.bf16.mxu0 0
    %2922 = vmatpush1.bf16.msra.mxu0 0
    %2923 = vmatprep.subr.bf16.mxu0 0
    %2924 = vmatpush1.bf16.msra.mxu0 0
    %2925 = vmatprep.subr.bf16.mxu0 0
    %2926 = vmatpush1.bf16.msra.mxu0 0
    %2927 = vmatprep.subr.bf16.mxu0 0
    %2928 = vmatpush1.bf16.msra.mxu0 0
    %2929 = vmatprep.subr.bf16.mxu0 0
    %2930 = vmatpush1.bf16.msra.mxu0 0
    %2931 = vmatprep.subr.bf16.mxu0 0
    %2932 = vmatpush1.bf16.msra.mxu0 0
    %2933 = vmatprep.mubr.bf16.mxu0 0
    %2934 = vmatmul.mubr.bf16.gmra.mrb[0].mxu0 %v2899
    %v2935 = vpop.f32.mrb[0].mxu0
    %v2936 = vadd.f32 0.0, %v2935
    %v2937 = vpop.f32.mrb[0].mxu0
    %v2938 = vpop.f32.mrb[0].mxu0
    %v2939 = vpop.f32.mrb[0].mxu0
    %2940 = vdwg.mxu0
    %v2949 = vrot.slane %v2618, 7
    %v2950 = vsel %vm850, %v2949, %v2565
    %v2951 = vrot.slane %v2671, 6
    %v2952 = vsel %vm852, %v2951, %v2950
    %v2953 = vrot.slane %v2724, 5
    %v2954 = vsel %vm854, %v2953, %v2952
    %v2955 = vrot.slane %v2777, 4
    %v2956 = vsel %vm856, %v2955, %v2954
    %v2957 = vrot.slane %v2830, 3
    %v2958 = vsel %vm858, %v2957, %v2956
    %v2959 = vrot.slane %v2883, 2
    %v2960 = vsel %vm860, %v2959, %v2958
    %v2961 = vrot.slane %v2936, 1
    %v2962 = vsel %vm862, %v2961, %v2960
    %2963 = vrot.lane.b32.xlu0 %v2962, 32
    %v2964 = vpop.permute.xlu0 %2963
    %2967 = vrot.lane.b32.xlu0 %v2050, 32
    %v2968 = vpop.permute.xlu0 %2967
    %v2970 = vsel %vm357, %v1939, %v2964
    %v2971 = vsel %vm384, %v2970, %v2968
    %v2972 = vpack.c.bf16 %v2971, %v2971
    %v2974 = vsel %vm1584, %v2972, 0
    %2976 = vmatprep.subr.bf16.mxu0 0
    %2977 = vmatpush1.bf16.msra.mxu0 %v1572
    %2978 = vmatprep.subr.bf16.mxu0 0
    %2979 = vmatpush1.bf16.msra.mxu0 %v1573
    %2980 = vmatprep.subr.bf16.mxu0 0
    %2981 = vmatpush1.bf16.msra.mxu0 %v1574
    %2982 = vmatprep.subr.bf16.mxu0 0
    %2983 = vmatpush1.bf16.msra.mxu0 %v1575
    %2984 = vmatprep.subr.bf16.mxu0 0
    %2985 = vmatpush1.bf16.msra.mxu0 %v1576
    %2986 = vmatprep.subr.bf16.mxu0 0
    %2987 = vmatpush1.bf16.msra.mxu0 %v1577
    %2988 = vmatprep.subr.bf16.mxu0 0
    %2989 = vmatpush1.bf16.msra.mxu0 0
    %2990 = vmatprep.subr.bf16.mxu0 0
    %2991 = vmatpush1.bf16.msra.mxu0 0
    %2992 = vmatprep.subr.bf16.mxu0 0
    %2993 = vmatpush1.bf16.msra.mxu0 0
    %2994 = vmatprep.subr.bf16.mxu0 0
    %2995 = vmatpush1.bf16.msra.mxu0 0
    %2996 = vmatprep.subr.bf16.mxu0 0
    %2997 = vmatpush1.bf16.msra.mxu0 0
    %2998 = vmatprep.subr.bf16.mxu0 0
    %2999 = vmatpush1.bf16.msra.mxu0 0
    %3000 = vmatprep.subr.bf16.mxu0 0
    %3001 = vmatpush1.bf16.msra.mxu0 0
    %3002 = vmatprep.subr.bf16.mxu0 0
    %3003 = vmatpush1.bf16.msra.mxu0 0
    %3004 = vmatprep.subr.bf16.mxu0 0
    %3005 = vmatpush1.bf16.msra.mxu0 0
    %3006 = vmatprep.subr.bf16.mxu0 0
    %3007 = vmatpush1.bf16.msra.mxu0 0
    %3008 = vmatprep.mubr.bf16.mxu0 0
    %3009 = vmatmul.mubr.bf16.gmra.mrb[0].mxu0 %v2974
    %v3010 = vpop.f32.mrb[0].mxu0
    %v3011 = vadd.f32 %v327, %v3010
    %v3012 = vpop.f32.mrb[0].mxu0
    %v3013 = vpop.f32.mrb[0].mxu0
    %v3014 = vpop.f32.mrb[0].mxu0
    %3015 = vdwg.mxu0
    %v3016 = vxor.u32 %v3011, 2147483648
    %v3017 = vmul.f32 %v3016, 1.442695
    %v3018 = vpow.pop %v3017
    %v3019 = vadd.f32 %v3018, 1.0
    %v3020 = vrcp.pop %v3019
    %v3021 = vmul.f32 1.0, %v3020
    %3022 = vmatprep.subr.bf16.mxu0 0
    %3023 = vmatpush1.bf16.msra.mxu0 %v1658
    %3024 = vmatprep.subr.bf16.mxu0 0
    %3025 = vmatpush1.bf16.msra.mxu0 %v1659
    %3026 = vmatprep.subr.bf16.mxu0 0
    %3027 = vmatpush1.bf16.msra.mxu0 %v1660
    %3028 = vmatprep.subr.bf16.mxu0 0
    %3029 = vmatpush1.bf16.msra.mxu0 %v1661
    %3030 = vmatprep.subr.bf16.mxu0 0
    %3031 = vmatpush1.bf16.msra.mxu0 %v1662
    %3032 = vmatprep.subr.bf16.mxu0 0
    %3033 = vmatpush1.bf16.msra.mxu0 %v1663
    %3034 = vmatprep.subr.bf16.mxu0 0
    %3035 = vmatpush1.bf16.msra.mxu0 0
    %3036 = vmatprep.subr.bf16.mxu0 0
    %3037 = vmatpush1.bf16.msra.mxu0 0
    %3038 = vmatprep.subr.bf16.mxu0 0
    %3039 = vmatpush1.bf16.msra.mxu0 0
    %3040 = vmatprep.subr.bf16.mxu0 0
    %3041 = vmatpush1.bf16.msra.mxu0 0
    %3042 = vmatprep.subr.bf16.mxu0 0
    %3043 = vmatpush1.bf16.msra.mxu0 0
    %3044 = vmatprep.subr.bf16.mxu0 0
    %3045 = vmatpush1.bf16.msra.mxu0 0
    %3046 = vmatprep.subr.bf16.mxu0 0
    %3047 = vmatpush1.bf16.msra.mxu0 0
    %3048 = vmatprep.subr.bf16.mxu0 0
    %3049 = vmatpush1.bf16.msra.mxu0 0
    %3050 = vmatprep.subr.bf16.mxu0 0
    %3051 = vmatpush1.bf16.msra.mxu0 0
    %3052 = vmatprep.subr.bf16.mxu0 0
    %3053 = vmatpush1.bf16.msra.mxu0 0
    %3054 = vmatprep.mubr.bf16.mxu0 0
    %3055 = vmatmul.mubr.bf16.gmra.mrb[0].mxu0 %v2974
    %v3056 = vpop.f32.mrb[0].mxu0
    %v3057 = vadd.f32 %v346, %v3056
    %v3058 = vpop.f32.mrb[0].mxu0
    %v3059 = vpop.f32.mrb[0].mxu0
    %v3060 = vpop.f32.mrb[0].mxu0
    %3061 = vdwg.mxu0
    %3063 = vrot.lane.b32.xlu0 %v3057, 112
    %v3064 = vpop.permute.xlu0 %3063
    %v3066 = vmax.f32 %v3057, %v3064
    %v3067 = vpack.c.bf16 %v3066, %v3066
    %v3069 = vsel %vm1722, %v3067, 0
    %3071 = vmatprep.subr.bf16.mxu0 0
    %3072 = vmatpush1.bf16.msra.mxu0 %v1720
    %3073 = vmatprep.subr.bf16.mxu0 0
    %3074 = vmatpush1.bf16.msra.mxu0 0
    %3075 = vmatprep.subr.bf16.mxu0 0
    %3076 = vmatpush1.bf16.msra.mxu0 0
    %3077 = vmatprep.subr.bf16.mxu0 0
    %3078 = vmatpush1.bf16.msra.mxu0 0
    %3079 = vmatprep.subr.bf16.mxu0 0
    %3080 = vmatpush1.bf16.msra.mxu0 0
    %3081 = vmatprep.subr.bf16.mxu0 0
    %3082 = vmatpush1.bf16.msra.mxu0 0
    %3083 = vmatprep.subr.bf16.mxu0 0
    %3084 = vmatpush1.bf16.msra.mxu0 0
    %3085 = vmatprep.subr.bf16.mxu0 0
    %3086 = vmatpush1.bf16.msra.mxu0 0
    %3087 = vmatprep.subr.bf16.mxu0 0
    %3088 = vmatpush1.bf16.msra.mxu0 0
    %3089 = vmatprep.subr.bf16.mxu0 0
    %3090 = vmatpush1.bf16.msra.mxu0 0
    %3091 = vmatprep.subr.bf16.mxu0 0
    %3092 = vmatpush1.bf16.msra.mxu0 0
    %3093 = vmatprep.subr.bf16.mxu0 0
    %3094 = vmatpush1.bf16.msra.mxu0 0
    %3095 = vmatprep.subr.bf16.mxu0 0
    %3096 = vmatpush1.bf16.msra.mxu0 0
    %3097 = vmatprep.subr.bf16.mxu0 0
    %3098 = vmatpush1.bf16.msra.mxu0 0
    %3099 = vmatprep.subr.bf16.mxu0 0
    %3100 = vmatpush1.bf16.msra.mxu0 0
    %3101 = vmatprep.subr.bf16.mxu0 0
    %3102 = vmatpush1.bf16.msra.mxu0 0
    %3103 = vmatprep.mubr.bf16.mxu0 0
    %3104 = vmatmul.mubr.bf16.gmra.mrb[0].mxu0 %v3069
    %v3105 = vpop.f32.mrb[0].mxu0
    %v3106 = vadd.f32 0.0, %v3105
    %v3107 = vpop.f32.mrb[0].mxu0
    %v3108 = vpop.f32.mrb[0].mxu0
    %v3109 = vpop.f32.mrb[0].mxu0
    %3110 = vdwg.mxu0
    %v3111 = vsel %vm384, %v3106, -inf
    %3112 = vmax.xlane.f32.xlu0 %v3111
    %v3113 = vpop.xlane.xlu0 %3112
    %v3114 = vsub.f32 %v3106, %v3113
    %v3115 = vmul.f32 %v3114, 1.442695
    %v3116 = vpow.pop %v3115
    %v3117 = vsel %vm384, %v3116, 0.0
    %3118 = vadd.xlane.f32.xlu0 %v3117
    %v3119 = vpop.xlane.xlu0 %3118
    %v3120 = vrcp.pop %v3119
    %v3121 = vmul.f32 %v3116, %v3120
    %v3122 = vsub.f32 1.0, %v3021
    %3124 = vset.pattern.permute.xlu0 0
    %3125 = vperm.xlu0 %3124, %v3122
    %v3126 = vpop.permute.xlu0 %3125
    %v3128 = vmul.f32 %v3126, %v3121
    %3130 = vset.pattern.permute.xlu0 0
    %3131 = vperm.xlu0 %3130, %v3021
    %v3132 = vpop.permute.xlu0 %3131
    %3142 = vset.pattern.permute.xlu0 0
    %3143 = vperm.xlu0 %3142, %v2501
    %v3144 = vpop.permute.xlu0 %3143
    %3145 = vset.pattern.permute.xlu0 0
    %3146 = vperm.xlu0 %3145, %v2502
    %v3147 = vpop.permute.xlu0 %3146
    %3148 = vset.pattern.permute.xlu0 0
    %3149 = vperm.xlu0 %3148, %v2503
    %v3150 = vpop.permute.xlu0 %3149
    %3151 = vset.pattern.permute.xlu0 0
    %3152 = vperm.xlu0 %3151, %v2504
    %v3153 = vpop.permute.xlu0 %3152
    %3154 = vset.pattern.permute.xlu0 0
    %3155 = vperm.xlu0 %3154, %v2505
    %v3156 = vpop.permute.xlu0 %3155
    %3157 = vset.pattern.permute.xlu0 0
    %3158 = vperm.xlu0 %3157, %v2506
    %v3159 = vpop.permute.xlu0 %3158
    %3160 = vset.pattern.permute.xlu0 0
    %3161 = vperm.xlu0 %3160, %v2507
    %v3162 = vpop.permute.xlu0 %3161
    %3163 = vset.pattern.permute.xlu0 0
    %3164 = vperm.xlu0 %3163, %v2508
    %v3165 = vpop.permute.xlu0 %3164
    %v3166 = vlaneseq
    %v3167 = vshrl.u32 %v3166, 7
    %v3168 = vsub.s32 %v817, %v3167
    %v3169 = vrot.slane %v3144, %v3168
    %v3170 = vlaneseq
    %v3171 = vshrl.u32 %v3170, 7
    %v3172 = vsub.s32 %v817, %v3171
    %v3173 = vrot.slane %v3147, %v3172
    %v3174 = vlaneseq
    %v3175 = vshrl.u32 %v3174, 7
    %v3176 = vsub.s32 %v817, %v3175
    %v3177 = vrot.slane %v3150, %v3176
    %v3178 = vlaneseq
    %v3179 = vshrl.u32 %v3178, 7
    %v3180 = vsub.s32 %v817, %v3179
    %v3181 = vrot.slane %v3153, %v3180
    %v3182 = vlaneseq
    %v3183 = vshrl.u32 %v3182, 7
    %v3184 = vsub.s32 %v817, %v3183
    %v3185 = vrot.slane %v3156, %v3184
    %v3186 = vlaneseq
    %v3187 = vshrl.u32 %v3186, 7
    %v3188 = vsub.s32 %v817, %v3187
    %v3189 = vrot.slane %v3159, %v3188
    %v3190 = vlaneseq
    %v3191 = vshrl.u32 %v3190, 7
    %v3192 = vsub.s32 %v817, %v3191
    %v3193 = vrot.slane %v3162, %v3192
    %v3194 = vlaneseq
    %v3195 = vshrl.u32 %v3194, 7
    %v3196 = vsub.s32 %v817, %v3195
    %v3197 = vrot.slane %v3165, %v3196
    %v3198 = vsel %vm850, %v3173, %v3169
    %v3199 = vsel %vm852, %v3177, %v3198
    %v3200 = vsel %vm854, %v3181, %v3199
    %v3201 = vsel %vm856, %v3185, %v3200
    %v3202 = vsel %vm858, %v3189, %v3201
    %v3203 = vsel %vm860, %v3193, %v3202
    %v3204 = vsel %vm862, %v3197, %v3203
    %v3206 = vmul.f32 %v3132, %v3204
    %3208 = vrot.lane.b32.xlu0 %v3206, 64
    %v3209 = vpop.permute.xlu0 %3208
    %v3211 = vsel %vm384, %v3128, %v3209
    %v3212 = vsel %vm1867, %v3211, 0.0
    %v3213 = vadd.f32 %v3212, 1e-12
    %v3214 = vlog2.pop %v3213
    %v3215 = vmul.f32 %v3214, 0.6931472
    %v3217 = vcombine.high %v3215, %v3215
    %v3219 = vunpack.c.l.s4 1966171168
    %v3220 = vunpack.c.0.s8 %v3219
    %v3221 = vlaneseq
    %v3222 = vshrl.u32 %v3221, 7
    %v3223 = vsub.s32 %v3220, %v3222
    %v3224 = vrot.slane %v3215, %v3223
    %v3226 = vunpack.c.l.s4 1966171168
    %v3227 = vunpack.c.0.s8 %v3226
    %v3228 = vlaneseq
    %v3229 = vshrl.u32 %v3228, 7
    %v3230 = vsub.s32 %v3227, %v3229
    %v3231 = vrot.slane %v3217, %v3230
    %v3232 = vcombine.high %v3224, %v3224
    %v3233 = vcombine.high %v3231, %v3231
    %v3235 = vunpack.c.l.s4 1966171168
    %v3236 = vunpack.c.0.s8 %v3235
    %v3237 = vlaneseq
    %v3238 = vshrl.u32 %v3237, 7
    %v3239 = vsub.s32 %v3236, %v3238
    %v3240 = vrot.slane %v3224, %v3239
    %v3242 = vunpack.c.l.s4 1966171168
    %v3243 = vunpack.c.0.s8 %v3242
    %v3244 = vlaneseq
    %v3245 = vshrl.u32 %v3244, 7
    %v3246 = vsub.s32 %v3243, %v3245
    %v3247 = vrot.slane %v3231, %v3246
    %v3249 = vunpack.c.l.s4 1966171168
    %v3250 = vunpack.c.0.s8 %v3249
    %v3251 = vlaneseq
    %v3252 = vshrl.u32 %v3251, 7
    %v3253 = vsub.s32 %v3250, %v3252
    %v3254 = vrot.slane %v3232, %v3253
    %v3256 = vunpack.c.l.s4 1966171168
    %v3257 = vunpack.c.0.s8 %v3256
    %v3258 = vlaneseq
    %v3259 = vshrl.u32 %v3258, 7
    %v3260 = vsub.s32 %v3257, %v3259
    %v3261 = vrot.slane %v3233, %v3260
    %v3262 = vcombine.high %v3240, %v3240
    %v3263 = vcombine.high %v3247, %v3247
    %v3264 = vcombine.high %v3254, %v3254
    %v3265 = vcombine.high %v3261, %v3261
    %3274 = vst [vmem:[#allocation29 + $0x1] sm:$0x1] %v3240
    %3275 = vst [vmem:[#allocation29 + $0x9] sm:$0x1] %v3254
    %3276 = vst [vmem:[#allocation29 + $0x11] sm:$0x1] %v3262
    %3277 = vst [vmem:[#allocation29 + $0x19] sm:$0x1] %v3264
    %3278 = vst [vmem:[#allocation29 + $0x21] sm:$0x1] %v3247
    %3279 = vst [vmem:[#allocation29 + $0x29] sm:$0x1] %v3261
    %3280 = vst [vmem:[#allocation29 + $0x31] sm:$0x1] %v3263
    %3281 = vst [vmem:[#allocation29 + $0x39] sm:$0x1] %v3265
    %s3282 = scalar_lea.vmem [#allocation5], 16
    %v3283 = vld [vmem:[%s3282] sm:$0xff]
    %v3284 = vsel %vm357, %v3283, %v2964
    %v3285 = vpack.c.bf16 %v3284, %v3284
    %v3287 = vsel %vm384, %v3285, 0
    %3289 = vmatprep.subr.bf16.mxu0 0
    %3290 = vmatpush1.bf16.msra.mxu0 %v376
    %3291 = vmatprep.subr.bf16.mxu0 0
    %3292 = vmatpush1.bf16.msra.mxu0 %v377
    %3293 = vmatprep.subr.bf16.mxu0 0
    %3294 = vmatpush1.bf16.msra.mxu0 %v378
    %3295 = vmatprep.subr.bf16.mxu0 0
    %3296 = vmatpush1.bf16.msra.mxu0 %v379
    %3297 = vmatprep.subr.bf16.mxu0 0
    %3298 = vmatpush1.bf16.msra.mxu0 0
    %3299 = vmatprep.subr.bf16.mxu0 0
    %3300 = vmatpush1.bf16.msra.mxu0 0
    %3301 = vmatprep.subr.bf16.mxu0 0
    %3302 = vmatpush1.bf16.msra.mxu0 0
    %3303 = vmatprep.subr.bf16.mxu0 0
    %3304 = vmatpush1.bf16.msra.mxu0 0
    %3305 = vmatprep.subr.bf16.mxu0 0
    %3306 = vmatpush1.bf16.msra.mxu0 0
    %3307 = vmatprep.subr.bf16.mxu0 0
    %3308 = vmatpush1.bf16.msra.mxu0 0
    %3309 = vmatprep.subr.bf16.mxu0 0
    %3310 = vmatpush1.bf16.msra.mxu0 0
    %3311 = vmatprep.subr.bf16.mxu0 0
    %3312 = vmatpush1.bf16.msra.mxu0 0
    %3313 = vmatprep.subr.bf16.mxu0 0
    %3314 = vmatpush1.bf16.msra.mxu0 0
    %3315 = vmatprep.subr.bf16.mxu0 0
    %3316 = vmatpush1.bf16.msra.mxu0 0
    %3317 = vmatprep.subr.bf16.mxu0 0
    %3318 = vmatpush1.bf16.msra.mxu0 0
    %3319 = vmatprep.subr.bf16.mxu0 0
    %3320 = vmatpush1.bf16.msra.mxu0 0
    %3321 = vmatprep.mubr.bf16.mxu0 0
    %3322 = vmatmul.mubr.bf16.gmra.mrb[0].mxu0 %v3287
    %v3323 = vpop.f32.mrb[0].mxu0
    %v3324 = vadd.f32 %v297, %v3323
    %v3325 = vpop.f32.mrb[0].mxu0
    %v3326 = vpop.f32.mrb[0].mxu0
    %v3327 = vpop.f32.mrb[0].mxu0
    %3328 = vdwg.mxu0
    %3329 = vmatprep.subr.bf16.mxu0 0
    %3330 = vmatpush1.bf16.msra.mxu0 %v437
    %3331 = vmatprep.subr.bf16.mxu0 0
    %3332 = vmatpush1.bf16.msra.mxu0 %v438
    %3333 = vmatprep.subr.bf16.mxu0 0
    %3334 = vmatpush1.bf16.msra.mxu0 0
    %3335 = vmatprep.subr.bf16.mxu0 0
    %3336 = vmatpush1.bf16.msra.mxu0 0
    %3337 = vmatprep.subr.bf16.mxu0 0
    %3338 = vmatpush1.bf16.msra.mxu0 0
    %3339 = vmatprep.subr.bf16.mxu0 0
    %3340 = vmatpush1.bf16.msra.mxu0 0
    %3341 = vmatprep.subr.bf16.mxu0 0
    %3342 = vmatpush1.bf16.msra.mxu0 0
    %3343 = vmatprep.subr.bf16.mxu0 0
    %3344 = vmatpush1.bf16.msra.mxu0 0
    %3345 = vmatprep.subr.bf16.mxu0 0
    %3346 = vmatpush1.bf16.msra.mxu0 0
    %3347 = vmatprep.subr.bf16.mxu0 0
    %3348 = vmatpush1.bf16.msra.mxu0 0
    %3349 = vmatprep.subr.bf16.mxu0 0
    %3350 = vmatpush1.bf16.msra.mxu0 0
    %3351 = vmatprep.subr.bf16.mxu0 0
    %3352 = vmatpush1.bf16.msra.mxu0 0
    %3353 = vmatprep.subr.bf16.mxu0 0
    %3354 = vmatpush1.bf16.msra.mxu0 0
    %3355 = vmatprep.subr.bf16.mxu0 0
    %3356 = vmatpush1.bf16.msra.mxu0 0
    %3357 = vmatprep.subr.bf16.mxu0 0
    %3358 = vmatpush1.bf16.msra.mxu0 0
    %3359 = vmatprep.subr.bf16.mxu0 0
    %3360 = vmatpush1.bf16.msra.mxu0 0
    %3361 = vmatprep.mubr.bf16.mxu0 0
    %3362 = vmatmul.mubr.bf16.gmra.mrb[0].mxu0 %v2056
    %v3363 = vpop.f32.mrb[0].mxu0
    %v3364 = vadd.f32 %v304, %v3363
    %v3365 = vpop.f32.mrb[0].mxu0
    %v3366 = vpop.f32.mrb[0].mxu0
    %v3367 = vpop.f32.mrb[0].mxu0
    %3368 = vdwg.mxu0
    %v3369 = vadd.f32 %v3324, %v3364
    %v3370 = vxor.u32 %v3369, 2147483648
    %v3371 = vmul.f32 %v3370, 1.442695
    %v3372 = vpow.pop %v3371
    %v3373 = vadd.f32 %v3372, 1.0
    %v3374 = vrcp.pop %v3373
    %v3375 = vmul.f32 1.0, %v3374
    %3377 = vrot.lane.b32.xlu0 %v3364, 64
    %v3378 = vpop.permute.xlu0 %3377
    %v3380 = vmul.f32 %v3375, %v3378
    %3382 = vrot.lane.b32.xlu0 %v3380, 64
    %v3383 = vpop.permute.xlu0 %3382
    %v3385 = vadd.f32 %v3324, %v3383
    %v3386 = vtanh.pop %v3385
    %v3387 = vsub.f32 1.0, %v3375
    %3389 = vrot.lane.b32.xlu0 %v3386, 96
    %v3390 = vpop.permute.xlu0 %3389
    %v3392 = vmul.f32 %v3387, %v3390
    %v3393 = vmul.f32 %v3375, %v2050
    %v3394 = vadd.f32 %v3392, %v3393
    %v3395 = vpack.c.bf16 %v3394, %v3394
    %3397 = vrot.lane.b32.xlu0 %v3395, 96
    %v3398 = vpop.permute.xlu0 %3397
    %v3400 = vsel %vm357, %v3398, 0
    %3402 = vmatprep.subr.bf16.mxu0 0
    %3403 = vmatpush1.bf16.msra.mxu0 %v526
    %3404 = vmatprep.subr.bf16.mxu0 0
    %3405 = vmatpush1.bf16.msra.mxu0 %v527
    %3406 = vmatprep.subr.bf16.mxu0 0
    %3407 = vmatpush1.bf16.msra.mxu0 0
    %3408 = vmatprep.subr.bf16.mxu0 0
    %3409 = vmatpush1.bf16.msra.mxu0 0
    %3410 = vmatprep.subr.bf16.mxu0 0
    %3411 = vmatpush1.bf16.msra.mxu0 0
    %3412 = vmatprep.subr.bf16.mxu0 0
    %3413 = vmatpush1.bf16.msra.mxu0 0
    %3414 = vmatprep.subr.bf16.mxu0 0
    %3415 = vmatpush1.bf16.msra.mxu0 0
    %3416 = vmatprep.subr.bf16.mxu0 0
    %3417 = vmatpush1.bf16.msra.mxu0 0
    %3418 = vmatprep.subr.bf16.mxu0 0
    %3419 = vmatpush1.bf16.msra.mxu0 0
    %3420 = vmatprep.subr.bf16.mxu0 0
    %3421 = vmatpush1.bf16.msra.mxu0 0
    %3422 = vmatprep.subr.bf16.mxu0 0
    %3423 = vmatpush1.bf16.msra.mxu0 0
    %3424 = vmatprep.subr.bf16.mxu0 0
    %3425 = vmatpush1.bf16.msra.mxu0 0
    %3426 = vmatprep.subr.bf16.mxu0 0
    %3427 = vmatpush1.bf16.msra.mxu0 0
    %3428 = vmatprep.subr.bf16.mxu0 0
    %3429 = vmatpush1.bf16.msra.mxu0 0
    %3430 = vmatprep.subr.bf16.mxu0 0
    %3431 = vmatpush1.bf16.msra.mxu0 0
    %3432 = vmatprep.subr.bf16.mxu0 0
    %3433 = vmatpush1.bf16.msra.mxu0 0
    %3434 = vmatprep.mubr.bf16.mxu0 0
    %3435 = vmatmul.mubr.bf16.gmra.mrb[0].mxu0 %v3400
    %v3436 = vpop.f32.mrb[0].mxu0
    %v3437 = vadd.f32 0.0, %v3436
    %v3438 = vpop.f32.mrb[0].mxu0
    %v3439 = vpop.f32.mrb[0].mxu0
    %v3440 = vpop.f32.mrb[0].mxu0
    %3441 = vdwg.mxu0
    %v3443 = vcombine.high %v3437, %v3437
    %v3445 = vunpack.c.l.s4 1966171168
    %v3446 = vunpack.c.0.s8 %v3445
    %v3447 = vlaneseq
    %v3448 = vshrl.u32 %v3447, 7
    %v3449 = vsub.s32 %v3446, %v3448
    %v3450 = vrot.slane %v3437, %v3449
    %v3452 = vunpack.c.l.s4 1966171168
    %v3453 = vunpack.c.0.s8 %v3452
    %v3454 = vlaneseq
    %v3455 = vshrl.u32 %v3454, 7
    %v3456 = vsub.s32 %v3453, %v3455
    %v3457 = vrot.slane %v3443, %v3456
    %v3458 = vcombine.high %v3450, %v3450
    %v3459 = vcombine.high %v3457, %v3457
    %v3461 = vunpack.c.l.s4 1966171168
    %v3462 = vunpack.c.0.s8 %v3461
    %v3463 = vlaneseq
    %v3464 = vshrl.u32 %v3463, 7
    %v3465 = vsub.s32 %v3462, %v3464
    %v3466 = vrot.slane %v3450, %v3465
    %v3468 = vunpack.c.l.s4 1966171168
    %v3469 = vunpack.c.0.s8 %v3468
    %v3470 = vlaneseq
    %v3471 = vshrl.u32 %v3470, 7
    %v3472 = vsub.s32 %v3469, %v3471
    %v3473 = vrot.slane %v3457, %v3472
    %v3475 = vunpack.c.l.s4 1966171168
    %v3476 = vunpack.c.0.s8 %v3475
    %v3477 = vlaneseq
    %v3478 = vshrl.u32 %v3477, 7
    %v3479 = vsub.s32 %v3476, %v3478
    %v3480 = vrot.slane %v3458, %v3479
    %v3482 = vunpack.c.l.s4 1966171168
    %v3483 = vunpack.c.0.s8 %v3482
    %v3484 = vlaneseq
    %v3485 = vshrl.u32 %v3484, 7
    %v3486 = vsub.s32 %v3483, %v3485
    %v3487 = vrot.slane %v3459, %v3486
    %v3488 = vcombine.high %v3466, %v3466
    %v3489 = vcombine.high %v3473, %v3473
    %v3490 = vcombine.high %v3480, %v3480
    %v3491 = vcombine.high %v3487, %v3487
    %v3492 = vlaneseq
    %v3493 = vshrl.u32 %v3492, 7
    %v3494 = vsub.s32 0, %v3493
    %v3495 = vrot.slane %v3466, %v3494
    %v3496 = vlaneseq
    %v3497 = vshrl.u32 %v3496, 7
    %v3498 = vsub.s32 0, %v3497
    %v3499 = vrot.slane %v3480, %v3498
    %v3500 = vlaneseq
    %v3501 = vshrl.u32 %v3500, 7
    %v3502 = vsub.s32 0, %v3501
    %v3503 = vrot.slane %v3488, %v3502
    %v3504 = vlaneseq
    %v3505 = vshrl.u32 %v3504, 7
    %v3506 = vsub.s32 0, %v3505
    %v3507 = vrot.slane %v3490, %v3506
    %v3508 = vlaneseq
    %v3509 = vshrl.u32 %v3508, 7
    %v3510 = vsub.s32 0, %v3509
    %v3511 = vrot.slane %v3473, %v3510
    %v3512 = vlaneseq
    %v3513 = vshrl.u32 %v3512, 7
    %v3514 = vsub.s32 0, %v3513
    %v3515 = vrot.slane %v3487, %v3514
    %v3516 = vlaneseq
    %v3517 = vshrl.u32 %v3516, 7
    %v3518 = vsub.s32 0, %v3517
    %v3519 = vrot.slane %v3489, %v3518
    %v3520 = vlaneseq
    %v3521 = vshrl.u32 %v3520, 7
    %v3522 = vsub.s32 0, %v3521
    %v3523 = vrot.slane %v3491, %v3522
    %v3532 = vadd.f32 %v264, %v3495
    %v3533 = vadd.f32 %v265, %v3499
    %v3534 = vadd.f32 %v266, %v3503
    %v3535 = vadd.f32 %v267, %v3507
    %v3536 = vadd.f32 %v268, %v3511
    %v3537 = vadd.f32 %v269, %v3515
    %v3538 = vadd.f32 %v270, %v3519
    %v3539 = vadd.f32 %v271, %v3523
    %v3540 = vtanh.pop %v3532
    %v3541 = vtanh.pop %v3533
    %v3542 = vtanh.pop %v3534
    %v3543 = vtanh.pop %v3535
    %v3544 = vtanh.pop %v3536
    %v3545 = vtanh.pop %v3537
    %v3546 = vtanh.pop %v3538
    %v3547 = vtanh.pop %v3539
    %v3548 = vmul.f32 %v3540, %v278
    %v3549 = vmul.f32 %v3541, %v278
    %v3550 = vmul.f32 %v3542, %v278
    %v3551 = vmul.f32 %v3543, %v278
    %v3552 = vmul.f32 %v3544, %v278
    %v3553 = vmul.f32 %v3545, %v278
    %v3554 = vmul.f32 %v3546, %v278
    %v3555 = vmul.f32 %v3547, %v278
    %v3556 = vsel %vm357, %v3548, 0.0
    %3557 = vadd.xlane.f32.xlu0 %v3556
    %v3558 = vpop.xlane.xlu0 %3557
    %v3559 = vsel %vm357, %v3549, 0.0
    %3560 = vadd.xlane.f32.xlu0 %v3559
    %v3561 = vpop.xlane.xlu0 %3560
    %v3562 = vsel %vm357, %v3550, 0.0
    %3563 = vadd.xlane.f32.xlu0 %v3562
    %v3564 = vpop.xlane.xlu0 %3563
    %v3565 = vsel %vm357, %v3551, 0.0
    %3566 = vadd.xlane.f32.xlu0 %v3565
    %v3567 = vpop.xlane.xlu0 %3566
    %v3568 = vsel %vm357, %v3552, 0.0
    %3569 = vadd.xlane.f32.xlu0 %v3568
    %v3570 = vpop.xlane.xlu0 %3569
    %v3571 = vsel %vm357, %v3553, 0.0
    %3572 = vadd.xlane.f32.xlu0 %v3571
    %v3573 = vpop.xlane.xlu0 %3572
    %v3574 = vsel %vm357, %v3554, 0.0
    %3575 = vadd.xlane.f32.xlu0 %v3574
    %v3576 = vpop.xlane.xlu0 %3575
    %v3577 = vsel %vm357, %v3555, 0.0
    %3578 = vadd.xlane.f32.xlu0 %v3577
    %v3579 = vpop.xlane.xlu0 %3578
    %v3580 = vadd.f32 %v3558, %v718
    %v3581 = vadd.f32 %v3561, %v725
    %v3582 = vadd.f32 %v3564, %v732
    %v3583 = vadd.f32 %v3567, %v739
    %v3584 = vadd.f32 %v3570, %v746
    %v3585 = vadd.f32 %v3573, %v753
    %v3586 = vadd.f32 %v3576, %v760
    %v3587 = vadd.f32 %v3579, %v767
    %3596 = vset.pattern.permute.xlu0 0
    %3597 = vperm.xlu0 %3596, %v3580
    %v3598 = vpop.permute.xlu0 %3597
    %3599 = vset.pattern.permute.xlu0 0
    %3600 = vperm.xlu0 %3599, %v3581
    %v3601 = vpop.permute.xlu0 %3600
    %3602 = vset.pattern.permute.xlu0 0
    %3603 = vperm.xlu0 %3602, %v3582
    %v3604 = vpop.permute.xlu0 %3603
    %3605 = vset.pattern.permute.xlu0 0
    %3606 = vperm.xlu0 %3605, %v3583
    %v3607 = vpop.permute.xlu0 %3606
    %3608 = vset.pattern.permute.xlu0 0
    %3609 = vperm.xlu0 %3608, %v3584
    %v3610 = vpop.permute.xlu0 %3609
    %3611 = vset.pattern.permute.xlu0 0
    %3612 = vperm.xlu0 %3611, %v3585
    %v3613 = vpop.permute.xlu0 %3612
    %3614 = vset.pattern.permute.xlu0 0
    %3615 = vperm.xlu0 %3614, %v3586
    %v3616 = vpop.permute.xlu0 %3615
    %3617 = vset.pattern.permute.xlu0 0
    %3618 = vperm.xlu0 %3617, %v3587
    %v3619 = vpop.permute.xlu0 %3618
    %v3620 = vlaneseq
    %v3621 = vshrl.u32 %v3620, 7
    %v3622 = vsub.s32 %v817, %v3621
    %v3623 = vrot.slane %v3598, %v3622
    %v3624 = vlaneseq
    %v3625 = vshrl.u32 %v3624, 7
    %v3626 = vsub.s32 %v817, %v3625
    %v3627 = vrot.slane %v3601, %v3626
    %v3628 = vlaneseq
    %v3629 = vshrl.u32 %v3628, 7
    %v3630 = vsub.s32 %v817, %v3629
    %v3631 = vrot.slane %v3604, %v3630
    %v3632 = vlaneseq
    %v3633 = vshrl.u32 %v3632, 7
    %v3634 = vsub.s32 %v817, %v3633
    %v3635 = vrot.slane %v3607, %v3634
    %v3636 = vlaneseq
    %v3637 = vshrl.u32 %v3636, 7
    %v3638 = vsub.s32 %v817, %v3637
    %v3639 = vrot.slane %v3610, %v3638
    %v3640 = vlaneseq
    %v3641 = vshrl.u32 %v3640, 7
    %v3642 = vsub.s32 %v817, %v3641
    %v3643 = vrot.slane %v3613, %v3642
    %v3644 = vlaneseq
    %v3645 = vshrl.u32 %v3644, 7
    %v3646 = vsub.s32 %v817, %v3645
    %v3647 = vrot.slane %v3616, %v3646
    %v3648 = vlaneseq
    %v3649 = vshrl.u32 %v3648, 7
    %v3650 = vsub.s32 %v817, %v3649
    %v3651 = vrot.slane %v3619, %v3650
    %v3652 = vsel %vm850, %v3627, %v3623
    %v3653 = vsel %vm852, %v3631, %v3652
    %v3654 = vsel %vm854, %v3635, %v3653
    %v3655 = vsel %vm856, %v3639, %v3654
    %v3656 = vsel %vm858, %v3643, %v3655
    %v3657 = vsel %vm860, %v3647, %v3656
    %v3658 = vsel %vm862, %v3651, %v3657
    %v3660 = vsel %vm865, %v3658, -inf
    %3661 = vmax.xlane.f32.xlu0 %v3660
    %v3662 = vpop.xlane.xlu0 %3661
    %v3664 = vlaneseq
    %v3665 = vshrl.u32 %v3664, 7
    %v3666 = vsub.s32 0, %v3665
    %v3667 = vrot.slane %v3662, %v3666
    %v3668 = vlaneseq
    %v3669 = vshrl.u32 %v3668, 7
    %v3670 = vsub.s32 1, %v3669
    %v3671 = vrot.slane %v3662, %v3670
    %v3672 = vlaneseq
    %v3673 = vshrl.u32 %v3672, 7
    %v3674 = vsub.s32 2, %v3673
    %v3675 = vrot.slane %v3662, %v3674
    %v3676 = vlaneseq
    %v3677 = vshrl.u32 %v3676, 7
    %v3678 = vsub.s32 3, %v3677
    %v3679 = vrot.slane %v3662, %v3678
    %v3680 = vlaneseq
    %v3681 = vshrl.u32 %v3680, 7
    %v3682 = vsub.s32 4, %v3681
    %v3683 = vrot.slane %v3662, %v3682
    %v3684 = vlaneseq
    %v3685 = vshrl.u32 %v3684, 7
    %v3686 = vsub.s32 5, %v3685
    %v3687 = vrot.slane %v3662, %v3686
    %v3688 = vlaneseq
    %v3689 = vshrl.u32 %v3688, 7
    %v3690 = vsub.s32 6, %v3689
    %v3691 = vrot.slane %v3662, %v3690
    %v3692 = vlaneseq
    %v3693 = vshrl.u32 %v3692, 7
    %v3694 = vsub.s32 7, %v3693
    %v3695 = vrot.slane %v3662, %v3694
    %v3704 = vsub.f32 %v3580, %v3667
    %v3705 = vsub.f32 %v3581, %v3671
    %v3706 = vsub.f32 %v3582, %v3675
    %v3707 = vsub.f32 %v3583, %v3679
    %v3708 = vsub.f32 %v3584, %v3683
    %v3709 = vsub.f32 %v3585, %v3687
    %v3710 = vsub.f32 %v3586, %v3691
    %v3711 = vsub.f32 %v3587, %v3695
    %v3712 = vmul.f32 %v3704, 1.442695
    %v3713 = vpow.pop %v3712
    %v3714 = vmul.f32 %v3705, 1.442695
    %v3715 = vpow.pop %v3714
    %v3716 = vmul.f32 %v3706, 1.442695
    %v3717 = vpow.pop %v3716
    %v3718 = vmul.f32 %v3707, 1.442695
    %v3719 = vpow.pop %v3718
    %v3720 = vmul.f32 %v3708, 1.442695
    %v3721 = vpow.pop %v3720
    %v3722 = vmul.f32 %v3709, 1.442695
    %v3723 = vpow.pop %v3722
    %v3724 = vmul.f32 %v3710, 1.442695
    %v3725 = vpow.pop %v3724
    %v3726 = vmul.f32 %v3711, 1.442695
    %v3727 = vpow.pop %v3726
    %3736 = vset.pattern.permute.xlu0 0
    %3737 = vperm.xlu0 %3736, %v3713
    %v3738 = vpop.permute.xlu0 %3737
    %3739 = vset.pattern.permute.xlu0 0
    %3740 = vperm.xlu0 %3739, %v3715
    %v3741 = vpop.permute.xlu0 %3740
    %3742 = vset.pattern.permute.xlu0 0
    %3743 = vperm.xlu0 %3742, %v3717
    %v3744 = vpop.permute.xlu0 %3743
    %3745 = vset.pattern.permute.xlu0 0
    %3746 = vperm.xlu0 %3745, %v3719
    %v3747 = vpop.permute.xlu0 %3746
    %3748 = vset.pattern.permute.xlu0 0
    %3749 = vperm.xlu0 %3748, %v3721
    %v3750 = vpop.permute.xlu0 %3749
    %3751 = vset.pattern.permute.xlu0 0
    %3752 = vperm.xlu0 %3751, %v3723
    %v3753 = vpop.permute.xlu0 %3752
    %3754 = vset.pattern.permute.xlu0 0
    %3755 = vperm.xlu0 %3754, %v3725
    %v3756 = vpop.permute.xlu0 %3755
    %3757 = vset.pattern.permute.xlu0 0
    %3758 = vperm.xlu0 %3757, %v3727
    %v3759 = vpop.permute.xlu0 %3758
    %v3760 = vlaneseq
    %v3761 = vshrl.u32 %v3760, 7
    %v3762 = vsub.s32 %v817, %v3761
    %v3763 = vrot.slane %v3738, %v3762
    %v3764 = vlaneseq
    %v3765 = vshrl.u32 %v3764, 7
    %v3766 = vsub.s32 %v817, %v3765
    %v3767 = vrot.slane %v3741, %v3766
    %v3768 = vlaneseq
    %v3769 = vshrl.u32 %v3768, 7
    %v3770 = vsub.s32 %v817, %v3769
    %v3771 = vrot.slane %v3744, %v3770
    %v3772 = vlaneseq
    %v3773 = vshrl.u32 %v3772, 7
    %v3774 = vsub.s32 %v817, %v3773
    %v3775 = vrot.slane %v3747, %v3774
    %v3776 = vlaneseq
    %v3777 = vshrl.u32 %v3776, 7
    %v3778 = vsub.s32 %v817, %v3777
    %v3779 = vrot.slane %v3750, %v3778
    %v3780 = vlaneseq
    %v3781 = vshrl.u32 %v3780, 7
    %v3782 = vsub.s32 %v817, %v3781
    %v3783 = vrot.slane %v3753, %v3782
    %v3784 = vlaneseq
    %v3785 = vshrl.u32 %v3784, 7
    %v3786 = vsub.s32 %v817, %v3785
    %v3787 = vrot.slane %v3756, %v3786
    %v3788 = vlaneseq
    %v3789 = vshrl.u32 %v3788, 7
    %v3790 = vsub.s32 %v817, %v3789
    %v3791 = vrot.slane %v3759, %v3790
    %v3792 = vsel %vm850, %v3767, %v3763
    %v3793 = vsel %vm852, %v3771, %v3792
    %v3794 = vsel %vm854, %v3775, %v3793
    %v3795 = vsel %vm856, %v3779, %v3794
    %v3796 = vsel %vm858, %v3783, %v3795
    %v3797 = vsel %vm860, %v3787, %v3796
    %v3798 = vsel %vm862, %v3791, %v3797
    %v3800 = vsel %vm865, %v3798, 0.0
    %3801 = vadd.xlane.f32.xlu0 %v3800
    %v3802 = vpop.xlane.xlu0 %3801
    %v3803 = vrcp.pop %v3802
    %v3805 = vlaneseq
    %v3806 = vshrl.u32 %v3805, 7
    %v3807 = vsub.s32 0, %v3806
    %v3808 = vrot.slane %v3803, %v3807
    %v3809 = vlaneseq
    %v3810 = vshrl.u32 %v3809, 7
    %v3811 = vsub.s32 1, %v3810
    %v3812 = vrot.slane %v3803, %v3811
    %v3813 = vlaneseq
    %v3814 = vshrl.u32 %v3813, 7
    %v3815 = vsub.s32 2, %v3814
    %v3816 = vrot.slane %v3803, %v3815
    %v3817 = vlaneseq
    %v3818 = vshrl.u32 %v3817, 7
    %v3819 = vsub.s32 3, %v3818
    %v3820 = vrot.slane %v3803, %v3819
    %v3821 = vlaneseq
    %v3822 = vshrl.u32 %v3821, 7
    %v3823 = vsub.s32 4, %v3822
    %v3824 = vrot.slane %v3803, %v3823
    %v3825 = vlaneseq
    %v3826 = vshrl.u32 %v3825, 7
    %v3827 = vsub.s32 5, %v3826
    %v3828 = vrot.slane %v3803, %v3827
    %v3829 = vlaneseq
    %v3830 = vshrl.u32 %v3829, 7
    %v3831 = vsub.s32 6, %v3830
    %v3832 = vrot.slane %v3803, %v3831
    %v3833 = vlaneseq
    %v3834 = vshrl.u32 %v3833, 7
    %v3835 = vsub.s32 7, %v3834
    %v3836 = vrot.slane %v3803, %v3835
    %v3845 = vmul.f32 %v3713, %v3808
    %v3846 = vmul.f32 %v3715, %v3812
    %v3847 = vmul.f32 %v3717, %v3816
    %v3848 = vmul.f32 %v3719, %v3820
    %v3849 = vmul.f32 %v3721, %v3824
    %v3850 = vmul.f32 %v3723, %v3828
    %v3851 = vmul.f32 %v3725, %v3832
    %v3852 = vmul.f32 %v3727, %v3836
    %v3853 = vpack.c.bf16 %v3845, %v3845
    %v3854 = vpack.c.bf16 %v3846, %v3846
    %v3855 = vpack.c.bf16 %v3847, %v3847
    %v3856 = vpack.c.bf16 %v3848, %v3848
    %v3857 = vpack.c.bf16 %v3849, %v3849
    %v3858 = vpack.c.bf16 %v3850, %v3850
    %v3859 = vpack.c.bf16 %v3851, %v3851
    %v3860 = vpack.c.bf16 %v3852, %v3852
    %v3862 = vunpack.c.l.b16 %v3853
    %3863 = vset.pattern.permute.xlu0 0
    %3864 = vperm.xlu0 %3863, %v3862
    %v3865 = vpop.permute.xlu0 %3864
    %v3866 = vlaneseq
    %v3867 = vshrl.u32 %v3866, 7
    %v3868 = vsub.s32 %v817, %v3867
    %v3869 = vrot.slane %v3865, %v3868
    %v3870 = vpack.c.b16 %v3869, %v3869
    %v3872 = vsel %vm865, %v3870, 0
    %3874 = vmatprep.subr.bf16.mxu0 0
    %3875 = vmatpush1.bf16.msra.mxu0 %v1082
    %3876 = vmatprep.subr.bf16.mxu0 0
    %3877 = vmatpush1.bf16.msra.mxu0 0
    %3878 = vmatprep.subr.bf16.mxu0 0
    %3879 = vmatpush1.bf16.msra.mxu0 0
    %3880 = vmatprep.subr.bf16.mxu0 0
    %3881 = vmatpush1.bf16.msra.mxu0 0
    %3882 = vmatprep.subr.bf16.mxu0 0
    %3883 = vmatpush1.bf16.msra.mxu0 0
    %3884 = vmatprep.subr.bf16.mxu0 0
    %3885 = vmatpush1.bf16.msra.mxu0 0
    %3886 = vmatprep.subr.bf16.mxu0 0
    %3887 = vmatpush1.bf16.msra.mxu0 0
    %3888 = vmatprep.subr.bf16.mxu0 0
    %3889 = vmatpush1.bf16.msra.mxu0 0
    %3890 = vmatprep.subr.bf16.mxu0 0
    %3891 = vmatpush1.bf16.msra.mxu0 0
    %3892 = vmatprep.subr.bf16.mxu0 0
    %3893 = vmatpush1.bf16.msra.mxu0 0
    %3894 = vmatprep.subr.bf16.mxu0 0
    %3895 = vmatpush1.bf16.msra.mxu0 0
    %3896 = vmatprep.subr.bf16.mxu0 0
    %3897 = vmatpush1.bf16.msra.mxu0 0
    %3898 = vmatprep.subr.bf16.mxu0 0
    %3899 = vmatpush1.bf16.msra.mxu0 0
    %3900 = vmatprep.subr.bf16.mxu0 0
    %3901 = vmatpush1.bf16.msra.mxu0 0
    %3902 = vmatprep.subr.bf16.mxu0 0
    %3903 = vmatpush1.bf16.msra.mxu0 0
    %3904 = vmatprep.subr.bf16.mxu0 0
    %3905 = vmatpush1.bf16.msra.mxu0 0
    %3906 = vmatprep.mubr.bf16.mxu0 0
    %3907 = vmatmul.mubr.bf16.gmra.mrb[0].mxu0 %v3872
    %v3908 = vpop.f32.mrb[0].mxu0
    %v3909 = vadd.f32 0.0, %v3908
    %v3910 = vpop.f32.mrb[0].mxu0
    %v3911 = vpop.f32.mrb[0].mxu0
    %v3912 = vpop.f32.mrb[0].mxu0
    %3913 = vdwg.mxu0
    %v3915 = vunpack.c.l.b16 %v3854
    %3916 = vset.pattern.permute.xlu0 0
    %3917 = vperm.xlu0 %3916, %v3915
    %v3918 = vpop.permute.xlu0 %3917
    %v3919 = vlaneseq
    %v3920 = vshrl.u32 %v3919, 7
    %v3921 = vsub.s32 %v817, %v3920
    %v3922 = vrot.slane %v3918, %v3921
    %v3923 = vpack.c.b16 %v3922, %v3922
    %v3925 = vsel %vm865, %v3923, 0
    %3927 = vmatprep.subr.bf16.mxu0 0
    %3928 = vmatpush1.bf16.msra.mxu0 %v1138
    %3929 = vmatprep.subr.bf16.mxu0 0
    %3930 = vmatpush1.bf16.msra.mxu0 0
    %3931 = vmatprep.subr.bf16.mxu0 0
    %3932 = vmatpush1.bf16.msra.mxu0 0
    %3933 = vmatprep.subr.bf16.mxu0 0
    %3934 = vmatpush1.bf16.msra.mxu0 0
    %3935 = vmatprep.subr.bf16.mxu0 0
    %3936 = vmatpush1.bf16.msra.mxu0 0
    %3937 = vmatprep.subr.bf16.mxu0 0
    %3938 = vmatpush1.bf16.msra.mxu0 0
    %3939 = vmatprep.subr.bf16.mxu0 0
    %3940 = vmatpush1.bf16.msra.mxu0 0
    %3941 = vmatprep.subr.bf16.mxu0 0
    %3942 = vmatpush1.bf16.msra.mxu0 0
    %3943 = vmatprep.subr.bf16.mxu0 0
    %3944 = vmatpush1.bf16.msra.mxu0 0
    %3945 = vmatprep.subr.bf16.mxu0 0
    %3946 = vmatpush1.bf16.msra.mxu0 0
    %3947 = vmatprep.subr.bf16.mxu0 0
    %3948 = vmatpush1.bf16.msra.mxu0 0
    %3949 = vmatprep.subr.bf16.mxu0 0
    %3950 = vmatpush1.bf16.msra.mxu0 0
    %3951 = vmatprep.subr.bf16.mxu0 0
    %3952 = vmatpush1.bf16.msra.mxu0 0
    %3953 = vmatprep.subr.bf16.mxu0 0
    %3954 = vmatpush1.bf16.msra.mxu0 0
    %3955 = vmatprep.subr.bf16.mxu0 0
    %3956 = vmatpush1.bf16.msra.mxu0 0
    %3957 = vmatprep.subr.bf16.mxu0 0
    %3958 = vmatpush1.bf16.msra.mxu0 0
    %3959 = vmatprep.mubr.bf16.mxu0 0
    %3960 = vmatmul.mubr.bf16.gmra.mrb[0].mxu0 %v3925
    %v3961 = vpop.f32.mrb[0].mxu0
    %v3962 = vadd.f32 0.0, %v3961
    %v3963 = vpop.f32.mrb[0].mxu0
    %v3964 = vpop.f32.mrb[0].mxu0
    %v3965 = vpop.f32.mrb[0].mxu0
    %3966 = vdwg.mxu0
    %v3968 = vunpack.c.l.b16 %v3855
    %3969 = vset.pattern.permute.xlu0 0
    %3970 = vperm.xlu0 %3969, %v3968
    %v3971 = vpop.permute.xlu0 %3970
    %v3972 = vlaneseq
    %v3973 = vshrl.u32 %v3972, 7
    %v3974 = vsub.s32 %v817, %v3973
    %v3975 = vrot.slane %v3971, %v3974
    %v3976 = vpack.c.b16 %v3975, %v3975
    %v3978 = vsel %vm865, %v3976, 0
    %3980 = vmatprep.subr.bf16.mxu0 0
    %3981 = vmatpush1.bf16.msra.mxu0 %v1194
    %3982 = vmatprep.subr.bf16.mxu0 0
    %3983 = vmatpush1.bf16.msra.mxu0 0
    %3984 = vmatprep.subr.bf16.mxu0 0
    %3985 = vmatpush1.bf16.msra.mxu0 0
    %3986 = vmatprep.subr.bf16.mxu0 0
    %3987 = vmatpush1.bf16.msra.mxu0 0
    %3988 = vmatprep.subr.bf16.mxu0 0
    %3989 = vmatpush1.bf16.msra.mxu0 0
    %3990 = vmatprep.subr.bf16.mxu0 0
    %3991 = vmatpush1.bf16.msra.mxu0 0
    %3992 = vmatprep.subr.bf16.mxu0 0
    %3993 = vmatpush1.bf16.msra.mxu0 0
    %3994 = vmatprep.subr.bf16.mxu0 0
    %3995 = vmatpush1.bf16.msra.mxu0 0
    %3996 = vmatprep.subr.bf16.mxu0 0
    %3997 = vmatpush1.bf16.msra.mxu0 0
    %3998 = vmatprep.subr.bf16.mxu0 0
    %3999 = vmatpush1.bf16.msra.mxu0 0
    %4000 = vmatprep.subr.bf16.mxu0 0
    %4001 = vmatpush1.bf16.msra.mxu0 0
    %4002 = vmatprep.subr.bf16.mxu0 0
    %4003 = vmatpush1.bf16.msra.mxu0 0
    %4004 = vmatprep.subr.bf16.mxu0 0
    %4005 = vmatpush1.bf16.msra.mxu0 0
    %4006 = vmatprep.subr.bf16.mxu0 0
    %4007 = vmatpush1.bf16.msra.mxu0 0
    %4008 = vmatprep.subr.bf16.mxu0 0
    %4009 = vmatpush1.bf16.msra.mxu0 0
    %4010 = vmatprep.subr.bf16.mxu0 0
    %4011 = vmatpush1.bf16.msra.mxu0 0
    %4012 = vmatprep.mubr.bf16.mxu0 0
    %4013 = vmatmul.mubr.bf16.gmra.mrb[0].mxu0 %v3978
    %v4014 = vpop.f32.mrb[0].mxu0
    %v4015 = vadd.f32 0.0, %v4014
    %v4016 = vpop.f32.mrb[0].mxu0
    %v4017 = vpop.f32.mrb[0].mxu0
    %v4018 = vpop.f32.mrb[0].mxu0
    %4019 = vdwg.mxu0
    %v4021 = vunpack.c.l.b16 %v3856
    %4022 = vset.pattern.permute.xlu0 0
    %4023 = vperm.xlu0 %4022, %v4021
    %v4024 = vpop.permute.xlu0 %4023
    %v4025 = vlaneseq
    %v4026 = vshrl.u32 %v4025, 7
    %v4027 = vsub.s32 %v817, %v4026
    %v4028 = vrot.slane %v4024, %v4027
    %v4029 = vpack.c.b16 %v4028, %v4028
    %v4031 = vsel %vm865, %v4029, 0
    %4033 = vmatprep.subr.bf16.mxu0 0
    %4034 = vmatpush1.bf16.msra.mxu0 %v1250
    %4035 = vmatprep.subr.bf16.mxu0 0
    %4036 = vmatpush1.bf16.msra.mxu0 0
    %4037 = vmatprep.subr.bf16.mxu0 0
    %4038 = vmatpush1.bf16.msra.mxu0 0
    %4039 = vmatprep.subr.bf16.mxu0 0
    %4040 = vmatpush1.bf16.msra.mxu0 0
    %4041 = vmatprep.subr.bf16.mxu0 0
    %4042 = vmatpush1.bf16.msra.mxu0 0
    %4043 = vmatprep.subr.bf16.mxu0 0
    %4044 = vmatpush1.bf16.msra.mxu0 0
    %4045 = vmatprep.subr.bf16.mxu0 0
    %4046 = vmatpush1.bf16.msra.mxu0 0
    %4047 = vmatprep.subr.bf16.mxu0 0
    %4048 = vmatpush1.bf16.msra.mxu0 0
    %4049 = vmatprep.subr.bf16.mxu0 0
    %4050 = vmatpush1.bf16.msra.mxu0 0
    %4051 = vmatprep.subr.bf16.mxu0 0
    %4052 = vmatpush1.bf16.msra.mxu0 0
    %4053 = vmatprep.subr.bf16.mxu0 0
    %4054 = vmatpush1.bf16.msra.mxu0 0
    %4055 = vmatprep.subr.bf16.mxu0 0
    %4056 = vmatpush1.bf16.msra.mxu0 0
    %4057 = vmatprep.subr.bf16.mxu0 0
    %4058 = vmatpush1.bf16.msra.mxu0 0
    %4059 = vmatprep.subr.bf16.mxu0 0
    %4060 = vmatpush1.bf16.msra.mxu0 0
    %4061 = vmatprep.subr.bf16.mxu0 0
    %4062 = vmatpush1.bf16.msra.mxu0 0
    %4063 = vmatprep.subr.bf16.mxu0 0
    %4064 = vmatpush1.bf16.msra.mxu0 0
    %4065 = vmatprep.mubr.bf16.mxu0 0
    %4066 = vmatmul.mubr.bf16.gmra.mrb[0].mxu0 %v4031
    %v4067 = vpop.f32.mrb[0].mxu0
    %v4068 = vadd.f32 0.0, %v4067
    %v4069 = vpop.f32.mrb[0].mxu0
    %v4070 = vpop.f32.mrb[0].mxu0
    %v4071 = vpop.f32.mrb[0].mxu0
    %4072 = vdwg.mxu0
    %v4074 = vunpack.c.l.b16 %v3857
    %4075 = vset.pattern.permute.xlu0 0
    %4076 = vperm.xlu0 %4075, %v4074
    %v4077 = vpop.permute.xlu0 %4076
    %v4078 = vlaneseq
    %v4079 = vshrl.u32 %v4078, 7
    %v4080 = vsub.s32 %v817, %v4079
    %v4081 = vrot.slane %v4077, %v4080
    %v4082 = vpack.c.b16 %v4081, %v4081
    %v4084 = vsel %vm865, %v4082, 0
    %4086 = vmatprep.subr.bf16.mxu0 0
    %4087 = vmatpush1.bf16.msra.mxu0 %v1306
    %4088 = vmatprep.subr.bf16.mxu0 0
    %4089 = vmatpush1.bf16.msra.mxu0 0
    %4090 = vmatprep.subr.bf16.mxu0 0
    %4091 = vmatpush1.bf16.msra.mxu0 0
    %4092 = vmatprep.subr.bf16.mxu0 0
    %4093 = vmatpush1.bf16.msra.mxu0 0
    %4094 = vmatprep.subr.bf16.mxu0 0
    %4095 = vmatpush1.bf16.msra.mxu0 0
    %4096 = vmatprep.subr.bf16.mxu0 0
    %4097 = vmatpush1.bf16.msra.mxu0 0
    %4098 = vmatprep.subr.bf16.mxu0 0
    %4099 = vmatpush1.bf16.msra.mxu0 0
    %4100 = vmatprep.subr.bf16.mxu0 0
    %4101 = vmatpush1.bf16.msra.mxu0 0
    %4102 = vmatprep.subr.bf16.mxu0 0
    %4103 = vmatpush1.bf16.msra.mxu0 0
    %4104 = vmatprep.subr.bf16.mxu0 0
    %4105 = vmatpush1.bf16.msra.mxu0 0
    %4106 = vmatprep.subr.bf16.mxu0 0
    %4107 = vmatpush1.bf16.msra.mxu0 0
    %4108 = vmatprep.subr.bf16.mxu0 0
    %4109 = vmatpush1.bf16.msra.mxu0 0
    %4110 = vmatprep.subr.bf16.mxu0 0
    %4111 = vmatpush1.bf16.msra.mxu0 0
    %4112 = vmatprep.subr.bf16.mxu0 0
    %4113 = vmatpush1.bf16.msra.mxu0 0
    %4114 = vmatprep.subr.bf16.mxu0 0
    %4115 = vmatpush1.bf16.msra.mxu0 0
    %4116 = vmatprep.subr.bf16.mxu0 0
    %4117 = vmatpush1.bf16.msra.mxu0 0
    %4118 = vmatprep.mubr.bf16.mxu0 0
    %4119 = vmatmul.mubr.bf16.gmra.mrb[0].mxu0 %v4084
    %v4120 = vpop.f32.mrb[0].mxu0
    %v4121 = vadd.f32 0.0, %v4120
    %v4122 = vpop.f32.mrb[0].mxu0
    %v4123 = vpop.f32.mrb[0].mxu0
    %v4124 = vpop.f32.mrb[0].mxu0
    %4125 = vdwg.mxu0
    %v4127 = vunpack.c.l.b16 %v3858
    %4128 = vset.pattern.permute.xlu0 0
    %4129 = vperm.xlu0 %4128, %v4127
    %v4130 = vpop.permute.xlu0 %4129
    %v4131 = vlaneseq
    %v4132 = vshrl.u32 %v4131, 7
    %v4133 = vsub.s32 %v817, %v4132
    %v4134 = vrot.slane %v4130, %v4133
    %v4135 = vpack.c.b16 %v4134, %v4134
    %v4137 = vsel %vm865, %v4135, 0
    %4139 = vmatprep.subr.bf16.mxu0 0
    %4140 = vmatpush1.bf16.msra.mxu0 %v1362
    %4141 = vmatprep.subr.bf16.mxu0 0
    %4142 = vmatpush1.bf16.msra.mxu0 0
    %4143 = vmatprep.subr.bf16.mxu0 0
    %4144 = vmatpush1.bf16.msra.mxu0 0
    %4145 = vmatprep.subr.bf16.mxu0 0
    %4146 = vmatpush1.bf16.msra.mxu0 0
    %4147 = vmatprep.subr.bf16.mxu0 0
    %4148 = vmatpush1.bf16.msra.mxu0 0
    %4149 = vmatprep.subr.bf16.mxu0 0
    %4150 = vmatpush1.bf16.msra.mxu0 0
    %4151 = vmatprep.subr.bf16.mxu0 0
    %4152 = vmatpush1.bf16.msra.mxu0 0
    %4153 = vmatprep.subr.bf16.mxu0 0
    %4154 = vmatpush1.bf16.msra.mxu0 0
    %4155 = vmatprep.subr.bf16.mxu0 0
    %4156 = vmatpush1.bf16.msra.mxu0 0
    %4157 = vmatprep.subr.bf16.mxu0 0
    %4158 = vmatpush1.bf16.msra.mxu0 0
    %4159 = vmatprep.subr.bf16.mxu0 0
    %4160 = vmatpush1.bf16.msra.mxu0 0
    %4161 = vmatprep.subr.bf16.mxu0 0
    %4162 = vmatpush1.bf16.msra.mxu0 0
    %4163 = vmatprep.subr.bf16.mxu0 0
    %4164 = vmatpush1.bf16.msra.mxu0 0
    %4165 = vmatprep.subr.bf16.mxu0 0
    %4166 = vmatpush1.bf16.msra.mxu0 0
    %4167 = vmatprep.subr.bf16.mxu0 0
    %4168 = vmatpush1.bf16.msra.mxu0 0
    %4169 = vmatprep.subr.bf16.mxu0 0
    %4170 = vmatpush1.bf16.msra.mxu0 0
    %4171 = vmatprep.mubr.bf16.mxu0 0
    %4172 = vmatmul.mubr.bf16.gmra.mrb[0].mxu0 %v4137
    %v4173 = vpop.f32.mrb[0].mxu0
    %v4174 = vadd.f32 0.0, %v4173
    %v4175 = vpop.f32.mrb[0].mxu0
    %v4176 = vpop.f32.mrb[0].mxu0
    %v4177 = vpop.f32.mrb[0].mxu0
    %4178 = vdwg.mxu0
    %v4180 = vunpack.c.l.b16 %v3859
    %4181 = vset.pattern.permute.xlu0 0
    %4182 = vperm.xlu0 %4181, %v4180
    %v4183 = vpop.permute.xlu0 %4182
    %v4184 = vlaneseq
    %v4185 = vshrl.u32 %v4184, 7
    %v4186 = vsub.s32 %v817, %v4185
    %v4187 = vrot.slane %v4183, %v4186
    %v4188 = vpack.c.b16 %v4187, %v4187
    %v4190 = vsel %vm865, %v4188, 0
    %4192 = vmatprep.subr.bf16.mxu0 0
    %4193 = vmatpush1.bf16.msra.mxu0 %v1418
    %4194 = vmatprep.subr.bf16.mxu0 0
    %4195 = vmatpush1.bf16.msra.mxu0 0
    %4196 = vmatprep.subr.bf16.mxu0 0
    %4197 = vmatpush1.bf16.msra.mxu0 0
    %4198 = vmatprep.subr.bf16.mxu0 0
    %4199 = vmatpush1.bf16.msra.mxu0 0
    %4200 = vmatprep.subr.bf16.mxu0 0
    %4201 = vmatpush1.bf16.msra.mxu0 0
    %4202 = vmatprep.subr.bf16.mxu0 0
    %4203 = vmatpush1.bf16.msra.mxu0 0
    %4204 = vmatprep.subr.bf16.mxu0 0
    %4205 = vmatpush1.bf16.msra.mxu0 0
    %4206 = vmatprep.subr.bf16.mxu0 0
    %4207 = vmatpush1.bf16.msra.mxu0 0
    %4208 = vmatprep.subr.bf16.mxu0 0
    %4209 = vmatpush1.bf16.msra.mxu0 0
    %4210 = vmatprep.subr.bf16.mxu0 0
    %4211 = vmatpush1.bf16.msra.mxu0 0
    %4212 = vmatprep.subr.bf16.mxu0 0
    %4213 = vmatpush1.bf16.msra.mxu0 0
    %4214 = vmatprep.subr.bf16.mxu0 0
    %4215 = vmatpush1.bf16.msra.mxu0 0
    %4216 = vmatprep.subr.bf16.mxu0 0
    %4217 = vmatpush1.bf16.msra.mxu0 0
    %4218 = vmatprep.subr.bf16.mxu0 0
    %4219 = vmatpush1.bf16.msra.mxu0 0
    %4220 = vmatprep.subr.bf16.mxu0 0
    %4221 = vmatpush1.bf16.msra.mxu0 0
    %4222 = vmatprep.subr.bf16.mxu0 0
    %4223 = vmatpush1.bf16.msra.mxu0 0
    %4224 = vmatprep.mubr.bf16.mxu0 0
    %4225 = vmatmul.mubr.bf16.gmra.mrb[0].mxu0 %v4190
    %v4226 = vpop.f32.mrb[0].mxu0
    %v4227 = vadd.f32 0.0, %v4226
    %v4228 = vpop.f32.mrb[0].mxu0
    %v4229 = vpop.f32.mrb[0].mxu0
    %v4230 = vpop.f32.mrb[0].mxu0
    %4231 = vdwg.mxu0
    %v4233 = vunpack.c.l.b16 %v3860
    %4234 = vset.pattern.permute.xlu0 0
    %4235 = vperm.xlu0 %4234, %v4233
    %v4236 = vpop.permute.xlu0 %4235
    %v4237 = vlaneseq
    %v4238 = vshrl.u32 %v4237, 7
    %v4239 = vsub.s32 %v817, %v4238
    %v4240 = vrot.slane %v4236, %v4239
    %v4241 = vpack.c.b16 %v4240, %v4240
    %v4243 = vsel %vm865, %v4241, 0
    %4245 = vmatprep.subr.bf16.mxu0 0
    %4246 = vmatpush1.bf16.msra.mxu0 %v1474
    %4247 = vmatprep.subr.bf16.mxu0 0
    %4248 = vmatpush1.bf16.msra.mxu0 0
    %4249 = vmatprep.subr.bf16.mxu0 0
    %4250 = vmatpush1.bf16.msra.mxu0 0
    %4251 = vmatprep.subr.bf16.mxu0 0
    %4252 = vmatpush1.bf16.msra.mxu0 0
    %4253 = vmatprep.subr.bf16.mxu0 0
    %4254 = vmatpush1.bf16.msra.mxu0 0
    %4255 = vmatprep.subr.bf16.mxu0 0
    %4256 = vmatpush1.bf16.msra.mxu0 0
    %4257 = vmatprep.subr.bf16.mxu0 0
    %4258 = vmatpush1.bf16.msra.mxu0 0
    %4259 = vmatprep.subr.bf16.mxu0 0
    %4260 = vmatpush1.bf16.msra.mxu0 0
    %4261 = vmatprep.subr.bf16.mxu0 0
    %4262 = vmatpush1.bf16.msra.mxu0 0
    %4263 = vmatprep.subr.bf16.mxu0 0
    %4264 = vmatpush1.bf16.msra.mxu0 0
    %4265 = vmatprep.subr.bf16.mxu0 0
    %4266 = vmatpush1.bf16.msra.mxu0 0
    %4267 = vmatprep.subr.bf16.mxu0 0
    %4268 = vmatpush1.bf16.msra.mxu0 0
    %4269 = vmatprep.subr.bf16.mxu0 0
    %4270 = vmatpush1.bf16.msra.mxu0 0
    %4271 = vmatprep.subr.bf16.mxu0 0
    %4272 = vmatpush1.bf16.msra.mxu0 0
    %4273 = vmatprep.subr.bf16.mxu0 0
    %4274 = vmatpush1.bf16.msra.mxu0 0
    %4275 = vmatprep.subr.bf16.mxu0 0
    %4276 = vmatpush1.bf16.msra.mxu0 0
    %4277 = vmatprep.mubr.bf16.mxu0 0
    %4278 = vmatmul.mubr.bf16.gmra.mrb[0].mxu0 %v4243
    %v4279 = vpop.f32.mrb[0].mxu0
    %v4280 = vadd.f32 0.0, %v4279
    %v4281 = vpop.f32.mrb[0].mxu0
    %v4282 = vpop.f32.mrb[0].mxu0
    %v4283 = vpop.f32.mrb[0].mxu0
    %4284 = vdwg.mxu0
    %v4293 = vrot.slane %v3962, 7
    %v4294 = vsel %vm850, %v4293, %v3909
    %v4295 = vrot.slane %v4015, 6
    %v4296 = vsel %vm852, %v4295, %v4294
    %v4297 = vrot.slane %v4068, 5
    %v4298 = vsel %vm854, %v4297, %v4296
    %v4299 = vrot.slane %v4121, 4
    %v4300 = vsel %vm856, %v4299, %v4298
    %v4301 = vrot.slane %v4174, 3
    %v4302 = vsel %vm858, %v4301, %v4300
    %v4303 = vrot.slane %v4227, 2
    %v4304 = vsel %vm860, %v4303, %v4302
    %v4305 = vrot.slane %v4280, 1
    %v4306 = vsel %vm862, %v4305, %v4304
    %4307 = vrot.lane.b32.xlu0 %v4306, 32
    %v4308 = vpop.permute.xlu0 %4307
    %4311 = vrot.lane.b32.xlu0 %v3394, 32
    %v4312 = vpop.permute.xlu0 %4311
    %v4314 = vsel %vm357, %v3283, %v4308
    %v4315 = vsel %vm384, %v4314, %v4312
    %v4316 = vpack.c.bf16 %v4315, %v4315
    %v4318 = vsel %vm1584, %v4316, 0
    %4320 = vmatprep.subr.bf16.mxu0 0
    %4321 = vmatpush1.bf16.msra.mxu0 %v1572
    %4322 = vmatprep.subr.bf16.mxu0 0
    %4323 = vmatpush1.bf16.msra.mxu0 %v1573
    %4324 = vmatprep.subr.bf16.mxu0 0
    %4325 = vmatpush1.bf16.msra.mxu0 %v1574
    %4326 = vmatprep.subr.bf16.mxu0 0
    %4327 = vmatpush1.bf16.msra.mxu0 %v1575
    %4328 = vmatprep.subr.bf16.mxu0 0
    %4329 = vmatpush1.bf16.msra.mxu0 %v1576
    %4330 = vmatprep.subr.bf16.mxu0 0
    %4331 = vmatpush1.bf16.msra.mxu0 %v1577
    %4332 = vmatprep.subr.bf16.mxu0 0
    %4333 = vmatpush1.bf16.msra.mxu0 0
    %4334 = vmatprep.subr.bf16.mxu0 0
    %4335 = vmatpush1.bf16.msra.mxu0 0
    %4336 = vmatprep.subr.bf16.mxu0 0
    %4337 = vmatpush1.bf16.msra.mxu0 0
    %4338 = vmatprep.subr.bf16.mxu0 0
    %4339 = vmatpush1.bf16.msra.mxu0 0
    %4340 = vmatprep.subr.bf16.mxu0 0
    %4341 = vmatpush1.bf16.msra.mxu0 0
    %4342 = vmatprep.subr.bf16.mxu0 0
    %4343 = vmatpush1.bf16.msra.mxu0 0
    %4344 = vmatprep.subr.bf16.mxu0 0
    %4345 = vmatpush1.bf16.msra.mxu0 0
    %4346 = vmatprep.subr.bf16.mxu0 0
    %4347 = vmatpush1.bf16.msra.mxu0 0
    %4348 = vmatprep.subr.bf16.mxu0 0
    %4349 = vmatpush1.bf16.msra.mxu0 0
    %4350 = vmatprep.subr.bf16.mxu0 0
    %4351 = vmatpush1.bf16.msra.mxu0 0
    %4352 = vmatprep.mubr.bf16.mxu0 0
    %4353 = vmatmul.mubr.bf16.gmra.mrb[0].mxu0 %v4318
    %v4354 = vpop.f32.mrb[0].mxu0
    %v4355 = vadd.f32 %v327, %v4354
    %v4356 = vpop.f32.mrb[0].mxu0
    %v4357 = vpop.f32.mrb[0].mxu0
    %v4358 = vpop.f32.mrb[0].mxu0
    %4359 = vdwg.mxu0
    %v4360 = vxor.u32 %v4355, 2147483648
    %v4361 = vmul.f32 %v4360, 1.442695
    %v4362 = vpow.pop %v4361
    %v4363 = vadd.f32 %v4362, 1.0
    %v4364 = vrcp.pop %v4363
    %v4365 = vmul.f32 1.0, %v4364
    %4366 = vmatprep.subr.bf16.mxu0 0
    %4367 = vmatpush1.bf16.msra.mxu0 %v1658
    %4368 = vmatprep.subr.bf16.mxu0 0
    %4369 = vmatpush1.bf16.msra.mxu0 %v1659
    %4370 = vmatprep.subr.bf16.mxu0 0
    %4371 = vmatpush1.bf16.msra.mxu0 %v1660
    %4372 = vmatprep.subr.bf16.mxu0 0
    %4373 = vmatpush1.bf16.msra.mxu0 %v1661
    %4374 = vmatprep.subr.bf16.mxu0 0
    %4375 = vmatpush1.bf16.msra.mxu0 %v1662
    %4376 = vmatprep.subr.bf16.mxu0 0
    %4377 = vmatpush1.bf16.msra.mxu0 %v1663
    %4378 = vmatprep.subr.bf16.mxu0 0
    %4379 = vmatpush1.bf16.msra.mxu0 0
    %4380 = vmatprep.subr.bf16.mxu0 0
    %4381 = vmatpush1.bf16.msra.mxu0 0
    %4382 = vmatprep.subr.bf16.mxu0 0
    %4383 = vmatpush1.bf16.msra.mxu0 0
    %4384 = vmatprep.subr.bf16.mxu0 0
    %4385 = vmatpush1.bf16.msra.mxu0 0
    %4386 = vmatprep.subr.bf16.mxu0 0
    %4387 = vmatpush1.bf16.msra.mxu0 0
    %4388 = vmatprep.subr.bf16.mxu0 0
    %4389 = vmatpush1.bf16.msra.mxu0 0
    %4390 = vmatprep.subr.bf16.mxu0 0
    %4391 = vmatpush1.bf16.msra.mxu0 0
    %4392 = vmatprep.subr.bf16.mxu0 0
    %4393 = vmatpush1.bf16.msra.mxu0 0
    %4394 = vmatprep.subr.bf16.mxu0 0
    %4395 = vmatpush1.bf16.msra.mxu0 0
    %4396 = vmatprep.subr.bf16.mxu0 0
    %4397 = vmatpush1.bf16.msra.mxu0 0
    %4398 = vmatprep.mubr.bf16.mxu0 0
    %4399 = vmatmul.mubr.bf16.gmra.mrb[0].mxu0 %v4318
    %v4400 = vpop.f32.mrb[0].mxu0
    %v4401 = vadd.f32 %v346, %v4400
    %v4402 = vpop.f32.mrb[0].mxu0
    %v4403 = vpop.f32.mrb[0].mxu0
    %v4404 = vpop.f32.mrb[0].mxu0
    %4405 = vdwg.mxu0
    %4407 = vrot.lane.b32.xlu0 %v4401, 112
    %v4408 = vpop.permute.xlu0 %4407
    %v4410 = vmax.f32 %v4401, %v4408
    %v4411 = vpack.c.bf16 %v4410, %v4410
    %v4413 = vsel %vm1722, %v4411, 0
    %4415 = vmatprep.subr.bf16.mxu0 0
    %4416 = vmatpush1.bf16.msra.mxu0 %v1720
    %4417 = vmatprep.subr.bf16.mxu0 0
    %4418 = vmatpush1.bf16.msra.mxu0 0
    %4419 = vmatprep.subr.bf16.mxu0 0
    %4420 = vmatpush1.bf16.msra.mxu0 0
    %4421 = vmatprep.subr.bf16.mxu0 0
    %4422 = vmatpush1.bf16.msra.mxu0 0
    %4423 = vmatprep.subr.bf16.mxu0 0
    %4424 = vmatpush1.bf16.msra.mxu0 0
    %4425 = vmatprep.subr.bf16.mxu0 0
    %4426 = vmatpush1.bf16.msra.mxu0 0
    %4427 = vmatprep.subr.bf16.mxu0 0
    %4428 = vmatpush1.bf16.msra.mxu0 0
    %4429 = vmatprep.subr.bf16.mxu0 0
    %4430 = vmatpush1.bf16.msra.mxu0 0
    %4431 = vmatprep.subr.bf16.mxu0 0
    %4432 = vmatpush1.bf16.msra.mxu0 0
    %4433 = vmatprep.subr.bf16.mxu0 0
    %4434 = vmatpush1.bf16.msra.mxu0 0
    %4435 = vmatprep.subr.bf16.mxu0 0
    %4436 = vmatpush1.bf16.msra.mxu0 0
    %4437 = vmatprep.subr.bf16.mxu0 0
    %4438 = vmatpush1.bf16.msra.mxu0 0
    %4439 = vmatprep.subr.bf16.mxu0 0
    %4440 = vmatpush1.bf16.msra.mxu0 0
    %4441 = vmatprep.subr.bf16.mxu0 0
    %4442 = vmatpush1.bf16.msra.mxu0 0
    %4443 = vmatprep.subr.bf16.mxu0 0
    %4444 = vmatpush1.bf16.msra.mxu0 0
    %4445 = vmatprep.subr.bf16.mxu0 0
    %4446 = vmatpush1.bf16.msra.mxu0 0
    %4447 = vmatprep.mubr.bf16.mxu0 0
    %4448 = vmatmul.mubr.bf16.gmra.mrb[0].mxu0 %v4413
    %v4449 = vpop.f32.mrb[0].mxu0
    %v4450 = vadd.f32 0.0, %v4449
    %v4451 = vpop.f32.mrb[0].mxu0
    %v4452 = vpop.f32.mrb[0].mxu0
    %v4453 = vpop.f32.mrb[0].mxu0
    %4454 = vdwg.mxu0
    %v4455 = vsel %vm384, %v4450, -inf
    %4456 = vmax.xlane.f32.xlu0 %v4455
    %v4457 = vpop.xlane.xlu0 %4456
    %v4458 = vsub.f32 %v4450, %v4457
    %v4459 = vmul.f32 %v4458, 1.442695
    %v4460 = vpow.pop %v4459
    %v4461 = vsel %vm384, %v4460, 0.0
    %4462 = vadd.xlane.f32.xlu0 %v4461
    %v4463 = vpop.xlane.xlu0 %4462
    %v4464 = vrcp.pop %v4463
    %v4465 = vmul.f32 %v4460, %v4464
    %v4466 = vsub.f32 1.0, %v4365
    %4468 = vset.pattern.permute.xlu0 0
    %4469 = vperm.xlu0 %4468, %v4466
    %v4470 = vpop.permute.xlu0 %4469
    %v4472 = vmul.f32 %v4470, %v4465
    %4474 = vset.pattern.permute.xlu0 0
    %4475 = vperm.xlu0 %4474, %v4365
    %v4476 = vpop.permute.xlu0 %4475
    %4486 = vset.pattern.permute.xlu0 0
    %4487 = vperm.xlu0 %4486, %v3845
    %v4488 = vpop.permute.xlu0 %4487
    %4489 = vset.pattern.permute.xlu0 0
    %4490 = vperm.xlu0 %4489, %v3846
    %v4491 = vpop.permute.xlu0 %4490
    %4492 = vset.pattern.permute.xlu0 0
    %4493 = vperm.xlu0 %4492, %v3847
    %v4494 = vpop.permute.xlu0 %4493
    %4495 = vset.pattern.permute.xlu0 0
    %4496 = vperm.xlu0 %4495, %v3848
    %v4497 = vpop.permute.xlu0 %4496
    %4498 = vset.pattern.permute.xlu0 0
    %4499 = vperm.xlu0 %4498, %v3849
    %v4500 = vpop.permute.xlu0 %4499
    %4501 = vset.pattern.permute.xlu0 0
    %4502 = vperm.xlu0 %4501, %v3850
    %v4503 = vpop.permute.xlu0 %4502
    %4504 = vset.pattern.permute.xlu0 0
    %4505 = vperm.xlu0 %4504, %v3851
    %v4506 = vpop.permute.xlu0 %4505
    %4507 = vset.pattern.permute.xlu0 0
    %4508 = vperm.xlu0 %4507, %v3852
    %v4509 = vpop.permute.xlu0 %4508
    %v4510 = vlaneseq
    %v4511 = vshrl.u32 %v4510, 7
    %v4512 = vsub.s32 %v817, %v4511
    %v4513 = vrot.slane %v4488, %v4512
    %v4514 = vlaneseq
    %v4515 = vshrl.u32 %v4514, 7
    %v4516 = vsub.s32 %v817, %v4515
    %v4517 = vrot.slane %v4491, %v4516
    %v4518 = vlaneseq
    %v4519 = vshrl.u32 %v4518, 7
    %v4520 = vsub.s32 %v817, %v4519
    %v4521 = vrot.slane %v4494, %v4520
    %v4522 = vlaneseq
    %v4523 = vshrl.u32 %v4522, 7
    %v4524 = vsub.s32 %v817, %v4523
    %v4525 = vrot.slane %v4497, %v4524
    %v4526 = vlaneseq
    %v4527 = vshrl.u32 %v4526, 7
    %v4528 = vsub.s32 %v817, %v4527
    %v4529 = vrot.slane %v4500, %v4528
    %v4530 = vlaneseq
    %v4531 = vshrl.u32 %v4530, 7
    %v4532 = vsub.s32 %v817, %v4531
    %v4533 = vrot.slane %v4503, %v4532
    %v4534 = vlaneseq
    %v4535 = vshrl.u32 %v4534, 7
    %v4536 = vsub.s32 %v817, %v4535
    %v4537 = vrot.slane %v4506, %v4536
    %v4538 = vlaneseq
    %v4539 = vshrl.u32 %v4538, 7
    %v4540 = vsub.s32 %v817, %v4539
    %v4541 = vrot.slane %v4509, %v4540
    %v4542 = vsel %vm850, %v4517, %v4513
    %v4543 = vsel %vm852, %v4521, %v4542
    %v4544 = vsel %vm854, %v4525, %v4543
    %v4545 = vsel %vm856, %v4529, %v4544
    %v4546 = vsel %vm858, %v4533, %v4545
    %v4547 = vsel %vm860, %v4537, %v4546
    %v4548 = vsel %vm862, %v4541, %v4547
    %v4550 = vmul.f32 %v4476, %v4548
    %4552 = vrot.lane.b32.xlu0 %v4550, 64
    %v4553 = vpop.permute.xlu0 %4552
    %v4555 = vsel %vm384, %v4472, %v4553
    %v4556 = vsel %vm1867, %v4555, 0.0
    %v4557 = vadd.f32 %v4556, 1e-12
    %v4558 = vlog2.pop %v4557
    %v4559 = vmul.f32 %v4558, 0.6931472
    %v4561 = vcombine.high %v4559, %v4559
    %v4563 = vunpack.c.l.s4 1966171168
    %v4564 = vunpack.c.0.s8 %v4563
    %v4565 = vlaneseq
    %v4566 = vshrl.u32 %v4565, 7
    %v4567 = vsub.s32 %v4564, %v4566
    %v4568 = vrot.slane %v4559, %v4567
    %v4570 = vunpack.c.l.s4 1966171168
    %v4571 = vunpack.c.0.s8 %v4570
    %v4572 = vlaneseq
    %v4573 = vshrl.u32 %v4572, 7
    %v4574 = vsub.s32 %v4571, %v4573
    %v4575 = vrot.slane %v4561, %v4574
    %v4576 = vcombine.high %v4568, %v4568
    %v4577 = vcombine.high %v4575, %v4575
    %v4579 = vunpack.c.l.s4 1966171168
    %v4580 = vunpack.c.0.s8 %v4579
    %v4581 = vlaneseq
    %v4582 = vshrl.u32 %v4581, 7
    %v4583 = vsub.s32 %v4580, %v4582
    %v4584 = vrot.slane %v4568, %v4583
    %v4586 = vunpack.c.l.s4 1966171168
    %v4587 = vunpack.c.0.s8 %v4586
    %v4588 = vlaneseq
    %v4589 = vshrl.u32 %v4588, 7
    %v4590 = vsub.s32 %v4587, %v4589
    %v4591 = vrot.slane %v4575, %v4590
    %v4593 = vunpack.c.l.s4 1966171168
    %v4594 = vunpack.c.0.s8 %v4593
    %v4595 = vlaneseq
    %v4596 = vshrl.u32 %v4595, 7
    %v4597 = vsub.s32 %v4594, %v4596
    %v4598 = vrot.slane %v4576, %v4597
    %v4600 = vunpack.c.l.s4 1966171168
    %v4601 = vunpack.c.0.s8 %v4600
    %v4602 = vlaneseq
    %v4603 = vshrl.u32 %v4602, 7
    %v4604 = vsub.s32 %v4601, %v4603
    %v4605 = vrot.slane %v4577, %v4604
    %v4606 = vcombine.high %v4584, %v4584
    %v4607 = vcombine.high %v4591, %v4591
    %v4608 = vcombine.high %v4598, %v4598
    %v4609 = vcombine.high %v4605, %v4605
    %4618 = vst [vmem:[#allocation29 + $0x2] sm:$0x1] %v4584
    %4619 = vst [vmem:[#allocation29 + $0xa] sm:$0x1] %v4598
    %4620 = vst [vmem:[#allocation29 + $0x12] sm:$0x1] %v4606
    %4621 = vst [vmem:[#allocation29 + $0x1a] sm:$0x1] %v4608
    %4622 = vst [vmem:[#allocation29 + $0x22] sm:$0x1] %v4591
    %4623 = vst [vmem:[#allocation29 + $0x2a] sm:$0x1] %v4605
    %4624 = vst [vmem:[#allocation29 + $0x32] sm:$0x1] %v4607
    %4625 = vst [vmem:[#allocation29 + $0x3a] sm:$0x1] %v4609
    %s4626 = scalar_lea.vmem [#allocation5], 24
    %v4627 = vld [vmem:[%s4626] sm:$0xff]
    %v4628 = vsel %vm357, %v4627, %v4308
    %v4629 = vpack.c.bf16 %v4628, %v4628
    %v4631 = vsel %vm384, %v4629, 0
    %4633 = vmatprep.subr.bf16.mxu0 0
    %4634 = vmatpush1.bf16.msra.mxu0 %v376
    %4635 = vmatprep.subr.bf16.mxu0 0
    %4636 = vmatpush1.bf16.msra.mxu0 %v377
    %4637 = vmatprep.subr.bf16.mxu0 0
    %4638 = vmatpush1.bf16.msra.mxu0 %v378
    %4639 = vmatprep.subr.bf16.mxu0 0
    %4640 = vmatpush1.bf16.msra.mxu0 %v379
    %4641 = vmatprep.subr.bf16.mxu0 0
    %4642 = vmatpush1.bf16.msra.mxu0 0
    %4643 = vmatprep.subr.bf16.mxu0 0
    %4644 = vmatpush1.bf16.msra.mxu0 0
    %4645 = vmatprep.subr.bf16.mxu0 0
    %4646 = vmatpush1.bf16.msra.mxu0 0
    %4647 = vmatprep.subr.bf16.mxu0 0
    %4648 = vmatpush1.bf16.msra.mxu0 0
    %4649 = vmatprep.subr.bf16.mxu0 0
    %4650 = vmatpush1.bf16.msra.mxu0 0
    %4651 = vmatprep.subr.bf16.mxu0 0
    %4652 = vmatpush1.bf16.msra.mxu0 0
    %4653 = vmatprep.subr.bf16.mxu0 0
    %4654 = vmatpush1.bf16.msra.mxu0 0
    %4655 = vmatprep.subr.bf16.mxu0 0
    %4656 = vmatpush1.bf16.msra.mxu0 0
    %4657 = vmatprep.subr.bf16.mxu0 0
    %4658 = vmatpush1.bf16.msra.mxu0 0
    %4659 = vmatprep.subr.bf16.mxu0 0
    %4660 = vmatpush1.bf16.msra.mxu0 0
    %4661 = vmatprep.subr.bf16.mxu0 0
    %4662 = vmatpush1.bf16.msra.mxu0 0
    %4663 = vmatprep.subr.bf16.mxu0 0
    %4664 = vmatpush1.bf16.msra.mxu0 0
    %4665 = vmatprep.mubr.bf16.mxu0 0
    %4666 = vmatmul.mubr.bf16.gmra.mrb[0].mxu0 %v4631
    %v4667 = vpop.f32.mrb[0].mxu0
    %v4668 = vadd.f32 %v297, %v4667
    %v4669 = vpop.f32.mrb[0].mxu0
    %v4670 = vpop.f32.mrb[0].mxu0
    %v4671 = vpop.f32.mrb[0].mxu0
    %4672 = vdwg.mxu0
    %4673 = vmatprep.subr.bf16.mxu0 0
    %4674 = vmatpush1.bf16.msra.mxu0 %v437
    %4675 = vmatprep.subr.bf16.mxu0 0
    %4676 = vmatpush1.bf16.msra.mxu0 %v438
    %4677 = vmatprep.subr.bf16.mxu0 0
    %4678 = vmatpush1.bf16.msra.mxu0 0
    %4679 = vmatprep.subr.bf16.mxu0 0
    %4680 = vmatpush1.bf16.msra.mxu0 0
    %4681 = vmatprep.subr.bf16.mxu0 0
    %4682 = vmatpush1.bf16.msra.mxu0 0
    %4683 = vmatprep.subr.bf16.mxu0 0
    %4684 = vmatpush1.bf16.msra.mxu0 0
    %4685 = vmatprep.subr.bf16.mxu0 0
    %4686 = vmatpush1.bf16.msra.mxu0 0
    %4687 = vmatprep.subr.bf16.mxu0 0
    %4688 = vmatpush1.bf16.msra.mxu0 0
    %4689 = vmatprep.subr.bf16.mxu0 0
    %4690 = vmatpush1.bf16.msra.mxu0 0
    %4691 = vmatprep.subr.bf16.mxu0 0
    %4692 = vmatpush1.bf16.msra.mxu0 0
    %4693 = vmatprep.subr.bf16.mxu0 0
    %4694 = vmatpush1.bf16.msra.mxu0 0
    %4695 = vmatprep.subr.bf16.mxu0 0
    %4696 = vmatpush1.bf16.msra.mxu0 0
    %4697 = vmatprep.subr.bf16.mxu0 0
    %4698 = vmatpush1.bf16.msra.mxu0 0
    %4699 = vmatprep.subr.bf16.mxu0 0
    %4700 = vmatpush1.bf16.msra.mxu0 0
    %4701 = vmatprep.subr.bf16.mxu0 0
    %4702 = vmatpush1.bf16.msra.mxu0 0
    %4703 = vmatprep.subr.bf16.mxu0 0
    %4704 = vmatpush1.bf16.msra.mxu0 0
    %4705 = vmatprep.mubr.bf16.mxu0 0
    %4706 = vmatmul.mubr.bf16.gmra.mrb[0].mxu0 %v3400
    %v4707 = vpop.f32.mrb[0].mxu0
    %v4708 = vadd.f32 %v304, %v4707
    %v4709 = vpop.f32.mrb[0].mxu0
    %v4710 = vpop.f32.mrb[0].mxu0
    %v4711 = vpop.f32.mrb[0].mxu0
    %4712 = vdwg.mxu0
    %v4713 = vadd.f32 %v4668, %v4708
    %v4714 = vxor.u32 %v4713, 2147483648
    %v4715 = vmul.f32 %v4714, 1.442695
    %v4716 = vpow.pop %v4715
    %v4717 = vadd.f32 %v4716, 1.0
    %v4718 = vrcp.pop %v4717
    %v4719 = vmul.f32 1.0, %v4718
    %4721 = vrot.lane.b32.xlu0 %v4708, 64
    %v4722 = vpop.permute.xlu0 %4721
    %v4724 = vmul.f32 %v4719, %v4722
    %4726 = vrot.lane.b32.xlu0 %v4724, 64
    %v4727 = vpop.permute.xlu0 %4726
    %v4729 = vadd.f32 %v4668, %v4727
    %v4730 = vtanh.pop %v4729
    %v4731 = vsub.f32 1.0, %v4719
    %4733 = vrot.lane.b32.xlu0 %v4730, 96
    %v4734 = vpop.permute.xlu0 %4733
    %v4736 = vmul.f32 %v4731, %v4734
    %v4737 = vmul.f32 %v4719, %v3394
    %v4738 = vadd.f32 %v4736, %v4737
    %v4739 = vpack.c.bf16 %v4738, %v4738
    %4741 = vrot.lane.b32.xlu0 %v4739, 96
    %v4742 = vpop.permute.xlu0 %4741
    %v4744 = vsel %vm357, %v4742, 0
    %4746 = vmatprep.subr.bf16.mxu0 0
    %4747 = vmatpush1.bf16.msra.mxu0 %v526
    %4748 = vmatprep.subr.bf16.mxu0 0
    %4749 = vmatpush1.bf16.msra.mxu0 %v527
    %4750 = vmatprep.subr.bf16.mxu0 0
    %4751 = vmatpush1.bf16.msra.mxu0 0
    %4752 = vmatprep.subr.bf16.mxu0 0
    %4753 = vmatpush1.bf16.msra.mxu0 0
    %4754 = vmatprep.subr.bf16.mxu0 0
    %4755 = vmatpush1.bf16.msra.mxu0 0
    %4756 = vmatprep.subr.bf16.mxu0 0
    %4757 = vmatpush1.bf16.msra.mxu0 0
    %4758 = vmatprep.subr.bf16.mxu0 0
    %4759 = vmatpush1.bf16.msra.mxu0 0
    %4760 = vmatprep.subr.bf16.mxu0 0
    %4761 = vmatpush1.bf16.msra.mxu0 0
    %4762 = vmatprep.subr.bf16.mxu0 0
    %4763 = vmatpush1.bf16.msra.mxu0 0
    %4764 = vmatprep.subr.bf16.mxu0 0
    %4765 = vmatpush1.bf16.msra.mxu0 0
    %4766 = vmatprep.subr.bf16.mxu0 0
    %4767 = vmatpush1.bf16.msra.mxu0 0
    %4768 = vmatprep.subr.bf16.mxu0 0
    %4769 = vmatpush1.bf16.msra.mxu0 0
    %4770 = vmatprep.subr.bf16.mxu0 0
    %4771 = vmatpush1.bf16.msra.mxu0 0
    %4772 = vmatprep.subr.bf16.mxu0 0
    %4773 = vmatpush1.bf16.msra.mxu0 0
    %4774 = vmatprep.subr.bf16.mxu0 0
    %4775 = vmatpush1.bf16.msra.mxu0 0
    %4776 = vmatprep.subr.bf16.mxu0 0
    %4777 = vmatpush1.bf16.msra.mxu0 0
    %4778 = vmatprep.mubr.bf16.mxu0 0
    %4779 = vmatmul.mubr.bf16.gmra.mrb[0].mxu0 %v4744
    %v4780 = vpop.f32.mrb[0].mxu0
    %v4781 = vadd.f32 0.0, %v4780
    %v4782 = vpop.f32.mrb[0].mxu0
    %v4783 = vpop.f32.mrb[0].mxu0
    %v4784 = vpop.f32.mrb[0].mxu0
    %4785 = vdwg.mxu0
    %v4787 = vcombine.high %v4781, %v4781
    %v4789 = vunpack.c.l.s4 1966171168
    %v4790 = vunpack.c.0.s8 %v4789
    %v4791 = vlaneseq
    %v4792 = vshrl.u32 %v4791, 7
    %v4793 = vsub.s32 %v4790, %v4792
    %v4794 = vrot.slane %v4781, %v4793
    %v4796 = vunpack.c.l.s4 1966171168
    %v4797 = vunpack.c.0.s8 %v4796
    %v4798 = vlaneseq
    %v4799 = vshrl.u32 %v4798, 7
    %v4800 = vsub.s32 %v4797, %v4799
    %v4801 = vrot.slane %v4787, %v4800
    %v4802 = vcombine.high %v4794, %v4794
    %v4803 = vcombine.high %v4801, %v4801
    %v4805 = vunpack.c.l.s4 1966171168
    %v4806 = vunpack.c.0.s8 %v4805
    %v4807 = vlaneseq
    %v4808 = vshrl.u32 %v4807, 7
    %v4809 = vsub.s32 %v4806, %v4808
    %v4810 = vrot.slane %v4794, %v4809
    %v4812 = vunpack.c.l.s4 1966171168
    %v4813 = vunpack.c.0.s8 %v4812
    %v4814 = vlaneseq
    %v4815 = vshrl.u32 %v4814, 7
    %v4816 = vsub.s32 %v4813, %v4815
    %v4817 = vrot.slane %v4801, %v4816
    %v4819 = vunpack.c.l.s4 1966171168
    %v4820 = vunpack.c.0.s8 %v4819
    %v4821 = vlaneseq
    %v4822 = vshrl.u32 %v4821, 7
    %v4823 = vsub.s32 %v4820, %v4822
    %v4824 = vrot.slane %v4802, %v4823
    %v4826 = vunpack.c.l.s4 1966171168
    %v4827 = vunpack.c.0.s8 %v4826
    %v4828 = vlaneseq
    %v4829 = vshrl.u32 %v4828, 7
    %v4830 = vsub.s32 %v4827, %v4829
    %v4831 = vrot.slane %v4803, %v4830
    %v4832 = vcombine.high %v4810, %v4810
    %v4833 = vcombine.high %v4817, %v4817
    %v4834 = vcombine.high %v4824, %v4824
    %v4835 = vcombine.high %v4831, %v4831
    %v4836 = vlaneseq
    %v4837 = vshrl.u32 %v4836, 7
    %v4838 = vsub.s32 0, %v4837
    %v4839 = vrot.slane %v4810, %v4838
    %v4840 = vlaneseq
    %v4841 = vshrl.u32 %v4840, 7
    %v4842 = vsub.s32 0, %v4841
    %v4843 = vrot.slane %v4824, %v4842
    %v4844 = vlaneseq
    %v4845 = vshrl.u32 %v4844, 7
    %v4846 = vsub.s32 0, %v4845
    %v4847 = vrot.slane %v4832, %v4846
    %v4848 = vlaneseq
    %v4849 = vshrl.u32 %v4848, 7
    %v4850 = vsub.s32 0, %v4849
    %v4851 = vrot.slane %v4834, %v4850
    %v4852 = vlaneseq
    %v4853 = vshrl.u32 %v4852, 7
    %v4854 = vsub.s32 0, %v4853
    %v4855 = vrot.slane %v4817, %v4854
    %v4856 = vlaneseq
    %v4857 = vshrl.u32 %v4856, 7
    %v4858 = vsub.s32 0, %v4857
    %v4859 = vrot.slane %v4831, %v4858
    %v4860 = vlaneseq
    %v4861 = vshrl.u32 %v4860, 7
    %v4862 = vsub.s32 0, %v4861
    %v4863 = vrot.slane %v4833, %v4862
    %v4864 = vlaneseq
    %v4865 = vshrl.u32 %v4864, 7
    %v4866 = vsub.s32 0, %v4865
    %v4867 = vrot.slane %v4835, %v4866
    %v4876 = vadd.f32 %v264, %v4839
    %v4877 = vadd.f32 %v265, %v4843
    %v4878 = vadd.f32 %v266, %v4847
    %v4879 = vadd.f32 %v267, %v4851
    %v4880 = vadd.f32 %v268, %v4855
    %v4881 = vadd.f32 %v269, %v4859
    %v4882 = vadd.f32 %v270, %v4863
    %v4883 = vadd.f32 %v271, %v4867
    %v4884 = vtanh.pop %v4876
    %v4885 = vtanh.pop %v4877
    %v4886 = vtanh.pop %v4878
    %v4887 = vtanh.pop %v4879
    %v4888 = vtanh.pop %v4880
    %v4889 = vtanh.pop %v4881
    %v4890 = vtanh.pop %v4882
    %v4891 = vtanh.pop %v4883
    %v4892 = vmul.f32 %v4884, %v278
    %v4893 = vmul.f32 %v4885, %v278
    %v4894 = vmul.f32 %v4886, %v278
    %v4895 = vmul.f32 %v4887, %v278
    %v4896 = vmul.f32 %v4888, %v278
    %v4897 = vmul.f32 %v4889, %v278
    %v4898 = vmul.f32 %v4890, %v278
    %v4899 = vmul.f32 %v4891, %v278
    %v4900 = vsel %vm357, %v4892, 0.0
    %4901 = vadd.xlane.f32.xlu0 %v4900
    %v4902 = vpop.xlane.xlu0 %4901
    %v4903 = vsel %vm357, %v4893, 0.0
    %4904 = vadd.xlane.f32.xlu0 %v4903
    %v4905 = vpop.xlane.xlu0 %4904
    %v4906 = vsel %vm357, %v4894, 0.0
    %4907 = vadd.xlane.f32.xlu0 %v4906
    %v4908 = vpop.xlane.xlu0 %4907
    %v4909 = vsel %vm357, %v4895, 0.0
    %4910 = vadd.xlane.f32.xlu0 %v4909
    %v4911 = vpop.xlane.xlu0 %4910
    %v4912 = vsel %vm357, %v4896, 0.0
    %4913 = vadd.xlane.f32.xlu0 %v4912
    %v4914 = vpop.xlane.xlu0 %4913
    %v4915 = vsel %vm357, %v4897, 0.0
    %4916 = vadd.xlane.f32.xlu0 %v4915
    %v4917 = vpop.xlane.xlu0 %4916
    %v4918 = vsel %vm357, %v4898, 0.0
    %4919 = vadd.xlane.f32.xlu0 %v4918
    %v4920 = vpop.xlane.xlu0 %4919
    %v4921 = vsel %vm357, %v4899, 0.0
    %4922 = vadd.xlane.f32.xlu0 %v4921
    %v4923 = vpop.xlane.xlu0 %4922
    %v4924 = vadd.f32 %v4902, %v718
    %v4925 = vadd.f32 %v4905, %v725
    %v4926 = vadd.f32 %v4908, %v732
    %v4927 = vadd.f32 %v4911, %v739
    %v4928 = vadd.f32 %v4914, %v746
    %v4929 = vadd.f32 %v4917, %v753
    %v4930 = vadd.f32 %v4920, %v760
    %v4931 = vadd.f32 %v4923, %v767
    %4940 = vset.pattern.permute.xlu0 0
    %4941 = vperm.xlu0 %4940, %v4924
    %v4942 = vpop.permute.xlu0 %4941
    %4943 = vset.pattern.permute.xlu0 0
    %4944 = vperm.xlu0 %4943, %v4925
    %v4945 = vpop.permute.xlu0 %4944
    %4946 = vset.pattern.permute.xlu0 0
    %4947 = vperm.xlu0 %4946, %v4926
    %v4948 = vpop.permute.xlu0 %4947
    %4949 = vset.pattern.permute.xlu0 0
    %4950 = vperm.xlu0 %4949, %v4927
    %v4951 = vpop.permute.xlu0 %4950
    %4952 = vset.pattern.permute.xlu0 0
    %4953 = vperm.xlu0 %4952, %v4928
    %v4954 = vpop.permute.xlu0 %4953
    %4955 = vset.pattern.permute.xlu0 0
    %4956 = vperm.xlu0 %4955, %v4929
    %v4957 = vpop.permute.xlu0 %4956
    %4958 = vset.pattern.permute.xlu0 0
    %4959 = vperm.xlu0 %4958, %v4930
    %v4960 = vpop.permute.xlu0 %4959
    %4961 = vset.pattern.permute.xlu0 0
    %4962 = vperm.xlu0 %4961, %v4931
    %v4963 = vpop.permute.xlu0 %4962
    %v4964 = vlaneseq
    %v4965 = vshrl.u32 %v4964, 7
    %v4966 = vsub.s32 %v817, %v4965
    %v4967 = vrot.slane %v4942, %v4966
    %v4968 = vlaneseq
    %v4969 = vshrl.u32 %v4968, 7
    %v4970 = vsub.s32 %v817, %v4969
    %v4971 = vrot.slane %v4945, %v4970
    %v4972 = vlaneseq
    %v4973 = vshrl.u32 %v4972, 7
    %v4974 = vsub.s32 %v817, %v4973
    %v4975 = vrot.slane %v4948, %v4974
    %v4976 = vlaneseq
    %v4977 = vshrl.u32 %v4976, 7
    %v4978 = vsub.s32 %v817, %v4977
    %v4979 = vrot.slane %v4951, %v4978
    %v4980 = vlaneseq
    %v4981 = vshrl.u32 %v4980, 7
    %v4982 = vsub.s32 %v817, %v4981
    %v4983 = vrot.slane %v4954, %v4982
    %v4984 = vlaneseq
    %v4985 = vshrl.u32 %v4984, 7
    %v4986 = vsub.s32 %v817, %v4985
    %v4987 = vrot.slane %v4957, %v4986
    %v4988 = vlaneseq
    %v4989 = vshrl.u32 %v4988, 7
    %v4990 = vsub.s32 %v817, %v4989
    %v4991 = vrot.slane %v4960, %v4990
    %v4992 = vlaneseq
    %v4993 = vshrl.u32 %v4992, 7
    %v4994 = vsub.s32 %v817, %v4993
    %v4995 = vrot.slane %v4963, %v4994
    %v4996 = vsel %vm850, %v4971, %v4967
    %v4997 = vsel %vm852, %v4975, %v4996
    %v4998 = vsel %vm854, %v4979, %v4997
    %v4999 = vsel %vm856, %v4983, %v4998
    %v5000 = vsel %vm858, %v4987, %v4999
    %v5001 = vsel %vm860, %v4991, %v5000
    %v5002 = vsel %vm862, %v4995, %v5001
    %v5004 = vsel %vm865, %v5002, -inf
    %5005 = vmax.xlane.f32.xlu0 %v5004
    %v5006 = vpop.xlane.xlu0 %5005
    %v5008 = vlaneseq
    %v5009 = vshrl.u32 %v5008, 7
    %v5010 = vsub.s32 0, %v5009
    %v5011 = vrot.slane %v5006, %v5010
    %v5012 = vlaneseq
    %v5013 = vshrl.u32 %v5012, 7
    %v5014 = vsub.s32 1, %v5013
    %v5015 = vrot.slane %v5006, %v5014
    %v5016 = vlaneseq
    %v5017 = vshrl.u32 %v5016, 7
    %v5018 = vsub.s32 2, %v5017
    %v5019 = vrot.slane %v5006, %v5018
    %v5020 = vlaneseq
    %v5021 = vshrl.u32 %v5020, 7
    %v5022 = vsub.s32 3, %v5021
    %v5023 = vrot.slane %v5006, %v5022
    %v5024 = vlaneseq
    %v5025 = vshrl.u32 %v5024, 7
    %v5026 = vsub.s32 4, %v5025
    %v5027 = vrot.slane %v5006, %v5026
    %v5028 = vlaneseq
    %v5029 = vshrl.u32 %v5028, 7
    %v5030 = vsub.s32 5, %v5029
    %v5031 = vrot.slane %v5006, %v5030
    %v5032 = vlaneseq
    %v5033 = vshrl.u32 %v5032, 7
    %v5034 = vsub.s32 6, %v5033
    %v5035 = vrot.slane %v5006, %v5034
    %v5036 = vlaneseq
    %v5037 = vshrl.u32 %v5036, 7
    %v5038 = vsub.s32 7, %v5037
    %v5039 = vrot.slane %v5006, %v5038
    %v5048 = vsub.f32 %v4924, %v5011
    %v5049 = vsub.f32 %v4925, %v5015
    %v5050 = vsub.f32 %v4926, %v5019
    %v5051 = vsub.f32 %v4927, %v5023
    %v5052 = vsub.f32 %v4928, %v5027
    %v5053 = vsub.f32 %v4929, %v5031
    %v5054 = vsub.f32 %v4930, %v5035
    %v5055 = vsub.f32 %v4931, %v5039
    %v5056 = vmul.f32 %v5048, 1.442695
    %v5057 = vpow.pop %v5056
    %v5058 = vmul.f32 %v5049, 1.442695
    %v5059 = vpow.pop %v5058
    %v5060 = vmul.f32 %v5050, 1.442695
    %v5061 = vpow.pop %v5060
    %v5062 = vmul.f32 %v5051, 1.442695
    %v5063 = vpow.pop %v5062
    %v5064 = vmul.f32 %v5052, 1.442695
    %v5065 = vpow.pop %v5064
    %v5066 = vmul.f32 %v5053, 1.442695
    %v5067 = vpow.pop %v5066
    %v5068 = vmul.f32 %v5054, 1.442695
    %v5069 = vpow.pop %v5068
    %v5070 = vmul.f32 %v5055, 1.442695
    %v5071 = vpow.pop %v5070
    %5080 = vset.pattern.permute.xlu0 0
    %5081 = vperm.xlu0 %5080, %v5057
    %v5082 = vpop.permute.xlu0 %5081
    %5083 = vset.pattern.permute.xlu0 0
    %5084 = vperm.xlu0 %5083, %v5059
    %v5085 = vpop.permute.xlu0 %5084
    %5086 = vset.pattern.permute.xlu0 0
    %5087 = vperm.xlu0 %5086, %v5061
    %v5088 = vpop.permute.xlu0 %5087
    %5089 = vset.pattern.permute.xlu0 0
    %5090 = vperm.xlu0 %5089, %v5063
    %v5091 = vpop.permute.xlu0 %5090
    %5092 = vset.pattern.permute.xlu0 0
    %5093 = vperm.xlu0 %5092, %v5065
    %v5094 = vpop.permute.xlu0 %5093
    %5095 = vset.pattern.permute.xlu0 0
    %5096 = vperm.xlu0 %5095, %v5067
    %v5097 = vpop.permute.xlu0 %5096
    %5098 = vset.pattern.permute.xlu0 0
    %5099 = vperm.xlu0 %5098, %v5069
    %v5100 = vpop.permute.xlu0 %5099
    %5101 = vset.pattern.permute.xlu0 0
    %5102 = vperm.xlu0 %5101, %v5071
    %v5103 = vpop.permute.xlu0 %5102
    %v5104 = vlaneseq
    %v5105 = vshrl.u32 %v5104, 7
    %v5106 = vsub.s32 %v817, %v5105
    %v5107 = vrot.slane %v5082, %v5106
    %v5108 = vlaneseq
    %v5109 = vshrl.u32 %v5108, 7
    %v5110 = vsub.s32 %v817, %v5109
    %v5111 = vrot.slane %v5085, %v5110
    %v5112 = vlaneseq
    %v5113 = vshrl.u32 %v5112, 7
    %v5114 = vsub.s32 %v817, %v5113
    %v5115 = vrot.slane %v5088, %v5114
    %v5116 = vlaneseq
    %v5117 = vshrl.u32 %v5116, 7
    %v5118 = vsub.s32 %v817, %v5117
    %v5119 = vrot.slane %v5091, %v5118
    %v5120 = vlaneseq
    %v5121 = vshrl.u32 %v5120, 7
    %v5122 = vsub.s32 %v817, %v5121
    %v5123 = vrot.slane %v5094, %v5122
    %v5124 = vlaneseq
    %v5125 = vshrl.u32 %v5124, 7
    %v5126 = vsub.s32 %v817, %v5125
    %v5127 = vrot.slane %v5097, %v5126
    %v5128 = vlaneseq
    %v5129 = vshrl.u32 %v5128, 7
    %v5130 = vsub.s32 %v817, %v5129
    %v5131 = vrot.slane %v5100, %v5130
    %v5132 = vlaneseq
    %v5133 = vshrl.u32 %v5132, 7
    %v5134 = vsub.s32 %v817, %v5133
    %v5135 = vrot.slane %v5103, %v5134
    %v5136 = vsel %vm850, %v5111, %v5107
    %v5137 = vsel %vm852, %v5115, %v5136
    %v5138 = vsel %vm854, %v5119, %v5137
    %v5139 = vsel %vm856, %v5123, %v5138
    %v5140 = vsel %vm858, %v5127, %v5139
    %v5141 = vsel %vm860, %v5131, %v5140
    %v5142 = vsel %vm862, %v5135, %v5141
    %v5144 = vsel %vm865, %v5142, 0.0
    %5145 = vadd.xlane.f32.xlu0 %v5144
    %v5146 = vpop.xlane.xlu0 %5145
    %v5147 = vrcp.pop %v5146
    %v5149 = vlaneseq
    %v5150 = vshrl.u32 %v5149, 7
    %v5151 = vsub.s32 0, %v5150
    %v5152 = vrot.slane %v5147, %v5151
    %v5153 = vlaneseq
    %v5154 = vshrl.u32 %v5153, 7
    %v5155 = vsub.s32 1, %v5154
    %v5156 = vrot.slane %v5147, %v5155
    %v5157 = vlaneseq
    %v5158 = vshrl.u32 %v5157, 7
    %v5159 = vsub.s32 2, %v5158
    %v5160 = vrot.slane %v5147, %v5159
    %v5161 = vlaneseq
    %v5162 = vshrl.u32 %v5161, 7
    %v5163 = vsub.s32 3, %v5162
    %v5164 = vrot.slane %v5147, %v5163
    %v5165 = vlaneseq
    %v5166 = vshrl.u32 %v5165, 7
    %v5167 = vsub.s32 4, %v5166
    %v5168 = vrot.slane %v5147, %v5167
    %v5169 = vlaneseq
    %v5170 = vshrl.u32 %v5169, 7
    %v5171 = vsub.s32 5, %v5170
    %v5172 = vrot.slane %v5147, %v5171
    %v5173 = vlaneseq
    %v5174 = vshrl.u32 %v5173, 7
    %v5175 = vsub.s32 6, %v5174
    %v5176 = vrot.slane %v5147, %v5175
    %v5177 = vlaneseq
    %v5178 = vshrl.u32 %v5177, 7
    %v5179 = vsub.s32 7, %v5178
    %v5180 = vrot.slane %v5147, %v5179
    %v5189 = vmul.f32 %v5057, %v5152
    %v5190 = vmul.f32 %v5059, %v5156
    %v5191 = vmul.f32 %v5061, %v5160
    %v5192 = vmul.f32 %v5063, %v5164
    %v5193 = vmul.f32 %v5065, %v5168
    %v5194 = vmul.f32 %v5067, %v5172
    %v5195 = vmul.f32 %v5069, %v5176
    %v5196 = vmul.f32 %v5071, %v5180
    %v5197 = vpack.c.bf16 %v5189, %v5189
    %v5198 = vpack.c.bf16 %v5190, %v5190
    %v5199 = vpack.c.bf16 %v5191, %v5191
    %v5200 = vpack.c.bf16 %v5192, %v5192
    %v5201 = vpack.c.bf16 %v5193, %v5193
    %v5202 = vpack.c.bf16 %v5194, %v5194
    %v5203 = vpack.c.bf16 %v5195, %v5195
    %v5204 = vpack.c.bf16 %v5196, %v5196
    %v5206 = vunpack.c.l.b16 %v5197
    %5207 = vset.pattern.permute.xlu0 0
    %5208 = vperm.xlu0 %5207, %v5206
    %v5209 = vpop.permute.xlu0 %5208
    %v5210 = vlaneseq
    %v5211 = vshrl.u32 %v5210, 7
    %v5212 = vsub.s32 %v817, %v5211
    %v5213 = vrot.slane %v5209, %v5212
    %v5214 = vpack.c.b16 %v5213, %v5213
    %v5216 = vsel %vm865, %v5214, 0
    %5218 = vmatprep.subr.bf16.mxu0 0
    %5219 = vmatpush1.bf16.msra.mxu0 %v1082
    %5220 = vmatprep.subr.bf16.mxu0 0
    %5221 = vmatpush1.bf16.msra.mxu0 0
    %5222 = vmatprep.subr.bf16.mxu0 0
    %5223 = vmatpush1.bf16.msra.mxu0 0
    %5224 = vmatprep.subr.bf16.mxu0 0
    %5225 = vmatpush1.bf16.msra.mxu0 0
    %5226 = vmatprep.subr.bf16.mxu0 0
    %5227 = vmatpush1.bf16.msra.mxu0 0
    %5228 = vmatprep.subr.bf16.mxu0 0
    %5229 = vmatpush1.bf16.msra.mxu0 0
    %5230 = vmatprep.subr.bf16.mxu0 0
    %5231 = vmatpush1.bf16.msra.mxu0 0
    %5232 = vmatprep.subr.bf16.mxu0 0
    %5233 = vmatpush1.bf16.msra.mxu0 0
    %5234 = vmatprep.subr.bf16.mxu0 0
    %5235 = vmatpush1.bf16.msra.mxu0 0
    %5236 = vmatprep.subr.bf16.mxu0 0
    %5237 = vmatpush1.bf16.msra.mxu0 0
    %5238 = vmatprep.subr.bf16.mxu0 0
    %5239 = vmatpush1.bf16.msra.mxu0 0
    %5240 = vmatprep.subr.bf16.mxu0 0
    %5241 = vmatpush1.bf16.msra.mxu0 0
    %5242 = vmatprep.subr.bf16.mxu0 0
    %5243 = vmatpush1.bf16.msra.mxu0 0
    %5244 = vmatprep.subr.bf16.mxu0 0
    %5245 = vmatpush1.bf16.msra.mxu0 0
    %5246 = vmatprep.subr.bf16.mxu0 0
    %5247 = vmatpush1.bf16.msra.mxu0 0
    %5248 = vmatprep.subr.bf16.mxu0 0
    %5249 = vmatpush1.bf16.msra.mxu0 0
    %5250 = vmatprep.mubr.bf16.mxu0 0
    %5251 = vmatmul.mubr.bf16.gmra.mrb[0].mxu0 %v5216
    %v5252 = vpop.f32.mrb[0].mxu0
    %v5253 = vadd.f32 0.0, %v5252
    %v5254 = vpop.f32.mrb[0].mxu0
    %v5255 = vpop.f32.mrb[0].mxu0
    %v5256 = vpop.f32.mrb[0].mxu0
    %5257 = vdwg.mxu0
    %v5259 = vunpack.c.l.b16 %v5198
    %5260 = vset.pattern.permute.xlu0 0
    %5261 = vperm.xlu0 %5260, %v5259
    %v5262 = vpop.permute.xlu0 %5261
    %v5263 = vlaneseq
    %v5264 = vshrl.u32 %v5263, 7
    %v5265 = vsub.s32 %v817, %v5264
    %v5266 = vrot.slane %v5262, %v5265
    %v5267 = vpack.c.b16 %v5266, %v5266
    %v5269 = vsel %vm865, %v5267, 0
    %5271 = vmatprep.subr.bf16.mxu0 0
    %5272 = vmatpush1.bf16.msra.mxu0 %v1138
    %5273 = vmatprep.subr.bf16.mxu0 0
    %5274 = vmatpush1.bf16.msra.mxu0 0
    %5275 = vmatprep.subr.bf16.mxu0 0
    %5276 = vmatpush1.bf16.msra.mxu0 0
    %5277 = vmatprep.subr.bf16.mxu0 0
    %5278 = vmatpush1.bf16.msra.mxu0 0
    %5279 = vmatprep.subr.bf16.mxu0 0
    %5280 = vmatpush1.bf16.msra.mxu0 0
    %5281 = vmatprep.subr.bf16.mxu0 0
    %5282 = vmatpush1.bf16.msra.mxu0 0
    %5283 = vmatprep.subr.bf16.mxu0 0
    %5284 = vmatpush1.bf16.msra.mxu0 0
    %5285 = vmatprep.subr.bf16.mxu0 0
    %5286 = vmatpush1.bf16.msra.mxu0 0
    %5287 = vmatprep.subr.bf16.mxu0 0
    %5288 = vmatpush1.bf16.msra.mxu0 0
    %5289 = vmatprep.subr.bf16.mxu0 0
    %5290 = vmatpush1.bf16.msra.mxu0 0
    %5291 = vmatprep.subr.bf16.mxu0 0
    %5292 = vmatpush1.bf16.msra.mxu0 0
    %5293 = vmatprep.subr.bf16.mxu0 0
    %5294 = vmatpush1.bf16.msra.mxu0 0
    %5295 = vmatprep.subr.bf16.mxu0 0
    %5296 = vmatpush1.bf16.msra.mxu0 0
    %5297 = vmatprep.subr.bf16.mxu0 0
    %5298 = vmatpush1.bf16.msra.mxu0 0
    %5299 = vmatprep.subr.bf16.mxu0 0
    %5300 = vmatpush1.bf16.msra.mxu0 0
    %5301 = vmatprep.subr.bf16.mxu0 0
    %5302 = vmatpush1.bf16.msra.mxu0 0
    %5303 = vmatprep.mubr.bf16.mxu0 0
    %5304 = vmatmul.mubr.bf16.gmra.mrb[0].mxu0 %v5269
    %v5305 = vpop.f32.mrb[0].mxu0
    %v5306 = vadd.f32 0.0, %v5305
    %v5307 = vpop.f32.mrb[0].mxu0
    %v5308 = vpop.f32.mrb[0].mxu0
    %v5309 = vpop.f32.mrb[0].mxu0
    %5310 = vdwg.mxu0
    %v5312 = vunpack.c.l.b16 %v5199
    %5313 = vset.pattern.permute.xlu0 0
    %5314 = vperm.xlu0 %5313, %v5312
    %v5315 = vpop.permute.xlu0 %5314
    %v5316 = vlaneseq
    %v5317 = vshrl.u32 %v5316, 7
    %v5318 = vsub.s32 %v817, %v5317
    %v5319 = vrot.slane %v5315, %v5318
    %v5320 = vpack.c.b16 %v5319, %v5319
    %v5322 = vsel %vm865, %v5320, 0
    %5324 = vmatprep.subr.bf16.mxu0 0
    %5325 = vmatpush1.bf16.msra.mxu0 %v1194
    %5326 = vmatprep.subr.bf16.mxu0 0
    %5327 = vmatpush1.bf16.msra.mxu0 0
    %5328 = vmatprep.subr.bf16.mxu0 0
    %5329 = vmatpush1.bf16.msra.mxu0 0
    %5330 = vmatprep.subr.bf16.mxu0 0
    %5331 = vmatpush1.bf16.msra.mxu0 0
    %5332 = vmatprep.subr.bf16.mxu0 0
    %5333 = vmatpush1.bf16.msra.mxu0 0
    %5334 = vmatprep.subr.bf16.mxu0 0
    %5335 = vmatpush1.bf16.msra.mxu0 0
    %5336 = vmatprep.subr.bf16.mxu0 0
    %5337 = vmatpush1.bf16.msra.mxu0 0
    %5338 = vmatprep.subr.bf16.mxu0 0
    %5339 = vmatpush1.bf16.msra.mxu0 0
    %5340 = vmatprep.subr.bf16.mxu0 0
    %5341 = vmatpush1.bf16.msra.mxu0 0
    %5342 = vmatprep.subr.bf16.mxu0 0
    %5343 = vmatpush1.bf16.msra.mxu0 0
    %5344 = vmatprep.subr.bf16.mxu0 0
    %5345 = vmatpush1.bf16.msra.mxu0 0
    %5346 = vmatprep.subr.bf16.mxu0 0
    %5347 = vmatpush1.bf16.msra.mxu0 0
    %5348 = vmatprep.subr.bf16.mxu0 0
    %5349 = vmatpush1.bf16.msra.mxu0 0
    %5350 = vmatprep.subr.bf16.mxu0 0
    %5351 = vmatpush1.bf16.msra.mxu0 0
    %5352 = vmatprep.subr.bf16.mxu0 0
    %5353 = vmatpush1.bf16.msra.mxu0 0
    %5354 = vmatprep.subr.bf16.mxu0 0
    %5355 = vmatpush1.bf16.msra.mxu0 0
    %5356 = vmatprep.mubr.bf16.mxu0 0
    %5357 = vmatmul.mubr.bf16.gmra.mrb[0].mxu0 %v5322
    %v5358 = vpop.f32.mrb[0].mxu0
    %v5359 = vadd.f32 0.0, %v5358
    %v5360 = vpop.f32.mrb[0].mxu0
    %v5361 = vpop.f32.mrb[0].mxu0
    %v5362 = vpop.f32.mrb[0].mxu0
    %5363 = vdwg.mxu0
    %v5365 = vunpack.c.l.b16 %v5200
    %5366 = vset.pattern.permute.xlu0 0
    %5367 = vperm.xlu0 %5366, %v5365
    %v5368 = vpop.permute.xlu0 %5367
    %v5369 = vlaneseq
    %v5370 = vshrl.u32 %v5369, 7
    %v5371 = vsub.s32 %v817, %v5370
    %v5372 = vrot.slane %v5368, %v5371
    %v5373 = vpack.c.b16 %v5372, %v5372
    %v5375 = vsel %vm865, %v5373, 0
    %5377 = vmatprep.subr.bf16.mxu0 0
    %5378 = vmatpush1.bf16.msra.mxu0 %v1250
    %5379 = vmatprep.subr.bf16.mxu0 0
    %5380 = vmatpush1.bf16.msra.mxu0 0
    %5381 = vmatprep.subr.bf16.mxu0 0
    %5382 = vmatpush1.bf16.msra.mxu0 0
    %5383 = vmatprep.subr.bf16.mxu0 0
    %5384 = vmatpush1.bf16.msra.mxu0 0
    %5385 = vmatprep.subr.bf16.mxu0 0
    %5386 = vmatpush1.bf16.msra.mxu0 0
    %5387 = vmatprep.subr.bf16.mxu0 0
    %5388 = vmatpush1.bf16.msra.mxu0 0
    %5389 = vmatprep.subr.bf16.mxu0 0
    %5390 = vmatpush1.bf16.msra.mxu0 0
    %5391 = vmatprep.subr.bf16.mxu0 0
    %5392 = vmatpush1.bf16.msra.mxu0 0
    %5393 = vmatprep.subr.bf16.mxu0 0
    %5394 = vmatpush1.bf16.msra.mxu0 0
    %5395 = vmatprep.subr.bf16.mxu0 0
    %5396 = vmatpush1.bf16.msra.mxu0 0
    %5397 = vmatprep.subr.bf16.mxu0 0
    %5398 = vmatpush1.bf16.msra.mxu0 0
    %5399 = vmatprep.subr.bf16.mxu0 0
    %5400 = vmatpush1.bf16.msra.mxu0 0
    %5401 = vmatprep.subr.bf16.mxu0 0
    %5402 = vmatpush1.bf16.msra.mxu0 0
    %5403 = vmatprep.subr.bf16.mxu0 0
    %5404 = vmatpush1.bf16.msra.mxu0 0
    %5405 = vmatprep.subr.bf16.mxu0 0
    %5406 = vmatpush1.bf16.msra.mxu0 0
    %5407 = vmatprep.subr.bf16.mxu0 0
    %5408 = vmatpush1.bf16.msra.mxu0 0
    %5409 = vmatprep.mubr.bf16.mxu0 0
    %5410 = vmatmul.mubr.bf16.gmra.mrb[0].mxu0 %v5375
    %v5411 = vpop.f32.mrb[0].mxu0
    %v5412 = vadd.f32 0.0, %v5411
    %v5413 = vpop.f32.mrb[0].mxu0
    %v5414 = vpop.f32.mrb[0].mxu0
    %v5415 = vpop.f32.mrb[0].mxu0
    %5416 = vdwg.mxu0
    %v5418 = vunpack.c.l.b16 %v5201
    %5419 = vset.pattern.permute.xlu0 0
    %5420 = vperm.xlu0 %5419, %v5418
    %v5421 = vpop.permute.xlu0 %5420
    %v5422 = vlaneseq
    %v5423 = vshrl.u32 %v5422, 7
    %v5424 = vsub.s32 %v817, %v5423
    %v5425 = vrot.slane %v5421, %v5424
    %v5426 = vpack.c.b16 %v5425, %v5425
    %v5428 = vsel %vm865, %v5426, 0
    %5430 = vmatprep.subr.bf16.mxu0 0
    %5431 = vmatpush1.bf16.msra.mxu0 %v1306
    %5432 = vmatprep.subr.bf16.mxu0 0
    %5433 = vmatpush1.bf16.msra.mxu0 0
    %5434 = vmatprep.subr.bf16.mxu0 0
    %5435 = vmatpush1.bf16.msra.mxu0 0
    %5436 = vmatprep.subr.bf16.mxu0 0
    %5437 = vmatpush1.bf16.msra.mxu0 0
    %5438 = vmatprep.subr.bf16.mxu0 0
    %5439 = vmatpush1.bf16.msra.mxu0 0
    %5440 = vmatprep.subr.bf16.mxu0 0
    %5441 = vmatpush1.bf16.msra.mxu0 0
    %5442 = vmatprep.subr.bf16.mxu0 0
    %5443 = vmatpush1.bf16.msra.mxu0 0
    %5444 = vmatprep.subr.bf16.mxu0 0
    %5445 = vmatpush1.bf16.msra.mxu0 0
    %5446 = vmatprep.subr.bf16.mxu0 0
    %5447 = vmatpush1.bf16.msra.mxu0 0
    %5448 = vmatprep.subr.bf16.mxu0 0
    %5449 = vmatpush1.bf16.msra.mxu0 0
    %5450 = vmatprep.subr.bf16.mxu0 0
    %5451 = vmatpush1.bf16.msra.mxu0 0
    %5452 = vmatprep.subr.bf16.mxu0 0
    %5453 = vmatpush1.bf16.msra.mxu0 0
    %5454 = vmatprep.subr.bf16.mxu0 0
    %5455 = vmatpush1.bf16.msra.mxu0 0
    %5456 = vmatprep.subr.bf16.mxu0 0
    %5457 = vmatpush1.bf16.msra.mxu0 0
    %5458 = vmatprep.subr.bf16.mxu0 0
    %5459 = vmatpush1.bf16.msra.mxu0 0
    %5460 = vmatprep.subr.bf16.mxu0 0
    %5461 = vmatpush1.bf16.msra.mxu0 0
    %5462 = vmatprep.mubr.bf16.mxu0 0
    %5463 = vmatmul.mubr.bf16.gmra.mrb[0].mxu0 %v5428
    %v5464 = vpop.f32.mrb[0].mxu0
    %v5465 = vadd.f32 0.0, %v5464
    %v5466 = vpop.f32.mrb[0].mxu0
    %v5467 = vpop.f32.mrb[0].mxu0
    %v5468 = vpop.f32.mrb[0].mxu0
    %5469 = vdwg.mxu0
    %v5471 = vunpack.c.l.b16 %v5202
    %5472 = vset.pattern.permute.xlu0 0
    %5473 = vperm.xlu0 %5472, %v5471
    %v5474 = vpop.permute.xlu0 %5473
    %v5475 = vlaneseq
    %v5476 = vshrl.u32 %v5475, 7
    %v5477 = vsub.s32 %v817, %v5476
    %v5478 = vrot.slane %v5474, %v5477
    %v5479 = vpack.c.b16 %v5478, %v5478
    %v5481 = vsel %vm865, %v5479, 0
    %5483 = vmatprep.subr.bf16.mxu0 0
    %5484 = vmatpush1.bf16.msra.mxu0 %v1362
    %5485 = vmatprep.subr.bf16.mxu0 0
    %5486 = vmatpush1.bf16.msra.mxu0 0
    %5487 = vmatprep.subr.bf16.mxu0 0
    %5488 = vmatpush1.bf16.msra.mxu0 0
    %5489 = vmatprep.subr.bf16.mxu0 0
    %5490 = vmatpush1.bf16.msra.mxu0 0
    %5491 = vmatprep.subr.bf16.mxu0 0
    %5492 = vmatpush1.bf16.msra.mxu0 0
    %5493 = vmatprep.subr.bf16.mxu0 0
    %5494 = vmatpush1.bf16.msra.mxu0 0
    %5495 = vmatprep.subr.bf16.mxu0 0
    %5496 = vmatpush1.bf16.msra.mxu0 0
    %5497 = vmatprep.subr.bf16.mxu0 0
    %5498 = vmatpush1.bf16.msra.mxu0 0
    %5499 = vmatprep.subr.bf16.mxu0 0
    %5500 = vmatpush1.bf16.msra.mxu0 0
    %5501 = vmatprep.subr.bf16.mxu0 0
    %5502 = vmatpush1.bf16.msra.mxu0 0
    %5503 = vmatprep.subr.bf16.mxu0 0
    %5504 = vmatpush1.bf16.msra.mxu0 0
    %5505 = vmatprep.subr.bf16.mxu0 0
    %5506 = vmatpush1.bf16.msra.mxu0 0
    %5507 = vmatprep.subr.bf16.mxu0 0
    %5508 = vmatpush1.bf16.msra.mxu0 0
    %5509 = vmatprep.subr.bf16.mxu0 0
    %5510 = vmatpush1.bf16.msra.mxu0 0
    %5511 = vmatprep.subr.bf16.mxu0 0
    %5512 = vmatpush1.bf16.msra.mxu0 0
    %5513 = vmatprep.subr.bf16.mxu0 0
    %5514 = vmatpush1.bf16.msra.mxu0 0
    %5515 = vmatprep.mubr.bf16.mxu0 0
    %5516 = vmatmul.mubr.bf16.gmra.mrb[0].mxu0 %v5481
    %v5517 = vpop.f32.mrb[0].mxu0
    %v5518 = vadd.f32 0.0, %v5517
    %v5519 = vpop.f32.mrb[0].mxu0
    %v5520 = vpop.f32.mrb[0].mxu0
    %v5521 = vpop.f32.mrb[0].mxu0
    %5522 = vdwg.mxu0
    %v5524 = vunpack.c.l.b16 %v5203
    %5525 = vset.pattern.permute.xlu0 0
    %5526 = vperm.xlu0 %5525, %v5524
    %v5527 = vpop.permute.xlu0 %5526
    %v5528 = vlaneseq
    %v5529 = vshrl.u32 %v5528, 7
    %v5530 = vsub.s32 %v817, %v5529
    %v5531 = vrot.slane %v5527, %v5530
    %v5532 = vpack.c.b16 %v5531, %v5531
    %v5534 = vsel %vm865, %v5532, 0
    %5536 = vmatprep.subr.bf16.mxu0 0
    %5537 = vmatpush1.bf16.msra.mxu0 %v1418
    %5538 = vmatprep.subr.bf16.mxu0 0
    %5539 = vmatpush1.bf16.msra.mxu0 0
    %5540 = vmatprep.subr.bf16.mxu0 0
    %5541 = vmatpush1.bf16.msra.mxu0 0
    %5542 = vmatprep.subr.bf16.mxu0 0
    %5543 = vmatpush1.bf16.msra.mxu0 0
    %5544 = vmatprep.subr.bf16.mxu0 0
    %5545 = vmatpush1.bf16.msra.mxu0 0
    %5546 = vmatprep.subr.bf16.mxu0 0
    %5547 = vmatpush1.bf16.msra.mxu0 0
    %5548 = vmatprep.subr.bf16.mxu0 0
    %5549 = vmatpush1.bf16.msra.mxu0 0
    %5550 = vmatprep.subr.bf16.mxu0 0
    %5551 = vmatpush1.bf16.msra.mxu0 0
    %5552 = vmatprep.subr.bf16.mxu0 0
    %5553 = vmatpush1.bf16.msra.mxu0 0
    %5554 = vmatprep.subr.bf16.mxu0 0
    %5555 = vmatpush1.bf16.msra.mxu0 0
    %5556 = vmatprep.subr.bf16.mxu0 0
    %5557 = vmatpush1.bf16.msra.mxu0 0
    %5558 = vmatprep.subr.bf16.mxu0 0
    %5559 = vmatpush1.bf16.msra.mxu0 0
    %5560 = vmatprep.subr.bf16.mxu0 0
    %5561 = vmatpush1.bf16.msra.mxu0 0
    %5562 = vmatprep.subr.bf16.mxu0 0
    %5563 = vmatpush1.bf16.msra.mxu0 0
    %5564 = vmatprep.subr.bf16.mxu0 0
    %5565 = vmatpush1.bf16.msra.mxu0 0
    %5566 = vmatprep.subr.bf16.mxu0 0
    %5567 = vmatpush1.bf16.msra.mxu0 0
    %5568 = vmatprep.mubr.bf16.mxu0 0
    %5569 = vmatmul.mubr.bf16.gmra.mrb[0].mxu0 %v5534
    %v5570 = vpop.f32.mrb[0].mxu0
    %v5571 = vadd.f32 0.0, %v5570
    %v5572 = vpop.f32.mrb[0].mxu0
    %v5573 = vpop.f32.mrb[0].mxu0
    %v5574 = vpop.f32.mrb[0].mxu0
    %5575 = vdwg.mxu0
    %v5577 = vunpack.c.l.b16 %v5204
    %5578 = vset.pattern.permute.xlu0 0
    %5579 = vperm.xlu0 %5578, %v5577
    %v5580 = vpop.permute.xlu0 %5579
    %v5581 = vlaneseq
    %v5582 = vshrl.u32 %v5581, 7
    %v5583 = vsub.s32 %v817, %v5582
    %v5584 = vrot.slane %v5580, %v5583
    %v5585 = vpack.c.b16 %v5584, %v5584
    %v5587 = vsel %vm865, %v5585, 0
    %5589 = vmatprep.subr.bf16.mxu0 0
    %5590 = vmatpush1.bf16.msra.mxu0 %v1474
    %5591 = vmatprep.subr.bf16.mxu0 0
    %5592 = vmatpush1.bf16.msra.mxu0 0
    %5593 = vmatprep.subr.bf16.mxu0 0
    %5594 = vmatpush1.bf16.msra.mxu0 0
    %5595 = vmatprep.subr.bf16.mxu0 0
    %5596 = vmatpush1.bf16.msra.mxu0 0
    %5597 = vmatprep.subr.bf16.mxu0 0
    %5598 = vmatpush1.bf16.msra.mxu0 0
    %5599 = vmatprep.subr.bf16.mxu0 0
    %5600 = vmatpush1.bf16.msra.mxu0 0
    %5601 = vmatprep.subr.bf16.mxu0 0
    %5602 = vmatpush1.bf16.msra.mxu0 0
    %5603 = vmatprep.subr.bf16.mxu0 0
    %5604 = vmatpush1.bf16.msra.mxu0 0
    %5605 = vmatprep.subr.bf16.mxu0 0
    %5606 = vmatpush1.bf16.msra.mxu0 0
    %5607 = vmatprep.subr.bf16.mxu0 0
    %5608 = vmatpush1.bf16.msra.mxu0 0
    %5609 = vmatprep.subr.bf16.mxu0 0
    %5610 = vmatpush1.bf16.msra.mxu0 0
    %5611 = vmatprep.subr.bf16.mxu0 0
    %5612 = vmatpush1.bf16.msra.mxu0 0
    %5613 = vmatprep.subr.bf16.mxu0 0
    %5614 = vmatpush1.bf16.msra.mxu0 0
    %5615 = vmatprep.subr.bf16.mxu0 0
    %5616 = vmatpush1.bf16.msra.mxu0 0
    %5617 = vmatprep.subr.bf16.mxu0 0
    %5618 = vmatpush1.bf16.msra.mxu0 0
    %5619 = vmatprep.subr.bf16.mxu0 0
    %5620 = vmatpush1.bf16.msra.mxu0 0
    %5621 = vmatprep.mubr.bf16.mxu0 0
    %5622 = vmatmul.mubr.bf16.gmra.mrb[0].mxu0 %v5587
    %v5623 = vpop.f32.mrb[0].mxu0
    %v5624 = vadd.f32 0.0, %v5623
    %v5625 = vpop.f32.mrb[0].mxu0
    %v5626 = vpop.f32.mrb[0].mxu0
    %v5627 = vpop.f32.mrb[0].mxu0
    %5628 = vdwg.mxu0
    %v5637 = vrot.slane %v5306, 7
    %v5638 = vsel %vm850, %v5637, %v5253
    %v5639 = vrot.slane %v5359, 6
    %v5640 = vsel %vm852, %v5639, %v5638
    %v5641 = vrot.slane %v5412, 5
    %v5642 = vsel %vm854, %v5641, %v5640
    %v5643 = vrot.slane %v5465, 4
    %v5644 = vsel %vm856, %v5643, %v5642
    %v5645 = vrot.slane %v5518, 3
    %v5646 = vsel %vm858, %v5645, %v5644
    %v5647 = vrot.slane %v5571, 2
    %v5648 = vsel %vm860, %v5647, %v5646
    %v5649 = vrot.slane %v5624, 1
    %v5650 = vsel %vm862, %v5649, %v5648
    %5651 = vrot.lane.b32.xlu0 %v5650, 32
    %v5652 = vpop.permute.xlu0 %5651
    %5655 = vrot.lane.b32.xlu0 %v4738, 32
    %v5656 = vpop.permute.xlu0 %5655
    %v5658 = vsel %vm357, %v4627, %v5652
    %v5659 = vsel %vm384, %v5658, %v5656
    %v5660 = vpack.c.bf16 %v5659, %v5659
    %v5662 = vsel %vm1584, %v5660, 0
    %5664 = vmatprep.subr.bf16.mxu0 0
    %5665 = vmatpush1.bf16.msra.mxu0 %v1572
    %5666 = vmatprep.subr.bf16.mxu0 0
    %5667 = vmatpush1.bf16.msra.mxu0 %v1573
    %5668 = vmatprep.subr.bf16.mxu0 0
    %5669 = vmatpush1.bf16.msra.mxu0 %v1574
    %5670 = vmatprep.subr.bf16.mxu0 0
    %5671 = vmatpush1.bf16.msra.mxu0 %v1575
    %5672 = vmatprep.subr.bf16.mxu0 0
    %5673 = vmatpush1.bf16.msra.mxu0 %v1576
    %5674 = vmatprep.subr.bf16.mxu0 0
    %5675 = vmatpush1.bf16.msra.mxu0 %v1577
    %5676 = vmatprep.subr.bf16.mxu0 0
    %5677 = vmatpush1.bf16.msra.mxu0 0
    %5678 = vmatprep.subr.bf16.mxu0 0
    %5679 = vmatpush1.bf16.msra.mxu0 0
    %5680 = vmatprep.subr.bf16.mxu0 0
    %5681 = vmatpush1.bf16.msra.mxu0 0
    %5682 = vmatprep.subr.bf16.mxu0 0
    %5683 = vmatpush1.bf16.msra.mxu0 0
    %5684 = vmatprep.subr.bf16.mxu0 0
    %5685 = vmatpush1.bf16.msra.mxu0 0
    %5686 = vmatprep.subr.bf16.mxu0 0
    %5687 = vmatpush1.bf16.msra.mxu0 0
    %5688 = vmatprep.subr.bf16.mxu0 0
    %5689 = vmatpush1.bf16.msra.mxu0 0
    %5690 = vmatprep.subr.bf16.mxu0 0
    %5691 = vmatpush1.bf16.msra.mxu0 0
    %5692 = vmatprep.subr.bf16.mxu0 0
    %5693 = vmatpush1.bf16.msra.mxu0 0
    %5694 = vmatprep.subr.bf16.mxu0 0
    %5695 = vmatpush1.bf16.msra.mxu0 0
    %5696 = vmatprep.mubr.bf16.mxu0 0
    %5697 = vmatmul.mubr.bf16.gmra.mrb[0].mxu0 %v5662
    %v5698 = vpop.f32.mrb[0].mxu0
    %v5699 = vadd.f32 %v327, %v5698
    %v5700 = vpop.f32.mrb[0].mxu0
    %v5701 = vpop.f32.mrb[0].mxu0
    %v5702 = vpop.f32.mrb[0].mxu0
    %5703 = vdwg.mxu0
    %v5704 = vxor.u32 %v5699, 2147483648
    %v5705 = vmul.f32 %v5704, 1.442695
    %v5706 = vpow.pop %v5705
    %v5707 = vadd.f32 %v5706, 1.0
    %v5708 = vrcp.pop %v5707
    %v5709 = vmul.f32 1.0, %v5708
    %5710 = vmatprep.subr.bf16.mxu0 0
    %5711 = vmatpush1.bf16.msra.mxu0 %v1658
    %5712 = vmatprep.subr.bf16.mxu0 0
    %5713 = vmatpush1.bf16.msra.mxu0 %v1659
    %5714 = vmatprep.subr.bf16.mxu0 0
    %5715 = vmatpush1.bf16.msra.mxu0 %v1660
    %5716 = vmatprep.subr.bf16.mxu0 0
    %5717 = vmatpush1.bf16.msra.mxu0 %v1661
    %5718 = vmatprep.subr.bf16.mxu0 0
    %5719 = vmatpush1.bf16.msra.mxu0 %v1662
    %5720 = vmatprep.subr.bf16.mxu0 0
    %5721 = vmatpush1.bf16.msra.mxu0 %v1663
    %5722 = vmatprep.subr.bf16.mxu0 0
    %5723 = vmatpush1.bf16.msra.mxu0 0
    %5724 = vmatprep.subr.bf16.mxu0 0
    %5725 = vmatpush1.bf16.msra.mxu0 0
    %5726 = vmatprep.subr.bf16.mxu0 0
    %5727 = vmatpush1.bf16.msra.mxu0 0
    %5728 = vmatprep.subr.bf16.mxu0 0
    %5729 = vmatpush1.bf16.msra.mxu0 0
    %5730 = vmatprep.subr.bf16.mxu0 0
    %5731 = vmatpush1.bf16.msra.mxu0 0
    %5732 = vmatprep.subr.bf16.mxu0 0
    %5733 = vmatpush1.bf16.msra.mxu0 0
    %5734 = vmatprep.subr.bf16.mxu0 0
    %5735 = vmatpush1.bf16.msra.mxu0 0
    %5736 = vmatprep.subr.bf16.mxu0 0
    %5737 = vmatpush1.bf16.msra.mxu0 0
    %5738 = vmatprep.subr.bf16.mxu0 0
    %5739 = vmatpush1.bf16.msra.mxu0 0
    %5740 = vmatprep.subr.bf16.mxu0 0
    %5741 = vmatpush1.bf16.msra.mxu0 0
    %5742 = vmatprep.mubr.bf16.mxu0 0
    %5743 = vmatmul.mubr.bf16.gmra.mrb[0].mxu0 %v5662
    %v5744 = vpop.f32.mrb[0].mxu0
    %v5745 = vadd.f32 %v346, %v5744
    %v5746 = vpop.f32.mrb[0].mxu0
    %v5747 = vpop.f32.mrb[0].mxu0
    %v5748 = vpop.f32.mrb[0].mxu0
    %5749 = vdwg.mxu0
    %5751 = vrot.lane.b32.xlu0 %v5745, 112
    %v5752 = vpop.permute.xlu0 %5751
    %v5754 = vmax.f32 %v5745, %v5752
    %v5755 = vpack.c.bf16 %v5754, %v5754
    %v5757 = vsel %vm1722, %v5755, 0
    %5759 = vmatprep.subr.bf16.mxu0 0
    %5760 = vmatpush1.bf16.msra.mxu0 %v1720
    %5761 = vmatprep.subr.bf16.mxu0 0
    %5762 = vmatpush1.bf16.msra.mxu0 0
    %5763 = vmatprep.subr.bf16.mxu0 0
    %5764 = vmatpush1.bf16.msra.mxu0 0
    %5765 = vmatprep.subr.bf16.mxu0 0
    %5766 = vmatpush1.bf16.msra.mxu0 0
    %5767 = vmatprep.subr.bf16.mxu0 0
    %5768 = vmatpush1.bf16.msra.mxu0 0
    %5769 = vmatprep.subr.bf16.mxu0 0
    %5770 = vmatpush1.bf16.msra.mxu0 0
    %5771 = vmatprep.subr.bf16.mxu0 0
    %5772 = vmatpush1.bf16.msra.mxu0 0
    %5773 = vmatprep.subr.bf16.mxu0 0
    %5774 = vmatpush1.bf16.msra.mxu0 0
    %5775 = vmatprep.subr.bf16.mxu0 0
    %5776 = vmatpush1.bf16.msra.mxu0 0
    %5777 = vmatprep.subr.bf16.mxu0 0
    %5778 = vmatpush1.bf16.msra.mxu0 0
    %5779 = vmatprep.subr.bf16.mxu0 0
    %5780 = vmatpush1.bf16.msra.mxu0 0
    %5781 = vmatprep.subr.bf16.mxu0 0
    %5782 = vmatpush1.bf16.msra.mxu0 0
    %5783 = vmatprep.subr.bf16.mxu0 0
    %5784 = vmatpush1.bf16.msra.mxu0 0
    %5785 = vmatprep.subr.bf16.mxu0 0
    %5786 = vmatpush1.bf16.msra.mxu0 0
    %5787 = vmatprep.subr.bf16.mxu0 0
    %5788 = vmatpush1.bf16.msra.mxu0 0
    %5789 = vmatprep.subr.bf16.mxu0 0
    %5790 = vmatpush1.bf16.msra.mxu0 0
    %5791 = vmatprep.mubr.bf16.mxu0 0
    %5792 = vmatmul.mubr.bf16.gmra.mrb[0].mxu0 %v5757
    %v5793 = vpop.f32.mrb[0].mxu0
    %v5794 = vadd.f32 0.0, %v5793
    %v5795 = vpop.f32.mrb[0].mxu0
    %v5796 = vpop.f32.mrb[0].mxu0
    %v5797 = vpop.f32.mrb[0].mxu0
    %5798 = vdwg.mxu0
    %v5799 = vsel %vm384, %v5794, -inf
    %5800 = vmax.xlane.f32.xlu0 %v5799
    %v5801 = vpop.xlane.xlu0 %5800
    %v5802 = vsub.f32 %v5794, %v5801
    %v5803 = vmul.f32 %v5802, 1.442695
    %v5804 = vpow.pop %v5803
    %v5805 = vsel %vm384, %v5804, 0.0
    %5806 = vadd.xlane.f32.xlu0 %v5805
    %v5807 = vpop.xlane.xlu0 %5806
    %v5808 = vrcp.pop %v5807
    %v5809 = vmul.f32 %v5804, %v5808
    %v5810 = vsub.f32 1.0, %v5709
    %5812 = vset.pattern.permute.xlu0 0
    %5813 = vperm.xlu0 %5812, %v5810
    %v5814 = vpop.permute.xlu0 %5813
    %v5816 = vmul.f32 %v5814, %v5809
    %5818 = vset.pattern.permute.xlu0 0
    %5819 = vperm.xlu0 %5818, %v5709
    %v5820 = vpop.permute.xlu0 %5819
    %5830 = vset.pattern.permute.xlu0 0
    %5831 = vperm.xlu0 %5830, %v5189
    %v5832 = vpop.permute.xlu0 %5831
    %5833 = vset.pattern.permute.xlu0 0
    %5834 = vperm.xlu0 %5833, %v5190
    %v5835 = vpop.permute.xlu0 %5834
    %5836 = vset.pattern.permute.xlu0 0
    %5837 = vperm.xlu0 %5836, %v5191
    %v5838 = vpop.permute.xlu0 %5837
    %5839 = vset.pattern.permute.xlu0 0
    %5840 = vperm.xlu0 %5839, %v5192
    %v5841 = vpop.permute.xlu0 %5840
    %5842 = vset.pattern.permute.xlu0 0
    %5843 = vperm.xlu0 %5842, %v5193
    %v5844 = vpop.permute.xlu0 %5843
    %5845 = vset.pattern.permute.xlu0 0
    %5846 = vperm.xlu0 %5845, %v5194
    %v5847 = vpop.permute.xlu0 %5846
    %5848 = vset.pattern.permute.xlu0 0
    %5849 = vperm.xlu0 %5848, %v5195
    %v5850 = vpop.permute.xlu0 %5849
    %5851 = vset.pattern.permute.xlu0 0
    %5852 = vperm.xlu0 %5851, %v5196
    %v5853 = vpop.permute.xlu0 %5852
    %v5854 = vlaneseq
    %v5855 = vshrl.u32 %v5854, 7
    %v5856 = vsub.s32 %v817, %v5855
    %v5857 = vrot.slane %v5832, %v5856
    %v5858 = vlaneseq
    %v5859 = vshrl.u32 %v5858, 7
    %v5860 = vsub.s32 %v817, %v5859
    %v5861 = vrot.slane %v5835, %v5860
    %v5862 = vlaneseq
    %v5863 = vshrl.u32 %v5862, 7
    %v5864 = vsub.s32 %v817, %v5863
    %v5865 = vrot.slane %v5838, %v5864
    %v5866 = vlaneseq
    %v5867 = vshrl.u32 %v5866, 7
    %v5868 = vsub.s32 %v817, %v5867
    %v5869 = vrot.slane %v5841, %v5868
    %v5870 = vlaneseq
    %v5871 = vshrl.u32 %v5870, 7
    %v5872 = vsub.s32 %v817, %v5871
    %v5873 = vrot.slane %v5844, %v5872
    %v5874 = vlaneseq
    %v5875 = vshrl.u32 %v5874, 7
    %v5876 = vsub.s32 %v817, %v5875
    %v5877 = vrot.slane %v5847, %v5876
    %v5878 = vlaneseq
    %v5879 = vshrl.u32 %v5878, 7
    %v5880 = vsub.s32 %v817, %v5879
    %v5881 = vrot.slane %v5850, %v5880
    %v5882 = vlaneseq
    %v5883 = vshrl.u32 %v5882, 7
    %v5884 = vsub.s32 %v817, %v5883
    %v5885 = vrot.slane %v5853, %v5884
    %v5886 = vsel %vm850, %v5861, %v5857
    %v5887 = vsel %vm852, %v5865, %v5886
    %v5888 = vsel %vm854, %v5869, %v5887
    %v5889 = vsel %vm856, %v5873, %v5888
    %v5890 = vsel %vm858, %v5877, %v5889
    %v5891 = vsel %vm860, %v5881, %v5890
    %v5892 = vsel %vm862, %v5885, %v5891
    %v5894 = vmul.f32 %v5820, %v5892
    %5896 = vrot.lane.b32.xlu0 %v5894, 64
    %v5897 = vpop.permute.xlu0 %5896
    %v5899 = vsel %vm384, %v5816, %v5897
    %v5900 = vsel %vm1867, %v5899, 0.0
    %v5901 = vadd.f32 %v5900, 1e-12
    %v5902 = vlog2.pop %v5901
    %v5903 = vmul.f32 %v5902, 0.6931472
    %v5905 = vcombine.high %v5903, %v5903
    %v5907 = vunpack.c.l.s4 1966171168
    %v5908 = vunpack.c.0.s8 %v5907
    %v5909 = vlaneseq
    %v5910 = vshrl.u32 %v5909, 7
    %v5911 = vsub.s32 %v5908, %v5910
    %v5912 = vrot.slane %v5903, %v5911
    %v5914 = vunpack.c.l.s4 1966171168
    %v5915 = vunpack.c.0.s8 %v5914
    %v5916 = vlaneseq
    %v5917 = vshrl.u32 %v5916, 7
    %v5918 = vsub.s32 %v5915, %v5917
    %v5919 = vrot.slane %v5905, %v5918
    %v5920 = vcombine.high %v5912, %v5912
    %v5921 = vcombine.high %v5919, %v5919
    %v5923 = vunpack.c.l.s4 1966171168
    %v5924 = vunpack.c.0.s8 %v5923
    %v5925 = vlaneseq
    %v5926 = vshrl.u32 %v5925, 7
    %v5927 = vsub.s32 %v5924, %v5926
    %v5928 = vrot.slane %v5912, %v5927
    %v5930 = vunpack.c.l.s4 1966171168
    %v5931 = vunpack.c.0.s8 %v5930
    %v5932 = vlaneseq
    %v5933 = vshrl.u32 %v5932, 7
    %v5934 = vsub.s32 %v5931, %v5933
    %v5935 = vrot.slane %v5919, %v5934
    %v5937 = vunpack.c.l.s4 1966171168
    %v5938 = vunpack.c.0.s8 %v5937
    %v5939 = vlaneseq
    %v5940 = vshrl.u32 %v5939, 7
    %v5941 = vsub.s32 %v5938, %v5940
    %v5942 = vrot.slane %v5920, %v5941
    %v5944 = vunpack.c.l.s4 1966171168
    %v5945 = vunpack.c.0.s8 %v5944
    %v5946 = vlaneseq
    %v5947 = vshrl.u32 %v5946, 7
    %v5948 = vsub.s32 %v5945, %v5947
    %v5949 = vrot.slane %v5921, %v5948
    %v5950 = vcombine.high %v5928, %v5928
    %v5951 = vcombine.high %v5935, %v5935
    %v5952 = vcombine.high %v5942, %v5942
    %v5953 = vcombine.high %v5949, %v5949
    %5962 = vst [vmem:[#allocation29 + $0x3] sm:$0x1] %v5928
    %5963 = vst [vmem:[#allocation29 + $0xb] sm:$0x1] %v5942
    %5964 = vst [vmem:[#allocation29 + $0x13] sm:$0x1] %v5950
    %5965 = vst [vmem:[#allocation29 + $0x1b] sm:$0x1] %v5952
    %5966 = vst [vmem:[#allocation29 + $0x23] sm:$0x1] %v5935
    %5967 = vst [vmem:[#allocation29 + $0x2b] sm:$0x1] %v5949
    %5968 = vst [vmem:[#allocation29 + $0x33] sm:$0x1] %v5951
    %5969 = vst [vmem:[#allocation29 + $0x3b] sm:$0x1] %v5953
    %s5970 = scalar_lea.vmem [#allocation5], 32
    %v5971 = vld [vmem:[%s5970] sm:$0xff]
    %v5972 = vsel %vm357, %v5971, %v5652
    %v5973 = vpack.c.bf16 %v5972, %v5972
    %v5975 = vsel %vm384, %v5973, 0
    %5977 = vmatprep.subr.bf16.mxu0 0
    %5978 = vmatpush1.bf16.msra.mxu0 %v376
    %5979 = vmatprep.subr.bf16.mxu0 0
    %5980 = vmatpush1.bf16.msra.mxu0 %v377
    %5981 = vmatprep.subr.bf16.mxu0 0
    %5982 = vmatpush1.bf16.msra.mxu0 %v378
    %5983 = vmatprep.subr.bf16.mxu0 0
    %5984 = vmatpush1.bf16.msra.mxu0 %v379
    %5985 = vmatprep.subr.bf16.mxu0 0
    %5986 = vmatpush1.bf16.msra.mxu0 0
    %5987 = vmatprep.subr.bf16.mxu0 0
    %5988 = vmatpush1.bf16.msra.mxu0 0
    %5989 = vmatprep.subr.bf16.mxu0 0
    %5990 = vmatpush1.bf16.msra.mxu0 0
    %5991 = vmatprep.subr.bf16.mxu0 0
    %5992 = vmatpush1.bf16.msra.mxu0 0
    %5993 = vmatprep.subr.bf16.mxu0 0
    %5994 = vmatpush1.bf16.msra.mxu0 0
    %5995 = vmatprep.subr.bf16.mxu0 0
    %5996 = vmatpush1.bf16.msra.mxu0 0
    %5997 = vmatprep.subr.bf16.mxu0 0
    %5998 = vmatpush1.bf16.msra.mxu0 0
    %5999 = vmatprep.subr.bf16.mxu0 0
    %6000 = vmatpush1.bf16.msra.mxu0 0
    %6001 = vmatprep.subr.bf16.mxu0 0
    %6002 = vmatpush1.bf16.msra.mxu0 0
    %6003 = vmatprep.subr.bf16.mxu0 0
    %6004 = vmatpush1.bf16.msra.mxu0 0
    %6005 = vmatprep.subr.bf16.mxu0 0
    %6006 = vmatpush1.bf16.msra.mxu0 0
    %6007 = vmatprep.subr.bf16.mxu0 0
    %6008 = vmatpush1.bf16.msra.mxu0 0
    %6009 = vmatprep.mubr.bf16.mxu0 0
    %6010 = vmatmul.mubr.bf16.gmra.mrb[0].mxu0 %v5975
    %v6011 = vpop.f32.mrb[0].mxu0
    %v6012 = vadd.f32 %v297, %v6011
    %v6013 = vpop.f32.mrb[0].mxu0
    %v6014 = vpop.f32.mrb[0].mxu0
    %v6015 = vpop.f32.mrb[0].mxu0
    %6016 = vdwg.mxu0
    %6017 = vmatprep.subr.bf16.mxu0 0
    %6018 = vmatpush1.bf16.msra.mxu0 %v437
    %6019 = vmatprep.subr.bf16.mxu0 0
    %6020 = vmatpush1.bf16.msra.mxu0 %v438
    %6021 = vmatprep.subr.bf16.mxu0 0
    %6022 = vmatpush1.bf16.msra.mxu0 0
    %6023 = vmatprep.subr.bf16.mxu0 0
    %6024 = vmatpush1.bf16.msra.mxu0 0
    %6025 = vmatprep.subr.bf16.mxu0 0
    %6026 = vmatpush1.bf16.msra.mxu0 0
    %6027 = vmatprep.subr.bf16.mxu0 0
    %6028 = vmatpush1.bf16.msra.mxu0 0
    %6029 = vmatprep.subr.bf16.mxu0 0
    %6030 = vmatpush1.bf16.msra.mxu0 0
    %6031 = vmatprep.subr.bf16.mxu0 0
    %6032 = vmatpush1.bf16.msra.mxu0 0
    %6033 = vmatprep.subr.bf16.mxu0 0
    %6034 = vmatpush1.bf16.msra.mxu0 0
    %6035 = vmatprep.subr.bf16.mxu0 0
    %6036 = vmatpush1.bf16.msra.mxu0 0
    %6037 = vmatprep.subr.bf16.mxu0 0
    %6038 = vmatpush1.bf16.msra.mxu0 0
    %6039 = vmatprep.subr.bf16.mxu0 0
    %6040 = vmatpush1.bf16.msra.mxu0 0
    %6041 = vmatprep.subr.bf16.mxu0 0
    %6042 = vmatpush1.bf16.msra.mxu0 0
    %6043 = vmatprep.subr.bf16.mxu0 0
    %6044 = vmatpush1.bf16.msra.mxu0 0
    %6045 = vmatprep.subr.bf16.mxu0 0
    %6046 = vmatpush1.bf16.msra.mxu0 0
    %6047 = vmatprep.subr.bf16.mxu0 0
    %6048 = vmatpush1.bf16.msra.mxu0 0
    %6049 = vmatprep.mubr.bf16.mxu0 0
    %6050 = vmatmul.mubr.bf16.gmra.mrb[0].mxu0 %v4744
    %v6051 = vpop.f32.mrb[0].mxu0
    %v6052 = vadd.f32 %v304, %v6051
    %v6053 = vpop.f32.mrb[0].mxu0
    %v6054 = vpop.f32.mrb[0].mxu0
    %v6055 = vpop.f32.mrb[0].mxu0
    %6056 = vdwg.mxu0
    %v6057 = vadd.f32 %v6012, %v6052
    %v6058 = vxor.u32 %v6057, 2147483648
    %v6059 = vmul.f32 %v6058, 1.442695
    %v6060 = vpow.pop %v6059
    %v6061 = vadd.f32 %v6060, 1.0
    %v6062 = vrcp.pop %v6061
    %v6063 = vmul.f32 1.0, %v6062
    %6065 = vrot.lane.b32.xlu0 %v6052, 64
    %v6066 = vpop.permute.xlu0 %6065
    %v6068 = vmul.f32 %v6063, %v6066
    %6070 = vrot.lane.b32.xlu0 %v6068, 64
    %v6071 = vpop.permute.xlu0 %6070
    %v6073 = vadd.f32 %v6012, %v6071
    %v6074 = vtanh.pop %v6073
    %v6075 = vsub.f32 1.0, %v6063
    %6077 = vrot.lane.b32.xlu0 %v6074, 96
    %v6078 = vpop.permute.xlu0 %6077
    %v6080 = vmul.f32 %v6075, %v6078
    %v6081 = vmul.f32 %v6063, %v4738
    %v6082 = vadd.f32 %v6080, %v6081
    %v6083 = vpack.c.bf16 %v6082, %v6082
    %6085 = vrot.lane.b32.xlu0 %v6083, 96
    %v6086 = vpop.permute.xlu0 %6085
    %v6088 = vsel %vm357, %v6086, 0
    %6090 = vmatprep.subr.bf16.mxu0 0
    %6091 = vmatpush1.bf16.msra.mxu0 %v526
    %6092 = vmatprep.subr.bf16.mxu0 0
    %6093 = vmatpush1.bf16.msra.mxu0 %v527
    %6094 = vmatprep.subr.bf16.mxu0 0
    %6095 = vmatpush1.bf16.msra.mxu0 0
    %6096 = vmatprep.subr.bf16.mxu0 0
    %6097 = vmatpush1.bf16.msra.mxu0 0
    %6098 = vmatprep.subr.bf16.mxu0 0
    %6099 = vmatpush1.bf16.msra.mxu0 0
    %6100 = vmatprep.subr.bf16.mxu0 0
    %6101 = vmatpush1.bf16.msra.mxu0 0
    %6102 = vmatprep.subr.bf16.mxu0 0
    %6103 = vmatpush1.bf16.msra.mxu0 0
    %6104 = vmatprep.subr.bf16.mxu0 0
    %6105 = vmatpush1.bf16.msra.mxu0 0
    %6106 = vmatprep.subr.bf16.mxu0 0
    %6107 = vmatpush1.bf16.msra.mxu0 0
    %6108 = vmatprep.subr.bf16.mxu0 0
    %6109 = vmatpush1.bf16.msra.mxu0 0
    %6110 = vmatprep.subr.bf16.mxu0 0
    %6111 = vmatpush1.bf16.msra.mxu0 0
    %6112 = vmatprep.subr.bf16.mxu0 0
    %6113 = vmatpush1.bf16.msra.mxu0 0
    %6114 = vmatprep.subr.bf16.mxu0 0
    %6115 = vmatpush1.bf16.msra.mxu0 0
    %6116 = vmatprep.subr.bf16.mxu0 0
    %6117 = vmatpush1.bf16.msra.mxu0 0
    %6118 = vmatprep.subr.bf16.mxu0 0
    %6119 = vmatpush1.bf16.msra.mxu0 0
    %6120 = vmatprep.subr.bf16.mxu0 0
    %6121 = vmatpush1.bf16.msra.mxu0 0
    %6122 = vmatprep.mubr.bf16.mxu0 0
    %6123 = vmatmul.mubr.bf16.gmra.mrb[0].mxu0 %v6088
    %v6124 = vpop.f32.mrb[0].mxu0
    %v6125 = vadd.f32 0.0, %v6124
    %v6126 = vpop.f32.mrb[0].mxu0
    %v6127 = vpop.f32.mrb[0].mxu0
    %v6128 = vpop.f32.mrb[0].mxu0
    %6129 = vdwg.mxu0
    %v6131 = vcombine.high %v6125, %v6125
    %v6133 = vunpack.c.l.s4 1966171168
    %v6134 = vunpack.c.0.s8 %v6133
    %v6135 = vlaneseq
    %v6136 = vshrl.u32 %v6135, 7
    %v6137 = vsub.s32 %v6134, %v6136
    %v6138 = vrot.slane %v6125, %v6137
    %v6140 = vunpack.c.l.s4 1966171168
    %v6141 = vunpack.c.0.s8 %v6140
    %v6142 = vlaneseq
    %v6143 = vshrl.u32 %v6142, 7
    %v6144 = vsub.s32 %v6141, %v6143
    %v6145 = vrot.slane %v6131, %v6144
    %v6146 = vcombine.high %v6138, %v6138
    %v6147 = vcombine.high %v6145, %v6145
    %v6149 = vunpack.c.l.s4 1966171168
    %v6150 = vunpack.c.0.s8 %v6149
    %v6151 = vlaneseq
    %v6152 = vshrl.u32 %v6151, 7
    %v6153 = vsub.s32 %v6150, %v6152
    %v6154 = vrot.slane %v6138, %v6153
    %v6156 = vunpack.c.l.s4 1966171168
    %v6157 = vunpack.c.0.s8 %v6156
    %v6158 = vlaneseq
    %v6159 = vshrl.u32 %v6158, 7
    %v6160 = vsub.s32 %v6157, %v6159
    %v6161 = vrot.slane %v6145, %v6160
    %v6163 = vunpack.c.l.s4 1966171168
    %v6164 = vunpack.c.0.s8 %v6163
    %v6165 = vlaneseq
    %v6166 = vshrl.u32 %v6165, 7
    %v6167 = vsub.s32 %v6164, %v6166
    %v6168 = vrot.slane %v6146, %v6167
    %v6170 = vunpack.c.l.s4 1966171168
    %v6171 = vunpack.c.0.s8 %v6170
    %v6172 = vlaneseq
    %v6173 = vshrl.u32 %v6172, 7
    %v6174 = vsub.s32 %v6171, %v6173
    %v6175 = vrot.slane %v6147, %v6174
    %v6176 = vcombine.high %v6154, %v6154
    %v6177 = vcombine.high %v6161, %v6161
    %v6178 = vcombine.high %v6168, %v6168
    %v6179 = vcombine.high %v6175, %v6175
    %v6180 = vlaneseq
    %v6181 = vshrl.u32 %v6180, 7
    %v6182 = vsub.s32 0, %v6181
    %v6183 = vrot.slane %v6154, %v6182
    %v6184 = vlaneseq
    %v6185 = vshrl.u32 %v6184, 7
    %v6186 = vsub.s32 0, %v6185
    %v6187 = vrot.slane %v6168, %v6186
    %v6188 = vlaneseq
    %v6189 = vshrl.u32 %v6188, 7
    %v6190 = vsub.s32 0, %v6189
    %v6191 = vrot.slane %v6176, %v6190
    %v6192 = vlaneseq
    %v6193 = vshrl.u32 %v6192, 7
    %v6194 = vsub.s32 0, %v6193
    %v6195 = vrot.slane %v6178, %v6194
    %v6196 = vlaneseq
    %v6197 = vshrl.u32 %v6196, 7
    %v6198 = vsub.s32 0, %v6197
    %v6199 = vrot.slane %v6161, %v6198
    %v6200 = vlaneseq
    %v6201 = vshrl.u32 %v6200, 7
    %v6202 = vsub.s32 0, %v6201
    %v6203 = vrot.slane %v6175, %v6202
    %v6204 = vlaneseq
    %v6205 = vshrl.u32 %v6204, 7
    %v6206 = vsub.s32 0, %v6205
    %v6207 = vrot.slane %v6177, %v6206
    %v6208 = vlaneseq
    %v6209 = vshrl.u32 %v6208, 7
    %v6210 = vsub.s32 0, %v6209
    %v6211 = vrot.slane %v6179, %v6210
    %v6220 = vadd.f32 %v264, %v6183
    %v6221 = vadd.f32 %v265, %v6187
    %v6222 = vadd.f32 %v266, %v6191
    %v6223 = vadd.f32 %v267, %v6195
    %v6224 = vadd.f32 %v268, %v6199
    %v6225 = vadd.f32 %v269, %v6203
    %v6226 = vadd.f32 %v270, %v6207
    %v6227 = vadd.f32 %v271, %v6211
    %v6228 = vtanh.pop %v6220
    %v6229 = vtanh.pop %v6221
    %v6230 = vtanh.pop %v6222
    %v6231 = vtanh.pop %v6223
    %v6232 = vtanh.pop %v6224
    %v6233 = vtanh.pop %v6225
    %v6234 = vtanh.pop %v6226
    %v6235 = vtanh.pop %v6227
    %v6236 = vmul.f32 %v6228, %v278
    %v6237 = vmul.f32 %v6229, %v278
    %v6238 = vmul.f32 %v6230, %v278
    %v6239 = vmul.f32 %v6231, %v278
    %v6240 = vmul.f32 %v6232, %v278
    %v6241 = vmul.f32 %v6233, %v278
    %v6242 = vmul.f32 %v6234, %v278
    %v6243 = vmul.f32 %v6235, %v278
    %v6244 = vsel %vm357, %v6236, 0.0
    %6245 = vadd.xlane.f32.xlu0 %v6244
    %v6246 = vpop.xlane.xlu0 %6245
    %v6247 = vsel %vm357, %v6237, 0.0
    %6248 = vadd.xlane.f32.xlu0 %v6247
    %v6249 = vpop.xlane.xlu0 %6248
    %v6250 = vsel %vm357, %v6238, 0.0
    %6251 = vadd.xlane.f32.xlu0 %v6250
    %v6252 = vpop.xlane.xlu0 %6251
    %v6253 = vsel %vm357, %v6239, 0.0
    %6254 = vadd.xlane.f32.xlu0 %v6253
    %v6255 = vpop.xlane.xlu0 %6254
    %v6256 = vsel %vm357, %v6240, 0.0
    %6257 = vadd.xlane.f32.xlu0 %v6256
    %v6258 = vpop.xlane.xlu0 %6257
    %v6259 = vsel %vm357, %v6241, 0.0
    %6260 = vadd.xlane.f32.xlu0 %v6259
    %v6261 = vpop.xlane.xlu0 %6260
    %v6262 = vsel %vm357, %v6242, 0.0
    %6263 = vadd.xlane.f32.xlu0 %v6262
    %v6264 = vpop.xlane.xlu0 %6263
    %v6265 = vsel %vm357, %v6243, 0.0
    %6266 = vadd.xlane.f32.xlu0 %v6265
    %v6267 = vpop.xlane.xlu0 %6266
    %v6268 = vadd.f32 %v6246, %v718
    %v6269 = vadd.f32 %v6249, %v725
    %v6270 = vadd.f32 %v6252, %v732
    %v6271 = vadd.f32 %v6255, %v739
    %v6272 = vadd.f32 %v6258, %v746
    %v6273 = vadd.f32 %v6261, %v753
    %v6274 = vadd.f32 %v6264, %v760
    %v6275 = vadd.f32 %v6267, %v767
    %6284 = vset.pattern.permute.xlu0 0
    %6285 = vperm.xlu0 %6284, %v6268
    %v6286 = vpop.permute.xlu0 %6285
    %6287 = vset.pattern.permute.xlu0 0
    %6288 = vperm.xlu0 %6287, %v6269
    %v6289 = vpop.permute.xlu0 %6288
    %6290 = vset.pattern.permute.xlu0 0
    %6291 = vperm.xlu0 %6290, %v6270
    %v6292 = vpop.permute.xlu0 %6291
    %6293 = vset.pattern.permute.xlu0 0
    %6294 = vperm.xlu0 %6293, %v6271
    %v6295 = vpop.permute.xlu0 %6294
    %6296 = vset.pattern.permute.xlu0 0
    %6297 = vperm.xlu0 %6296, %v6272
    %v6298 = vpop.permute.xlu0 %6297
    %6299 = vset.pattern.permute.xlu0 0
    %6300 = vperm.xlu0 %6299, %v6273
    %v6301 = vpop.permute.xlu0 %6300
    %6302 = vset.pattern.permute.xlu0 0
    %6303 = vperm.xlu0 %6302, %v6274
    %v6304 = vpop.permute.xlu0 %6303
    %6305 = vset.pattern.permute.xlu0 0
    %6306 = vperm.xlu0 %6305, %v6275
    %v6307 = vpop.permute.xlu0 %6306
    %v6308 = vlaneseq
    %v6309 = vshrl.u32 %v6308, 7
    %v6310 = vsub.s32 %v817, %v6309
    %v6311 = vrot.slane %v6286, %v6310
    %v6312 = vlaneseq
    %v6313 = vshrl.u32 %v6312, 7
    %v6314 = vsub.s32 %v817, %v6313
    %v6315 = vrot.slane %v6289, %v6314
    %v6316 = vlaneseq
    %v6317 = vshrl.u32 %v6316, 7
    %v6318 = vsub.s32 %v817, %v6317
    %v6319 = vrot.slane %v6292, %v6318
    %v6320 = vlaneseq
    %v6321 = vshrl.u32 %v6320, 7
    %v6322 = vsub.s32 %v817, %v6321
    %v6323 = vrot.slane %v6295, %v6322
    %v6324 = vlaneseq
    %v6325 = vshrl.u32 %v6324, 7
    %v6326 = vsub.s32 %v817, %v6325
    %v6327 = vrot.slane %v6298, %v6326
    %v6328 = vlaneseq
    %v6329 = vshrl.u32 %v6328, 7
    %v6330 = vsub.s32 %v817, %v6329
    %v6331 = vrot.slane %v6301, %v6330
    %v6332 = vlaneseq
    %v6333 = vshrl.u32 %v6332, 7
    %v6334 = vsub.s32 %v817, %v6333
    %v6335 = vrot.slane %v6304, %v6334
    %v6336 = vlaneseq
    %v6337 = vshrl.u32 %v6336, 7
    %v6338 = vsub.s32 %v817, %v6337
    %v6339 = vrot.slane %v6307, %v6338
    %v6340 = vsel %vm850, %v6315, %v6311
    %v6341 = vsel %vm852, %v6319, %v6340
    %v6342 = vsel %vm854, %v6323, %v6341
    %v6343 = vsel %vm856, %v6327, %v6342
    %v6344 = vsel %vm858, %v6331, %v6343
    %v6345 = vsel %vm860, %v6335, %v6344
    %v6346 = vsel %vm862, %v6339, %v6345
    %v6348 = vsel %vm865, %v6346, -inf
    %6349 = vmax.xlane.f32.xlu0 %v6348
    %v6350 = vpop.xlane.xlu0 %6349
    %v6352 = vlaneseq
    %v6353 = vshrl.u32 %v6352, 7
    %v6354 = vsub.s32 0, %v6353
    %v6355 = vrot.slane %v6350, %v6354
    %v6356 = vlaneseq
    %v6357 = vshrl.u32 %v6356, 7
    %v6358 = vsub.s32 1, %v6357
    %v6359 = vrot.slane %v6350, %v6358
    %v6360 = vlaneseq
    %v6361 = vshrl.u32 %v6360, 7
    %v6362 = vsub.s32 2, %v6361
    %v6363 = vrot.slane %v6350, %v6362
    %v6364 = vlaneseq
    %v6365 = vshrl.u32 %v6364, 7
    %v6366 = vsub.s32 3, %v6365
    %v6367 = vrot.slane %v6350, %v6366
    %v6368 = vlaneseq
    %v6369 = vshrl.u32 %v6368, 7
    %v6370 = vsub.s32 4, %v6369
    %v6371 = vrot.slane %v6350, %v6370
    %v6372 = vlaneseq
    %v6373 = vshrl.u32 %v6372, 7
    %v6374 = vsub.s32 5, %v6373
    %v6375 = vrot.slane %v6350, %v6374
    %v6376 = vlaneseq
    %v6377 = vshrl.u32 %v6376, 7
    %v6378 = vsub.s32 6, %v6377
    %v6379 = vrot.slane %v6350, %v6378
    %v6380 = vlaneseq
    %v6381 = vshrl.u32 %v6380, 7
    %v6382 = vsub.s32 7, %v6381
    %v6383 = vrot.slane %v6350, %v6382
    %v6392 = vsub.f32 %v6268, %v6355
    %v6393 = vsub.f32 %v6269, %v6359
    %v6394 = vsub.f32 %v6270, %v6363
    %v6395 = vsub.f32 %v6271, %v6367
    %v6396 = vsub.f32 %v6272, %v6371
    %v6397 = vsub.f32 %v6273, %v6375
    %v6398 = vsub.f32 %v6274, %v6379
    %v6399 = vsub.f32 %v6275, %v6383
    %v6400 = vmul.f32 %v6392, 1.442695
    %v6401 = vpow.pop %v6400
    %v6402 = vmul.f32 %v6393, 1.442695
    %v6403 = vpow.pop %v6402
    %v6404 = vmul.f32 %v6394, 1.442695
    %v6405 = vpow.pop %v6404
    %v6406 = vmul.f32 %v6395, 1.442695
    %v6407 = vpow.pop %v6406
    %v6408 = vmul.f32 %v6396, 1.442695
    %v6409 = vpow.pop %v6408
    %v6410 = vmul.f32 %v6397, 1.442695
    %v6411 = vpow.pop %v6410
    %v6412 = vmul.f32 %v6398, 1.442695
    %v6413 = vpow.pop %v6412
    %v6414 = vmul.f32 %v6399, 1.442695
    %v6415 = vpow.pop %v6414
    %6424 = vset.pattern.permute.xlu0 0
    %6425 = vperm.xlu0 %6424, %v6401
    %v6426 = vpop.permute.xlu0 %6425
    %6427 = vset.pattern.permute.xlu0 0
    %6428 = vperm.xlu0 %6427, %v6403
    %v6429 = vpop.permute.xlu0 %6428
    %6430 = vset.pattern.permute.xlu0 0
    %6431 = vperm.xlu0 %6430, %v6405
    %v6432 = vpop.permute.xlu0 %6431
    %6433 = vset.pattern.permute.xlu0 0
    %6434 = vperm.xlu0 %6433, %v6407
    %v6435 = vpop.permute.xlu0 %6434
    %6436 = vset.pattern.permute.xlu0 0
    %6437 = vperm.xlu0 %6436, %v6409
    %v6438 = vpop.permute.xlu0 %6437
    %6439 = vset.pattern.permute.xlu0 0
    %6440 = vperm.xlu0 %6439, %v6411
    %v6441 = vpop.permute.xlu0 %6440
    %6442 = vset.pattern.permute.xlu0 0
    %6443 = vperm.xlu0 %6442, %v6413
    %v6444 = vpop.permute.xlu0 %6443
    %6445 = vset.pattern.permute.xlu0 0
    %6446 = vperm.xlu0 %6445, %v6415
    %v6447 = vpop.permute.xlu0 %6446
    %v6448 = vlaneseq
    %v6449 = vshrl.u32 %v6448, 7
    %v6450 = vsub.s32 %v817, %v6449
    %v6451 = vrot.slane %v6426, %v6450
    %v6452 = vlaneseq
    %v6453 = vshrl.u32 %v6452, 7
    %v6454 = vsub.s32 %v817, %v6453
    %v6455 = vrot.slane %v6429, %v6454
    %v6456 = vlaneseq
    %v6457 = vshrl.u32 %v6456, 7
    %v6458 = vsub.s32 %v817, %v6457
    %v6459 = vrot.slane %v6432, %v6458
    %v6460 = vlaneseq
    %v6461 = vshrl.u32 %v6460, 7
    %v6462 = vsub.s32 %v817, %v6461
    %v6463 = vrot.slane %v6435, %v6462
    %v6464 = vlaneseq
    %v6465 = vshrl.u32 %v6464, 7
    %v6466 = vsub.s32 %v817, %v6465
    %v6467 = vrot.slane %v6438, %v6466
    %v6468 = vlaneseq
    %v6469 = vshrl.u32 %v6468, 7
    %v6470 = vsub.s32 %v817, %v6469
    %v6471 = vrot.slane %v6441, %v6470
    %v6472 = vlaneseq
    %v6473 = vshrl.u32 %v6472, 7
    %v6474 = vsub.s32 %v817, %v6473
    %v6475 = vrot.slane %v6444, %v6474
    %v6476 = vlaneseq
    %v6477 = vshrl.u32 %v6476, 7
    %v6478 = vsub.s32 %v817, %v6477
    %v6479 = vrot.slane %v6447, %v6478
    %v6480 = vsel %vm850, %v6455, %v6451
    %v6481 = vsel %vm852, %v6459, %v6480
    %v6482 = vsel %vm854, %v6463, %v6481
    %v6483 = vsel %vm856, %v6467, %v6482
    %v6484 = vsel %vm858, %v6471, %v6483
    %v6485 = vsel %vm860, %v6475, %v6484
    %v6486 = vsel %vm862, %v6479, %v6485
    %v6488 = vsel %vm865, %v6486, 0.0
    %6489 = vadd.xlane.f32.xlu0 %v6488
    %v6490 = vpop.xlane.xlu0 %6489
    %v6491 = vrcp.pop %v6490
    %v6493 = vlaneseq
    %v6494 = vshrl.u32 %v6493, 7
    %v6495 = vsub.s32 0, %v6494
    %v6496 = vrot.slane %v6491, %v6495
    %v6497 = vlaneseq
    %v6498 = vshrl.u32 %v6497, 7
    %v6499 = vsub.s32 1, %v6498
    %v6500 = vrot.slane %v6491, %v6499
    %v6501 = vlaneseq
    %v6502 = vshrl.u32 %v6501, 7
    %v6503 = vsub.s32 2, %v6502
    %v6504 = vrot.slane %v6491, %v6503
    %v6505 = vlaneseq
    %v6506 = vshrl.u32 %v6505, 7
    %v6507 = vsub.s32 3, %v6506
    %v6508 = vrot.slane %v6491, %v6507
    %v6509 = vlaneseq
    %v6510 = vshrl.u32 %v6509, 7
    %v6511 = vsub.s32 4, %v6510
    %v6512 = vrot.slane %v6491, %v6511
    %v6513 = vlaneseq
    %v6514 = vshrl.u32 %v6513, 7
    %v6515 = vsub.s32 5, %v6514
    %v6516 = vrot.slane %v6491, %v6515
    %v6517 = vlaneseq
    %v6518 = vshrl.u32 %v6517, 7
    %v6519 = vsub.s32 6, %v6518
    %v6520 = vrot.slane %v6491, %v6519
    %v6521 = vlaneseq
    %v6522 = vshrl.u32 %v6521, 7
    %v6523 = vsub.s32 7, %v6522
    %v6524 = vrot.slane %v6491, %v6523
    %v6533 = vmul.f32 %v6401, %v6496
    %v6534 = vmul.f32 %v6403, %v6500
    %v6535 = vmul.f32 %v6405, %v6504
    %v6536 = vmul.f32 %v6407, %v6508
    %v6537 = vmul.f32 %v6409, %v6512
    %v6538 = vmul.f32 %v6411, %v6516
    %v6539 = vmul.f32 %v6413, %v6520
    %v6540 = vmul.f32 %v6415, %v6524
    %v6541 = vpack.c.bf16 %v6533, %v6533
    %v6542 = vpack.c.bf16 %v6534, %v6534
    %v6543 = vpack.c.bf16 %v6535, %v6535
    %v6544 = vpack.c.bf16 %v6536, %v6536
    %v6545 = vpack.c.bf16 %v6537, %v6537
    %v6546 = vpack.c.bf16 %v6538, %v6538
    %v6547 = vpack.c.bf16 %v6539, %v6539
    %v6548 = vpack.c.bf16 %v6540, %v6540
    %v6550 = vunpack.c.l.b16 %v6541
    %6551 = vset.pattern.permute.xlu0 0
    %6552 = vperm.xlu0 %6551, %v6550
    %v6553 = vpop.permute.xlu0 %6552
    %v6554 = vlaneseq
    %v6555 = vshrl.u32 %v6554, 7
    %v6556 = vsub.s32 %v817, %v6555
    %v6557 = vrot.slane %v6553, %v6556
    %v6558 = vpack.c.b16 %v6557, %v6557
    %v6560 = vsel %vm865, %v6558, 0
    %6562 = vmatprep.subr.bf16.mxu0 0
    %6563 = vmatpush1.bf16.msra.mxu0 %v1082
    %6564 = vmatprep.subr.bf16.mxu0 0
    %6565 = vmatpush1.bf16.msra.mxu0 0
    %6566 = vmatprep.subr.bf16.mxu0 0
    %6567 = vmatpush1.bf16.msra.mxu0 0
    %6568 = vmatprep.subr.bf16.mxu0 0
    %6569 = vmatpush1.bf16.msra.mxu0 0
    %6570 = vmatprep.subr.bf16.mxu0 0
    %6571 = vmatpush1.bf16.msra.mxu0 0
    %6572 = vmatprep.subr.bf16.mxu0 0
    %6573 = vmatpush1.bf16.msra.mxu0 0
    %6574 = vmatprep.subr.bf16.mxu0 0
    %6575 = vmatpush1.bf16.msra.mxu0 0
    %6576 = vmatprep.subr.bf16.mxu0 0
    %6577 = vmatpush1.bf16.msra.mxu0 0
    %6578 = vmatprep.subr.bf16.mxu0 0
    %6579 = vmatpush1.bf16.msra.mxu0 0
    %6580 = vmatprep.subr.bf16.mxu0 0
    %6581 = vmatpush1.bf16.msra.mxu0 0
    %6582 = vmatprep.subr.bf16.mxu0 0
    %6583 = vmatpush1.bf16.msra.mxu0 0
    %6584 = vmatprep.subr.bf16.mxu0 0
    %6585 = vmatpush1.bf16.msra.mxu0 0
    %6586 = vmatprep.subr.bf16.mxu0 0
    %6587 = vmatpush1.bf16.msra.mxu0 0
    %6588 = vmatprep.subr.bf16.mxu0 0
    %6589 = vmatpush1.bf16.msra.mxu0 0
    %6590 = vmatprep.subr.bf16.mxu0 0
    %6591 = vmatpush1.bf16.msra.mxu0 0
    %6592 = vmatprep.subr.bf16.mxu0 0
    %6593 = vmatpush1.bf16.msra.mxu0 0
    %6594 = vmatprep.mubr.bf16.mxu0 0
    %6595 = vmatmul.mubr.bf16.gmra.mrb[0].mxu0 %v6560
    %v6596 = vpop.f32.mrb[0].mxu0
    %v6597 = vadd.f32 0.0, %v6596
    %v6598 = vpop.f32.mrb[0].mxu0
    %v6599 = vpop.f32.mrb[0].mxu0
    %v6600 = vpop.f32.mrb[0].mxu0
    %6601 = vdwg.mxu0
    %v6603 = vunpack.c.l.b16 %v6542
    %6604 = vset.pattern.permute.xlu0 0
    %6605 = vperm.xlu0 %6604, %v6603
    %v6606 = vpop.permute.xlu0 %6605
    %v6607 = vlaneseq
    %v6608 = vshrl.u32 %v6607, 7
    %v6609 = vsub.s32 %v817, %v6608
    %v6610 = vrot.slane %v6606, %v6609
    %v6611 = vpack.c.b16 %v6610, %v6610
    %v6613 = vsel %vm865, %v6611, 0
    %6615 = vmatprep.subr.bf16.mxu0 0
    %6616 = vmatpush1.bf16.msra.mxu0 %v1138
    %6617 = vmatprep.subr.bf16.mxu0 0
    %6618 = vmatpush1.bf16.msra.mxu0 0
    %6619 = vmatprep.subr.bf16.mxu0 0
    %6620 = vmatpush1.bf16.msra.mxu0 0
    %6621 = vmatprep.subr.bf16.mxu0 0
    %6622 = vmatpush1.bf16.msra.mxu0 0
    %6623 = vmatprep.subr.bf16.mxu0 0
    %6624 = vmatpush1.bf16.msra.mxu0 0
    %6625 = vmatprep.subr.bf16.mxu0 0
    %6626 = vmatpush1.bf16.msra.mxu0 0
    %6627 = vmatprep.subr.bf16.mxu0 0
    %6628 = vmatpush1.bf16.msra.mxu0 0
    %6629 = vmatprep.subr.bf16.mxu0 0
    %6630 = vmatpush1.bf16.msra.mxu0 0
    %6631 = vmatprep.subr.bf16.mxu0 0
    %6632 = vmatpush1.bf16.msra.mxu0 0
    %6633 = vmatprep.subr.bf16.mxu0 0
    %6634 = vmatpush1.bf16.msra.mxu0 0
    %6635 = vmatprep.subr.bf16.mxu0 0
    %6636 = vmatpush1.bf16.msra.mxu0 0
    %6637 = vmatprep.subr.bf16.mxu0 0
    %6638 = vmatpush1.bf16.msra.mxu0 0
    %6639 = vmatprep.subr.bf16.mxu0 0
    %6640 = vmatpush1.bf16.msra.mxu0 0
    %6641 = vmatprep.subr.bf16.mxu0 0
    %6642 = vmatpush1.bf16.msra.mxu0 0
    %6643 = vmatprep.subr.bf16.mxu0 0
    %6644 = vmatpush1.bf16.msra.mxu0 0
    %6645 = vmatprep.subr.bf16.mxu0 0
    %6646 = vmatpush1.bf16.msra.mxu0 0
    %6647 = vmatprep.mubr.bf16.mxu0 0
    %6648 = vmatmul.mubr.bf16.gmra.mrb[0].mxu0 %v6613
    %v6649 = vpop.f32.mrb[0].mxu0
    %v6650 = vadd.f32 0.0, %v6649
    %v6651 = vpop.f32.mrb[0].mxu0
    %v6652 = vpop.f32.mrb[0].mxu0
    %v6653 = vpop.f32.mrb[0].mxu0
    %6654 = vdwg.mxu0
    %v6656 = vunpack.c.l.b16 %v6543
    %6657 = vset.pattern.permute.xlu0 0
    %6658 = vperm.xlu0 %6657, %v6656
    %v6659 = vpop.permute.xlu0 %6658
    %v6660 = vlaneseq
    %v6661 = vshrl.u32 %v6660, 7
    %v6662 = vsub.s32 %v817, %v6661
    %v6663 = vrot.slane %v6659, %v6662
    %v6664 = vpack.c.b16 %v6663, %v6663
    %v6666 = vsel %vm865, %v6664, 0
    %6668 = vmatprep.subr.bf16.mxu0 0
    %6669 = vmatpush1.bf16.msra.mxu0 %v1194
    %6670 = vmatprep.subr.bf16.mxu0 0
    %6671 = vmatpush1.bf16.msra.mxu0 0
    %6672 = vmatprep.subr.bf16.mxu0 0
    %6673 = vmatpush1.bf16.msra.mxu0 0
    %6674 = vmatprep.subr.bf16.mxu0 0
    %6675 = vmatpush1.bf16.msra.mxu0 0
    %6676 = vmatprep.subr.bf16.mxu0 0
    %6677 = vmatpush1.bf16.msra.mxu0 0
    %6678 = vmatprep.subr.bf16.mxu0 0
    %6679 = vmatpush1.bf16.msra.mxu0 0
    %6680 = vmatprep.subr.bf16.mxu0 0
    %6681 = vmatpush1.bf16.msra.mxu0 0
    %6682 = vmatprep.subr.bf16.mxu0 0
    %6683 = vmatpush1.bf16.msra.mxu0 0
    %6684 = vmatprep.subr.bf16.mxu0 0
    %6685 = vmatpush1.bf16.msra.mxu0 0
    %6686 = vmatprep.subr.bf16.mxu0 0
    %6687 = vmatpush1.bf16.msra.mxu0 0
    %6688 = vmatprep.subr.bf16.mxu0 0
    %6689 = vmatpush1.bf16.msra.mxu0 0
    %6690 = vmatprep.subr.bf16.mxu0 0
    %6691 = vmatpush1.bf16.msra.mxu0 0
    %6692 = vmatprep.subr.bf16.mxu0 0
    %6693 = vmatpush1.bf16.msra.mxu0 0
    %6694 = vmatprep.subr.bf16.mxu0 0
    %6695 = vmatpush1.bf16.msra.mxu0 0
    %6696 = vmatprep.subr.bf16.mxu0 0
    %6697 = vmatpush1.bf16.msra.mxu0 0
    %6698 = vmatprep.subr.bf16.mxu0 0
    %6699 = vmatpush1.bf16.msra.mxu0 0
    %6700 = vmatprep.mubr.bf16.mxu0 0
    %6701 = vmatmul.mubr.bf16.gmra.mrb[0].mxu0 %v6666
    %v6702 = vpop.f32.mrb[0].mxu0
    %v6703 = vadd.f32 0.0, %v6702
    %v6704 = vpop.f32.mrb[0].mxu0
    %v6705 = vpop.f32.mrb[0].mxu0
    %v6706 = vpop.f32.mrb[0].mxu0
    %6707 = vdwg.mxu0
    %v6709 = vunpack.c.l.b16 %v6544
    %6710 = vset.pattern.permute.xlu0 0
    %6711 = vperm.xlu0 %6710, %v6709
    %v6712 = vpop.permute.xlu0 %6711
    %v6713 = vlaneseq
    %v6714 = vshrl.u32 %v6713, 7
    %v6715 = vsub.s32 %v817, %v6714
    %v6716 = vrot.slane %v6712, %v6715
    %v6717 = vpack.c.b16 %v6716, %v6716
    %v6719 = vsel %vm865, %v6717, 0
    %6721 = vmatprep.subr.bf16.mxu0 0
    %6722 = vmatpush1.bf16.msra.mxu0 %v1250
    %6723 = vmatprep.subr.bf16.mxu0 0
    %6724 = vmatpush1.bf16.msra.mxu0 0
    %6725 = vmatprep.subr.bf16.mxu0 0
    %6726 = vmatpush1.bf16.msra.mxu0 0
    %6727 = vmatprep.subr.bf16.mxu0 0
    %6728 = vmatpush1.bf16.msra.mxu0 0
    %6729 = vmatprep.subr.bf16.mxu0 0
    %6730 = vmatpush1.bf16.msra.mxu0 0
    %6731 = vmatprep.subr.bf16.mxu0 0
    %6732 = vmatpush1.bf16.msra.mxu0 0
    %6733 = vmatprep.subr.bf16.mxu0 0
    %6734 = vmatpush1.bf16.msra.mxu0 0
    %6735 = vmatprep.subr.bf16.mxu0 0
    %6736 = vmatpush1.bf16.msra.mxu0 0
    %6737 = vmatprep.subr.bf16.mxu0 0
    %6738 = vmatpush1.bf16.msra.mxu0 0
    %6739 = vmatprep.subr.bf16.mxu0 0
    %6740 = vmatpush1.bf16.msra.mxu0 0
    %6741 = vmatprep.subr.bf16.mxu0 0
    %6742 = vmatpush1.bf16.msra.mxu0 0
    %6743 = vmatprep.subr.bf16.mxu0 0
    %6744 = vmatpush1.bf16.msra.mxu0 0
    %6745 = vmatprep.subr.bf16.mxu0 0
    %6746 = vmatpush1.bf16.msra.mxu0 0
    %6747 = vmatprep.subr.bf16.mxu0 0
    %6748 = vmatpush1.bf16.msra.mxu0 0
    %6749 = vmatprep.subr.bf16.mxu0 0
    %6750 = vmatpush1.bf16.msra.mxu0 0
    %6751 = vmatprep.subr.bf16.mxu0 0
    %6752 = vmatpush1.bf16.msra.mxu0 0
    %6753 = vmatprep.mubr.bf16.mxu0 0
    %6754 = vmatmul.mubr.bf16.gmra.mrb[0].mxu0 %v6719
    %v6755 = vpop.f32.mrb[0].mxu0
    %v6756 = vadd.f32 0.0, %v6755
    %v6757 = vpop.f32.mrb[0].mxu0
    %v6758 = vpop.f32.mrb[0].mxu0
    %v6759 = vpop.f32.mrb[0].mxu0
    %6760 = vdwg.mxu0
    %v6762 = vunpack.c.l.b16 %v6545
    %6763 = vset.pattern.permute.xlu0 0
    %6764 = vperm.xlu0 %6763, %v6762
    %v6765 = vpop.permute.xlu0 %6764
    %v6766 = vlaneseq
    %v6767 = vshrl.u32 %v6766, 7
    %v6768 = vsub.s32 %v817, %v6767
    %v6769 = vrot.slane %v6765, %v6768
    %v6770 = vpack.c.b16 %v6769, %v6769
    %v6772 = vsel %vm865, %v6770, 0
    %6774 = vmatprep.subr.bf16.mxu0 0
    %6775 = vmatpush1.bf16.msra.mxu0 %v1306
    %6776 = vmatprep.subr.bf16.mxu0 0
    %6777 = vmatpush1.bf16.msra.mxu0 0
    %6778 = vmatprep.subr.bf16.mxu0 0
    %6779 = vmatpush1.bf16.msra.mxu0 0
    %6780 = vmatprep.subr.bf16.mxu0 0
    %6781 = vmatpush1.bf16.msra.mxu0 0
    %6782 = vmatprep.subr.bf16.mxu0 0
    %6783 = vmatpush1.bf16.msra.mxu0 0
    %6784 = vmatprep.subr.bf16.mxu0 0
    %6785 = vmatpush1.bf16.msra.mxu0 0
    %6786 = vmatprep.subr.bf16.mxu0 0
    %6787 = vmatpush1.bf16.msra.mxu0 0
    %6788 = vmatprep.subr.bf16.mxu0 0
    %6789 = vmatpush1.bf16.msra.mxu0 0
    %6790 = vmatprep.subr.bf16.mxu0 0
    %6791 = vmatpush1.bf16.msra.mxu0 0
    %6792 = vmatprep.subr.bf16.mxu0 0
    %6793 = vmatpush1.bf16.msra.mxu0 0
    %6794 = vmatprep.subr.bf16.mxu0 0
    %6795 = vmatpush1.bf16.msra.mxu0 0
    %6796 = vmatprep.subr.bf16.mxu0 0
    %6797 = vmatpush1.bf16.msra.mxu0 0
    %6798 = vmatprep.subr.bf16.mxu0 0
    %6799 = vmatpush1.bf16.msra.mxu0 0
    %6800 = vmatprep.subr.bf16.mxu0 0
    %6801 = vmatpush1.bf16.msra.mxu0 0
    %6802 = vmatprep.subr.bf16.mxu0 0
    %6803 = vmatpush1.bf16.msra.mxu0 0
    %6804 = vmatprep.subr.bf16.mxu0 0
    %6805 = vmatpush1.bf16.msra.mxu0 0
    %6806 = vmatprep.mubr.bf16.mxu0 0
    %6807 = vmatmul.mubr.bf16.gmra.mrb[0].mxu0 %v6772
    %v6808 = vpop.f32.mrb[0].mxu0
    %v6809 = vadd.f32 0.0, %v6808
    %v6810 = vpop.f32.mrb[0].mxu0
    %v6811 = vpop.f32.mrb[0].mxu0
    %v6812 = vpop.f32.mrb[0].mxu0
    %6813 = vdwg.mxu0
    %v6815 = vunpack.c.l.b16 %v6546
    %6816 = vset.pattern.permute.xlu0 0
    %6817 = vperm.xlu0 %6816, %v6815
    %v6818 = vpop.permute.xlu0 %6817
    %v6819 = vlaneseq
    %v6820 = vshrl.u32 %v6819, 7
    %v6821 = vsub.s32 %v817, %v6820
    %v6822 = vrot.slane %v6818, %v6821
    %v6823 = vpack.c.b16 %v6822, %v6822
    %v6825 = vsel %vm865, %v6823, 0
    %6827 = vmatprep.subr.bf16.mxu0 0
    %6828 = vmatpush1.bf16.msra.mxu0 %v1362
    %6829 = vmatprep.subr.bf16.mxu0 0
    %6830 = vmatpush1.bf16.msra.mxu0 0
    %6831 = vmatprep.subr.bf16.mxu0 0
    %6832 = vmatpush1.bf16.msra.mxu0 0
    %6833 = vmatprep.subr.bf16.mxu0 0
    %6834 = vmatpush1.bf16.msra.mxu0 0
    %6835 = vmatprep.subr.bf16.mxu0 0
    %6836 = vmatpush1.bf16.msra.mxu0 0
    %6837 = vmatprep.subr.bf16.mxu0 0
    %6838 = vmatpush1.bf16.msra.mxu0 0
    %6839 = vmatprep.subr.bf16.mxu0 0
    %6840 = vmatpush1.bf16.msra.mxu0 0
    %6841 = vmatprep.subr.bf16.mxu0 0
    %6842 = vmatpush1.bf16.msra.mxu0 0
    %6843 = vmatprep.subr.bf16.mxu0 0
    %6844 = vmatpush1.bf16.msra.mxu0 0
    %6845 = vmatprep.subr.bf16.mxu0 0
    %6846 = vmatpush1.bf16.msra.mxu0 0
    %6847 = vmatprep.subr.bf16.mxu0 0
    %6848 = vmatpush1.bf16.msra.mxu0 0
    %6849 = vmatprep.subr.bf16.mxu0 0
    %6850 = vmatpush1.bf16.msra.mxu0 0
    %6851 = vmatprep.subr.bf16.mxu0 0
    %6852 = vmatpush1.bf16.msra.mxu0 0
    %6853 = vmatprep.subr.bf16.mxu0 0
    %6854 = vmatpush1.bf16.msra.mxu0 0
    %6855 = vmatprep.subr.bf16.mxu0 0
    %6856 = vmatpush1.bf16.msra.mxu0 0
    %6857 = vmatprep.subr.bf16.mxu0 0
    %6858 = vmatpush1.bf16.msra.mxu0 0
    %6859 = vmatprep.mubr.bf16.mxu0 0
    %6860 = vmatmul.mubr.bf16.gmra.mrb[0].mxu0 %v6825
    %v6861 = vpop.f32.mrb[0].mxu0
    %v6862 = vadd.f32 0.0, %v6861
    %v6863 = vpop.f32.mrb[0].mxu0
    %v6864 = vpop.f32.mrb[0].mxu0
    %v6865 = vpop.f32.mrb[0].mxu0
    %6866 = vdwg.mxu0
    %v6868 = vunpack.c.l.b16 %v6547
    %6869 = vset.pattern.permute.xlu0 0
    %6870 = vperm.xlu0 %6869, %v6868
    %v6871 = vpop.permute.xlu0 %6870
    %v6872 = vlaneseq
    %v6873 = vshrl.u32 %v6872, 7
    %v6874 = vsub.s32 %v817, %v6873
    %v6875 = vrot.slane %v6871, %v6874
    %v6876 = vpack.c.b16 %v6875, %v6875
    %v6878 = vsel %vm865, %v6876, 0
    %6880 = vmatprep.subr.bf16.mxu0 0
    %6881 = vmatpush1.bf16.msra.mxu0 %v1418
    %6882 = vmatprep.subr.bf16.mxu0 0
    %6883 = vmatpush1.bf16.msra.mxu0 0
    %6884 = vmatprep.subr.bf16.mxu0 0
    %6885 = vmatpush1.bf16.msra.mxu0 0
    %6886 = vmatprep.subr.bf16.mxu0 0
    %6887 = vmatpush1.bf16.msra.mxu0 0
    %6888 = vmatprep.subr.bf16.mxu0 0
    %6889 = vmatpush1.bf16.msra.mxu0 0
    %6890 = vmatprep.subr.bf16.mxu0 0
    %6891 = vmatpush1.bf16.msra.mxu0 0
    %6892 = vmatprep.subr.bf16.mxu0 0
    %6893 = vmatpush1.bf16.msra.mxu0 0
    %6894 = vmatprep.subr.bf16.mxu0 0
    %6895 = vmatpush1.bf16.msra.mxu0 0
    %6896 = vmatprep.subr.bf16.mxu0 0
    %6897 = vmatpush1.bf16.msra.mxu0 0
    %6898 = vmatprep.subr.bf16.mxu0 0
    %6899 = vmatpush1.bf16.msra.mxu0 0
    %6900 = vmatprep.subr.bf16.mxu0 0
    %6901 = vmatpush1.bf16.msra.mxu0 0
    %6902 = vmatprep.subr.bf16.mxu0 0
    %6903 = vmatpush1.bf16.msra.mxu0 0
    %6904 = vmatprep.subr.bf16.mxu0 0
    %6905 = vmatpush1.bf16.msra.mxu0 0
    %6906 = vmatprep.subr.bf16.mxu0 0
    %6907 = vmatpush1.bf16.msra.mxu0 0
    %6908 = vmatprep.subr.bf16.mxu0 0
    %6909 = vmatpush1.bf16.msra.mxu0 0
    %6910 = vmatprep.subr.bf16.mxu0 0
    %6911 = vmatpush1.bf16.msra.mxu0 0
    %6912 = vmatprep.mubr.bf16.mxu0 0
    %6913 = vmatmul.mubr.bf16.gmra.mrb[0].mxu0 %v6878
    %v6914 = vpop.f32.mrb[0].mxu0
    %v6915 = vadd.f32 0.0, %v6914
    %v6916 = vpop.f32.mrb[0].mxu0
    %v6917 = vpop.f32.mrb[0].mxu0
    %v6918 = vpop.f32.mrb[0].mxu0
    %6919 = vdwg.mxu0
    %v6921 = vunpack.c.l.b16 %v6548
    %6922 = vset.pattern.permute.xlu0 0
    %6923 = vperm.xlu0 %6922, %v6921
    %v6924 = vpop.permute.xlu0 %6923
    %v6925 = vlaneseq
    %v6926 = vshrl.u32 %v6925, 7
    %v6927 = vsub.s32 %v817, %v6926
    %v6928 = vrot.slane %v6924, %v6927
    %v6929 = vpack.c.b16 %v6928, %v6928
    %v6931 = vsel %vm865, %v6929, 0
    %6933 = vmatprep.subr.bf16.mxu0 0
    %6934 = vmatpush1.bf16.msra.mxu0 %v1474
    %6935 = vmatprep.subr.bf16.mxu0 0
    %6936 = vmatpush1.bf16.msra.mxu0 0
    %6937 = vmatprep.subr.bf16.mxu0 0
    %6938 = vmatpush1.bf16.msra.mxu0 0
    %6939 = vmatprep.subr.bf16.mxu0 0
    %6940 = vmatpush1.bf16.msra.mxu0 0
    %6941 = vmatprep.subr.bf16.mxu0 0
    %6942 = vmatpush1.bf16.msra.mxu0 0
    %6943 = vmatprep.subr.bf16.mxu0 0
    %6944 = vmatpush1.bf16.msra.mxu0 0
    %6945 = vmatprep.subr.bf16.mxu0 0
    %6946 = vmatpush1.bf16.msra.mxu0 0
    %6947 = vmatprep.subr.bf16.mxu0 0
    %6948 = vmatpush1.bf16.msra.mxu0 0
    %6949 = vmatprep.subr.bf16.mxu0 0
    %6950 = vmatpush1.bf16.msra.mxu0 0
    %6951 = vmatprep.subr.bf16.mxu0 0
    %6952 = vmatpush1.bf16.msra.mxu0 0
    %6953 = vmatprep.subr.bf16.mxu0 0
    %6954 = vmatpush1.bf16.msra.mxu0 0
    %6955 = vmatprep.subr.bf16.mxu0 0
    %6956 = vmatpush1.bf16.msra.mxu0 0
    %6957 = vmatprep.subr.bf16.mxu0 0
    %6958 = vmatpush1.bf16.msra.mxu0 0
    %6959 = vmatprep.subr.bf16.mxu0 0
    %6960 = vmatpush1.bf16.msra.mxu0 0
    %6961 = vmatprep.subr.bf16.mxu0 0
    %6962 = vmatpush1.bf16.msra.mxu0 0
    %6963 = vmatprep.subr.bf16.mxu0 0
    %6964 = vmatpush1.bf16.msra.mxu0 0
    %6965 = vmatprep.mubr.bf16.mxu0 0
    %6966 = vmatmul.mubr.bf16.gmra.mrb[0].mxu0 %v6931
    %v6967 = vpop.f32.mrb[0].mxu0
    %v6968 = vadd.f32 0.0, %v6967
    %v6969 = vpop.f32.mrb[0].mxu0
    %v6970 = vpop.f32.mrb[0].mxu0
    %v6971 = vpop.f32.mrb[0].mxu0
    %6972 = vdwg.mxu0
    %v6981 = vrot.slane %v6650, 7
    %v6982 = vsel %vm850, %v6981, %v6597
    %v6983 = vrot.slane %v6703, 6
    %v6984 = vsel %vm852, %v6983, %v6982
    %v6985 = vrot.slane %v6756, 5
    %v6986 = vsel %vm854, %v6985, %v6984
    %v6987 = vrot.slane %v6809, 4
    %v6988 = vsel %vm856, %v6987, %v6986
    %v6989 = vrot.slane %v6862, 3
    %v6990 = vsel %vm858, %v6989, %v6988
    %v6991 = vrot.slane %v6915, 2
    %v6992 = vsel %vm860, %v6991, %v6990
    %v6993 = vrot.slane %v6968, 1
    %v6994 = vsel %vm862, %v6993, %v6992
    %6995 = vrot.lane.b32.xlu0 %v6994, 32
    %v6996 = vpop.permute.xlu0 %6995
    %6999 = vrot.lane.b32.xlu0 %v6082, 32
    %v7000 = vpop.permute.xlu0 %6999
    %v7002 = vsel %vm357, %v5971, %v6996
    %v7003 = vsel %vm384, %v7002, %v7000
    %v7004 = vpack.c.bf16 %v7003, %v7003
    %v7006 = vsel %vm1584, %v7004, 0
    %7008 = vmatprep.subr.bf16.mxu0 0
    %7009 = vmatpush1.bf16.msra.mxu0 %v1572
    %7010 = vmatprep.subr.bf16.mxu0 0
    %7011 = vmatpush1.bf16.msra.mxu0 %v1573
    %7012 = vmatprep.subr.bf16.mxu0 0
    %7013 = vmatpush1.bf16.msra.mxu0 %v1574
    %7014 = vmatprep.subr.bf16.mxu0 0
    %7015 = vmatpush1.bf16.msra.mxu0 %v1575
    %7016 = vmatprep.subr.bf16.mxu0 0
    %7017 = vmatpush1.bf16.msra.mxu0 %v1576
    %7018 = vmatprep.subr.bf16.mxu0 0
    %7019 = vmatpush1.bf16.msra.mxu0 %v1577
    %7020 = vmatprep.subr.bf16.mxu0 0
    %7021 = vmatpush1.bf16.msra.mxu0 0
    %7022 = vmatprep.subr.bf16.mxu0 0
    %7023 = vmatpush1.bf16.msra.mxu0 0
    %7024 = vmatprep.subr.bf16.mxu0 0
    %7025 = vmatpush1.bf16.msra.mxu0 0
    %7026 = vmatprep.subr.bf16.mxu0 0
    %7027 = vmatpush1.bf16.msra.mxu0 0
    %7028 = vmatprep.subr.bf16.mxu0 0
    %7029 = vmatpush1.bf16.msra.mxu0 0
    %7030 = vmatprep.subr.bf16.mxu0 0
    %7031 = vmatpush1.bf16.msra.mxu0 0
    %7032 = vmatprep.subr.bf16.mxu0 0
    %7033 = vmatpush1.bf16.msra.mxu0 0
    %7034 = vmatprep.subr.bf16.mxu0 0
    %7035 = vmatpush1.bf16.msra.mxu0 0
    %7036 = vmatprep.subr.bf16.mxu0 0
    %7037 = vmatpush1.bf16.msra.mxu0 0
    %7038 = vmatprep.subr.bf16.mxu0 0
    %7039 = vmatpush1.bf16.msra.mxu0 0
    %7040 = vmatprep.mubr.bf16.mxu0 0
    %7041 = vmatmul.mubr.bf16.gmra.mrb[0].mxu0 %v7006
    %v7042 = vpop.f32.mrb[0].mxu0
    %v7043 = vadd.f32 %v327, %v7042
    %v7044 = vpop.f32.mrb[0].mxu0
    %v7045 = vpop.f32.mrb[0].mxu0
    %v7046 = vpop.f32.mrb[0].mxu0
    %7047 = vdwg.mxu0
    %v7048 = vxor.u32 %v7043, 2147483648
    %v7049 = vmul.f32 %v7048, 1.442695
    %v7050 = vpow.pop %v7049
    %v7051 = vadd.f32 %v7050, 1.0
    %v7052 = vrcp.pop %v7051
    %v7053 = vmul.f32 1.0, %v7052
    %7054 = vmatprep.subr.bf16.mxu0 0
    %7055 = vmatpush1.bf16.msra.mxu0 %v1658
    %7056 = vmatprep.subr.bf16.mxu0 0
    %7057 = vmatpush1.bf16.msra.mxu0 %v1659
    %7058 = vmatprep.subr.bf16.mxu0 0
    %7059 = vmatpush1.bf16.msra.mxu0 %v1660
    %7060 = vmatprep.subr.bf16.mxu0 0
    %7061 = vmatpush1.bf16.msra.mxu0 %v1661
    %7062 = vmatprep.subr.bf16.mxu0 0
    %7063 = vmatpush1.bf16.msra.mxu0 %v1662
    %7064 = vmatprep.subr.bf16.mxu0 0
    %7065 = vmatpush1.bf16.msra.mxu0 %v1663
    %7066 = vmatprep.subr.bf16.mxu0 0
    %7067 = vmatpush1.bf16.msra.mxu0 0
    %7068 = vmatprep.subr.bf16.mxu0 0
    %7069 = vmatpush1.bf16.msra.mxu0 0
    %7070 = vmatprep.subr.bf16.mxu0 0
    %7071 = vmatpush1.bf16.msra.mxu0 0
    %7072 = vmatprep.subr.bf16.mxu0 0
    %7073 = vmatpush1.bf16.msra.mxu0 0
    %7074 = vmatprep.subr.bf16.mxu0 0
    %7075 = vmatpush1.bf16.msra.mxu0 0
    %7076 = vmatprep.subr.bf16.mxu0 0
    %7077 = vmatpush1.bf16.msra.mxu0 0
    %7078 = vmatprep.subr.bf16.mxu0 0
    %7079 = vmatpush1.bf16.msra.mxu0 0
    %7080 = vmatprep.subr.bf16.mxu0 0
    %7081 = vmatpush1.bf16.msra.mxu0 0
    %7082 = vmatprep.subr.bf16.mxu0 0
    %7083 = vmatpush1.bf16.msra.mxu0 0
    %7084 = vmatprep.subr.bf16.mxu0 0
    %7085 = vmatpush1.bf16.msra.mxu0 0
    %7086 = vmatprep.mubr.bf16.mxu0 0
    %7087 = vmatmul.mubr.bf16.gmra.mrb[0].mxu0 %v7006
    %v7088 = vpop.f32.mrb[0].mxu0
    %v7089 = vadd.f32 %v346, %v7088
    %v7090 = vpop.f32.mrb[0].mxu0
    %v7091 = vpop.f32.mrb[0].mxu0
    %v7092 = vpop.f32.mrb[0].mxu0
    %7093 = vdwg.mxu0
    %7095 = vrot.lane.b32.xlu0 %v7089, 112
    %v7096 = vpop.permute.xlu0 %7095
    %v7098 = vmax.f32 %v7089, %v7096
    %v7099 = vpack.c.bf16 %v7098, %v7098
    %v7101 = vsel %vm1722, %v7099, 0
    %7103 = vmatprep.subr.bf16.mxu0 0
    %7104 = vmatpush1.bf16.msra.mxu0 %v1720
    %7105 = vmatprep.subr.bf16.mxu0 0
    %7106 = vmatpush1.bf16.msra.mxu0 0
    %7107 = vmatprep.subr.bf16.mxu0 0
    %7108 = vmatpush1.bf16.msra.mxu0 0
    %7109 = vmatprep.subr.bf16.mxu0 0
    %7110 = vmatpush1.bf16.msra.mxu0 0
    %7111 = vmatprep.subr.bf16.mxu0 0
    %7112 = vmatpush1.bf16.msra.mxu0 0
    %7113 = vmatprep.subr.bf16.mxu0 0
    %7114 = vmatpush1.bf16.msra.mxu0 0
    %7115 = vmatprep.subr.bf16.mxu0 0
    %7116 = vmatpush1.bf16.msra.mxu0 0
    %7117 = vmatprep.subr.bf16.mxu0 0
    %7118 = vmatpush1.bf16.msra.mxu0 0
    %7119 = vmatprep.subr.bf16.mxu0 0
    %7120 = vmatpush1.bf16.msra.mxu0 0
    %7121 = vmatprep.subr.bf16.mxu0 0
    %7122 = vmatpush1.bf16.msra.mxu0 0
    %7123 = vmatprep.subr.bf16.mxu0 0
    %7124 = vmatpush1.bf16.msra.mxu0 0
    %7125 = vmatprep.subr.bf16.mxu0 0
    %7126 = vmatpush1.bf16.msra.mxu0 0
    %7127 = vmatprep.subr.bf16.mxu0 0
    %7128 = vmatpush1.bf16.msra.mxu0 0
    %7129 = vmatprep.subr.bf16.mxu0 0
    %7130 = vmatpush1.bf16.msra.mxu0 0
    %7131 = vmatprep.subr.bf16.mxu0 0
    %7132 = vmatpush1.bf16.msra.mxu0 0
    %7133 = vmatprep.subr.bf16.mxu0 0
    %7134 = vmatpush1.bf16.msra.mxu0 0
    %7135 = vmatprep.mubr.bf16.mxu0 0
    %7136 = vmatmul.mubr.bf16.gmra.mrb[0].mxu0 %v7101
    %v7137 = vpop.f32.mrb[0].mxu0
    %v7138 = vadd.f32 0.0, %v7137
    %v7139 = vpop.f32.mrb[0].mxu0
    %v7140 = vpop.f32.mrb[0].mxu0
    %v7141 = vpop.f32.mrb[0].mxu0
    %7142 = vdwg.mxu0
    %v7143 = vsel %vm384, %v7138, -inf
    %7144 = vmax.xlane.f32.xlu0 %v7143
    %v7145 = vpop.xlane.xlu0 %7144
    %v7146 = vsub.f32 %v7138, %v7145
    %v7147 = vmul.f32 %v7146, 1.442695
    %v7148 = vpow.pop %v7147
    %v7149 = vsel %vm384, %v7148, 0.0
    %7150 = vadd.xlane.f32.xlu0 %v7149
    %v7151 = vpop.xlane.xlu0 %7150
    %v7152 = vrcp.pop %v7151
    %v7153 = vmul.f32 %v7148, %v7152
    %v7154 = vsub.f32 1.0, %v7053
    %7156 = vset.pattern.permute.xlu0 0
    %7157 = vperm.xlu0 %7156, %v7154
    %v7158 = vpop.permute.xlu0 %7157
    %v7160 = vmul.f32 %v7158, %v7153
    %7162 = vset.pattern.permute.xlu0 0
    %7163 = vperm.xlu0 %7162, %v7053
    %v7164 = vpop.permute.xlu0 %7163
    %7174 = vset.pattern.permute.xlu0 0
    %7175 = vperm.xlu0 %7174, %v6533
    %v7176 = vpop.permute.xlu0 %7175
    %7177 = vset.pattern.permute.xlu0 0
    %7178 = vperm.xlu0 %7177, %v6534
    %v7179 = vpop.permute.xlu0 %7178
    %7180 = vset.pattern.permute.xlu0 0
    %7181 = vperm.xlu0 %7180, %v6535
    %v7182 = vpop.permute.xlu0 %7181
    %7183 = vset.pattern.permute.xlu0 0
    %7184 = vperm.xlu0 %7183, %v6536
    %v7185 = vpop.permute.xlu0 %7184
    %7186 = vset.pattern.permute.xlu0 0
    %7187 = vperm.xlu0 %7186, %v6537
    %v7188 = vpop.permute.xlu0 %7187
    %7189 = vset.pattern.permute.xlu0 0
    %7190 = vperm.xlu0 %7189, %v6538
    %v7191 = vpop.permute.xlu0 %7190
    %7192 = vset.pattern.permute.xlu0 0
    %7193 = vperm.xlu0 %7192, %v6539
    %v7194 = vpop.permute.xlu0 %7193
    %7195 = vset.pattern.permute.xlu0 0
    %7196 = vperm.xlu0 %7195, %v6540
    %v7197 = vpop.permute.xlu0 %7196
    %v7198 = vlaneseq
    %v7199 = vshrl.u32 %v7198, 7
    %v7200 = vsub.s32 %v817, %v7199
    %v7201 = vrot.slane %v7176, %v7200
    %v7202 = vlaneseq
    %v7203 = vshrl.u32 %v7202, 7
    %v7204 = vsub.s32 %v817, %v7203
    %v7205 = vrot.slane %v7179, %v7204
    %v7206 = vlaneseq
    %v7207 = vshrl.u32 %v7206, 7
    %v7208 = vsub.s32 %v817, %v7207
    %v7209 = vrot.slane %v7182, %v7208
    %v7210 = vlaneseq
    %v7211 = vshrl.u32 %v7210, 7
    %v7212 = vsub.s32 %v817, %v7211
    %v7213 = vrot.slane %v7185, %v7212
    %v7214 = vlaneseq
    %v7215 = vshrl.u32 %v7214, 7
    %v7216 = vsub.s32 %v817, %v7215
    %v7217 = vrot.slane %v7188, %v7216
    %v7218 = vlaneseq
    %v7219 = vshrl.u32 %v7218, 7
    %v7220 = vsub.s32 %v817, %v7219
    %v7221 = vrot.slane %v7191, %v7220
    %v7222 = vlaneseq
    %v7223 = vshrl.u32 %v7222, 7
    %v7224 = vsub.s32 %v817, %v7223
    %v7225 = vrot.slane %v7194, %v7224
    %v7226 = vlaneseq
    %v7227 = vshrl.u32 %v7226, 7
    %v7228 = vsub.s32 %v817, %v7227
    %v7229 = vrot.slane %v7197, %v7228
    %v7230 = vsel %vm850, %v7205, %v7201
    %v7231 = vsel %vm852, %v7209, %v7230
    %v7232 = vsel %vm854, %v7213, %v7231
    %v7233 = vsel %vm856, %v7217, %v7232
    %v7234 = vsel %vm858, %v7221, %v7233
    %v7235 = vsel %vm860, %v7225, %v7234
    %v7236 = vsel %vm862, %v7229, %v7235
    %v7238 = vmul.f32 %v7164, %v7236
    %7240 = vrot.lane.b32.xlu0 %v7238, 64
    %v7241 = vpop.permute.xlu0 %7240
    %v7243 = vsel %vm384, %v7160, %v7241
    %v7244 = vsel %vm1867, %v7243, 0.0
    %v7245 = vadd.f32 %v7244, 1e-12
    %v7246 = vlog2.pop %v7245
    %v7247 = vmul.f32 %v7246, 0.6931472
    %v7249 = vcombine.high %v7247, %v7247
    %v7251 = vunpack.c.l.s4 1966171168
    %v7252 = vunpack.c.0.s8 %v7251
    %v7253 = vlaneseq
    %v7254 = vshrl.u32 %v7253, 7
    %v7255 = vsub.s32 %v7252, %v7254
    %v7256 = vrot.slane %v7247, %v7255
    %v7258 = vunpack.c.l.s4 1966171168
    %v7259 = vunpack.c.0.s8 %v7258
    %v7260 = vlaneseq
    %v7261 = vshrl.u32 %v7260, 7
    %v7262 = vsub.s32 %v7259, %v7261
    %v7263 = vrot.slane %v7249, %v7262
    %v7264 = vcombine.high %v7256, %v7256
    %v7265 = vcombine.high %v7263, %v7263
    %v7267 = vunpack.c.l.s4 1966171168
    %v7268 = vunpack.c.0.s8 %v7267
    %v7269 = vlaneseq
    %v7270 = vshrl.u32 %v7269, 7
    %v7271 = vsub.s32 %v7268, %v7270
    %v7272 = vrot.slane %v7256, %v7271
    %v7274 = vunpack.c.l.s4 1966171168
    %v7275 = vunpack.c.0.s8 %v7274
    %v7276 = vlaneseq
    %v7277 = vshrl.u32 %v7276, 7
    %v7278 = vsub.s32 %v7275, %v7277
    %v7279 = vrot.slane %v7263, %v7278
    %v7281 = vunpack.c.l.s4 1966171168
    %v7282 = vunpack.c.0.s8 %v7281
    %v7283 = vlaneseq
    %v7284 = vshrl.u32 %v7283, 7
    %v7285 = vsub.s32 %v7282, %v7284
    %v7286 = vrot.slane %v7264, %v7285
    %v7288 = vunpack.c.l.s4 1966171168
    %v7289 = vunpack.c.0.s8 %v7288
    %v7290 = vlaneseq
    %v7291 = vshrl.u32 %v7290, 7
    %v7292 = vsub.s32 %v7289, %v7291
    %v7293 = vrot.slane %v7265, %v7292
    %v7294 = vcombine.high %v7272, %v7272
    %v7295 = vcombine.high %v7279, %v7279
    %v7296 = vcombine.high %v7286, %v7286
    %v7297 = vcombine.high %v7293, %v7293
    %7306 = vst [vmem:[#allocation29 + $0x4] sm:$0x1] %v7272
    %7307 = vst [vmem:[#allocation29 + $0xc] sm:$0x1] %v7286
    %7308 = vst [vmem:[#allocation29 + $0x14] sm:$0x1] %v7294
    %7309 = vst [vmem:[#allocation29 + $0x1c] sm:$0x1] %v7296
    %7310 = vst [vmem:[#allocation29 + $0x24] sm:$0x1] %v7279
    %7311 = vst [vmem:[#allocation29 + $0x2c] sm:$0x1] %v7293
    %7312 = vst [vmem:[#allocation29 + $0x34] sm:$0x1] %v7295
    %7313 = vst [vmem:[#allocation29 + $0x3c] sm:$0x1] %v7297
    %s7314 = scalar_lea.vmem [#allocation5], 40
    %v7315 = vld [vmem:[%s7314] sm:$0xff]
    %v7316 = vsel %vm357, %v7315, %v6996
    %v7317 = vpack.c.bf16 %v7316, %v7316
    %v7319 = vsel %vm384, %v7317, 0
    %7321 = vmatprep.subr.bf16.mxu0 0
    %7322 = vmatpush1.bf16.msra.mxu0 %v376
    %7323 = vmatprep.subr.bf16.mxu0 0
    %7324 = vmatpush1.bf16.msra.mxu0 %v377
    %7325 = vmatprep.subr.bf16.mxu0 0
    %7326 = vmatpush1.bf16.msra.mxu0 %v378
    %7327 = vmatprep.subr.bf16.mxu0 0
    %7328 = vmatpush1.bf16.msra.mxu0 %v379
    %7329 = vmatprep.subr.bf16.mxu0 0
    %7330 = vmatpush1.bf16.msra.mxu0 0
    %7331 = vmatprep.subr.bf16.mxu0 0
    %7332 = vmatpush1.bf16.msra.mxu0 0
    %7333 = vmatprep.subr.bf16.mxu0 0
    %7334 = vmatpush1.bf16.msra.mxu0 0
    %7335 = vmatprep.subr.bf16.mxu0 0
    %7336 = vmatpush1.bf16.msra.mxu0 0
    %7337 = vmatprep.subr.bf16.mxu0 0
    %7338 = vmatpush1.bf16.msra.mxu0 0
    %7339 = vmatprep.subr.bf16.mxu0 0
    %7340 = vmatpush1.bf16.msra.mxu0 0
    %7341 = vmatprep.subr.bf16.mxu0 0
    %7342 = vmatpush1.bf16.msra.mxu0 0
    %7343 = vmatprep.subr.bf16.mxu0 0
    %7344 = vmatpush1.bf16.msra.mxu0 0
    %7345 = vmatprep.subr.bf16.mxu0 0
    %7346 = vmatpush1.bf16.msra.mxu0 0
    %7347 = vmatprep.subr.bf16.mxu0 0
    %7348 = vmatpush1.bf16.msra.mxu0 0
    %7349 = vmatprep.subr.bf16.mxu0 0
    %7350 = vmatpush1.bf16.msra.mxu0 0
    %7351 = vmatprep.subr.bf16.mxu0 0
    %7352 = vmatpush1.bf16.msra.mxu0 0
    %7353 = vmatprep.mubr.bf16.mxu0 0
    %7354 = vmatmul.mubr.bf16.gmra.mrb[0].mxu0 %v7319
    %v7355 = vpop.f32.mrb[0].mxu0
    %v7356 = vadd.f32 %v297, %v7355
    %v7357 = vpop.f32.mrb[0].mxu0
    %v7358 = vpop.f32.mrb[0].mxu0
    %v7359 = vpop.f32.mrb[0].mxu0
    %7360 = vdwg.mxu0
    %7361 = vmatprep.subr.bf16.mxu0 0
    %7362 = vmatpush1.bf16.msra.mxu0 %v437
    %7363 = vmatprep.subr.bf16.mxu0 0
    %7364 = vmatpush1.bf16.msra.mxu0 %v438
    %7365 = vmatprep.subr.bf16.mxu0 0
    %7366 = vmatpush1.bf16.msra.mxu0 0
    %7367 = vmatprep.subr.bf16.mxu0 0
    %7368 = vmatpush1.bf16.msra.mxu0 0
    %7369 = vmatprep.subr.bf16.mxu0 0
    %7370 = vmatpush1.bf16.msra.mxu0 0
    %7371 = vmatprep.subr.bf16.mxu0 0
    %7372 = vmatpush1.bf16.msra.mxu0 0
    %7373 = vmatprep.subr.bf16.mxu0 0
    %7374 = vmatpush1.bf16.msra.mxu0 0
    %7375 = vmatprep.subr.bf16.mxu0 0
    %7376 = vmatpush1.bf16.msra.mxu0 0
    %7377 = vmatprep.subr.bf16.mxu0 0
    %7378 = vmatpush1.bf16.msra.mxu0 0
    %7379 = vmatprep.subr.bf16.mxu0 0
    %7380 = vmatpush1.bf16.msra.mxu0 0
    %7381 = vmatprep.subr.bf16.mxu0 0
    %7382 = vmatpush1.bf16.msra.mxu0 0
    %7383 = vmatprep.subr.bf16.mxu0 0
    %7384 = vmatpush1.bf16.msra.mxu0 0
    %7385 = vmatprep.subr.bf16.mxu0 0
    %7386 = vmatpush1.bf16.msra.mxu0 0
    %7387 = vmatprep.subr.bf16.mxu0 0
    %7388 = vmatpush1.bf16.msra.mxu0 0
    %7389 = vmatprep.subr.bf16.mxu0 0
    %7390 = vmatpush1.bf16.msra.mxu0 0
    %7391 = vmatprep.subr.bf16.mxu0 0
    %7392 = vmatpush1.bf16.msra.mxu0 0
    %7393 = vmatprep.mubr.bf16.mxu0 0
    %7394 = vmatmul.mubr.bf16.gmra.mrb[0].mxu0 %v6088
    %v7395 = vpop.f32.mrb[0].mxu0
    %v7396 = vadd.f32 %v304, %v7395
    %v7397 = vpop.f32.mrb[0].mxu0
    %v7398 = vpop.f32.mrb[0].mxu0
    %v7399 = vpop.f32.mrb[0].mxu0
    %7400 = vdwg.mxu0
    %v7401 = vadd.f32 %v7356, %v7396
    %v7402 = vxor.u32 %v7401, 2147483648
    %v7403 = vmul.f32 %v7402, 1.442695
    %v7404 = vpow.pop %v7403
    %v7405 = vadd.f32 %v7404, 1.0
    %v7406 = vrcp.pop %v7405
    %v7407 = vmul.f32 1.0, %v7406
    %7409 = vrot.lane.b32.xlu0 %v7396, 64
    %v7410 = vpop.permute.xlu0 %7409
    %v7412 = vmul.f32 %v7407, %v7410
    %7414 = vrot.lane.b32.xlu0 %v7412, 64
    %v7415 = vpop.permute.xlu0 %7414
    %v7417 = vadd.f32 %v7356, %v7415
    %v7418 = vtanh.pop %v7417
    %v7419 = vsub.f32 1.0, %v7407
    %7421 = vrot.lane.b32.xlu0 %v7418, 96
    %v7422 = vpop.permute.xlu0 %7421
    %v7424 = vmul.f32 %v7419, %v7422
    %v7425 = vmul.f32 %v7407, %v6082
    %v7426 = vadd.f32 %v7424, %v7425
    %v7427 = vpack.c.bf16 %v7426, %v7426
    %7429 = vrot.lane.b32.xlu0 %v7427, 96
    %v7430 = vpop.permute.xlu0 %7429
    %v7432 = vsel %vm357, %v7430, 0
    %7434 = vmatprep.subr.bf16.mxu0 0
    %7435 = vmatpush1.bf16.msra.mxu0 %v526
    %7436 = vmatprep.subr.bf16.mxu0 0
    %7437 = vmatpush1.bf16.msra.mxu0 %v527
    %7438 = vmatprep.subr.bf16.mxu0 0
    %7439 = vmatpush1.bf16.msra.mxu0 0
    %7440 = vmatprep.subr.bf16.mxu0 0
    %7441 = vmatpush1.bf16.msra.mxu0 0
    %7442 = vmatprep.subr.bf16.mxu0 0
    %7443 = vmatpush1.bf16.msra.mxu0 0
    %7444 = vmatprep.subr.bf16.mxu0 0
    %7445 = vmatpush1.bf16.msra.mxu0 0
    %7446 = vmatprep.subr.bf16.mxu0 0
    %7447 = vmatpush1.bf16.msra.mxu0 0
    %7448 = vmatprep.subr.bf16.mxu0 0
    %7449 = vmatpush1.bf16.msra.mxu0 0
    %7450 = vmatprep.subr.bf16.mxu0 0
    %7451 = vmatpush1.bf16.msra.mxu0 0
    %7452 = vmatprep.subr.bf16.mxu0 0
    %7453 = vmatpush1.bf16.msra.mxu0 0
    %7454 = vmatprep.subr.bf16.mxu0 0
    %7455 = vmatpush1.bf16.msra.mxu0 0
    %7456 = vmatprep.subr.bf16.mxu0 0
    %7457 = vmatpush1.bf16.msra.mxu0 0
    %7458 = vmatprep.subr.bf16.mxu0 0
    %7459 = vmatpush1.bf16.msra.mxu0 0
    %7460 = vmatprep.subr.bf16.mxu0 0
    %7461 = vmatpush1.bf16.msra.mxu0 0
    %7462 = vmatprep.subr.bf16.mxu0 0
    %7463 = vmatpush1.bf16.msra.mxu0 0
    %7464 = vmatprep.subr.bf16.mxu0 0
    %7465 = vmatpush1.bf16.msra.mxu0 0
    %7466 = vmatprep.mubr.bf16.mxu0 0
    %7467 = vmatmul.mubr.bf16.gmra.mrb[0].mxu0 %v7432
    %v7468 = vpop.f32.mrb[0].mxu0
    %v7469 = vadd.f32 0.0, %v7468
    %v7470 = vpop.f32.mrb[0].mxu0
    %v7471 = vpop.f32.mrb[0].mxu0
    %v7472 = vpop.f32.mrb[0].mxu0
    %7473 = vdwg.mxu0
    %v7475 = vcombine.high %v7469, %v7469
    %v7477 = vunpack.c.l.s4 1966171168
    %v7478 = vunpack.c.0.s8 %v7477
    %v7479 = vlaneseq
    %v7480 = vshrl.u32 %v7479, 7
    %v7481 = vsub.s32 %v7478, %v7480
    %v7482 = vrot.slane %v7469, %v7481
    %v7484 = vunpack.c.l.s4 1966171168
    %v7485 = vunpack.c.0.s8 %v7484
    %v7486 = vlaneseq
    %v7487 = vshrl.u32 %v7486, 7
    %v7488 = vsub.s32 %v7485, %v7487
    %v7489 = vrot.slane %v7475, %v7488
    %v7490 = vcombine.high %v7482, %v7482
    %v7491 = vcombine.high %v7489, %v7489
    %v7493 = vunpack.c.l.s4 1966171168
    %v7494 = vunpack.c.0.s8 %v7493
    %v7495 = vlaneseq
    %v7496 = vshrl.u32 %v7495, 7
    %v7497 = vsub.s32 %v7494, %v7496
    %v7498 = vrot.slane %v7482, %v7497
    %v7500 = vunpack.c.l.s4 1966171168
    %v7501 = vunpack.c.0.s8 %v7500
    %v7502 = vlaneseq
    %v7503 = vshrl.u32 %v7502, 7
    %v7504 = vsub.s32 %v7501, %v7503
    %v7505 = vrot.slane %v7489, %v7504
    %v7507 = vunpack.c.l.s4 1966171168
    %v7508 = vunpack.c.0.s8 %v7507
    %v7509 = vlaneseq
    %v7510 = vshrl.u32 %v7509, 7
    %v7511 = vsub.s32 %v7508, %v7510
    %v7512 = vrot.slane %v7490, %v7511
    %v7514 = vunpack.c.l.s4 1966171168
    %v7515 = vunpack.c.0.s8 %v7514
    %v7516 = vlaneseq
    %v7517 = vshrl.u32 %v7516, 7
    %v7518 = vsub.s32 %v7515, %v7517
    %v7519 = vrot.slane %v7491, %v7518
    %v7520 = vcombine.high %v7498, %v7498
    %v7521 = vcombine.high %v7505, %v7505
    %v7522 = vcombine.high %v7512, %v7512
    %v7523 = vcombine.high %v7519, %v7519
    %v7524 = vlaneseq
    %v7525 = vshrl.u32 %v7524, 7
    %v7526 = vsub.s32 0, %v7525
    %v7527 = vrot.slane %v7498, %v7526
    %v7528 = vlaneseq
    %v7529 = vshrl.u32 %v7528, 7
    %v7530 = vsub.s32 0, %v7529
    %v7531 = vrot.slane %v7512, %v7530
    %v7532 = vlaneseq
    %v7533 = vshrl.u32 %v7532, 7
    %v7534 = vsub.s32 0, %v7533
    %v7535 = vrot.slane %v7520, %v7534
    %v7536 = vlaneseq
    %v7537 = vshrl.u32 %v7536, 7
    %v7538 = vsub.s32 0, %v7537
    %v7539 = vrot.slane %v7522, %v7538
    %v7540 = vlaneseq
    %v7541 = vshrl.u32 %v7540, 7
    %v7542 = vsub.s32 0, %v7541
    %v7543 = vrot.slane %v7505, %v7542
    %v7544 = vlaneseq
    %v7545 = vshrl.u32 %v7544, 7
    %v7546 = vsub.s32 0, %v7545
    %v7547 = vrot.slane %v7519, %v7546
    %v7548 = vlaneseq
    %v7549 = vshrl.u32 %v7548, 7
    %v7550 = vsub.s32 0, %v7549
    %v7551 = vrot.slane %v7521, %v7550
    %v7552 = vlaneseq
    %v7553 = vshrl.u32 %v7552, 7
    %v7554 = vsub.s32 0, %v7553
    %v7555 = vrot.slane %v7523, %v7554
    %v7564 = vadd.f32 %v264, %v7527
    %v7565 = vadd.f32 %v265, %v7531
    %v7566 = vadd.f32 %v266, %v7535
    %v7567 = vadd.f32 %v267, %v7539
    %v7568 = vadd.f32 %v268, %v7543
    %v7569 = vadd.f32 %v269, %v7547
    %v7570 = vadd.f32 %v270, %v7551
    %v7571 = vadd.f32 %v271, %v7555
    %v7572 = vtanh.pop %v7564
    %v7573 = vtanh.pop %v7565
    %v7574 = vtanh.pop %v7566
    %v7575 = vtanh.pop %v7567
    %v7576 = vtanh.pop %v7568
    %v7577 = vtanh.pop %v7569
    %v7578 = vtanh.pop %v7570
    %v7579 = vtanh.pop %v7571
    %v7580 = vmul.f32 %v7572, %v278
    %v7581 = vmul.f32 %v7573, %v278
    %v7582 = vmul.f32 %v7574, %v278
    %v7583 = vmul.f32 %v7575, %v278
    %v7584 = vmul.f32 %v7576, %v278
    %v7585 = vmul.f32 %v7577, %v278
    %v7586 = vmul.f32 %v7578, %v278
    %v7587 = vmul.f32 %v7579, %v278
    %v7588 = vsel %vm357, %v7580, 0.0
    %7589 = vadd.xlane.f32.xlu0 %v7588
    %v7590 = vpop.xlane.xlu0 %7589
    %v7591 = vsel %vm357, %v7581, 0.0
    %7592 = vadd.xlane.f32.xlu0 %v7591
    %v7593 = vpop.xlane.xlu0 %7592
    %v7594 = vsel %vm357, %v7582, 0.0
    %7595 = vadd.xlane.f32.xlu0 %v7594
    %v7596 = vpop.xlane.xlu0 %7595
    %v7597 = vsel %vm357, %v7583, 0.0
    %7598 = vadd.xlane.f32.xlu0 %v7597
    %v7599 = vpop.xlane.xlu0 %7598
    %v7600 = vsel %vm357, %v7584, 0.0
    %7601 = vadd.xlane.f32.xlu0 %v7600
    %v7602 = vpop.xlane.xlu0 %7601
    %v7603 = vsel %vm357, %v7585, 0.0
    %7604 = vadd.xlane.f32.xlu0 %v7603
    %v7605 = vpop.xlane.xlu0 %7604
    %v7606 = vsel %vm357, %v7586, 0.0
    %7607 = vadd.xlane.f32.xlu0 %v7606
    %v7608 = vpop.xlane.xlu0 %7607
    %v7609 = vsel %vm357, %v7587, 0.0
    %7610 = vadd.xlane.f32.xlu0 %v7609
    %v7611 = vpop.xlane.xlu0 %7610
    %v7612 = vadd.f32 %v7590, %v718
    %v7613 = vadd.f32 %v7593, %v725
    %v7614 = vadd.f32 %v7596, %v732
    %v7615 = vadd.f32 %v7599, %v739
    %v7616 = vadd.f32 %v7602, %v746
    %v7617 = vadd.f32 %v7605, %v753
    %v7618 = vadd.f32 %v7608, %v760
    %v7619 = vadd.f32 %v7611, %v767
    %7628 = vset.pattern.permute.xlu0 0
    %7629 = vperm.xlu0 %7628, %v7612
    %v7630 = vpop.permute.xlu0 %7629
    %7631 = vset.pattern.permute.xlu0 0
    %7632 = vperm.xlu0 %7631, %v7613
    %v7633 = vpop.permute.xlu0 %7632
    %7634 = vset.pattern.permute.xlu0 0
    %7635 = vperm.xlu0 %7634, %v7614
    %v7636 = vpop.permute.xlu0 %7635
    %7637 = vset.pattern.permute.xlu0 0
    %7638 = vperm.xlu0 %7637, %v7615
    %v7639 = vpop.permute.xlu0 %7638
    %7640 = vset.pattern.permute.xlu0 0
    %7641 = vperm.xlu0 %7640, %v7616
    %v7642 = vpop.permute.xlu0 %7641
    %7643 = vset.pattern.permute.xlu0 0
    %7644 = vperm.xlu0 %7643, %v7617
    %v7645 = vpop.permute.xlu0 %7644
    %7646 = vset.pattern.permute.xlu0 0
    %7647 = vperm.xlu0 %7646, %v7618
    %v7648 = vpop.permute.xlu0 %7647
    %7649 = vset.pattern.permute.xlu0 0
    %7650 = vperm.xlu0 %7649, %v7619
    %v7651 = vpop.permute.xlu0 %7650
    %v7652 = vlaneseq
    %v7653 = vshrl.u32 %v7652, 7
    %v7654 = vsub.s32 %v817, %v7653
    %v7655 = vrot.slane %v7630, %v7654
    %v7656 = vlaneseq
    %v7657 = vshrl.u32 %v7656, 7
    %v7658 = vsub.s32 %v817, %v7657
    %v7659 = vrot.slane %v7633, %v7658
    %v7660 = vlaneseq
    %v7661 = vshrl.u32 %v7660, 7
    %v7662 = vsub.s32 %v817, %v7661
    %v7663 = vrot.slane %v7636, %v7662
    %v7664 = vlaneseq
    %v7665 = vshrl.u32 %v7664, 7
    %v7666 = vsub.s32 %v817, %v7665
    %v7667 = vrot.slane %v7639, %v7666
    %v7668 = vlaneseq
    %v7669 = vshrl.u32 %v7668, 7
    %v7670 = vsub.s32 %v817, %v7669
    %v7671 = vrot.slane %v7642, %v7670
    %v7672 = vlaneseq
    %v7673 = vshrl.u32 %v7672, 7
    %v7674 = vsub.s32 %v817, %v7673
    %v7675 = vrot.slane %v7645, %v7674
    %v7676 = vlaneseq
    %v7677 = vshrl.u32 %v7676, 7
    %v7678 = vsub.s32 %v817, %v7677
    %v7679 = vrot.slane %v7648, %v7678
    %v7680 = vlaneseq
    %v7681 = vshrl.u32 %v7680, 7
    %v7682 = vsub.s32 %v817, %v7681
    %v7683 = vrot.slane %v7651, %v7682
    %v7684 = vsel %vm850, %v7659, %v7655
    %v7685 = vsel %vm852, %v7663, %v7684
    %v7686 = vsel %vm854, %v7667, %v7685
    %v7687 = vsel %vm856, %v7671, %v7686
    %v7688 = vsel %vm858, %v7675, %v7687
    %v7689 = vsel %vm860, %v7679, %v7688
    %v7690 = vsel %vm862, %v7683, %v7689
    %v7692 = vsel %vm865, %v7690, -inf
    %7693 = vmax.xlane.f32.xlu0 %v7692
    %v7694 = vpop.xlane.xlu0 %7693
    %v7696 = vlaneseq
    %v7697 = vshrl.u32 %v7696, 7
    %v7698 = vsub.s32 0, %v7697
    %v7699 = vrot.slane %v7694, %v7698
    %v7700 = vlaneseq
    %v7701 = vshrl.u32 %v7700, 7
    %v7702 = vsub.s32 1, %v7701
    %v7703 = vrot.slane %v7694, %v7702
    %v7704 = vlaneseq
    %v7705 = vshrl.u32 %v7704, 7
    %v7706 = vsub.s32 2, %v7705
    %v7707 = vrot.slane %v7694, %v7706
    %v7708 = vlaneseq
    %v7709 = vshrl.u32 %v7708, 7
    %v7710 = vsub.s32 3, %v7709
    %v7711 = vrot.slane %v7694, %v7710
    %v7712 = vlaneseq
    %v7713 = vshrl.u32 %v7712, 7
    %v7714 = vsub.s32 4, %v7713
    %v7715 = vrot.slane %v7694, %v7714
    %v7716 = vlaneseq
    %v7717 = vshrl.u32 %v7716, 7
    %v7718 = vsub.s32 5, %v7717
    %v7719 = vrot.slane %v7694, %v7718
    %v7720 = vlaneseq
    %v7721 = vshrl.u32 %v7720, 7
    %v7722 = vsub.s32 6, %v7721
    %v7723 = vrot.slane %v7694, %v7722
    %v7724 = vlaneseq
    %v7725 = vshrl.u32 %v7724, 7
    %v7726 = vsub.s32 7, %v7725
    %v7727 = vrot.slane %v7694, %v7726
    %v7736 = vsub.f32 %v7612, %v7699
    %v7737 = vsub.f32 %v7613, %v7703
    %v7738 = vsub.f32 %v7614, %v7707
    %v7739 = vsub.f32 %v7615, %v7711
    %v7740 = vsub.f32 %v7616, %v7715
    %v7741 = vsub.f32 %v7617, %v7719
    %v7742 = vsub.f32 %v7618, %v7723
    %v7743 = vsub.f32 %v7619, %v7727
    %v7744 = vmul.f32 %v7736, 1.442695
    %v7745 = vpow.pop %v7744
    %v7746 = vmul.f32 %v7737, 1.442695
    %v7747 = vpow.pop %v7746
    %v7748 = vmul.f32 %v7738, 1.442695
    %v7749 = vpow.pop %v7748
    %v7750 = vmul.f32 %v7739, 1.442695
    %v7751 = vpow.pop %v7750
    %v7752 = vmul.f32 %v7740, 1.442695
    %v7753 = vpow.pop %v7752
    %v7754 = vmul.f32 %v7741, 1.442695
    %v7755 = vpow.pop %v7754
    %v7756 = vmul.f32 %v7742, 1.442695
    %v7757 = vpow.pop %v7756
    %v7758 = vmul.f32 %v7743, 1.442695
    %v7759 = vpow.pop %v7758
    %7768 = vset.pattern.permute.xlu0 0
    %7769 = vperm.xlu0 %7768, %v7745
    %v7770 = vpop.permute.xlu0 %7769
    %7771 = vset.pattern.permute.xlu0 0
    %7772 = vperm.xlu0 %7771, %v7747
    %v7773 = vpop.permute.xlu0 %7772
    %7774 = vset.pattern.permute.xlu0 0
    %7775 = vperm.xlu0 %7774, %v7749
    %v7776 = vpop.permute.xlu0 %7775
    %7777 = vset.pattern.permute.xlu0 0
    %7778 = vperm.xlu0 %7777, %v7751
    %v7779 = vpop.permute.xlu0 %7778
    %7780 = vset.pattern.permute.xlu0 0
    %7781 = vperm.xlu0 %7780, %v7753
    %v7782 = vpop.permute.xlu0 %7781
    %7783 = vset.pattern.permute.xlu0 0
    %7784 = vperm.xlu0 %7783, %v7755
    %v7785 = vpop.permute.xlu0 %7784
    %7786 = vset.pattern.permute.xlu0 0
    %7787 = vperm.xlu0 %7786, %v7757
    %v7788 = vpop.permute.xlu0 %7787
    %7789 = vset.pattern.permute.xlu0 0
    %7790 = vperm.xlu0 %7789, %v7759
    %v7791 = vpop.permute.xlu0 %7790
    %v7792 = vlaneseq
    %v7793 = vshrl.u32 %v7792, 7
    %v7794 = vsub.s32 %v817, %v7793
    %v7795 = vrot.slane %v7770, %v7794
    %v7796 = vlaneseq
    %v7797 = vshrl.u32 %v7796, 7
    %v7798 = vsub.s32 %v817, %v7797
    %v7799 = vrot.slane %v7773, %v7798
    %v7800 = vlaneseq
    %v7801 = vshrl.u32 %v7800, 7
    %v7802 = vsub.s32 %v817, %v7801
    %v7803 = vrot.slane %v7776, %v7802
    %v7804 = vlaneseq
    %v7805 = vshrl.u32 %v7804, 7
    %v7806 = vsub.s32 %v817, %v7805
    %v7807 = vrot.slane %v7779, %v7806
    %v7808 = vlaneseq
    %v7809 = vshrl.u32 %v7808, 7
    %v7810 = vsub.s32 %v817, %v7809
    %v7811 = vrot.slane %v7782, %v7810
    %v7812 = vlaneseq
    %v7813 = vshrl.u32 %v7812, 7
    %v7814 = vsub.s32 %v817, %v7813
    %v7815 = vrot.slane %v7785, %v7814
    %v7816 = vlaneseq
    %v7817 = vshrl.u32 %v7816, 7
    %v7818 = vsub.s32 %v817, %v7817
    %v7819 = vrot.slane %v7788, %v7818
    %v7820 = vlaneseq
    %v7821 = vshrl.u32 %v7820, 7
    %v7822 = vsub.s32 %v817, %v7821
    %v7823 = vrot.slane %v7791, %v7822
    %v7824 = vsel %vm850, %v7799, %v7795
    %v7825 = vsel %vm852, %v7803, %v7824
    %v7826 = vsel %vm854, %v7807, %v7825
    %v7827 = vsel %vm856, %v7811, %v7826
    %v7828 = vsel %vm858, %v7815, %v7827
    %v7829 = vsel %vm860, %v7819, %v7828
    %v7830 = vsel %vm862, %v7823, %v7829
    %v7832 = vsel %vm865, %v7830, 0.0
    %7833 = vadd.xlane.f32.xlu0 %v7832
    %v7834 = vpop.xlane.xlu0 %7833
    %v7835 = vrcp.pop %v7834
    %v7837 = vlaneseq
    %v7838 = vshrl.u32 %v7837, 7
    %v7839 = vsub.s32 0, %v7838
    %v7840 = vrot.slane %v7835, %v7839
    %v7841 = vlaneseq
    %v7842 = vshrl.u32 %v7841, 7
    %v7843 = vsub.s32 1, %v7842
    %v7844 = vrot.slane %v7835, %v7843
    %v7845 = vlaneseq
    %v7846 = vshrl.u32 %v7845, 7
    %v7847 = vsub.s32 2, %v7846
    %v7848 = vrot.slane %v7835, %v7847
    %v7849 = vlaneseq
    %v7850 = vshrl.u32 %v7849, 7
    %v7851 = vsub.s32 3, %v7850
    %v7852 = vrot.slane %v7835, %v7851
    %v7853 = vlaneseq
    %v7854 = vshrl.u32 %v7853, 7
    %v7855 = vsub.s32 4, %v7854
    %v7856 = vrot.slane %v7835, %v7855
    %v7857 = vlaneseq
    %v7858 = vshrl.u32 %v7857, 7
    %v7859 = vsub.s32 5, %v7858
    %v7860 = vrot.slane %v7835, %v7859
    %v7861 = vlaneseq
    %v7862 = vshrl.u32 %v7861, 7
    %v7863 = vsub.s32 6, %v7862
    %v7864 = vrot.slane %v7835, %v7863
    %v7865 = vlaneseq
    %v7866 = vshrl.u32 %v7865, 7
    %v7867 = vsub.s32 7, %v7866
    %v7868 = vrot.slane %v7835, %v7867
    %v7877 = vmul.f32 %v7745, %v7840
    %v7878 = vmul.f32 %v7747, %v7844
    %v7879 = vmul.f32 %v7749, %v7848
    %v7880 = vmul.f32 %v7751, %v7852
    %v7881 = vmul.f32 %v7753, %v7856
    %v7882 = vmul.f32 %v7755, %v7860
    %v7883 = vmul.f32 %v7757, %v7864
    %v7884 = vmul.f32 %v7759, %v7868
    %v7885 = vpack.c.bf16 %v7877, %v7877
    %v7886 = vpack.c.bf16 %v7878, %v7878
    %v7887 = vpack.c.bf16 %v7879, %v7879
    %v7888 = vpack.c.bf16 %v7880, %v7880
    %v7889 = vpack.c.bf16 %v7881, %v7881
    %v7890 = vpack.c.bf16 %v7882, %v7882
    %v7891 = vpack.c.bf16 %v7883, %v7883
    %v7892 = vpack.c.bf16 %v7884, %v7884
    %v7894 = vunpack.c.l.b16 %v7885
    %7895 = vset.pattern.permute.xlu0 0
    %7896 = vperm.xlu0 %7895, %v7894
    %v7897 = vpop.permute.xlu0 %7896
    %v7898 = vlaneseq
    %v7899 = vshrl.u32 %v7898, 7
    %v7900 = vsub.s32 %v817, %v7899
    %v7901 = vrot.slane %v7897, %v7900
    %v7902 = vpack.c.b16 %v7901, %v7901
    %v7904 = vsel %vm865, %v7902, 0
    %7906 = vmatprep.subr.bf16.mxu0 0
    %7907 = vmatpush1.bf16.msra.mxu0 %v1082
    %7908 = vmatprep.subr.bf16.mxu0 0
    %7909 = vmatpush1.bf16.msra.mxu0 0
    %7910 = vmatprep.subr.bf16.mxu0 0
    %7911 = vmatpush1.bf16.msra.mxu0 0
    %7912 = vmatprep.subr.bf16.mxu0 0
    %7913 = vmatpush1.bf16.msra.mxu0 0
    %7914 = vmatprep.subr.bf16.mxu0 0
    %7915 = vmatpush1.bf16.msra.mxu0 0
    %7916 = vmatprep.subr.bf16.mxu0 0
    %7917 = vmatpush1.bf16.msra.mxu0 0
    %7918 = vmatprep.subr.bf16.mxu0 0
    %7919 = vmatpush1.bf16.msra.mxu0 0
    %7920 = vmatprep.subr.bf16.mxu0 0
    %7921 = vmatpush1.bf16.msra.mxu0 0
    %7922 = vmatprep.subr.bf16.mxu0 0
    %7923 = vmatpush1.bf16.msra.mxu0 0
    %7924 = vmatprep.subr.bf16.mxu0 0
    %7925 = vmatpush1.bf16.msra.mxu0 0
    %7926 = vmatprep.subr.bf16.mxu0 0
    %7927 = vmatpush1.bf16.msra.mxu0 0
    %7928 = vmatprep.subr.bf16.mxu0 0
    %7929 = vmatpush1.bf16.msra.mxu0 0
    %7930 = vmatprep.subr.bf16.mxu0 0
    %7931 = vmatpush1.bf16.msra.mxu0 0
    %7932 = vmatprep.subr.bf16.mxu0 0
    %7933 = vmatpush1.bf16.msra.mxu0 0
    %7934 = vmatprep.subr.bf16.mxu0 0
    %7935 = vmatpush1.bf16.msra.mxu0 0
    %7936 = vmatprep.subr.bf16.mxu0 0
    %7937 = vmatpush1.bf16.msra.mxu0 0
    %7938 = vmatprep.mubr.bf16.mxu0 0
    %7939 = vmatmul.mubr.bf16.gmra.mrb[0].mxu0 %v7904
    %v7940 = vpop.f32.mrb[0].mxu0
    %v7941 = vadd.f32 0.0, %v7940
    %v7942 = vpop.f32.mrb[0].mxu0
    %v7943 = vpop.f32.mrb[0].mxu0
    %v7944 = vpop.f32.mrb[0].mxu0
    %7945 = vdwg.mxu0
    %v7947 = vunpack.c.l.b16 %v7886
    %7948 = vset.pattern.permute.xlu0 0
    %7949 = vperm.xlu0 %7948, %v7947
    %v7950 = vpop.permute.xlu0 %7949
    %v7951 = vlaneseq
    %v7952 = vshrl.u32 %v7951, 7
    %v7953 = vsub.s32 %v817, %v7952
    %v7954 = vrot.slane %v7950, %v7953
    %v7955 = vpack.c.b16 %v7954, %v7954
    %v7957 = vsel %vm865, %v7955, 0
    %7959 = vmatprep.subr.bf16.mxu0 0
    %7960 = vmatpush1.bf16.msra.mxu0 %v1138
    %7961 = vmatprep.subr.bf16.mxu0 0
    %7962 = vmatpush1.bf16.msra.mxu0 0
    %7963 = vmatprep.subr.bf16.mxu0 0
    %7964 = vmatpush1.bf16.msra.mxu0 0
    %7965 = vmatprep.subr.bf16.mxu0 0
    %7966 = vmatpush1.bf16.msra.mxu0 0
    %7967 = vmatprep.subr.bf16.mxu0 0
    %7968 = vmatpush1.bf16.msra.mxu0 0
    %7969 = vmatprep.subr.bf16.mxu0 0
    %7970 = vmatpush1.bf16.msra.mxu0 0
    %7971 = vmatprep.subr.bf16.mxu0 0
    %7972 = vmatpush1.bf16.msra.mxu0 0
    %7973 = vmatprep.subr.bf16.mxu0 0
    %7974 = vmatpush1.bf16.msra.mxu0 0
    %7975 = vmatprep.subr.bf16.mxu0 0
    %7976 = vmatpush1.bf16.msra.mxu0 0
    %7977 = vmatprep.subr.bf16.mxu0 0
    %7978 = vmatpush1.bf16.msra.mxu0 0
    %7979 = vmatprep.subr.bf16.mxu0 0
    %7980 = vmatpush1.bf16.msra.mxu0 0
    %7981 = vmatprep.subr.bf16.mxu0 0
    %7982 = vmatpush1.bf16.msra.mxu0 0
    %7983 = vmatprep.subr.bf16.mxu0 0
    %7984 = vmatpush1.bf16.msra.mxu0 0
    %7985 = vmatprep.subr.bf16.mxu0 0
    %7986 = vmatpush1.bf16.msra.mxu0 0
    %7987 = vmatprep.subr.bf16.mxu0 0
    %7988 = vmatpush1.bf16.msra.mxu0 0
    %7989 = vmatprep.subr.bf16.mxu0 0
    %7990 = vmatpush1.bf16.msra.mxu0 0
    %7991 = vmatprep.mubr.bf16.mxu0 0
    %7992 = vmatmul.mubr.bf16.gmra.mrb[0].mxu0 %v7957
    %v7993 = vpop.f32.mrb[0].mxu0
    %v7994 = vadd.f32 0.0, %v7993
    %v7995 = vpop.f32.mrb[0].mxu0
    %v7996 = vpop.f32.mrb[0].mxu0
    %v7997 = vpop.f32.mrb[0].mxu0
    %7998 = vdwg.mxu0
    %v8000 = vunpack.c.l.b16 %v7887
    %8001 = vset.pattern.permute.xlu0 0
    %8002 = vperm.xlu0 %8001, %v8000
    %v8003 = vpop.permute.xlu0 %8002
    %v8004 = vlaneseq
    %v8005 = vshrl.u32 %v8004, 7
    %v8006 = vsub.s32 %v817, %v8005
    %v8007 = vrot.slane %v8003, %v8006
    %v8008 = vpack.c.b16 %v8007, %v8007
    %v8010 = vsel %vm865, %v8008, 0
    %8012 = vmatprep.subr.bf16.mxu0 0
    %8013 = vmatpush1.bf16.msra.mxu0 %v1194
    %8014 = vmatprep.subr.bf16.mxu0 0
    %8015 = vmatpush1.bf16.msra.mxu0 0
    %8016 = vmatprep.subr.bf16.mxu0 0
    %8017 = vmatpush1.bf16.msra.mxu0 0
    %8018 = vmatprep.subr.bf16.mxu0 0
    %8019 = vmatpush1.bf16.msra.mxu0 0
    %8020 = vmatprep.subr.bf16.mxu0 0
    %8021 = vmatpush1.bf16.msra.mxu0 0
    %8022 = vmatprep.subr.bf16.mxu0 0
    %8023 = vmatpush1.bf16.msra.mxu0 0
    %8024 = vmatprep.subr.bf16.mxu0 0
    %8025 = vmatpush1.bf16.msra.mxu0 0
    %8026 = vmatprep.subr.bf16.mxu0 0
    %8027 = vmatpush1.bf16.msra.mxu0 0
    %8028 = vmatprep.subr.bf16.mxu0 0
    %8029 = vmatpush1.bf16.msra.mxu0 0
    %8030 = vmatprep.subr.bf16.mxu0 0
    %8031 = vmatpush1.bf16.msra.mxu0 0
    %8032 = vmatprep.subr.bf16.mxu0 0
    %8033 = vmatpush1.bf16.msra.mxu0 0
    %8034 = vmatprep.subr.bf16.mxu0 0
    %8035 = vmatpush1.bf16.msra.mxu0 0
    %8036 = vmatprep.subr.bf16.mxu0 0
    %8037 = vmatpush1.bf16.msra.mxu0 0
    %8038 = vmatprep.subr.bf16.mxu0 0
    %8039 = vmatpush1.bf16.msra.mxu0 0
    %8040 = vmatprep.subr.bf16.mxu0 0
    %8041 = vmatpush1.bf16.msra.mxu0 0
    %8042 = vmatprep.subr.bf16.mxu0 0
    %8043 = vmatpush1.bf16.msra.mxu0 0
    %8044 = vmatprep.mubr.bf16.mxu0 0
    %8045 = vmatmul.mubr.bf16.gmra.mrb[0].mxu0 %v8010
    %v8046 = vpop.f32.mrb[0].mxu0
    %v8047 = vadd.f32 0.0, %v8046
    %v8048 = vpop.f32.mrb[0].mxu0
    %v8049 = vpop.f32.mrb[0].mxu0
    %v8050 = vpop.f32.mrb[0].mxu0
    %8051 = vdwg.mxu0
    %v8053 = vunpack.c.l.b16 %v7888
    %8054 = vset.pattern.permute.xlu0 0
    %8055 = vperm.xlu0 %8054, %v8053
    %v8056 = vpop.permute.xlu0 %8055
    %v8057 = vlaneseq
    %v8058 = vshrl.u32 %v8057, 7
    %v8059 = vsub.s32 %v817, %v8058
    %v8060 = vrot.slane %v8056, %v8059
    %v8061 = vpack.c.b16 %v8060, %v8060
    %v8063 = vsel %vm865, %v8061, 0
    %8065 = vmatprep.subr.bf16.mxu0 0
    %8066 = vmatpush1.bf16.msra.mxu0 %v1250
    %8067 = vmatprep.subr.bf16.mxu0 0
    %8068 = vmatpush1.bf16.msra.mxu0 0
    %8069 = vmatprep.subr.bf16.mxu0 0
    %8070 = vmatpush1.bf16.msra.mxu0 0
    %8071 = vmatprep.subr.bf16.mxu0 0
    %8072 = vmatpush1.bf16.msra.mxu0 0
    %8073 = vmatprep.subr.bf16.mxu0 0
    %8074 = vmatpush1.bf16.msra.mxu0 0
    %8075 = vmatprep.subr.bf16.mxu0 0
    %8076 = vmatpush1.bf16.msra.mxu0 0
    %8077 = vmatprep.subr.bf16.mxu0 0
    %8078 = vmatpush1.bf16.msra.mxu0 0
    %8079 = vmatprep.subr.bf16.mxu0 0
    %8080 = vmatpush1.bf16.msra.mxu0 0
    %8081 = vmatprep.subr.bf16.mxu0 0
    %8082 = vmatpush1.bf16.msra.mxu0 0
    %8083 = vmatprep.subr.bf16.mxu0 0
    %8084 = vmatpush1.bf16.msra.mxu0 0
    %8085 = vmatprep.subr.bf16.mxu0 0
    %8086 = vmatpush1.bf16.msra.mxu0 0
    %8087 = vmatprep.subr.bf16.mxu0 0
    %8088 = vmatpush1.bf16.msra.mxu0 0
    %8089 = vmatprep.subr.bf16.mxu0 0
    %8090 = vmatpush1.bf16.msra.mxu0 0
    %8091 = vmatprep.subr.bf16.mxu0 0
    %8092 = vmatpush1.bf16.msra.mxu0 0
    %8093 = vmatprep.subr.bf16.mxu0 0
    %8094 = vmatpush1.bf16.msra.mxu0 0
    %8095 = vmatprep.subr.bf16.mxu0 0
    %8096 = vmatpush1.bf16.msra.mxu0 0
    %8097 = vmatprep.mubr.bf16.mxu0 0
    %8098 = vmatmul.mubr.bf16.gmra.mrb[0].mxu0 %v8063
    %v8099 = vpop.f32.mrb[0].mxu0
    %v8100 = vadd.f32 0.0, %v8099
    %v8101 = vpop.f32.mrb[0].mxu0
    %v8102 = vpop.f32.mrb[0].mxu0
    %v8103 = vpop.f32.mrb[0].mxu0
    %8104 = vdwg.mxu0
    %v8106 = vunpack.c.l.b16 %v7889
    %8107 = vset.pattern.permute.xlu0 0
    %8108 = vperm.xlu0 %8107, %v8106
    %v8109 = vpop.permute.xlu0 %8108
    %v8110 = vlaneseq
    %v8111 = vshrl.u32 %v8110, 7
    %v8112 = vsub.s32 %v817, %v8111
    %v8113 = vrot.slane %v8109, %v8112
    %v8114 = vpack.c.b16 %v8113, %v8113
    %v8116 = vsel %vm865, %v8114, 0
    %8118 = vmatprep.subr.bf16.mxu0 0
    %8119 = vmatpush1.bf16.msra.mxu0 %v1306
    %8120 = vmatprep.subr.bf16.mxu0 0
    %8121 = vmatpush1.bf16.msra.mxu0 0
    %8122 = vmatprep.subr.bf16.mxu0 0
    %8123 = vmatpush1.bf16.msra.mxu0 0
    %8124 = vmatprep.subr.bf16.mxu0 0
    %8125 = vmatpush1.bf16.msra.mxu0 0
    %8126 = vmatprep.subr.bf16.mxu0 0
    %8127 = vmatpush1.bf16.msra.mxu0 0
    %8128 = vmatprep.subr.bf16.mxu0 0
    %8129 = vmatpush1.bf16.msra.mxu0 0
    %8130 = vmatprep.subr.bf16.mxu0 0
    %8131 = vmatpush1.bf16.msra.mxu0 0
    %8132 = vmatprep.subr.bf16.mxu0 0
    %8133 = vmatpush1.bf16.msra.mxu0 0
    %8134 = vmatprep.subr.bf16.mxu0 0
    %8135 = vmatpush1.bf16.msra.mxu0 0
    %8136 = vmatprep.subr.bf16.mxu0 0
    %8137 = vmatpush1.bf16.msra.mxu0 0
    %8138 = vmatprep.subr.bf16.mxu0 0
    %8139 = vmatpush1.bf16.msra.mxu0 0
    %8140 = vmatprep.subr.bf16.mxu0 0
    %8141 = vmatpush1.bf16.msra.mxu0 0
    %8142 = vmatprep.subr.bf16.mxu0 0
    %8143 = vmatpush1.bf16.msra.mxu0 0
    %8144 = vmatprep.subr.bf16.mxu0 0
    %8145 = vmatpush1.bf16.msra.mxu0 0
    %8146 = vmatprep.subr.bf16.mxu0 0
    %8147 = vmatpush1.bf16.msra.mxu0 0
    %8148 = vmatprep.subr.bf16.mxu0 0
    %8149 = vmatpush1.bf16.msra.mxu0 0
    %8150 = vmatprep.mubr.bf16.mxu0 0
    %8151 = vmatmul.mubr.bf16.gmra.mrb[0].mxu0 %v8116
    %v8152 = vpop.f32.mrb[0].mxu0
    %v8153 = vadd.f32 0.0, %v8152
    %v8154 = vpop.f32.mrb[0].mxu0
    %v8155 = vpop.f32.mrb[0].mxu0
    %v8156 = vpop.f32.mrb[0].mxu0
    %8157 = vdwg.mxu0
    %v8159 = vunpack.c.l.b16 %v7890
    %8160 = vset.pattern.permute.xlu0 0
    %8161 = vperm.xlu0 %8160, %v8159
    %v8162 = vpop.permute.xlu0 %8161
    %v8163 = vlaneseq
    %v8164 = vshrl.u32 %v8163, 7
    %v8165 = vsub.s32 %v817, %v8164
    %v8166 = vrot.slane %v8162, %v8165
    %v8167 = vpack.c.b16 %v8166, %v8166
    %v8169 = vsel %vm865, %v8167, 0
    %8171 = vmatprep.subr.bf16.mxu0 0
    %8172 = vmatpush1.bf16.msra.mxu0 %v1362
    %8173 = vmatprep.subr.bf16.mxu0 0
    %8174 = vmatpush1.bf16.msra.mxu0 0
    %8175 = vmatprep.subr.bf16.mxu0 0
    %8176 = vmatpush1.bf16.msra.mxu0 0
    %8177 = vmatprep.subr.bf16.mxu0 0
    %8178 = vmatpush1.bf16.msra.mxu0 0
    %8179 = vmatprep.subr.bf16.mxu0 0
    %8180 = vmatpush1.bf16.msra.mxu0 0
    %8181 = vmatprep.subr.bf16.mxu0 0
    %8182 = vmatpush1.bf16.msra.mxu0 0
    %8183 = vmatprep.subr.bf16.mxu0 0
    %8184 = vmatpush1.bf16.msra.mxu0 0
    %8185 = vmatprep.subr.bf16.mxu0 0
    %8186 = vmatpush1.bf16.msra.mxu0 0
    %8187 = vmatprep.subr.bf16.mxu0 0
    %8188 = vmatpush1.bf16.msra.mxu0 0
    %8189 = vmatprep.subr.bf16.mxu0 0
    %8190 = vmatpush1.bf16.msra.mxu0 0
    %8191 = vmatprep.subr.bf16.mxu0 0
    %8192 = vmatpush1.bf16.msra.mxu0 0
    %8193 = vmatprep.subr.bf16.mxu0 0
    %8194 = vmatpush1.bf16.msra.mxu0 0
    %8195 = vmatprep.subr.bf16.mxu0 0
    %8196 = vmatpush1.bf16.msra.mxu0 0
    %8197 = vmatprep.subr.bf16.mxu0 0
    %8198 = vmatpush1.bf16.msra.mxu0 0
    %8199 = vmatprep.subr.bf16.mxu0 0
    %8200 = vmatpush1.bf16.msra.mxu0 0
    %8201 = vmatprep.subr.bf16.mxu0 0
    %8202 = vmatpush1.bf16.msra.mxu0 0
    %8203 = vmatprep.mubr.bf16.mxu0 0
    %8204 = vmatmul.mubr.bf16.gmra.mrb[0].mxu0 %v8169
    %v8205 = vpop.f32.mrb[0].mxu0
    %v8206 = vadd.f32 0.0, %v8205
    %v8207 = vpop.f32.mrb[0].mxu0
    %v8208 = vpop.f32.mrb[0].mxu0
    %v8209 = vpop.f32.mrb[0].mxu0
    %8210 = vdwg.mxu0
    %v8212 = vunpack.c.l.b16 %v7891
    %8213 = vset.pattern.permute.xlu0 0
    %8214 = vperm.xlu0 %8213, %v8212
    %v8215 = vpop.permute.xlu0 %8214
    %v8216 = vlaneseq
    %v8217 = vshrl.u32 %v8216, 7
    %v8218 = vsub.s32 %v817, %v8217
    %v8219 = vrot.slane %v8215, %v8218
    %v8220 = vpack.c.b16 %v8219, %v8219
    %v8222 = vsel %vm865, %v8220, 0
    %8224 = vmatprep.subr.bf16.mxu0 0
    %8225 = vmatpush1.bf16.msra.mxu0 %v1418
    %8226 = vmatprep.subr.bf16.mxu0 0
    %8227 = vmatpush1.bf16.msra.mxu0 0
    %8228 = vmatprep.subr.bf16.mxu0 0
    %8229 = vmatpush1.bf16.msra.mxu0 0
    %8230 = vmatprep.subr.bf16.mxu0 0
    %8231 = vmatpush1.bf16.msra.mxu0 0
    %8232 = vmatprep.subr.bf16.mxu0 0
    %8233 = vmatpush1.bf16.msra.mxu0 0
    %8234 = vmatprep.subr.bf16.mxu0 0
    %8235 = vmatpush1.bf16.msra.mxu0 0
    %8236 = vmatprep.subr.bf16.mxu0 0
    %8237 = vmatpush1.bf16.msra.mxu0 0
    %8238 = vmatprep.subr.bf16.mxu0 0
    %8239 = vmatpush1.bf16.msra.mxu0 0
    %8240 = vmatprep.subr.bf16.mxu0 0
    %8241 = vmatpush1.bf16.msra.mxu0 0
    %8242 = vmatprep.subr.bf16.mxu0 0
    %8243 = vmatpush1.bf16.msra.mxu0 0
    %8244 = vmatprep.subr.bf16.mxu0 0
    %8245 = vmatpush1.bf16.msra.mxu0 0
    %8246 = vmatprep.subr.bf16.mxu0 0
    %8247 = vmatpush1.bf16.msra.mxu0 0
    %8248 = vmatprep.subr.bf16.mxu0 0
    %8249 = vmatpush1.bf16.msra.mxu0 0
    %8250 = vmatprep.subr.bf16.mxu0 0
    %8251 = vmatpush1.bf16.msra.mxu0 0
    %8252 = vmatprep.subr.bf16.mxu0 0
    %8253 = vmatpush1.bf16.msra.mxu0 0
    %8254 = vmatprep.subr.bf16.mxu0 0
    %8255 = vmatpush1.bf16.msra.mxu0 0
    %8256 = vmatprep.mubr.bf16.mxu0 0
    %8257 = vmatmul.mubr.bf16.gmra.mrb[0].mxu0 %v8222
    %v8258 = vpop.f32.mrb[0].mxu0
    %v8259 = vadd.f32 0.0, %v8258
    %v8260 = vpop.f32.mrb[0].mxu0
    %v8261 = vpop.f32.mrb[0].mxu0
    %v8262 = vpop.f32.mrb[0].mxu0
    %8263 = vdwg.mxu0
    %v8265 = vunpack.c.l.b16 %v7892
    %8266 = vset.pattern.permute.xlu0 0
    %8267 = vperm.xlu0 %8266, %v8265
    %v8268 = vpop.permute.xlu0 %8267
    %v8269 = vlaneseq
    %v8270 = vshrl.u32 %v8269, 7
    %v8271 = vsub.s32 %v817, %v8270
    %v8272 = vrot.slane %v8268, %v8271
    %v8273 = vpack.c.b16 %v8272, %v8272
    %v8275 = vsel %vm865, %v8273, 0
    %8277 = vmatprep.subr.bf16.mxu0 0
    %8278 = vmatpush1.bf16.msra.mxu0 %v1474
    %8279 = vmatprep.subr.bf16.mxu0 0
    %8280 = vmatpush1.bf16.msra.mxu0 0
    %8281 = vmatprep.subr.bf16.mxu0 0
    %8282 = vmatpush1.bf16.msra.mxu0 0
    %8283 = vmatprep.subr.bf16.mxu0 0
    %8284 = vmatpush1.bf16.msra.mxu0 0
    %8285 = vmatprep.subr.bf16.mxu0 0
    %8286 = vmatpush1.bf16.msra.mxu0 0
    %8287 = vmatprep.subr.bf16.mxu0 0
    %8288 = vmatpush1.bf16.msra.mxu0 0
    %8289 = vmatprep.subr.bf16.mxu0 0
    %8290 = vmatpush1.bf16.msra.mxu0 0
    %8291 = vmatprep.subr.bf16.mxu0 0
    %8292 = vmatpush1.bf16.msra.mxu0 0
    %8293 = vmatprep.subr.bf16.mxu0 0
    %8294 = vmatpush1.bf16.msra.mxu0 0
    %8295 = vmatprep.subr.bf16.mxu0 0
    %8296 = vmatpush1.bf16.msra.mxu0 0
    %8297 = vmatprep.subr.bf16.mxu0 0
    %8298 = vmatpush1.bf16.msra.mxu0 0
    %8299 = vmatprep.subr.bf16.mxu0 0
    %8300 = vmatpush1.bf16.msra.mxu0 0
    %8301 = vmatprep.subr.bf16.mxu0 0
    %8302 = vmatpush1.bf16.msra.mxu0 0
    %8303 = vmatprep.subr.bf16.mxu0 0
    %8304 = vmatpush1.bf16.msra.mxu0 0
    %8305 = vmatprep.subr.bf16.mxu0 0
    %8306 = vmatpush1.bf16.msra.mxu0 0
    %8307 = vmatprep.subr.bf16.mxu0 0
    %8308 = vmatpush1.bf16.msra.mxu0 0
    %8309 = vmatprep.mubr.bf16.mxu0 0
    %8310 = vmatmul.mubr.bf16.gmra.mrb[0].mxu0 %v8275
    %v8311 = vpop.f32.mrb[0].mxu0
    %v8312 = vadd.f32 0.0, %v8311
    %v8313 = vpop.f32.mrb[0].mxu0
    %v8314 = vpop.f32.mrb[0].mxu0
    %v8315 = vpop.f32.mrb[0].mxu0
    %8316 = vdwg.mxu0
    %v8325 = vrot.slane %v7994, 7
    %v8326 = vsel %vm850, %v8325, %v7941
    %v8327 = vrot.slane %v8047, 6
    %v8328 = vsel %vm852, %v8327, %v8326
    %v8329 = vrot.slane %v8100, 5
    %v8330 = vsel %vm854, %v8329, %v8328
    %v8331 = vrot.slane %v8153, 4
    %v8332 = vsel %vm856, %v8331, %v8330
    %v8333 = vrot.slane %v8206, 3
    %v8334 = vsel %vm858, %v8333, %v8332
    %v8335 = vrot.slane %v8259, 2
    %v8336 = vsel %vm860, %v8335, %v8334
    %v8337 = vrot.slane %v8312, 1
    %v8338 = vsel %vm862, %v8337, %v8336
    %8339 = vrot.lane.b32.xlu0 %v8338, 32
    %v8340 = vpop.permute.xlu0 %8339
    %8343 = vrot.lane.b32.xlu0 %v7426, 32
    %v8344 = vpop.permute.xlu0 %8343
    %v8346 = vsel %vm357, %v7315, %v8340
    %v8347 = vsel %vm384, %v8346, %v8344
    %v8348 = vpack.c.bf16 %v8347, %v8347
    %v8350 = vsel %vm1584, %v8348, 0
    %8352 = vmatprep.subr.bf16.mxu0 0
    %8353 = vmatpush1.bf16.msra.mxu0 %v1572
    %8354 = vmatprep.subr.bf16.mxu0 0
    %8355 = vmatpush1.bf16.msra.mxu0 %v1573
    %8356 = vmatprep.subr.bf16.mxu0 0
    %8357 = vmatpush1.bf16.msra.mxu0 %v1574
    %8358 = vmatprep.subr.bf16.mxu0 0
    %8359 = vmatpush1.bf16.msra.mxu0 %v1575
    %8360 = vmatprep.subr.bf16.mxu0 0
    %8361 = vmatpush1.bf16.msra.mxu0 %v1576
    %8362 = vmatprep.subr.bf16.mxu0 0
    %8363 = vmatpush1.bf16.msra.mxu0 %v1577
    %8364 = vmatprep.subr.bf16.mxu0 0
    %8365 = vmatpush1.bf16.msra.mxu0 0
    %8366 = vmatprep.subr.bf16.mxu0 0
    %8367 = vmatpush1.bf16.msra.mxu0 0
    %8368 = vmatprep.subr.bf16.mxu0 0
    %8369 = vmatpush1.bf16.msra.mxu0 0
    %8370 = vmatprep.subr.bf16.mxu0 0
    %8371 = vmatpush1.bf16.msra.mxu0 0
    %8372 = vmatprep.subr.bf16.mxu0 0
    %8373 = vmatpush1.bf16.msra.mxu0 0
    %8374 = vmatprep.subr.bf16.mxu0 0
    %8375 = vmatpush1.bf16.msra.mxu0 0
    %8376 = vmatprep.subr.bf16.mxu0 0
    %8377 = vmatpush1.bf16.msra.mxu0 0
    %8378 = vmatprep.subr.bf16.mxu0 0
    %8379 = vmatpush1.bf16.msra.mxu0 0
    %8380 = vmatprep.subr.bf16.mxu0 0
    %8381 = vmatpush1.bf16.msra.mxu0 0
    %8382 = vmatprep.subr.bf16.mxu0 0
    %8383 = vmatpush1.bf16.msra.mxu0 0
    %8384 = vmatprep.mubr.bf16.mxu0 0
    %8385 = vmatmul.mubr.bf16.gmra.mrb[0].mxu0 %v8350
    %v8386 = vpop.f32.mrb[0].mxu0
    %v8387 = vadd.f32 %v327, %v8386
    %v8388 = vpop.f32.mrb[0].mxu0
    %v8389 = vpop.f32.mrb[0].mxu0
    %v8390 = vpop.f32.mrb[0].mxu0
    %8391 = vdwg.mxu0
    %v8392 = vxor.u32 %v8387, 2147483648
    %v8393 = vmul.f32 %v8392, 1.442695
    %v8394 = vpow.pop %v8393
    %v8395 = vadd.f32 %v8394, 1.0
    %v8396 = vrcp.pop %v8395
    %v8397 = vmul.f32 1.0, %v8396
    %8398 = vmatprep.subr.bf16.mxu0 0
    %8399 = vmatpush1.bf16.msra.mxu0 %v1658
    %8400 = vmatprep.subr.bf16.mxu0 0
    %8401 = vmatpush1.bf16.msra.mxu0 %v1659
    %8402 = vmatprep.subr.bf16.mxu0 0
    %8403 = vmatpush1.bf16.msra.mxu0 %v1660
    %8404 = vmatprep.subr.bf16.mxu0 0
    %8405 = vmatpush1.bf16.msra.mxu0 %v1661
    %8406 = vmatprep.subr.bf16.mxu0 0
    %8407 = vmatpush1.bf16.msra.mxu0 %v1662
    %8408 = vmatprep.subr.bf16.mxu0 0
    %8409 = vmatpush1.bf16.msra.mxu0 %v1663
    %8410 = vmatprep.subr.bf16.mxu0 0
    %8411 = vmatpush1.bf16.msra.mxu0 0
    %8412 = vmatprep.subr.bf16.mxu0 0
    %8413 = vmatpush1.bf16.msra.mxu0 0
    %8414 = vmatprep.subr.bf16.mxu0 0
    %8415 = vmatpush1.bf16.msra.mxu0 0
    %8416 = vmatprep.subr.bf16.mxu0 0
    %8417 = vmatpush1.bf16.msra.mxu0 0
    %8418 = vmatprep.subr.bf16.mxu0 0
    %8419 = vmatpush1.bf16.msra.mxu0 0
    %8420 = vmatprep.subr.bf16.mxu0 0
    %8421 = vmatpush1.bf16.msra.mxu0 0
    %8422 = vmatprep.subr.bf16.mxu0 0
    %8423 = vmatpush1.bf16.msra.mxu0 0
    %8424 = vmatprep.subr.bf16.mxu0 0
    %8425 = vmatpush1.bf16.msra.mxu0 0
    %8426 = vmatprep.subr.bf16.mxu0 0
    %8427 = vmatpush1.bf16.msra.mxu0 0
    %8428 = vmatprep.subr.bf16.mxu0 0
    %8429 = vmatpush1.bf16.msra.mxu0 0
    %8430 = vmatprep.mubr.bf16.mxu0 0
    %8431 = vmatmul.mubr.bf16.gmra.mrb[0].mxu0 %v8350
    %v8432 = vpop.f32.mrb[0].mxu0
    %v8433 = vadd.f32 %v346, %v8432
    %v8434 = vpop.f32.mrb[0].mxu0
    %v8435 = vpop.f32.mrb[0].mxu0
    %v8436 = vpop.f32.mrb[0].mxu0
    %8437 = vdwg.mxu0
    %8439 = vrot.lane.b32.xlu0 %v8433, 112
    %v8440 = vpop.permute.xlu0 %8439
    %v8442 = vmax.f32 %v8433, %v8440
    %v8443 = vpack.c.bf16 %v8442, %v8442
    %v8445 = vsel %vm1722, %v8443, 0
    %8447 = vmatprep.subr.bf16.mxu0 0
    %8448 = vmatpush1.bf16.msra.mxu0 %v1720
    %8449 = vmatprep.subr.bf16.mxu0 0
    %8450 = vmatpush1.bf16.msra.mxu0 0
    %8451 = vmatprep.subr.bf16.mxu0 0
    %8452 = vmatpush1.bf16.msra.mxu0 0
    %8453 = vmatprep.subr.bf16.mxu0 0
    %8454 = vmatpush1.bf16.msra.mxu0 0
    %8455 = vmatprep.subr.bf16.mxu0 0
    %8456 = vmatpush1.bf16.msra.mxu0 0
    %8457 = vmatprep.subr.bf16.mxu0 0
    %8458 = vmatpush1.bf16.msra.mxu0 0
    %8459 = vmatprep.subr.bf16.mxu0 0
    %8460 = vmatpush1.bf16.msra.mxu0 0
    %8461 = vmatprep.subr.bf16.mxu0 0
    %8462 = vmatpush1.bf16.msra.mxu0 0
    %8463 = vmatprep.subr.bf16.mxu0 0
    %8464 = vmatpush1.bf16.msra.mxu0 0
    %8465 = vmatprep.subr.bf16.mxu0 0
    %8466 = vmatpush1.bf16.msra.mxu0 0
    %8467 = vmatprep.subr.bf16.mxu0 0
    %8468 = vmatpush1.bf16.msra.mxu0 0
    %8469 = vmatprep.subr.bf16.mxu0 0
    %8470 = vmatpush1.bf16.msra.mxu0 0
    %8471 = vmatprep.subr.bf16.mxu0 0
    %8472 = vmatpush1.bf16.msra.mxu0 0
    %8473 = vmatprep.subr.bf16.mxu0 0
    %8474 = vmatpush1.bf16.msra.mxu0 0
    %8475 = vmatprep.subr.bf16.mxu0 0
    %8476 = vmatpush1.bf16.msra.mxu0 0
    %8477 = vmatprep.subr.bf16.mxu0 0
    %8478 = vmatpush1.bf16.msra.mxu0 0
    %8479 = vmatprep.mubr.bf16.mxu0 0
    %8480 = vmatmul.mubr.bf16.gmra.mrb[0].mxu0 %v8445
    %v8481 = vpop.f32.mrb[0].mxu0
    %v8482 = vadd.f32 0.0, %v8481
    %v8483 = vpop.f32.mrb[0].mxu0
    %v8484 = vpop.f32.mrb[0].mxu0
    %v8485 = vpop.f32.mrb[0].mxu0
    %8486 = vdwg.mxu0
    %v8487 = vsel %vm384, %v8482, -inf
    %8488 = vmax.xlane.f32.xlu0 %v8487
    %v8489 = vpop.xlane.xlu0 %8488
    %v8490 = vsub.f32 %v8482, %v8489
    %v8491 = vmul.f32 %v8490, 1.442695
    %v8492 = vpow.pop %v8491
    %v8493 = vsel %vm384, %v8492, 0.0
    %8494 = vadd.xlane.f32.xlu0 %v8493
    %v8495 = vpop.xlane.xlu0 %8494
    %v8496 = vrcp.pop %v8495
    %v8497 = vmul.f32 %v8492, %v8496
    %v8498 = vsub.f32 1.0, %v8397
    %8500 = vset.pattern.permute.xlu0 0
    %8501 = vperm.xlu0 %8500, %v8498
    %v8502 = vpop.permute.xlu0 %8501
    %v8504 = vmul.f32 %v8502, %v8497
    %8506 = vset.pattern.permute.xlu0 0
    %8507 = vperm.xlu0 %8506, %v8397
    %v8508 = vpop.permute.xlu0 %8507
    %8518 = vset.pattern.permute.xlu0 0
    %8519 = vperm.xlu0 %8518, %v7877
    %v8520 = vpop.permute.xlu0 %8519
    %8521 = vset.pattern.permute.xlu0 0
    %8522 = vperm.xlu0 %8521, %v7878
    %v8523 = vpop.permute.xlu0 %8522
    %8524 = vset.pattern.permute.xlu0 0
    %8525 = vperm.xlu0 %8524, %v7879
    %v8526 = vpop.permute.xlu0 %8525
    %8527 = vset.pattern.permute.xlu0 0
    %8528 = vperm.xlu0 %8527, %v7880
    %v8529 = vpop.permute.xlu0 %8528
    %8530 = vset.pattern.permute.xlu0 0
    %8531 = vperm.xlu0 %8530, %v7881
    %v8532 = vpop.permute.xlu0 %8531
    %8533 = vset.pattern.permute.xlu0 0
    %8534 = vperm.xlu0 %8533, %v7882
    %v8535 = vpop.permute.xlu0 %8534
    %8536 = vset.pattern.permute.xlu0 0
    %8537 = vperm.xlu0 %8536, %v7883
    %v8538 = vpop.permute.xlu0 %8537
    %8539 = vset.pattern.permute.xlu0 0
    %8540 = vperm.xlu0 %8539, %v7884
    %v8541 = vpop.permute.xlu0 %8540
    %v8542 = vlaneseq
    %v8543 = vshrl.u32 %v8542, 7
    %v8544 = vsub.s32 %v817, %v8543
    %v8545 = vrot.slane %v8520, %v8544
    %v8546 = vlaneseq
    %v8547 = vshrl.u32 %v8546, 7
    %v8548 = vsub.s32 %v817, %v8547
    %v8549 = vrot.slane %v8523, %v8548
    %v8550 = vlaneseq
    %v8551 = vshrl.u32 %v8550, 7
    %v8552 = vsub.s32 %v817, %v8551
    %v8553 = vrot.slane %v8526, %v8552
    %v8554 = vlaneseq
    %v8555 = vshrl.u32 %v8554, 7
    %v8556 = vsub.s32 %v817, %v8555
    %v8557 = vrot.slane %v8529, %v8556
    %v8558 = vlaneseq
    %v8559 = vshrl.u32 %v8558, 7
    %v8560 = vsub.s32 %v817, %v8559
    %v8561 = vrot.slane %v8532, %v8560
    %v8562 = vlaneseq
    %v8563 = vshrl.u32 %v8562, 7
    %v8564 = vsub.s32 %v817, %v8563
    %v8565 = vrot.slane %v8535, %v8564
    %v8566 = vlaneseq
    %v8567 = vshrl.u32 %v8566, 7
    %v8568 = vsub.s32 %v817, %v8567
    %v8569 = vrot.slane %v8538, %v8568
    %v8570 = vlaneseq
    %v8571 = vshrl.u32 %v8570, 7
    %v8572 = vsub.s32 %v817, %v8571
    %v8573 = vrot.slane %v8541, %v8572
    %v8574 = vsel %vm850, %v8549, %v8545
    %v8575 = vsel %vm852, %v8553, %v8574
    %v8576 = vsel %vm854, %v8557, %v8575
    %v8577 = vsel %vm856, %v8561, %v8576
    %v8578 = vsel %vm858, %v8565, %v8577
    %v8579 = vsel %vm860, %v8569, %v8578
    %v8580 = vsel %vm862, %v8573, %v8579
    %v8582 = vmul.f32 %v8508, %v8580
    %8584 = vrot.lane.b32.xlu0 %v8582, 64
    %v8585 = vpop.permute.xlu0 %8584
    %v8587 = vsel %vm384, %v8504, %v8585
    %v8588 = vsel %vm1867, %v8587, 0.0
    %v8589 = vadd.f32 %v8588, 1e-12
    %v8590 = vlog2.pop %v8589
    %v8591 = vmul.f32 %v8590, 0.6931472
    %v8593 = vcombine.high %v8591, %v8591
    %v8595 = vunpack.c.l.s4 1966171168
    %v8596 = vunpack.c.0.s8 %v8595
    %v8597 = vlaneseq
    %v8598 = vshrl.u32 %v8597, 7
    %v8599 = vsub.s32 %v8596, %v8598
    %v8600 = vrot.slane %v8591, %v8599
    %v8602 = vunpack.c.l.s4 1966171168
    %v8603 = vunpack.c.0.s8 %v8602
    %v8604 = vlaneseq
    %v8605 = vshrl.u32 %v8604, 7
    %v8606 = vsub.s32 %v8603, %v8605
    %v8607 = vrot.slane %v8593, %v8606
    %v8608 = vcombine.high %v8600, %v8600
    %v8609 = vcombine.high %v8607, %v8607
    %v8611 = vunpack.c.l.s4 1966171168
    %v8612 = vunpack.c.0.s8 %v8611
    %v8613 = vlaneseq
    %v8614 = vshrl.u32 %v8613, 7
    %v8615 = vsub.s32 %v8612, %v8614
    %v8616 = vrot.slane %v8600, %v8615
    %v8618 = vunpack.c.l.s4 1966171168
    %v8619 = vunpack.c.0.s8 %v8618
    %v8620 = vlaneseq
    %v8621 = vshrl.u32 %v8620, 7
    %v8622 = vsub.s32 %v8619, %v8621
    %v8623 = vrot.slane %v8607, %v8622
    %v8625 = vunpack.c.l.s4 1966171168
    %v8626 = vunpack.c.0.s8 %v8625
    %v8627 = vlaneseq
    %v8628 = vshrl.u32 %v8627, 7
    %v8629 = vsub.s32 %v8626, %v8628
    %v8630 = vrot.slane %v8608, %v8629
    %v8632 = vunpack.c.l.s4 1966171168
    %v8633 = vunpack.c.0.s8 %v8632
    %v8634 = vlaneseq
    %v8635 = vshrl.u32 %v8634, 7
    %v8636 = vsub.s32 %v8633, %v8635
    %v8637 = vrot.slane %v8609, %v8636
    %v8638 = vcombine.high %v8616, %v8616
    %v8639 = vcombine.high %v8623, %v8623
    %v8640 = vcombine.high %v8630, %v8630
    %v8641 = vcombine.high %v8637, %v8637
    %8650 = vst [vmem:[#allocation29 + $0x5] sm:$0x1] %v8616
    %8651 = vst [vmem:[#allocation29 + $0xd] sm:$0x1] %v8630
    %8652 = vst [vmem:[#allocation29 + $0x15] sm:$0x1] %v8638
    %8653 = vst [vmem:[#allocation29 + $0x1d] sm:$0x1] %v8640
    %8654 = vst [vmem:[#allocation29 + $0x25] sm:$0x1] %v8623
    %8655 = vst [vmem:[#allocation29 + $0x2d] sm:$0x1] %v8637
    %8656 = vst [vmem:[#allocation29 + $0x35] sm:$0x1] %v8639
    %8657 = vst [vmem:[#allocation29 + $0x3d] sm:$0x1] %v8641
    %s8658 = scalar_lea.vmem [#allocation5], 48
    %v8659 = vld [vmem:[%s8658] sm:$0xff]
    %v8660 = vsel %vm357, %v8659, %v8340
    %v8661 = vpack.c.bf16 %v8660, %v8660
    %v8663 = vsel %vm384, %v8661, 0
    %8665 = vmatprep.subr.bf16.mxu0 0
    %8666 = vmatpush1.bf16.msra.mxu0 %v376
    %8667 = vmatprep.subr.bf16.mxu0 0
    %8668 = vmatpush1.bf16.msra.mxu0 %v377
    %8669 = vmatprep.subr.bf16.mxu0 0
    %8670 = vmatpush1.bf16.msra.mxu0 %v378
    %8671 = vmatprep.subr.bf16.mxu0 0
    %8672 = vmatpush1.bf16.msra.mxu0 %v379
    %8673 = vmatprep.subr.bf16.mxu0 0
    %8674 = vmatpush1.bf16.msra.mxu0 0
    %8675 = vmatprep.subr.bf16.mxu0 0
    %8676 = vmatpush1.bf16.msra.mxu0 0
    %8677 = vmatprep.subr.bf16.mxu0 0
    %8678 = vmatpush1.bf16.msra.mxu0 0
    %8679 = vmatprep.subr.bf16.mxu0 0
    %8680 = vmatpush1.bf16.msra.mxu0 0
    %8681 = vmatprep.subr.bf16.mxu0 0
    %8682 = vmatpush1.bf16.msra.mxu0 0
    %8683 = vmatprep.subr.bf16.mxu0 0
    %8684 = vmatpush1.bf16.msra.mxu0 0
    %8685 = vmatprep.subr.bf16.mxu0 0
    %8686 = vmatpush1.bf16.msra.mxu0 0
    %8687 = vmatprep.subr.bf16.mxu0 0
    %8688 = vmatpush1.bf16.msra.mxu0 0
    %8689 = vmatprep.subr.bf16.mxu0 0
    %8690 = vmatpush1.bf16.msra.mxu0 0
    %8691 = vmatprep.subr.bf16.mxu0 0
    %8692 = vmatpush1.bf16.msra.mxu0 0
    %8693 = vmatprep.subr.bf16.mxu0 0
    %8694 = vmatpush1.bf16.msra.mxu0 0
    %8695 = vmatprep.subr.bf16.mxu0 0
    %8696 = vmatpush1.bf16.msra.mxu0 0
    %8697 = vmatprep.mubr.bf16.mxu0 0
    %8698 = vmatmul.mubr.bf16.gmra.mrb[0].mxu0 %v8663
    %v8699 = vpop.f32.mrb[0].mxu0
    %v8700 = vadd.f32 %v297, %v8699
    %v8701 = vpop.f32.mrb[0].mxu0
    %v8702 = vpop.f32.mrb[0].mxu0
    %v8703 = vpop.f32.mrb[0].mxu0
    %8704 = vdwg.mxu0
    %8705 = vmatprep.subr.bf16.mxu0 0
    %8706 = vmatpush1.bf16.msra.mxu0 %v437
    %8707 = vmatprep.subr.bf16.mxu0 0
    %8708 = vmatpush1.bf16.msra.mxu0 %v438
    %8709 = vmatprep.subr.bf16.mxu0 0
    %8710 = vmatpush1.bf16.msra.mxu0 0
    %8711 = vmatprep.subr.bf16.mxu0 0
    %8712 = vmatpush1.bf16.msra.mxu0 0
    %8713 = vmatprep.subr.bf16.mxu0 0
    %8714 = vmatpush1.bf16.msra.mxu0 0
    %8715 = vmatprep.subr.bf16.mxu0 0
    %8716 = vmatpush1.bf16.msra.mxu0 0
    %8717 = vmatprep.subr.bf16.mxu0 0
    %8718 = vmatpush1.bf16.msra.mxu0 0
    %8719 = vmatprep.subr.bf16.mxu0 0
    %8720 = vmatpush1.bf16.msra.mxu0 0
    %8721 = vmatprep.subr.bf16.mxu0 0
    %8722 = vmatpush1.bf16.msra.mxu0 0
    %8723 = vmatprep.subr.bf16.mxu0 0
    %8724 = vmatpush1.bf16.msra.mxu0 0
    %8725 = vmatprep.subr.bf16.mxu0 0
    %8726 = vmatpush1.bf16.msra.mxu0 0
    %8727 = vmatprep.subr.bf16.mxu0 0
    %8728 = vmatpush1.bf16.msra.mxu0 0
    %8729 = vmatprep.subr.bf16.mxu0 0
    %8730 = vmatpush1.bf16.msra.mxu0 0
    %8731 = vmatprep.subr.bf16.mxu0 0
    %8732 = vmatpush1.bf16.msra.mxu0 0
    %8733 = vmatprep.subr.bf16.mxu0 0
    %8734 = vmatpush1.bf16.msra.mxu0 0
    %8735 = vmatprep.subr.bf16.mxu0 0
    %8736 = vmatpush1.bf16.msra.mxu0 0
    %8737 = vmatprep.mubr.bf16.mxu0 0
    %8738 = vmatmul.mubr.bf16.gmra.mrb[0].mxu0 %v7432
    %v8739 = vpop.f32.mrb[0].mxu0
    %v8740 = vadd.f32 %v304, %v8739
    %v8741 = vpop.f32.mrb[0].mxu0
    %v8742 = vpop.f32.mrb[0].mxu0
    %v8743 = vpop.f32.mrb[0].mxu0
    %8744 = vdwg.mxu0
    %v8745 = vadd.f32 %v8700, %v8740
    %v8746 = vxor.u32 %v8745, 2147483648
    %v8747 = vmul.f32 %v8746, 1.442695
    %v8748 = vpow.pop %v8747
    %v8749 = vadd.f32 %v8748, 1.0
    %v8750 = vrcp.pop %v8749
    %v8751 = vmul.f32 1.0, %v8750
    %8753 = vrot.lane.b32.xlu0 %v8740, 64
    %v8754 = vpop.permute.xlu0 %8753
    %v8756 = vmul.f32 %v8751, %v8754
    %8758 = vrot.lane.b32.xlu0 %v8756, 64
    %v8759 = vpop.permute.xlu0 %8758
    %v8761 = vadd.f32 %v8700, %v8759
    %v8762 = vtanh.pop %v8761
    %v8763 = vsub.f32 1.0, %v8751
    %8765 = vrot.lane.b32.xlu0 %v8762, 96
    %v8766 = vpop.permute.xlu0 %8765
    %v8768 = vmul.f32 %v8763, %v8766
    %v8769 = vmul.f32 %v8751, %v7426
    %v8770 = vadd.f32 %v8768, %v8769
    %v8771 = vpack.c.bf16 %v8770, %v8770
    %8773 = vrot.lane.b32.xlu0 %v8771, 96
    %v8774 = vpop.permute.xlu0 %8773
    %v8776 = vsel %vm357, %v8774, 0
    %8778 = vmatprep.subr.bf16.mxu0 0
    %8779 = vmatpush1.bf16.msra.mxu0 %v526
    %8780 = vmatprep.subr.bf16.mxu0 0
    %8781 = vmatpush1.bf16.msra.mxu0 %v527
    %8782 = vmatprep.subr.bf16.mxu0 0
    %8783 = vmatpush1.bf16.msra.mxu0 0
    %8784 = vmatprep.subr.bf16.mxu0 0
    %8785 = vmatpush1.bf16.msra.mxu0 0
    %8786 = vmatprep.subr.bf16.mxu0 0
    %8787 = vmatpush1.bf16.msra.mxu0 0
    %8788 = vmatprep.subr.bf16.mxu0 0
    %8789 = vmatpush1.bf16.msra.mxu0 0
    %8790 = vmatprep.subr.bf16.mxu0 0
    %8791 = vmatpush1.bf16.msra.mxu0 0
    %8792 = vmatprep.subr.bf16.mxu0 0
    %8793 = vmatpush1.bf16.msra.mxu0 0
    %8794 = vmatprep.subr.bf16.mxu0 0
    %8795 = vmatpush1.bf16.msra.mxu0 0
    %8796 = vmatprep.subr.bf16.mxu0 0
    %8797 = vmatpush1.bf16.msra.mxu0 0
    %8798 = vmatprep.subr.bf16.mxu0 0
    %8799 = vmatpush1.bf16.msra.mxu0 0
    %8800 = vmatprep.subr.bf16.mxu0 0
    %8801 = vmatpush1.bf16.msra.mxu0 0
    %8802 = vmatprep.subr.bf16.mxu0 0
    %8803 = vmatpush1.bf16.msra.mxu0 0
    %8804 = vmatprep.subr.bf16.mxu0 0
    %8805 = vmatpush1.bf16.msra.mxu0 0
    %8806 = vmatprep.subr.bf16.mxu0 0
    %8807 = vmatpush1.bf16.msra.mxu0 0
    %8808 = vmatprep.subr.bf16.mxu0 0
    %8809 = vmatpush1.bf16.msra.mxu0 0
    %8810 = vmatprep.mubr.bf16.mxu0 0
    %8811 = vmatmul.mubr.bf16.gmra.mrb[0].mxu0 %v8776
    %v8812 = vpop.f32.mrb[0].mxu0
    %v8813 = vadd.f32 0.0, %v8812
    %v8814 = vpop.f32.mrb[0].mxu0
    %v8815 = vpop.f32.mrb[0].mxu0
    %v8816 = vpop.f32.mrb[0].mxu0
    %8817 = vdwg.mxu0
    %v8819 = vcombine.high %v8813, %v8813
    %v8821 = vunpack.c.l.s4 1966171168
    %v8822 = vunpack.c.0.s8 %v8821
    %v8823 = vlaneseq
    %v8824 = vshrl.u32 %v8823, 7
    %v8825 = vsub.s32 %v8822, %v8824
    %v8826 = vrot.slane %v8813, %v8825
    %v8828 = vunpack.c.l.s4 1966171168
    %v8829 = vunpack.c.0.s8 %v8828
    %v8830 = vlaneseq
    %v8831 = vshrl.u32 %v8830, 7
    %v8832 = vsub.s32 %v8829, %v8831
    %v8833 = vrot.slane %v8819, %v8832
    %v8834 = vcombine.high %v8826, %v8826
    %v8835 = vcombine.high %v8833, %v8833
    %v8837 = vunpack.c.l.s4 1966171168
    %v8838 = vunpack.c.0.s8 %v8837
    %v8839 = vlaneseq
    %v8840 = vshrl.u32 %v8839, 7
    %v8841 = vsub.s32 %v8838, %v8840
    %v8842 = vrot.slane %v8826, %v8841
    %v8844 = vunpack.c.l.s4 1966171168
    %v8845 = vunpack.c.0.s8 %v8844
    %v8846 = vlaneseq
    %v8847 = vshrl.u32 %v8846, 7
    %v8848 = vsub.s32 %v8845, %v8847
    %v8849 = vrot.slane %v8833, %v8848
    %v8851 = vunpack.c.l.s4 1966171168
    %v8852 = vunpack.c.0.s8 %v8851
    %v8853 = vlaneseq
    %v8854 = vshrl.u32 %v8853, 7
    %v8855 = vsub.s32 %v8852, %v8854
    %v8856 = vrot.slane %v8834, %v8855
    %v8858 = vunpack.c.l.s4 1966171168
    %v8859 = vunpack.c.0.s8 %v8858
    %v8860 = vlaneseq
    %v8861 = vshrl.u32 %v8860, 7
    %v8862 = vsub.s32 %v8859, %v8861
    %v8863 = vrot.slane %v8835, %v8862
    %v8864 = vcombine.high %v8842, %v8842
    %v8865 = vcombine.high %v8849, %v8849
    %v8866 = vcombine.high %v8856, %v8856
    %v8867 = vcombine.high %v8863, %v8863
    %v8868 = vlaneseq
    %v8869 = vshrl.u32 %v8868, 7
    %v8870 = vsub.s32 0, %v8869
    %v8871 = vrot.slane %v8842, %v8870
    %v8872 = vlaneseq
    %v8873 = vshrl.u32 %v8872, 7
    %v8874 = vsub.s32 0, %v8873
    %v8875 = vrot.slane %v8856, %v8874
    %v8876 = vlaneseq
    %v8877 = vshrl.u32 %v8876, 7
    %v8878 = vsub.s32 0, %v8877
    %v8879 = vrot.slane %v8864, %v8878
    %v8880 = vlaneseq
    %v8881 = vshrl.u32 %v8880, 7
    %v8882 = vsub.s32 0, %v8881
    %v8883 = vrot.slane %v8866, %v8882
    %v8884 = vlaneseq
    %v8885 = vshrl.u32 %v8884, 7
    %v8886 = vsub.s32 0, %v8885
    %v8887 = vrot.slane %v8849, %v8886
    %v8888 = vlaneseq
    %v8889 = vshrl.u32 %v8888, 7
    %v8890 = vsub.s32 0, %v8889
    %v8891 = vrot.slane %v8863, %v8890
    %v8892 = vlaneseq
    %v8893 = vshrl.u32 %v8892, 7
    %v8894 = vsub.s32 0, %v8893
    %v8895 = vrot.slane %v8865, %v8894
    %v8896 = vlaneseq
    %v8897 = vshrl.u32 %v8896, 7
    %v8898 = vsub.s32 0, %v8897
    %v8899 = vrot.slane %v8867, %v8898
    %v8908 = vadd.f32 %v264, %v8871
    %v8909 = vadd.f32 %v265, %v8875
    %v8910 = vadd.f32 %v266, %v8879
    %v8911 = vadd.f32 %v267, %v8883
    %v8912 = vadd.f32 %v268, %v8887
    %v8913 = vadd.f32 %v269, %v8891
    %v8914 = vadd.f32 %v270, %v8895
    %v8915 = vadd.f32 %v271, %v8899
    %v8916 = vtanh.pop %v8908
    %v8917 = vtanh.pop %v8909
    %v8918 = vtanh.pop %v8910
    %v8919 = vtanh.pop %v8911
    %v8920 = vtanh.pop %v8912
    %v8921 = vtanh.pop %v8913
    %v8922 = vtanh.pop %v8914
    %v8923 = vtanh.pop %v8915
    %v8924 = vmul.f32 %v8916, %v278
    %v8925 = vmul.f32 %v8917, %v278
    %v8926 = vmul.f32 %v8918, %v278
    %v8927 = vmul.f32 %v8919, %v278
    %v8928 = vmul.f32 %v8920, %v278
    %v8929 = vmul.f32 %v8921, %v278
    %v8930 = vmul.f32 %v8922, %v278
    %v8931 = vmul.f32 %v8923, %v278
    %v8932 = vsel %vm357, %v8924, 0.0
    %8933 = vadd.xlane.f32.xlu0 %v8932
    %v8934 = vpop.xlane.xlu0 %8933
    %v8935 = vsel %vm357, %v8925, 0.0
    %8936 = vadd.xlane.f32.xlu0 %v8935
    %v8937 = vpop.xlane.xlu0 %8936
    %v8938 = vsel %vm357, %v8926, 0.0
    %8939 = vadd.xlane.f32.xlu0 %v8938
    %v8940 = vpop.xlane.xlu0 %8939
    %v8941 = vsel %vm357, %v8927, 0.0
    %8942 = vadd.xlane.f32.xlu0 %v8941
    %v8943 = vpop.xlane.xlu0 %8942
    %v8944 = vsel %vm357, %v8928, 0.0
    %8945 = vadd.xlane.f32.xlu0 %v8944
    %v8946 = vpop.xlane.xlu0 %8945
    %v8947 = vsel %vm357, %v8929, 0.0
    %8948 = vadd.xlane.f32.xlu0 %v8947
    %v8949 = vpop.xlane.xlu0 %8948
    %v8950 = vsel %vm357, %v8930, 0.0
    %8951 = vadd.xlane.f32.xlu0 %v8950
    %v8952 = vpop.xlane.xlu0 %8951
    %v8953 = vsel %vm357, %v8931, 0.0
    %8954 = vadd.xlane.f32.xlu0 %v8953
    %v8955 = vpop.xlane.xlu0 %8954
    %v8956 = vadd.f32 %v8934, %v718
    %v8957 = vadd.f32 %v8937, %v725
    %v8958 = vadd.f32 %v8940, %v732
    %v8959 = vadd.f32 %v8943, %v739
    %v8960 = vadd.f32 %v8946, %v746
    %v8961 = vadd.f32 %v8949, %v753
    %v8962 = vadd.f32 %v8952, %v760
    %v8963 = vadd.f32 %v8955, %v767
    %8972 = vset.pattern.permute.xlu0 0
    %8973 = vperm.xlu0 %8972, %v8956
    %v8974 = vpop.permute.xlu0 %8973
    %8975 = vset.pattern.permute.xlu0 0
    %8976 = vperm.xlu0 %8975, %v8957
    %v8977 = vpop.permute.xlu0 %8976
    %8978 = vset.pattern.permute.xlu0 0
    %8979 = vperm.xlu0 %8978, %v8958
    %v8980 = vpop.permute.xlu0 %8979
    %8981 = vset.pattern.permute.xlu0 0
    %8982 = vperm.xlu0 %8981, %v8959
    %v8983 = vpop.permute.xlu0 %8982
    %8984 = vset.pattern.permute.xlu0 0
    %8985 = vperm.xlu0 %8984, %v8960
    %v8986 = vpop.permute.xlu0 %8985
    %8987 = vset.pattern.permute.xlu0 0
    %8988 = vperm.xlu0 %8987, %v8961
    %v8989 = vpop.permute.xlu0 %8988
    %8990 = vset.pattern.permute.xlu0 0
    %8991 = vperm.xlu0 %8990, %v8962
    %v8992 = vpop.permute.xlu0 %8991
    %8993 = vset.pattern.permute.xlu0 0
    %8994 = vperm.xlu0 %8993, %v8963
    %v8995 = vpop.permute.xlu0 %8994
    %v8996 = vlaneseq
    %v8997 = vshrl.u32 %v8996, 7
    %v8998 = vsub.s32 %v817, %v8997
    %v8999 = vrot.slane %v8974, %v8998
    %v9000 = vlaneseq
    %v9001 = vshrl.u32 %v9000, 7
    %v9002 = vsub.s32 %v817, %v9001
    %v9003 = vrot.slane %v8977, %v9002
    %v9004 = vlaneseq
    %v9005 = vshrl.u32 %v9004, 7
    %v9006 = vsub.s32 %v817, %v9005
    %v9007 = vrot.slane %v8980, %v9006
    %v9008 = vlaneseq
    %v9009 = vshrl.u32 %v9008, 7
    %v9010 = vsub.s32 %v817, %v9009
    %v9011 = vrot.slane %v8983, %v9010
    %v9012 = vlaneseq
    %v9013 = vshrl.u32 %v9012, 7
    %v9014 = vsub.s32 %v817, %v9013
    %v9015 = vrot.slane %v8986, %v9014
    %v9016 = vlaneseq
    %v9017 = vshrl.u32 %v9016, 7
    %v9018 = vsub.s32 %v817, %v9017
    %v9019 = vrot.slane %v8989, %v9018
    %v9020 = vlaneseq
    %v9021 = vshrl.u32 %v9020, 7
    %v9022 = vsub.s32 %v817, %v9021
    %v9023 = vrot.slane %v8992, %v9022
    %v9024 = vlaneseq
    %v9025 = vshrl.u32 %v9024, 7
    %v9026 = vsub.s32 %v817, %v9025
    %v9027 = vrot.slane %v8995, %v9026
    %v9028 = vsel %vm850, %v9003, %v8999
    %v9029 = vsel %vm852, %v9007, %v9028
    %v9030 = vsel %vm854, %v9011, %v9029
    %v9031 = vsel %vm856, %v9015, %v9030
    %v9032 = vsel %vm858, %v9019, %v9031
    %v9033 = vsel %vm860, %v9023, %v9032
    %v9034 = vsel %vm862, %v9027, %v9033
    %v9036 = vsel %vm865, %v9034, -inf
    %9037 = vmax.xlane.f32.xlu0 %v9036
    %v9038 = vpop.xlane.xlu0 %9037
    %v9040 = vlaneseq
    %v9041 = vshrl.u32 %v9040, 7
    %v9042 = vsub.s32 0, %v9041
    %v9043 = vrot.slane %v9038, %v9042
    %v9044 = vlaneseq
    %v9045 = vshrl.u32 %v9044, 7
    %v9046 = vsub.s32 1, %v9045
    %v9047 = vrot.slane %v9038, %v9046
    %v9048 = vlaneseq
    %v9049 = vshrl.u32 %v9048, 7
    %v9050 = vsub.s32 2, %v9049
    %v9051 = vrot.slane %v9038, %v9050
    %v9052 = vlaneseq
    %v9053 = vshrl.u32 %v9052, 7
    %v9054 = vsub.s32 3, %v9053
    %v9055 = vrot.slane %v9038, %v9054
    %v9056 = vlaneseq
    %v9057 = vshrl.u32 %v9056, 7
    %v9058 = vsub.s32 4, %v9057
    %v9059 = vrot.slane %v9038, %v9058
    %v9060 = vlaneseq
    %v9061 = vshrl.u32 %v9060, 7
    %v9062 = vsub.s32 5, %v9061
    %v9063 = vrot.slane %v9038, %v9062
    %v9064 = vlaneseq
    %v9065 = vshrl.u32 %v9064, 7
    %v9066 = vsub.s32 6, %v9065
    %v9067 = vrot.slane %v9038, %v9066
    %v9068 = vlaneseq
    %v9069 = vshrl.u32 %v9068, 7
    %v9070 = vsub.s32 7, %v9069
    %v9071 = vrot.slane %v9038, %v9070
    %v9080 = vsub.f32 %v8956, %v9043
    %v9081 = vsub.f32 %v8957, %v9047
    %v9082 = vsub.f32 %v8958, %v9051
    %v9083 = vsub.f32 %v8959, %v9055
    %v9084 = vsub.f32 %v8960, %v9059
    %v9085 = vsub.f32 %v8961, %v9063
    %v9086 = vsub.f32 %v8962, %v9067
    %v9087 = vsub.f32 %v8963, %v9071
    %v9088 = vmul.f32 %v9080, 1.442695
    %v9089 = vpow.pop %v9088
    %v9090 = vmul.f32 %v9081, 1.442695
    %v9091 = vpow.pop %v9090
    %v9092 = vmul.f32 %v9082, 1.442695
    %v9093 = vpow.pop %v9092
    %v9094 = vmul.f32 %v9083, 1.442695
    %v9095 = vpow.pop %v9094
    %v9096 = vmul.f32 %v9084, 1.442695
    %v9097 = vpow.pop %v9096
    %v9098 = vmul.f32 %v9085, 1.442695
    %v9099 = vpow.pop %v9098
    %v9100 = vmul.f32 %v9086, 1.442695
    %v9101 = vpow.pop %v9100
    %v9102 = vmul.f32 %v9087, 1.442695
    %v9103 = vpow.pop %v9102
    %9112 = vset.pattern.permute.xlu0 0
    %9113 = vperm.xlu0 %9112, %v9089
    %v9114 = vpop.permute.xlu0 %9113
    %9115 = vset.pattern.permute.xlu0 0
    %9116 = vperm.xlu0 %9115, %v9091
    %v9117 = vpop.permute.xlu0 %9116
    %9118 = vset.pattern.permute.xlu0 0
    %9119 = vperm.xlu0 %9118, %v9093
    %v9120 = vpop.permute.xlu0 %9119
    %9121 = vset.pattern.permute.xlu0 0
    %9122 = vperm.xlu0 %9121, %v9095
    %v9123 = vpop.permute.xlu0 %9122
    %9124 = vset.pattern.permute.xlu0 0
    %9125 = vperm.xlu0 %9124, %v9097
    %v9126 = vpop.permute.xlu0 %9125
    %9127 = vset.pattern.permute.xlu0 0
    %9128 = vperm.xlu0 %9127, %v9099
    %v9129 = vpop.permute.xlu0 %9128
    %9130 = vset.pattern.permute.xlu0 0
    %9131 = vperm.xlu0 %9130, %v9101
    %v9132 = vpop.permute.xlu0 %9131
    %9133 = vset.pattern.permute.xlu0 0
    %9134 = vperm.xlu0 %9133, %v9103
    %v9135 = vpop.permute.xlu0 %9134
    %v9136 = vlaneseq
    %v9137 = vshrl.u32 %v9136, 7
    %v9138 = vsub.s32 %v817, %v9137
    %v9139 = vrot.slane %v9114, %v9138
    %v9140 = vlaneseq
    %v9141 = vshrl.u32 %v9140, 7
    %v9142 = vsub.s32 %v817, %v9141
    %v9143 = vrot.slane %v9117, %v9142
    %v9144 = vlaneseq
    %v9145 = vshrl.u32 %v9144, 7
    %v9146 = vsub.s32 %v817, %v9145
    %v9147 = vrot.slane %v9120, %v9146
    %v9148 = vlaneseq
    %v9149 = vshrl.u32 %v9148, 7
    %v9150 = vsub.s32 %v817, %v9149
    %v9151 = vrot.slane %v9123, %v9150
    %v9152 = vlaneseq
    %v9153 = vshrl.u32 %v9152, 7
    %v9154 = vsub.s32 %v817, %v9153
    %v9155 = vrot.slane %v9126, %v9154
    %v9156 = vlaneseq
    %v9157 = vshrl.u32 %v9156, 7
    %v9158 = vsub.s32 %v817, %v9157
    %v9159 = vrot.slane %v9129, %v9158
    %v9160 = vlaneseq
    %v9161 = vshrl.u32 %v9160, 7
    %v9162 = vsub.s32 %v817, %v9161
    %v9163 = vrot.slane %v9132, %v9162
    %v9164 = vlaneseq
    %v9165 = vshrl.u32 %v9164, 7
    %v9166 = vsub.s32 %v817, %v9165
    %v9167 = vrot.slane %v9135, %v9166
    %v9168 = vsel %vm850, %v9143, %v9139
    %v9169 = vsel %vm852, %v9147, %v9168
    %v9170 = vsel %vm854, %v9151, %v9169
    %v9171 = vsel %vm856, %v9155, %v9170
    %v9172 = vsel %vm858, %v9159, %v9171
    %v9173 = vsel %vm860, %v9163, %v9172
    %v9174 = vsel %vm862, %v9167, %v9173
    %v9176 = vsel %vm865, %v9174, 0.0
    %9177 = vadd.xlane.f32.xlu0 %v9176
    %v9178 = vpop.xlane.xlu0 %9177
    %v9179 = vrcp.pop %v9178
    %v9181 = vlaneseq
    %v9182 = vshrl.u32 %v9181, 7
    %v9183 = vsub.s32 0, %v9182
    %v9184 = vrot.slane %v9179, %v9183
    %v9185 = vlaneseq
    %v9186 = vshrl.u32 %v9185, 7
    %v9187 = vsub.s32 1, %v9186
    %v9188 = vrot.slane %v9179, %v9187
    %v9189 = vlaneseq
    %v9190 = vshrl.u32 %v9189, 7
    %v9191 = vsub.s32 2, %v9190
    %v9192 = vrot.slane %v9179, %v9191
    %v9193 = vlaneseq
    %v9194 = vshrl.u32 %v9193, 7
    %v9195 = vsub.s32 3, %v9194
    %v9196 = vrot.slane %v9179, %v9195
    %v9197 = vlaneseq
    %v9198 = vshrl.u32 %v9197, 7
    %v9199 = vsub.s32 4, %v9198
    %v9200 = vrot.slane %v9179, %v9199
    %v9201 = vlaneseq
    %v9202 = vshrl.u32 %v9201, 7
    %v9203 = vsub.s32 5, %v9202
    %v9204 = vrot.slane %v9179, %v9203
    %v9205 = vlaneseq
    %v9206 = vshrl.u32 %v9205, 7
    %v9207 = vsub.s32 6, %v9206
    %v9208 = vrot.slane %v9179, %v9207
    %v9209 = vlaneseq
    %v9210 = vshrl.u32 %v9209, 7
    %v9211 = vsub.s32 7, %v9210
    %v9212 = vrot.slane %v9179, %v9211
    %v9221 = vmul.f32 %v9089, %v9184
    %v9222 = vmul.f32 %v9091, %v9188
    %v9223 = vmul.f32 %v9093, %v9192
    %v9224 = vmul.f32 %v9095, %v9196
    %v9225 = vmul.f32 %v9097, %v9200
    %v9226 = vmul.f32 %v9099, %v9204
    %v9227 = vmul.f32 %v9101, %v9208
    %v9228 = vmul.f32 %v9103, %v9212
    %v9229 = vpack.c.bf16 %v9221, %v9221
    %v9230 = vpack.c.bf16 %v9222, %v9222
    %v9231 = vpack.c.bf16 %v9223, %v9223
    %v9232 = vpack.c.bf16 %v9224, %v9224
    %v9233 = vpack.c.bf16 %v9225, %v9225
    %v9234 = vpack.c.bf16 %v9226, %v9226
    %v9235 = vpack.c.bf16 %v9227, %v9227
    %v9236 = vpack.c.bf16 %v9228, %v9228
    %v9238 = vunpack.c.l.b16 %v9229
    %9239 = vset.pattern.permute.xlu0 0
    %9240 = vperm.xlu0 %9239, %v9238
    %v9241 = vpop.permute.xlu0 %9240
    %v9242 = vlaneseq
    %v9243 = vshrl.u32 %v9242, 7
    %v9244 = vsub.s32 %v817, %v9243
    %v9245 = vrot.slane %v9241, %v9244
    %v9246 = vpack.c.b16 %v9245, %v9245
    %v9248 = vsel %vm865, %v9246, 0
    %9250 = vmatprep.subr.bf16.mxu0 0
    %9251 = vmatpush1.bf16.msra.mxu0 %v1082
    %9252 = vmatprep.subr.bf16.mxu0 0
    %9253 = vmatpush1.bf16.msra.mxu0 0
    %9254 = vmatprep.subr.bf16.mxu0 0
    %9255 = vmatpush1.bf16.msra.mxu0 0
    %9256 = vmatprep.subr.bf16.mxu0 0
    %9257 = vmatpush1.bf16.msra.mxu0 0
    %9258 = vmatprep.subr.bf16.mxu0 0
    %9259 = vmatpush1.bf16.msra.mxu0 0
    %9260 = vmatprep.subr.bf16.mxu0 0
    %9261 = vmatpush1.bf16.msra.mxu0 0
    %9262 = vmatprep.subr.bf16.mxu0 0
    %9263 = vmatpush1.bf16.msra.mxu0 0
    %9264 = vmatprep.subr.bf16.mxu0 0
    %9265 = vmatpush1.bf16.msra.mxu0 0
    %9266 = vmatprep.subr.bf16.mxu0 0
    %9267 = vmatpush1.bf16.msra.mxu0 0
    %9268 = vmatprep.subr.bf16.mxu0 0
    %9269 = vmatpush1.bf16.msra.mxu0 0
    %9270 = vmatprep.subr.bf16.mxu0 0
    %9271 = vmatpush1.bf16.msra.mxu0 0
    %9272 = vmatprep.subr.bf16.mxu0 0
    %9273 = vmatpush1.bf16.msra.mxu0 0
    %9274 = vmatprep.subr.bf16.mxu0 0
    %9275 = vmatpush1.bf16.msra.mxu0 0
    %9276 = vmatprep.subr.bf16.mxu0 0
    %9277 = vmatpush1.bf16.msra.mxu0 0
    %9278 = vmatprep.subr.bf16.mxu0 0
    %9279 = vmatpush1.bf16.msra.mxu0 0
    %9280 = vmatprep.subr.bf16.mxu0 0
    %9281 = vmatpush1.bf16.msra.mxu0 0
    %9282 = vmatprep.mubr.bf16.mxu0 0
    %9283 = vmatmul.mubr.bf16.gmra.mrb[0].mxu0 %v9248
    %v9284 = vpop.f32.mrb[0].mxu0
    %v9285 = vadd.f32 0.0, %v9284
    %v9286 = vpop.f32.mrb[0].mxu0
    %v9287 = vpop.f32.mrb[0].mxu0
    %v9288 = vpop.f32.mrb[0].mxu0
    %9289 = vdwg.mxu0
    %v9291 = vunpack.c.l.b16 %v9230
    %9292 = vset.pattern.permute.xlu0 0
    %9293 = vperm.xlu0 %9292, %v9291
    %v9294 = vpop.permute.xlu0 %9293
    %v9295 = vlaneseq
    %v9296 = vshrl.u32 %v9295, 7
    %v9297 = vsub.s32 %v817, %v9296
    %v9298 = vrot.slane %v9294, %v9297
    %v9299 = vpack.c.b16 %v9298, %v9298
    %v9301 = vsel %vm865, %v9299, 0
    %9303 = vmatprep.subr.bf16.mxu0 0
    %9304 = vmatpush1.bf16.msra.mxu0 %v1138
    %9305 = vmatprep.subr.bf16.mxu0 0
    %9306 = vmatpush1.bf16.msra.mxu0 0
    %9307 = vmatprep.subr.bf16.mxu0 0
    %9308 = vmatpush1.bf16.msra.mxu0 0
    %9309 = vmatprep.subr.bf16.mxu0 0
    %9310 = vmatpush1.bf16.msra.mxu0 0
    %9311 = vmatprep.subr.bf16.mxu0 0
    %9312 = vmatpush1.bf16.msra.mxu0 0
    %9313 = vmatprep.subr.bf16.mxu0 0
    %9314 = vmatpush1.bf16.msra.mxu0 0
    %9315 = vmatprep.subr.bf16.mxu0 0
    %9316 = vmatpush1.bf16.msra.mxu0 0
    %9317 = vmatprep.subr.bf16.mxu0 0
    %9318 = vmatpush1.bf16.msra.mxu0 0
    %9319 = vmatprep.subr.bf16.mxu0 0
    %9320 = vmatpush1.bf16.msra.mxu0 0
    %9321 = vmatprep.subr.bf16.mxu0 0
    %9322 = vmatpush1.bf16.msra.mxu0 0
    %9323 = vmatprep.subr.bf16.mxu0 0
    %9324 = vmatpush1.bf16.msra.mxu0 0
    %9325 = vmatprep.subr.bf16.mxu0 0
    %9326 = vmatpush1.bf16.msra.mxu0 0
    %9327 = vmatprep.subr.bf16.mxu0 0
    %9328 = vmatpush1.bf16.msra.mxu0 0
    %9329 = vmatprep.subr.bf16.mxu0 0
    %9330 = vmatpush1.bf16.msra.mxu0 0
    %9331 = vmatprep.subr.bf16.mxu0 0
    %9332 = vmatpush1.bf16.msra.mxu0 0
    %9333 = vmatprep.subr.bf16.mxu0 0
    %9334 = vmatpush1.bf16.msra.mxu0 0
    %9335 = vmatprep.mubr.bf16.mxu0 0
    %9336 = vmatmul.mubr.bf16.gmra.mrb[0].mxu0 %v9301
    %v9337 = vpop.f32.mrb[0].mxu0
    %v9338 = vadd.f32 0.0, %v9337
    %v9339 = vpop.f32.mrb[0].mxu0
    %v9340 = vpop.f32.mrb[0].mxu0
    %v9341 = vpop.f32.mrb[0].mxu0
    %9342 = vdwg.mxu0
    %v9344 = vunpack.c.l.b16 %v9231
    %9345 = vset.pattern.permute.xlu0 0
    %9346 = vperm.xlu0 %9345, %v9344
    %v9347 = vpop.permute.xlu0 %9346
    %v9348 = vlaneseq
    %v9349 = vshrl.u32 %v9348, 7
    %v9350 = vsub.s32 %v817, %v9349
    %v9351 = vrot.slane %v9347, %v9350
    %v9352 = vpack.c.b16 %v9351, %v9351
    %v9354 = vsel %vm865, %v9352, 0
    %9356 = vmatprep.subr.bf16.mxu0 0
    %9357 = vmatpush1.bf16.msra.mxu0 %v1194
    %9358 = vmatprep.subr.bf16.mxu0 0
    %9359 = vmatpush1.bf16.msra.mxu0 0
    %9360 = vmatprep.subr.bf16.mxu0 0
    %9361 = vmatpush1.bf16.msra.mxu0 0
    %9362 = vmatprep.subr.bf16.mxu0 0
    %9363 = vmatpush1.bf16.msra.mxu0 0
    %9364 = vmatprep.subr.bf16.mxu0 0
    %9365 = vmatpush1.bf16.msra.mxu0 0
    %9366 = vmatprep.subr.bf16.mxu0 0
    %9367 = vmatpush1.bf16.msra.mxu0 0
    %9368 = vmatprep.subr.bf16.mxu0 0
    %9369 = vmatpush1.bf16.msra.mxu0 0
    %9370 = vmatprep.subr.bf16.mxu0 0
    %9371 = vmatpush1.bf16.msra.mxu0 0
    %9372 = vmatprep.subr.bf16.mxu0 0
    %9373 = vmatpush1.bf16.msra.mxu0 0
    %9374 = vmatprep.subr.bf16.mxu0 0
    %9375 = vmatpush1.bf16.msra.mxu0 0
    %9376 = vmatprep.subr.bf16.mxu0 0
    %9377 = vmatpush1.bf16.msra.mxu0 0
    %9378 = vmatprep.subr.bf16.mxu0 0
    %9379 = vmatpush1.bf16.msra.mxu0 0
    %9380 = vmatprep.subr.bf16.mxu0 0
    %9381 = vmatpush1.bf16.msra.mxu0 0
    %9382 = vmatprep.subr.bf16.mxu0 0
    %9383 = vmatpush1.bf16.msra.mxu0 0
    %9384 = vmatprep.subr.bf16.mxu0 0
    %9385 = vmatpush1.bf16.msra.mxu0 0
    %9386 = vmatprep.subr.bf16.mxu0 0
    %9387 = vmatpush1.bf16.msra.mxu0 0
    %9388 = vmatprep.mubr.bf16.mxu0 0
    %9389 = vmatmul.mubr.bf16.gmra.mrb[0].mxu0 %v9354
    %v9390 = vpop.f32.mrb[0].mxu0
    %v9391 = vadd.f32 0.0, %v9390
    %v9392 = vpop.f32.mrb[0].mxu0
    %v9393 = vpop.f32.mrb[0].mxu0
    %v9394 = vpop.f32.mrb[0].mxu0
    %9395 = vdwg.mxu0
    %v9397 = vunpack.c.l.b16 %v9232
    %9398 = vset.pattern.permute.xlu0 0
    %9399 = vperm.xlu0 %9398, %v9397
    %v9400 = vpop.permute.xlu0 %9399
    %v9401 = vlaneseq
    %v9402 = vshrl.u32 %v9401, 7
    %v9403 = vsub.s32 %v817, %v9402
    %v9404 = vrot.slane %v9400, %v9403
    %v9405 = vpack.c.b16 %v9404, %v9404
    %v9407 = vsel %vm865, %v9405, 0
    %9409 = vmatprep.subr.bf16.mxu0 0
    %9410 = vmatpush1.bf16.msra.mxu0 %v1250
    %9411 = vmatprep.subr.bf16.mxu0 0
    %9412 = vmatpush1.bf16.msra.mxu0 0
    %9413 = vmatprep.subr.bf16.mxu0 0
    %9414 = vmatpush1.bf16.msra.mxu0 0
    %9415 = vmatprep.subr.bf16.mxu0 0
    %9416 = vmatpush1.bf16.msra.mxu0 0
    %9417 = vmatprep.subr.bf16.mxu0 0
    %9418 = vmatpush1.bf16.msra.mxu0 0
    %9419 = vmatprep.subr.bf16.mxu0 0
    %9420 = vmatpush1.bf16.msra.mxu0 0
    %9421 = vmatprep.subr.bf16.mxu0 0
    %9422 = vmatpush1.bf16.msra.mxu0 0
    %9423 = vmatprep.subr.bf16.mxu0 0
    %9424 = vmatpush1.bf16.msra.mxu0 0
    %9425 = vmatprep.subr.bf16.mxu0 0
    %9426 = vmatpush1.bf16.msra.mxu0 0
    %9427 = vmatprep.subr.bf16.mxu0 0
    %9428 = vmatpush1.bf16.msra.mxu0 0
    %9429 = vmatprep.subr.bf16.mxu0 0
    %9430 = vmatpush1.bf16.msra.mxu0 0
    %9431 = vmatprep.subr.bf16.mxu0 0
    %9432 = vmatpush1.bf16.msra.mxu0 0
    %9433 = vmatprep.subr.bf16.mxu0 0
    %9434 = vmatpush1.bf16.msra.mxu0 0
    %9435 = vmatprep.subr.bf16.mxu0 0
    %9436 = vmatpush1.bf16.msra.mxu0 0
    %9437 = vmatprep.subr.bf16.mxu0 0
    %9438 = vmatpush1.bf16.msra.mxu0 0
    %9439 = vmatprep.subr.bf16.mxu0 0
    %9440 = vmatpush1.bf16.msra.mxu0 0
    %9441 = vmatprep.mubr.bf16.mxu0 0
    %9442 = vmatmul.mubr.bf16.gmra.mrb[0].mxu0 %v9407
    %v9443 = vpop.f32.mrb[0].mxu0
    %v9444 = vadd.f32 0.0, %v9443
    %v9445 = vpop.f32.mrb[0].mxu0
    %v9446 = vpop.f32.mrb[0].mxu0
    %v9447 = vpop.f32.mrb[0].mxu0
    %9448 = vdwg.mxu0
    %v9450 = vunpack.c.l.b16 %v9233
    %9451 = vset.pattern.permute.xlu0 0
    %9452 = vperm.xlu0 %9451, %v9450
    %v9453 = vpop.permute.xlu0 %9452
    %v9454 = vlaneseq
    %v9455 = vshrl.u32 %v9454, 7
    %v9456 = vsub.s32 %v817, %v9455
    %v9457 = vrot.slane %v9453, %v9456
    %v9458 = vpack.c.b16 %v9457, %v9457
    %v9460 = vsel %vm865, %v9458, 0
    %9462 = vmatprep.subr.bf16.mxu0 0
    %9463 = vmatpush1.bf16.msra.mxu0 %v1306
    %9464 = vmatprep.subr.bf16.mxu0 0
    %9465 = vmatpush1.bf16.msra.mxu0 0
    %9466 = vmatprep.subr.bf16.mxu0 0
    %9467 = vmatpush1.bf16.msra.mxu0 0
    %9468 = vmatprep.subr.bf16.mxu0 0
    %9469 = vmatpush1.bf16.msra.mxu0 0
    %9470 = vmatprep.subr.bf16.mxu0 0
    %9471 = vmatpush1.bf16.msra.mxu0 0
    %9472 = vmatprep.subr.bf16.mxu0 0
    %9473 = vmatpush1.bf16.msra.mxu0 0
    %9474 = vmatprep.subr.bf16.mxu0 0
    %9475 = vmatpush1.bf16.msra.mxu0 0
    %9476 = vmatprep.subr.bf16.mxu0 0
    %9477 = vmatpush1.bf16.msra.mxu0 0
    %9478 = vmatprep.subr.bf16.mxu0 0
    %9479 = vmatpush1.bf16.msra.mxu0 0
    %9480 = vmatprep.subr.bf16.mxu0 0
    %9481 = vmatpush1.bf16.msra.mxu0 0
    %9482 = vmatprep.subr.bf16.mxu0 0
    %9483 = vmatpush1.bf16.msra.mxu0 0
    %9484 = vmatprep.subr.bf16.mxu0 0
    %9485 = vmatpush1.bf16.msra.mxu0 0
    %9486 = vmatprep.subr.bf16.mxu0 0
    %9487 = vmatpush1.bf16.msra.mxu0 0
    %9488 = vmatprep.subr.bf16.mxu0 0
    %9489 = vmatpush1.bf16.msra.mxu0 0
    %9490 = vmatprep.subr.bf16.mxu0 0
    %9491 = vmatpush1.bf16.msra.mxu0 0
    %9492 = vmatprep.subr.bf16.mxu0 0
    %9493 = vmatpush1.bf16.msra.mxu0 0
    %9494 = vmatprep.mubr.bf16.mxu0 0
    %9495 = vmatmul.mubr.bf16.gmra.mrb[0].mxu0 %v9460
    %v9496 = vpop.f32.mrb[0].mxu0
    %v9497 = vadd.f32 0.0, %v9496
    %v9498 = vpop.f32.mrb[0].mxu0
    %v9499 = vpop.f32.mrb[0].mxu0
    %v9500 = vpop.f32.mrb[0].mxu0
    %9501 = vdwg.mxu0
    %v9503 = vunpack.c.l.b16 %v9234
    %9504 = vset.pattern.permute.xlu0 0
    %9505 = vperm.xlu0 %9504, %v9503
    %v9506 = vpop.permute.xlu0 %9505
    %v9507 = vlaneseq
    %v9508 = vshrl.u32 %v9507, 7
    %v9509 = vsub.s32 %v817, %v9508
    %v9510 = vrot.slane %v9506, %v9509
    %v9511 = vpack.c.b16 %v9510, %v9510
    %v9513 = vsel %vm865, %v9511, 0
    %9515 = vmatprep.subr.bf16.mxu0 0
    %9516 = vmatpush1.bf16.msra.mxu0 %v1362
    %9517 = vmatprep.subr.bf16.mxu0 0
    %9518 = vmatpush1.bf16.msra.mxu0 0
    %9519 = vmatprep.subr.bf16.mxu0 0
    %9520 = vmatpush1.bf16.msra.mxu0 0
    %9521 = vmatprep.subr.bf16.mxu0 0
    %9522 = vmatpush1.bf16.msra.mxu0 0
    %9523 = vmatprep.subr.bf16.mxu0 0
    %9524 = vmatpush1.bf16.msra.mxu0 0
    %9525 = vmatprep.subr.bf16.mxu0 0
    %9526 = vmatpush1.bf16.msra.mxu0 0
    %9527 = vmatprep.subr.bf16.mxu0 0
    %9528 = vmatpush1.bf16.msra.mxu0 0
    %9529 = vmatprep.subr.bf16.mxu0 0
    %9530 = vmatpush1.bf16.msra.mxu0 0
    %9531 = vmatprep.subr.bf16.mxu0 0
    %9532 = vmatpush1.bf16.msra.mxu0 0
    %9533 = vmatprep.subr.bf16.mxu0 0
    %9534 = vmatpush1.bf16.msra.mxu0 0
    %9535 = vmatprep.subr.bf16.mxu0 0
    %9536 = vmatpush1.bf16.msra.mxu0 0
    %9537 = vmatprep.subr.bf16.mxu0 0
    %9538 = vmatpush1.bf16.msra.mxu0 0
    %9539 = vmatprep.subr.bf16.mxu0 0
    %9540 = vmatpush1.bf16.msra.mxu0 0
    %9541 = vmatprep.subr.bf16.mxu0 0
    %9542 = vmatpush1.bf16.msra.mxu0 0
    %9543 = vmatprep.subr.bf16.mxu0 0
    %9544 = vmatpush1.bf16.msra.mxu0 0
    %9545 = vmatprep.subr.bf16.mxu0 0
    %9546 = vmatpush1.bf16.msra.mxu0 0
    %9547 = vmatprep.mubr.bf16.mxu0 0
    %9548 = vmatmul.mubr.bf16.gmra.mrb[0].mxu0 %v9513
    %v9549 = vpop.f32.mrb[0].mxu0
    %v9550 = vadd.f32 0.0, %v9549
    %v9551 = vpop.f32.mrb[0].mxu0
    %v9552 = vpop.f32.mrb[0].mxu0
    %v9553 = vpop.f32.mrb[0].mxu0
    %9554 = vdwg.mxu0
    %v9556 = vunpack.c.l.b16 %v9235
    %9557 = vset.pattern.permute.xlu0 0
    %9558 = vperm.xlu0 %9557, %v9556
    %v9559 = vpop.permute.xlu0 %9558
    %v9560 = vlaneseq
    %v9561 = vshrl.u32 %v9560, 7
    %v9562 = vsub.s32 %v817, %v9561
    %v9563 = vrot.slane %v9559, %v9562
    %v9564 = vpack.c.b16 %v9563, %v9563
    %v9566 = vsel %vm865, %v9564, 0
    %9568 = vmatprep.subr.bf16.mxu0 0
    %9569 = vmatpush1.bf16.msra.mxu0 %v1418
    %9570 = vmatprep.subr.bf16.mxu0 0
    %9571 = vmatpush1.bf16.msra.mxu0 0
    %9572 = vmatprep.subr.bf16.mxu0 0
    %9573 = vmatpush1.bf16.msra.mxu0 0
    %9574 = vmatprep.subr.bf16.mxu0 0
    %9575 = vmatpush1.bf16.msra.mxu0 0
    %9576 = vmatprep.subr.bf16.mxu0 0
    %9577 = vmatpush1.bf16.msra.mxu0 0
    %9578 = vmatprep.subr.bf16.mxu0 0
    %9579 = vmatpush1.bf16.msra.mxu0 0
    %9580 = vmatprep.subr.bf16.mxu0 0
    %9581 = vmatpush1.bf16.msra.mxu0 0
    %9582 = vmatprep.subr.bf16.mxu0 0
    %9583 = vmatpush1.bf16.msra.mxu0 0
    %9584 = vmatprep.subr.bf16.mxu0 0
    %9585 = vmatpush1.bf16.msra.mxu0 0
    %9586 = vmatprep.subr.bf16.mxu0 0
    %9587 = vmatpush1.bf16.msra.mxu0 0
    %9588 = vmatprep.subr.bf16.mxu0 0
    %9589 = vmatpush1.bf16.msra.mxu0 0
    %9590 = vmatprep.subr.bf16.mxu0 0
    %9591 = vmatpush1.bf16.msra.mxu0 0
    %9592 = vmatprep.subr.bf16.mxu0 0
    %9593 = vmatpush1.bf16.msra.mxu0 0
    %9594 = vmatprep.subr.bf16.mxu0 0
    %9595 = vmatpush1.bf16.msra.mxu0 0
    %9596 = vmatprep.subr.bf16.mxu0 0
    %9597 = vmatpush1.bf16.msra.mxu0 0
    %9598 = vmatprep.subr.bf16.mxu0 0
    %9599 = vmatpush1.bf16.msra.mxu0 0
    %9600 = vmatprep.mubr.bf16.mxu0 0
    %9601 = vmatmul.mubr.bf16.gmra.mrb[0].mxu0 %v9566
    %v9602 = vpop.f32.mrb[0].mxu0
    %v9603 = vadd.f32 0.0, %v9602
    %v9604 = vpop.f32.mrb[0].mxu0
    %v9605 = vpop.f32.mrb[0].mxu0
    %v9606 = vpop.f32.mrb[0].mxu0
    %9607 = vdwg.mxu0
    %v9609 = vunpack.c.l.b16 %v9236
    %9610 = vset.pattern.permute.xlu0 0
    %9611 = vperm.xlu0 %9610, %v9609
    %v9612 = vpop.permute.xlu0 %9611
    %v9613 = vlaneseq
    %v9614 = vshrl.u32 %v9613, 7
    %v9615 = vsub.s32 %v817, %v9614
    %v9616 = vrot.slane %v9612, %v9615
    %v9617 = vpack.c.b16 %v9616, %v9616
    %v9619 = vsel %vm865, %v9617, 0
    %9621 = vmatprep.subr.bf16.mxu0 0
    %9622 = vmatpush1.bf16.msra.mxu0 %v1474
    %9623 = vmatprep.subr.bf16.mxu0 0
    %9624 = vmatpush1.bf16.msra.mxu0 0
    %9625 = vmatprep.subr.bf16.mxu0 0
    %9626 = vmatpush1.bf16.msra.mxu0 0
    %9627 = vmatprep.subr.bf16.mxu0 0
    %9628 = vmatpush1.bf16.msra.mxu0 0
    %9629 = vmatprep.subr.bf16.mxu0 0
    %9630 = vmatpush1.bf16.msra.mxu0 0
    %9631 = vmatprep.subr.bf16.mxu0 0
    %9632 = vmatpush1.bf16.msra.mxu0 0
    %9633 = vmatprep.subr.bf16.mxu0 0
    %9634 = vmatpush1.bf16.msra.mxu0 0
    %9635 = vmatprep.subr.bf16.mxu0 0
    %9636 = vmatpush1.bf16.msra.mxu0 0
    %9637 = vmatprep.subr.bf16.mxu0 0
    %9638 = vmatpush1.bf16.msra.mxu0 0
    %9639 = vmatprep.subr.bf16.mxu0 0
    %9640 = vmatpush1.bf16.msra.mxu0 0
    %9641 = vmatprep.subr.bf16.mxu0 0
    %9642 = vmatpush1.bf16.msra.mxu0 0
    %9643 = vmatprep.subr.bf16.mxu0 0
    %9644 = vmatpush1.bf16.msra.mxu0 0
    %9645 = vmatprep.subr.bf16.mxu0 0
    %9646 = vmatpush1.bf16.msra.mxu0 0
    %9647 = vmatprep.subr.bf16.mxu0 0
    %9648 = vmatpush1.bf16.msra.mxu0 0
    %9649 = vmatprep.subr.bf16.mxu0 0
    %9650 = vmatpush1.bf16.msra.mxu0 0
    %9651 = vmatprep.subr.bf16.mxu0 0
    %9652 = vmatpush1.bf16.msra.mxu0 0
    %9653 = vmatprep.mubr.bf16.mxu0 0
    %9654 = vmatmul.mubr.bf16.gmra.mrb[0].mxu0 %v9619
    %v9655 = vpop.f32.mrb[0].mxu0
    %v9656 = vadd.f32 0.0, %v9655
    %v9657 = vpop.f32.mrb[0].mxu0
    %v9658 = vpop.f32.mrb[0].mxu0
    %v9659 = vpop.f32.mrb[0].mxu0
    %9660 = vdwg.mxu0
    %v9669 = vrot.slane %v9338, 7
    %v9670 = vsel %vm850, %v9669, %v9285
    %v9671 = vrot.slane %v9391, 6
    %v9672 = vsel %vm852, %v9671, %v9670
    %v9673 = vrot.slane %v9444, 5
    %v9674 = vsel %vm854, %v9673, %v9672
    %v9675 = vrot.slane %v9497, 4
    %v9676 = vsel %vm856, %v9675, %v9674
    %v9677 = vrot.slane %v9550, 3
    %v9678 = vsel %vm858, %v9677, %v9676
    %v9679 = vrot.slane %v9603, 2
    %v9680 = vsel %vm860, %v9679, %v9678
    %v9681 = vrot.slane %v9656, 1
    %v9682 = vsel %vm862, %v9681, %v9680
    %9683 = vrot.lane.b32.xlu0 %v9682, 32
    %v9684 = vpop.permute.xlu0 %9683
    %9687 = vrot.lane.b32.xlu0 %v8770, 32
    %v9688 = vpop.permute.xlu0 %9687
    %v9690 = vsel %vm357, %v8659, %v9684
    %v9691 = vsel %vm384, %v9690, %v9688
    %v9692 = vpack.c.bf16 %v9691, %v9691
    %v9694 = vsel %vm1584, %v9692, 0
    %9696 = vmatprep.subr.bf16.mxu0 0
    %9697 = vmatpush1.bf16.msra.mxu0 %v1572
    %9698 = vmatprep.subr.bf16.mxu0 0
    %9699 = vmatpush1.bf16.msra.mxu0 %v1573
    %9700 = vmatprep.subr.bf16.mxu0 0
    %9701 = vmatpush1.bf16.msra.mxu0 %v1574
    %9702 = vmatprep.subr.bf16.mxu0 0
    %9703 = vmatpush1.bf16.msra.mxu0 %v1575
    %9704 = vmatprep.subr.bf16.mxu0 0
    %9705 = vmatpush1.bf16.msra.mxu0 %v1576
    %9706 = vmatprep.subr.bf16.mxu0 0
    %9707 = vmatpush1.bf16.msra.mxu0 %v1577
    %9708 = vmatprep.subr.bf16.mxu0 0
    %9709 = vmatpush1.bf16.msra.mxu0 0
    %9710 = vmatprep.subr.bf16.mxu0 0
    %9711 = vmatpush1.bf16.msra.mxu0 0
    %9712 = vmatprep.subr.bf16.mxu0 0
    %9713 = vmatpush1.bf16.msra.mxu0 0
    %9714 = vmatprep.subr.bf16.mxu0 0
    %9715 = vmatpush1.bf16.msra.mxu0 0
    %9716 = vmatprep.subr.bf16.mxu0 0
    %9717 = vmatpush1.bf16.msra.mxu0 0
    %9718 = vmatprep.subr.bf16.mxu0 0
    %9719 = vmatpush1.bf16.msra.mxu0 0
    %9720 = vmatprep.subr.bf16.mxu0 0
    %9721 = vmatpush1.bf16.msra.mxu0 0
    %9722 = vmatprep.subr.bf16.mxu0 0
    %9723 = vmatpush1.bf16.msra.mxu0 0
    %9724 = vmatprep.subr.bf16.mxu0 0
    %9725 = vmatpush1.bf16.msra.mxu0 0
    %9726 = vmatprep.subr.bf16.mxu0 0
    %9727 = vmatpush1.bf16.msra.mxu0 0
    %9728 = vmatprep.mubr.bf16.mxu0 0
    %9729 = vmatmul.mubr.bf16.gmra.mrb[0].mxu0 %v9694
    %v9730 = vpop.f32.mrb[0].mxu0
    %v9731 = vadd.f32 %v327, %v9730
    %v9732 = vpop.f32.mrb[0].mxu0
    %v9733 = vpop.f32.mrb[0].mxu0
    %v9734 = vpop.f32.mrb[0].mxu0
    %9735 = vdwg.mxu0
    %v9736 = vxor.u32 %v9731, 2147483648
    %v9737 = vmul.f32 %v9736, 1.442695
    %v9738 = vpow.pop %v9737
    %v9739 = vadd.f32 %v9738, 1.0
    %v9740 = vrcp.pop %v9739
    %v9741 = vmul.f32 1.0, %v9740
    %9742 = vmatprep.subr.bf16.mxu0 0
    %9743 = vmatpush1.bf16.msra.mxu0 %v1658
    %9744 = vmatprep.subr.bf16.mxu0 0
    %9745 = vmatpush1.bf16.msra.mxu0 %v1659
    %9746 = vmatprep.subr.bf16.mxu0 0
    %9747 = vmatpush1.bf16.msra.mxu0 %v1660
    %9748 = vmatprep.subr.bf16.mxu0 0
    %9749 = vmatpush1.bf16.msra.mxu0 %v1661
    %9750 = vmatprep.subr.bf16.mxu0 0
    %9751 = vmatpush1.bf16.msra.mxu0 %v1662
    %9752 = vmatprep.subr.bf16.mxu0 0
    %9753 = vmatpush1.bf16.msra.mxu0 %v1663
    %9754 = vmatprep.subr.bf16.mxu0 0
    %9755 = vmatpush1.bf16.msra.mxu0 0
    %9756 = vmatprep.subr.bf16.mxu0 0
    %9757 = vmatpush1.bf16.msra.mxu0 0
    %9758 = vmatprep.subr.bf16.mxu0 0
    %9759 = vmatpush1.bf16.msra.mxu0 0
    %9760 = vmatprep.subr.bf16.mxu0 0
    %9761 = vmatpush1.bf16.msra.mxu0 0
    %9762 = vmatprep.subr.bf16.mxu0 0
    %9763 = vmatpush1.bf16.msra.mxu0 0
    %9764 = vmatprep.subr.bf16.mxu0 0
    %9765 = vmatpush1.bf16.msra.mxu0 0
    %9766 = vmatprep.subr.bf16.mxu0 0
    %9767 = vmatpush1.bf16.msra.mxu0 0
    %9768 = vmatprep.subr.bf16.mxu0 0
    %9769 = vmatpush1.bf16.msra.mxu0 0
    %9770 = vmatprep.subr.bf16.mxu0 0
    %9771 = vmatpush1.bf16.msra.mxu0 0
    %9772 = vmatprep.subr.bf16.mxu0 0
    %9773 = vmatpush1.bf16.msra.mxu0 0
    %9774 = vmatprep.mubr.bf16.mxu0 0
    %9775 = vmatmul.mubr.bf16.gmra.mrb[0].mxu0 %v9694
    %v9776 = vpop.f32.mrb[0].mxu0
    %v9777 = vadd.f32 %v346, %v9776
    %v9778 = vpop.f32.mrb[0].mxu0
    %v9779 = vpop.f32.mrb[0].mxu0
    %v9780 = vpop.f32.mrb[0].mxu0
    %9781 = vdwg.mxu0
    %9783 = vrot.lane.b32.xlu0 %v9777, 112
    %v9784 = vpop.permute.xlu0 %9783
    %v9786 = vmax.f32 %v9777, %v9784
    %v9787 = vpack.c.bf16 %v9786, %v9786
    %v9789 = vsel %vm1722, %v9787, 0
    %9791 = vmatprep.subr.bf16.mxu0 0
    %9792 = vmatpush1.bf16.msra.mxu0 %v1720
    %9793 = vmatprep.subr.bf16.mxu0 0
    %9794 = vmatpush1.bf16.msra.mxu0 0
    %9795 = vmatprep.subr.bf16.mxu0 0
    %9796 = vmatpush1.bf16.msra.mxu0 0
    %9797 = vmatprep.subr.bf16.mxu0 0
    %9798 = vmatpush1.bf16.msra.mxu0 0
    %9799 = vmatprep.subr.bf16.mxu0 0
    %9800 = vmatpush1.bf16.msra.mxu0 0
    %9801 = vmatprep.subr.bf16.mxu0 0
    %9802 = vmatpush1.bf16.msra.mxu0 0
    %9803 = vmatprep.subr.bf16.mxu0 0
    %9804 = vmatpush1.bf16.msra.mxu0 0
    %9805 = vmatprep.subr.bf16.mxu0 0
    %9806 = vmatpush1.bf16.msra.mxu0 0
    %9807 = vmatprep.subr.bf16.mxu0 0
    %9808 = vmatpush1.bf16.msra.mxu0 0
    %9809 = vmatprep.subr.bf16.mxu0 0
    %9810 = vmatpush1.bf16.msra.mxu0 0
    %9811 = vmatprep.subr.bf16.mxu0 0
    %9812 = vmatpush1.bf16.msra.mxu0 0
    %9813 = vmatprep.subr.bf16.mxu0 0
    %9814 = vmatpush1.bf16.msra.mxu0 0
    %9815 = vmatprep.subr.bf16.mxu0 0
    %9816 = vmatpush1.bf16.msra.mxu0 0
    %9817 = vmatprep.subr.bf16.mxu0 0
    %9818 = vmatpush1.bf16.msra.mxu0 0
    %9819 = vmatprep.subr.bf16.mxu0 0
    %9820 = vmatpush1.bf16.msra.mxu0 0
    %9821 = vmatprep.subr.bf16.mxu0 0
    %9822 = vmatpush1.bf16.msra.mxu0 0
    %9823 = vmatprep.mubr.bf16.mxu0 0
    %9824 = vmatmul.mubr.bf16.gmra.mrb[0].mxu0 %v9789
    %v9825 = vpop.f32.mrb[0].mxu0
    %v9826 = vadd.f32 0.0, %v9825
    %v9827 = vpop.f32.mrb[0].mxu0
    %v9828 = vpop.f32.mrb[0].mxu0
    %v9829 = vpop.f32.mrb[0].mxu0
    %9830 = vdwg.mxu0
    %v9831 = vsel %vm384, %v9826, -inf
    %9832 = vmax.xlane.f32.xlu0 %v9831
    %v9833 = vpop.xlane.xlu0 %9832
    %v9834 = vsub.f32 %v9826, %v9833
    %v9835 = vmul.f32 %v9834, 1.442695
    %v9836 = vpow.pop %v9835
    %v9837 = vsel %vm384, %v9836, 0.0
    %9838 = vadd.xlane.f32.xlu0 %v9837
    %v9839 = vpop.xlane.xlu0 %9838
    %v9840 = vrcp.pop %v9839
    %v9841 = vmul.f32 %v9836, %v9840
    %v9842 = vsub.f32 1.0, %v9741
    %9844 = vset.pattern.permute.xlu0 0
    %9845 = vperm.xlu0 %9844, %v9842
    %v9846 = vpop.permute.xlu0 %9845
    %v9848 = vmul.f32 %v9846, %v9841
    %9850 = vset.pattern.permute.xlu0 0
    %9851 = vperm.xlu0 %9850, %v9741
    %v9852 = vpop.permute.xlu0 %9851
    %9862 = vset.pattern.permute.xlu0 0
    %9863 = vperm.xlu0 %9862, %v9221
    %v9864 = vpop.permute.xlu0 %9863
    %9865 = vset.pattern.permute.xlu0 0
    %9866 = vperm.xlu0 %9865, %v9222
    %v9867 = vpop.permute.xlu0 %9866
    %9868 = vset.pattern.permute.xlu0 0
    %9869 = vperm.xlu0 %9868, %v9223
    %v9870 = vpop.permute.xlu0 %9869
    %9871 = vset.pattern.permute.xlu0 0
    %9872 = vperm.xlu0 %9871, %v9224
    %v9873 = vpop.permute.xlu0 %9872
    %9874 = vset.pattern.permute.xlu0 0
    %9875 = vperm.xlu0 %9874, %v9225
    %v9876 = vpop.permute.xlu0 %9875
    %9877 = vset.pattern.permute.xlu0 0
    %9878 = vperm.xlu0 %9877, %v9226
    %v9879 = vpop.permute.xlu0 %9878
    %9880 = vset.pattern.permute.xlu0 0
    %9881 = vperm.xlu0 %9880, %v9227
    %v9882 = vpop.permute.xlu0 %9881
    %9883 = vset.pattern.permute.xlu0 0
    %9884 = vperm.xlu0 %9883, %v9228
    %v9885 = vpop.permute.xlu0 %9884
    %v9886 = vlaneseq
    %v9887 = vshrl.u32 %v9886, 7
    %v9888 = vsub.s32 %v817, %v9887
    %v9889 = vrot.slane %v9864, %v9888
    %v9890 = vlaneseq
    %v9891 = vshrl.u32 %v9890, 7
    %v9892 = vsub.s32 %v817, %v9891
    %v9893 = vrot.slane %v9867, %v9892
    %v9894 = vlaneseq
    %v9895 = vshrl.u32 %v9894, 7
    %v9896 = vsub.s32 %v817, %v9895
    %v9897 = vrot.slane %v9870, %v9896
    %v9898 = vlaneseq
    %v9899 = vshrl.u32 %v9898, 7
    %v9900 = vsub.s32 %v817, %v9899
    %v9901 = vrot.slane %v9873, %v9900
    %v9902 = vlaneseq
    %v9903 = vshrl.u32 %v9902, 7
    %v9904 = vsub.s32 %v817, %v9903
    %v9905 = vrot.slane %v9876, %v9904
    %v9906 = vlaneseq
    %v9907 = vshrl.u32 %v9906, 7
    %v9908 = vsub.s32 %v817, %v9907
    %v9909 = vrot.slane %v9879, %v9908
    %v9910 = vlaneseq
    %v9911 = vshrl.u32 %v9910, 7
    %v9912 = vsub.s32 %v817, %v9911
    %v9913 = vrot.slane %v9882, %v9912
    %v9914 = vlaneseq
    %v9915 = vshrl.u32 %v9914, 7
    %v9916 = vsub.s32 %v817, %v9915
    %v9917 = vrot.slane %v9885, %v9916
    %v9918 = vsel %vm850, %v9893, %v9889
    %v9919 = vsel %vm852, %v9897, %v9918
    %v9920 = vsel %vm854, %v9901, %v9919
    %v9921 = vsel %vm856, %v9905, %v9920
    %v9922 = vsel %vm858, %v9909, %v9921
    %v9923 = vsel %vm860, %v9913, %v9922
    %v9924 = vsel %vm862, %v9917, %v9923
    %v9926 = vmul.f32 %v9852, %v9924
    %9928 = vrot.lane.b32.xlu0 %v9926, 64
    %v9929 = vpop.permute.xlu0 %9928
    %v9931 = vsel %vm384, %v9848, %v9929
    %v9932 = vsel %vm1867, %v9931, 0.0
    %v9933 = vadd.f32 %v9932, 1e-12
    %v9934 = vlog2.pop %v9933
    %v9935 = vmul.f32 %v9934, 0.6931472
    %v9937 = vcombine.high %v9935, %v9935
    %v9939 = vunpack.c.l.s4 1966171168
    %v9940 = vunpack.c.0.s8 %v9939
    %v9941 = vlaneseq
    %v9942 = vshrl.u32 %v9941, 7
    %v9943 = vsub.s32 %v9940, %v9942
    %v9944 = vrot.slane %v9935, %v9943
    %v9946 = vunpack.c.l.s4 1966171168
    %v9947 = vunpack.c.0.s8 %v9946
    %v9948 = vlaneseq
    %v9949 = vshrl.u32 %v9948, 7
    %v9950 = vsub.s32 %v9947, %v9949
    %v9951 = vrot.slane %v9937, %v9950
    %v9952 = vcombine.high %v9944, %v9944
    %v9953 = vcombine.high %v9951, %v9951
    %v9955 = vunpack.c.l.s4 1966171168
    %v9956 = vunpack.c.0.s8 %v9955
    %v9957 = vlaneseq
    %v9958 = vshrl.u32 %v9957, 7
    %v9959 = vsub.s32 %v9956, %v9958
    %v9960 = vrot.slane %v9944, %v9959
    %v9962 = vunpack.c.l.s4 1966171168
    %v9963 = vunpack.c.0.s8 %v9962
    %v9964 = vlaneseq
    %v9965 = vshrl.u32 %v9964, 7
    %v9966 = vsub.s32 %v9963, %v9965
    %v9967 = vrot.slane %v9951, %v9966
    %v9969 = vunpack.c.l.s4 1966171168
    %v9970 = vunpack.c.0.s8 %v9969
    %v9971 = vlaneseq
    %v9972 = vshrl.u32 %v9971, 7
    %v9973 = vsub.s32 %v9970, %v9972
    %v9974 = vrot.slane %v9952, %v9973
    %v9976 = vunpack.c.l.s4 1966171168
    %v9977 = vunpack.c.0.s8 %v9976
    %v9978 = vlaneseq
    %v9979 = vshrl.u32 %v9978, 7
    %v9980 = vsub.s32 %v9977, %v9979
    %v9981 = vrot.slane %v9953, %v9980
    %v9982 = vcombine.high %v9960, %v9960
    %v9983 = vcombine.high %v9967, %v9967
    %v9984 = vcombine.high %v9974, %v9974
    %v9985 = vcombine.high %v9981, %v9981
    %9994 = vst [vmem:[#allocation29 + $0x6] sm:$0x1] %v9960
    %9995 = vst [vmem:[#allocation29 + $0xe] sm:$0x1] %v9974
    %9996 = vst [vmem:[#allocation29 + $0x16] sm:$0x1] %v9982
    %9997 = vst [vmem:[#allocation29 + $0x1e] sm:$0x1] %v9984
    %9998 = vst [vmem:[#allocation29 + $0x26] sm:$0x1] %v9967
    %9999 = vst [vmem:[#allocation29 + $0x2e] sm:$0x1] %v9981
    %10000 = vst [vmem:[#allocation29 + $0x36] sm:$0x1] %v9983
    %10001 = vst [vmem:[#allocation29 + $0x3e] sm:$0x1] %v9985
    %s10002 = scalar_lea.vmem [#allocation5], 56
    %v10003 = vld [vmem:[%s10002] sm:$0xff]
    %v10004 = vsel %vm357, %v10003, %v9684
    %v10005 = vpack.c.bf16 %v10004, %v10004
    %v10007 = vsel %vm384, %v10005, 0
    %10009 = vmatprep.subr.bf16.mxu0 0
    %10010 = vmatpush1.bf16.msra.mxu0 %v376
    %10011 = vmatprep.subr.bf16.mxu0 0
    %10012 = vmatpush1.bf16.msra.mxu0 %v377
    %10013 = vmatprep.subr.bf16.mxu0 0
    %10014 = vmatpush1.bf16.msra.mxu0 %v378
    %10015 = vmatprep.subr.bf16.mxu0 0
    %10016 = vmatpush1.bf16.msra.mxu0 %v379
    %10017 = vmatprep.subr.bf16.mxu0 0
    %10018 = vmatpush1.bf16.msra.mxu0 0
    %10019 = vmatprep.subr.bf16.mxu0 0
    %10020 = vmatpush1.bf16.msra.mxu0 0
    %10021 = vmatprep.subr.bf16.mxu0 0
    %10022 = vmatpush1.bf16.msra.mxu0 0
    %10023 = vmatprep.subr.bf16.mxu0 0
    %10024 = vmatpush1.bf16.msra.mxu0 0
    %10025 = vmatprep.subr.bf16.mxu0 0
    %10026 = vmatpush1.bf16.msra.mxu0 0
    %10027 = vmatprep.subr.bf16.mxu0 0
    %10028 = vmatpush1.bf16.msra.mxu0 0
    %10029 = vmatprep.subr.bf16.mxu0 0
    %10030 = vmatpush1.bf16.msra.mxu0 0
    %10031 = vmatprep.subr.bf16.mxu0 0
    %10032 = vmatpush1.bf16.msra.mxu0 0
    %10033 = vmatprep.subr.bf16.mxu0 0
    %10034 = vmatpush1.bf16.msra.mxu0 0
    %10035 = vmatprep.subr.bf16.mxu0 0
    %10036 = vmatpush1.bf16.msra.mxu0 0
    %10037 = vmatprep.subr.bf16.mxu0 0
    %10038 = vmatpush1.bf16.msra.mxu0 0
    %10039 = vmatprep.subr.bf16.mxu0 0
    %10040 = vmatpush1.bf16.msra.mxu0 0
    %10041 = vmatprep.mubr.bf16.mxu0 0
    %10042 = vmatmul.mubr.bf16.gmra.mrb[0].mxu0 %v10007
    %v10043 = vpop.f32.mrb[0].mxu0
    %v10044 = vadd.f32 %v297, %v10043
    %v10045 = vpop.f32.mrb[0].mxu0
    %v10046 = vpop.f32.mrb[0].mxu0
    %v10047 = vpop.f32.mrb[0].mxu0
    %10048 = vdwg.mxu0
    %10049 = vmatprep.subr.bf16.mxu0 0
    %10050 = vmatpush1.bf16.msra.mxu0 %v437
    %10051 = vmatprep.subr.bf16.mxu0 0
    %10052 = vmatpush1.bf16.msra.mxu0 %v438
    %10053 = vmatprep.subr.bf16.mxu0 0
    %10054 = vmatpush1.bf16.msra.mxu0 0
    %10055 = vmatprep.subr.bf16.mxu0 0
    %10056 = vmatpush1.bf16.msra.mxu0 0
    %10057 = vmatprep.subr.bf16.mxu0 0
    %10058 = vmatpush1.bf16.msra.mxu0 0
    %10059 = vmatprep.subr.bf16.mxu0 0
    %10060 = vmatpush1.bf16.msra.mxu0 0
    %10061 = vmatprep.subr.bf16.mxu0 0
    %10062 = vmatpush1.bf16.msra.mxu0 0
    %10063 = vmatprep.subr.bf16.mxu0 0
    %10064 = vmatpush1.bf16.msra.mxu0 0
    %10065 = vmatprep.subr.bf16.mxu0 0
    %10066 = vmatpush1.bf16.msra.mxu0 0
    %10067 = vmatprep.subr.bf16.mxu0 0
    %10068 = vmatpush1.bf16.msra.mxu0 0
    %10069 = vmatprep.subr.bf16.mxu0 0
    %10070 = vmatpush1.bf16.msra.mxu0 0
    %10071 = vmatprep.subr.bf16.mxu0 0
    %10072 = vmatpush1.bf16.msra.mxu0 0
    %10073 = vmatprep.subr.bf16.mxu0 0
    %10074 = vmatpush1.bf16.msra.mxu0 0
    %10075 = vmatprep.subr.bf16.mxu0 0
    %10076 = vmatpush1.bf16.msra.mxu0 0
    %10077 = vmatprep.subr.bf16.mxu0 0
    %10078 = vmatpush1.bf16.msra.mxu0 0
    %10079 = vmatprep.subr.bf16.mxu0 0
    %10080 = vmatpush1.bf16.msra.mxu0 0
    %10081 = vmatprep.mubr.bf16.mxu0 0
    %10082 = vmatmul.mubr.bf16.gmra.mrb[0].mxu0 %v8776
    %v10083 = vpop.f32.mrb[0].mxu0
    %v10084 = vadd.f32 %v304, %v10083
    %v10085 = vpop.f32.mrb[0].mxu0
    %v10086 = vpop.f32.mrb[0].mxu0
    %v10087 = vpop.f32.mrb[0].mxu0
    %10088 = vdwg.mxu0
    %v10089 = vadd.f32 %v10044, %v10084
    %v10090 = vxor.u32 %v10089, 2147483648
    %v10091 = vmul.f32 %v10090, 1.442695
    %v10092 = vpow.pop %v10091
    %v10093 = vadd.f32 %v10092, 1.0
    %v10094 = vrcp.pop %v10093
    %v10095 = vmul.f32 1.0, %v10094
    %10097 = vrot.lane.b32.xlu0 %v10084, 64
    %v10098 = vpop.permute.xlu0 %10097
    %v10100 = vmul.f32 %v10095, %v10098
    %10102 = vrot.lane.b32.xlu0 %v10100, 64
    %v10103 = vpop.permute.xlu0 %10102
    %v10105 = vadd.f32 %v10044, %v10103
    %v10106 = vtanh.pop %v10105
    %v10107 = vsub.f32 1.0, %v10095
    %10109 = vrot.lane.b32.xlu0 %v10106, 96
    %v10110 = vpop.permute.xlu0 %10109
    %v10112 = vmul.f32 %v10107, %v10110
    %v10113 = vmul.f32 %v10095, %v8770
    %v10114 = vadd.f32 %v10112, %v10113
    %v10115 = vpack.c.bf16 %v10114, %v10114
    %10117 = vrot.lane.b32.xlu0 %v10115, 96
    %v10118 = vpop.permute.xlu0 %10117
    %v10120 = vsel %vm357, %v10118, 0
    %10122 = vmatprep.subr.bf16.mxu0 0
    %10123 = vmatpush1.bf16.msra.mxu0 %v526
    %10124 = vmatprep.subr.bf16.mxu0 0
    %10125 = vmatpush1.bf16.msra.mxu0 %v527
    %10126 = vmatprep.subr.bf16.mxu0 0
    %10127 = vmatpush1.bf16.msra.mxu0 0
    %10128 = vmatprep.subr.bf16.mxu0 0
    %10129 = vmatpush1.bf16.msra.mxu0 0
    %10130 = vmatprep.subr.bf16.mxu0 0
    %10131 = vmatpush1.bf16.msra.mxu0 0
    %10132 = vmatprep.subr.bf16.mxu0 0
    %10133 = vmatpush1.bf16.msra.mxu0 0
    %10134 = vmatprep.subr.bf16.mxu0 0
    %10135 = vmatpush1.bf16.msra.mxu0 0
    %10136 = vmatprep.subr.bf16.mxu0 0
    %10137 = vmatpush1.bf16.msra.mxu0 0
    %10138 = vmatprep.subr.bf16.mxu0 0
    %10139 = vmatpush1.bf16.msra.mxu0 0
    %10140 = vmatprep.subr.bf16.mxu0 0
    %10141 = vmatpush1.bf16.msra.mxu0 0
    %10142 = vmatprep.subr.bf16.mxu0 0
    %10143 = vmatpush1.bf16.msra.mxu0 0
    %10144 = vmatprep.subr.bf16.mxu0 0
    %10145 = vmatpush1.bf16.msra.mxu0 0
    %10146 = vmatprep.subr.bf16.mxu0 0
    %10147 = vmatpush1.bf16.msra.mxu0 0
    %10148 = vmatprep.subr.bf16.mxu0 0
    %10149 = vmatpush1.bf16.msra.mxu0 0
    %10150 = vmatprep.subr.bf16.mxu0 0
    %10151 = vmatpush1.bf16.msra.mxu0 0
    %10152 = vmatprep.subr.bf16.mxu0 0
    %10153 = vmatpush1.bf16.msra.mxu0 0
    %10154 = vmatprep.mubr.bf16.mxu0 0
    %10155 = vmatmul.mubr.bf16.gmra.mrb[0].mxu0 %v10120
    %v10156 = vpop.f32.mrb[0].mxu0
    %v10157 = vadd.f32 0.0, %v10156
    %v10158 = vpop.f32.mrb[0].mxu0
    %v10159 = vpop.f32.mrb[0].mxu0
    %v10160 = vpop.f32.mrb[0].mxu0
    %10161 = vdwg.mxu0
    %v10163 = vcombine.high %v10157, %v10157
    %v10165 = vunpack.c.l.s4 1966171168
    %v10166 = vunpack.c.0.s8 %v10165
    %v10167 = vlaneseq
    %v10168 = vshrl.u32 %v10167, 7
    %v10169 = vsub.s32 %v10166, %v10168
    %v10170 = vrot.slane %v10157, %v10169
    %v10172 = vunpack.c.l.s4 1966171168
    %v10173 = vunpack.c.0.s8 %v10172
    %v10174 = vlaneseq
    %v10175 = vshrl.u32 %v10174, 7
    %v10176 = vsub.s32 %v10173, %v10175
    %v10177 = vrot.slane %v10163, %v10176
    %v10178 = vcombine.high %v10170, %v10170
    %v10179 = vcombine.high %v10177, %v10177
    %v10181 = vunpack.c.l.s4 1966171168
    %v10182 = vunpack.c.0.s8 %v10181
    %v10183 = vlaneseq
    %v10184 = vshrl.u32 %v10183, 7
    %v10185 = vsub.s32 %v10182, %v10184
    %v10186 = vrot.slane %v10170, %v10185
    %v10188 = vunpack.c.l.s4 1966171168
    %v10189 = vunpack.c.0.s8 %v10188
    %v10190 = vlaneseq
    %v10191 = vshrl.u32 %v10190, 7
    %v10192 = vsub.s32 %v10189, %v10191
    %v10193 = vrot.slane %v10177, %v10192
    %v10195 = vunpack.c.l.s4 1966171168
    %v10196 = vunpack.c.0.s8 %v10195
    %v10197 = vlaneseq
    %v10198 = vshrl.u32 %v10197, 7
    %v10199 = vsub.s32 %v10196, %v10198
    %v10200 = vrot.slane %v10178, %v10199
    %v10202 = vunpack.c.l.s4 1966171168
    %v10203 = vunpack.c.0.s8 %v10202
    %v10204 = vlaneseq
    %v10205 = vshrl.u32 %v10204, 7
    %v10206 = vsub.s32 %v10203, %v10205
    %v10207 = vrot.slane %v10179, %v10206
    %v10208 = vcombine.high %v10186, %v10186
    %v10209 = vcombine.high %v10193, %v10193
    %v10210 = vcombine.high %v10200, %v10200
    %v10211 = vcombine.high %v10207, %v10207
    %v10212 = vlaneseq
    %v10213 = vshrl.u32 %v10212, 7
    %v10214 = vsub.s32 0, %v10213
    %v10215 = vrot.slane %v10186, %v10214
    %v10216 = vlaneseq
    %v10217 = vshrl.u32 %v10216, 7
    %v10218 = vsub.s32 0, %v10217
    %v10219 = vrot.slane %v10200, %v10218
    %v10220 = vlaneseq
    %v10221 = vshrl.u32 %v10220, 7
    %v10222 = vsub.s32 0, %v10221
    %v10223 = vrot.slane %v10208, %v10222
    %v10224 = vlaneseq
    %v10225 = vshrl.u32 %v10224, 7
    %v10226 = vsub.s32 0, %v10225
    %v10227 = vrot.slane %v10210, %v10226
    %v10228 = vlaneseq
    %v10229 = vshrl.u32 %v10228, 7
    %v10230 = vsub.s32 0, %v10229
    %v10231 = vrot.slane %v10193, %v10230
    %v10232 = vlaneseq
    %v10233 = vshrl.u32 %v10232, 7
    %v10234 = vsub.s32 0, %v10233
    %v10235 = vrot.slane %v10207, %v10234
    %v10236 = vlaneseq
    %v10237 = vshrl.u32 %v10236, 7
    %v10238 = vsub.s32 0, %v10237
    %v10239 = vrot.slane %v10209, %v10238
    %v10240 = vlaneseq
    %v10241 = vshrl.u32 %v10240, 7
    %v10242 = vsub.s32 0, %v10241
    %v10243 = vrot.slane %v10211, %v10242
    %v10252 = vadd.f32 %v264, %v10215
    %v10253 = vadd.f32 %v265, %v10219
    %v10254 = vadd.f32 %v266, %v10223
    %v10255 = vadd.f32 %v267, %v10227
    %v10256 = vadd.f32 %v268, %v10231
    %v10257 = vadd.f32 %v269, %v10235
    %v10258 = vadd.f32 %v270, %v10239
    %v10259 = vadd.f32 %v271, %v10243
    %v10260 = vtanh.pop %v10252
    %v10261 = vtanh.pop %v10253
    %v10262 = vtanh.pop %v10254
    %v10263 = vtanh.pop %v10255
    %v10264 = vtanh.pop %v10256
    %v10265 = vtanh.pop %v10257
    %v10266 = vtanh.pop %v10258
    %v10267 = vtanh.pop %v10259
    %v10268 = vmul.f32 %v10260, %v278
    %v10269 = vmul.f32 %v10261, %v278
    %v10270 = vmul.f32 %v10262, %v278
    %v10271 = vmul.f32 %v10263, %v278
    %v10272 = vmul.f32 %v10264, %v278
    %v10273 = vmul.f32 %v10265, %v278
    %v10274 = vmul.f32 %v10266, %v278
    %v10275 = vmul.f32 %v10267, %v278
    %v10276 = vsel %vm357, %v10268, 0.0
    %10277 = vadd.xlane.f32.xlu0 %v10276
    %v10278 = vpop.xlane.xlu0 %10277
    %v10279 = vsel %vm357, %v10269, 0.0
    %10280 = vadd.xlane.f32.xlu0 %v10279
    %v10281 = vpop.xlane.xlu0 %10280
    %v10282 = vsel %vm357, %v10270, 0.0
    %10283 = vadd.xlane.f32.xlu0 %v10282
    %v10284 = vpop.xlane.xlu0 %10283
    %v10285 = vsel %vm357, %v10271, 0.0
    %10286 = vadd.xlane.f32.xlu0 %v10285
    %v10287 = vpop.xlane.xlu0 %10286
    %v10288 = vsel %vm357, %v10272, 0.0
    %10289 = vadd.xlane.f32.xlu0 %v10288
    %v10290 = vpop.xlane.xlu0 %10289
    %v10291 = vsel %vm357, %v10273, 0.0
    %10292 = vadd.xlane.f32.xlu0 %v10291
    %v10293 = vpop.xlane.xlu0 %10292
    %v10294 = vsel %vm357, %v10274, 0.0
    %10295 = vadd.xlane.f32.xlu0 %v10294
    %v10296 = vpop.xlane.xlu0 %10295
    %v10297 = vsel %vm357, %v10275, 0.0
    %10298 = vadd.xlane.f32.xlu0 %v10297
    %v10299 = vpop.xlane.xlu0 %10298
    %v10300 = vadd.f32 %v10278, %v718
    %v10301 = vadd.f32 %v10281, %v725
    %v10302 = vadd.f32 %v10284, %v732
    %v10303 = vadd.f32 %v10287, %v739
    %v10304 = vadd.f32 %v10290, %v746
    %v10305 = vadd.f32 %v10293, %v753
    %v10306 = vadd.f32 %v10296, %v760
    %v10307 = vadd.f32 %v10299, %v767
    %10316 = vset.pattern.permute.xlu0 0
    %10317 = vperm.xlu0 %10316, %v10300
    %v10318 = vpop.permute.xlu0 %10317
    %10319 = vset.pattern.permute.xlu0 0
    %10320 = vperm.xlu0 %10319, %v10301
    %v10321 = vpop.permute.xlu0 %10320
    %10322 = vset.pattern.permute.xlu0 0
    %10323 = vperm.xlu0 %10322, %v10302
    %v10324 = vpop.permute.xlu0 %10323
    %10325 = vset.pattern.permute.xlu0 0
    %10326 = vperm.xlu0 %10325, %v10303
    %v10327 = vpop.permute.xlu0 %10326
    %10328 = vset.pattern.permute.xlu0 0
    %10329 = vperm.xlu0 %10328, %v10304
    %v10330 = vpop.permute.xlu0 %10329
    %10331 = vset.pattern.permute.xlu0 0
    %10332 = vperm.xlu0 %10331, %v10305
    %v10333 = vpop.permute.xlu0 %10332
    %10334 = vset.pattern.permute.xlu0 0
    %10335 = vperm.xlu0 %10334, %v10306
    %v10336 = vpop.permute.xlu0 %10335
    %10337 = vset.pattern.permute.xlu0 0
    %10338 = vperm.xlu0 %10337, %v10307
    %v10339 = vpop.permute.xlu0 %10338
    %v10340 = vlaneseq
    %v10341 = vshrl.u32 %v10340, 7
    %v10342 = vsub.s32 %v817, %v10341
    %v10343 = vrot.slane %v10318, %v10342
    %v10344 = vlaneseq
    %v10345 = vshrl.u32 %v10344, 7
    %v10346 = vsub.s32 %v817, %v10345
    %v10347 = vrot.slane %v10321, %v10346
    %v10348 = vlaneseq
    %v10349 = vshrl.u32 %v10348, 7
    %v10350 = vsub.s32 %v817, %v10349
    %v10351 = vrot.slane %v10324, %v10350
    %v10352 = vlaneseq
    %v10353 = vshrl.u32 %v10352, 7
    %v10354 = vsub.s32 %v817, %v10353
    %v10355 = vrot.slane %v10327, %v10354
    %v10356 = vlaneseq
    %v10357 = vshrl.u32 %v10356, 7
    %v10358 = vsub.s32 %v817, %v10357
    %v10359 = vrot.slane %v10330, %v10358
    %v10360 = vlaneseq
    %v10361 = vshrl.u32 %v10360, 7
    %v10362 = vsub.s32 %v817, %v10361
    %v10363 = vrot.slane %v10333, %v10362
    %v10364 = vlaneseq
    %v10365 = vshrl.u32 %v10364, 7
    %v10366 = vsub.s32 %v817, %v10365
    %v10367 = vrot.slane %v10336, %v10366
    %v10368 = vlaneseq
    %v10369 = vshrl.u32 %v10368, 7
    %v10370 = vsub.s32 %v817, %v10369
    %v10371 = vrot.slane %v10339, %v10370
    %v10372 = vsel %vm850, %v10347, %v10343
    %v10373 = vsel %vm852, %v10351, %v10372
    %v10374 = vsel %vm854, %v10355, %v10373
    %v10375 = vsel %vm856, %v10359, %v10374
    %v10376 = vsel %vm858, %v10363, %v10375
    %v10377 = vsel %vm860, %v10367, %v10376
    %v10378 = vsel %vm862, %v10371, %v10377
    %v10380 = vsel %vm865, %v10378, -inf
    %10381 = vmax.xlane.f32.xlu0 %v10380
    %v10382 = vpop.xlane.xlu0 %10381
    %v10384 = vlaneseq
    %v10385 = vshrl.u32 %v10384, 7
    %v10386 = vsub.s32 0, %v10385
    %v10387 = vrot.slane %v10382, %v10386
    %v10388 = vlaneseq
    %v10389 = vshrl.u32 %v10388, 7
    %v10390 = vsub.s32 1, %v10389
    %v10391 = vrot.slane %v10382, %v10390
    %v10392 = vlaneseq
    %v10393 = vshrl.u32 %v10392, 7
    %v10394 = vsub.s32 2, %v10393
    %v10395 = vrot.slane %v10382, %v10394
    %v10396 = vlaneseq
    %v10397 = vshrl.u32 %v10396, 7
    %v10398 = vsub.s32 3, %v10397
    %v10399 = vrot.slane %v10382, %v10398
    %v10400 = vlaneseq
    %v10401 = vshrl.u32 %v10400, 7
    %v10402 = vsub.s32 4, %v10401
    %v10403 = vrot.slane %v10382, %v10402
    %v10404 = vlaneseq
    %v10405 = vshrl.u32 %v10404, 7
    %v10406 = vsub.s32 5, %v10405
    %v10407 = vrot.slane %v10382, %v10406
    %v10408 = vlaneseq
    %v10409 = vshrl.u32 %v10408, 7
    %v10410 = vsub.s32 6, %v10409
    %v10411 = vrot.slane %v10382, %v10410
    %v10412 = vlaneseq
    %v10413 = vshrl.u32 %v10412, 7
    %v10414 = vsub.s32 7, %v10413
    %v10415 = vrot.slane %v10382, %v10414
    %v10424 = vsub.f32 %v10300, %v10387
    %v10425 = vsub.f32 %v10301, %v10391
    %v10426 = vsub.f32 %v10302, %v10395
    %v10427 = vsub.f32 %v10303, %v10399
    %v10428 = vsub.f32 %v10304, %v10403
    %v10429 = vsub.f32 %v10305, %v10407
    %v10430 = vsub.f32 %v10306, %v10411
    %v10431 = vsub.f32 %v10307, %v10415
    %v10432 = vmul.f32 %v10424, 1.442695
    %v10433 = vpow.pop %v10432
    %v10434 = vmul.f32 %v10425, 1.442695
    %v10435 = vpow.pop %v10434
    %v10436 = vmul.f32 %v10426, 1.442695
    %v10437 = vpow.pop %v10436
    %v10438 = vmul.f32 %v10427, 1.442695
    %v10439 = vpow.pop %v10438
    %v10440 = vmul.f32 %v10428, 1.442695
    %v10441 = vpow.pop %v10440
    %v10442 = vmul.f32 %v10429, 1.442695
    %v10443 = vpow.pop %v10442
    %v10444 = vmul.f32 %v10430, 1.442695
    %v10445 = vpow.pop %v10444
    %v10446 = vmul.f32 %v10431, 1.442695
    %v10447 = vpow.pop %v10446
    %10456 = vset.pattern.permute.xlu0 0
    %10457 = vperm.xlu0 %10456, %v10433
    %v10458 = vpop.permute.xlu0 %10457
    %10459 = vset.pattern.permute.xlu0 0
    %10460 = vperm.xlu0 %10459, %v10435
    %v10461 = vpop.permute.xlu0 %10460
    %10462 = vset.pattern.permute.xlu0 0
    %10463 = vperm.xlu0 %10462, %v10437
    %v10464 = vpop.permute.xlu0 %10463
    %10465 = vset.pattern.permute.xlu0 0
    %10466 = vperm.xlu0 %10465, %v10439
    %v10467 = vpop.permute.xlu0 %10466
    %10468 = vset.pattern.permute.xlu0 0
    %10469 = vperm.xlu0 %10468, %v10441
    %v10470 = vpop.permute.xlu0 %10469
    %10471 = vset.pattern.permute.xlu0 0
    %10472 = vperm.xlu0 %10471, %v10443
    %v10473 = vpop.permute.xlu0 %10472
    %10474 = vset.pattern.permute.xlu0 0
    %10475 = vperm.xlu0 %10474, %v10445
    %v10476 = vpop.permute.xlu0 %10475
    %10477 = vset.pattern.permute.xlu0 0
    %10478 = vperm.xlu0 %10477, %v10447
    %v10479 = vpop.permute.xlu0 %10478
    %v10480 = vlaneseq
    %v10481 = vshrl.u32 %v10480, 7
    %v10482 = vsub.s32 %v817, %v10481
    %v10483 = vrot.slane %v10458, %v10482
    %v10484 = vlaneseq
    %v10485 = vshrl.u32 %v10484, 7
    %v10486 = vsub.s32 %v817, %v10485
    %v10487 = vrot.slane %v10461, %v10486
    %v10488 = vlaneseq
    %v10489 = vshrl.u32 %v10488, 7
    %v10490 = vsub.s32 %v817, %v10489
    %v10491 = vrot.slane %v10464, %v10490
    %v10492 = vlaneseq
    %v10493 = vshrl.u32 %v10492, 7
    %v10494 = vsub.s32 %v817, %v10493
    %v10495 = vrot.slane %v10467, %v10494
    %v10496 = vlaneseq
    %v10497 = vshrl.u32 %v10496, 7
    %v10498 = vsub.s32 %v817, %v10497
    %v10499 = vrot.slane %v10470, %v10498
    %v10500 = vlaneseq
    %v10501 = vshrl.u32 %v10500, 7
    %v10502 = vsub.s32 %v817, %v10501
    %v10503 = vrot.slane %v10473, %v10502
    %v10504 = vlaneseq
    %v10505 = vshrl.u32 %v10504, 7
    %v10506 = vsub.s32 %v817, %v10505
    %v10507 = vrot.slane %v10476, %v10506
    %v10508 = vlaneseq
    %v10509 = vshrl.u32 %v10508, 7
    %v10510 = vsub.s32 %v817, %v10509
    %v10511 = vrot.slane %v10479, %v10510
    %v10512 = vsel %vm850, %v10487, %v10483
    %v10513 = vsel %vm852, %v10491, %v10512
    %v10514 = vsel %vm854, %v10495, %v10513
    %v10515 = vsel %vm856, %v10499, %v10514
    %v10516 = vsel %vm858, %v10503, %v10515
    %v10517 = vsel %vm860, %v10507, %v10516
    %v10518 = vsel %vm862, %v10511, %v10517
    %v10520 = vsel %vm865, %v10518, 0.0
    %10521 = vadd.xlane.f32.xlu0 %v10520
    %v10522 = vpop.xlane.xlu0 %10521
    %v10523 = vrcp.pop %v10522
    %v10525 = vlaneseq
    %v10526 = vshrl.u32 %v10525, 7
    %v10527 = vsub.s32 0, %v10526
    %v10528 = vrot.slane %v10523, %v10527
    %v10529 = vlaneseq
    %v10530 = vshrl.u32 %v10529, 7
    %v10531 = vsub.s32 1, %v10530
    %v10532 = vrot.slane %v10523, %v10531
    %v10533 = vlaneseq
    %v10534 = vshrl.u32 %v10533, 7
    %v10535 = vsub.s32 2, %v10534
    %v10536 = vrot.slane %v10523, %v10535
    %v10537 = vlaneseq
    %v10538 = vshrl.u32 %v10537, 7
    %v10539 = vsub.s32 3, %v10538
    %v10540 = vrot.slane %v10523, %v10539
    %v10541 = vlaneseq
    %v10542 = vshrl.u32 %v10541, 7
    %v10543 = vsub.s32 4, %v10542
    %v10544 = vrot.slane %v10523, %v10543
    %v10545 = vlaneseq
    %v10546 = vshrl.u32 %v10545, 7
    %v10547 = vsub.s32 5, %v10546
    %v10548 = vrot.slane %v10523, %v10547
    %v10549 = vlaneseq
    %v10550 = vshrl.u32 %v10549, 7
    %v10551 = vsub.s32 6, %v10550
    %v10552 = vrot.slane %v10523, %v10551
    %v10553 = vlaneseq
    %v10554 = vshrl.u32 %v10553, 7
    %v10555 = vsub.s32 7, %v10554
    %v10556 = vrot.slane %v10523, %v10555
    %v10565 = vmul.f32 %v10433, %v10528
    %v10566 = vmul.f32 %v10435, %v10532
    %v10567 = vmul.f32 %v10437, %v10536
    %v10568 = vmul.f32 %v10439, %v10540
    %v10569 = vmul.f32 %v10441, %v10544
    %v10570 = vmul.f32 %v10443, %v10548
    %v10571 = vmul.f32 %v10445, %v10552
    %v10572 = vmul.f32 %v10447, %v10556
    %v10573 = vpack.c.bf16 %v10565, %v10565
    %v10574 = vpack.c.bf16 %v10566, %v10566
    %v10575 = vpack.c.bf16 %v10567, %v10567
    %v10576 = vpack.c.bf16 %v10568, %v10568
    %v10577 = vpack.c.bf16 %v10569, %v10569
    %v10578 = vpack.c.bf16 %v10570, %v10570
    %v10579 = vpack.c.bf16 %v10571, %v10571
    %v10580 = vpack.c.bf16 %v10572, %v10572
    %v10582 = vunpack.c.l.b16 %v10573
    %10583 = vset.pattern.permute.xlu0 0
    %10584 = vperm.xlu0 %10583, %v10582
    %v10585 = vpop.permute.xlu0 %10584
    %v10586 = vlaneseq
    %v10587 = vshrl.u32 %v10586, 7
    %v10588 = vsub.s32 %v817, %v10587
    %v10589 = vrot.slane %v10585, %v10588
    %v10590 = vpack.c.b16 %v10589, %v10589
    %v10592 = vsel %vm865, %v10590, 0
    %10594 = vmatprep.subr.bf16.mxu0 0
    %10595 = vmatpush1.bf16.msra.mxu0 %v1082
    %10596 = vmatprep.subr.bf16.mxu0 0
    %10597 = vmatpush1.bf16.msra.mxu0 0
    %10598 = vmatprep.subr.bf16.mxu0 0
    %10599 = vmatpush1.bf16.msra.mxu0 0
    %10600 = vmatprep.subr.bf16.mxu0 0
    %10601 = vmatpush1.bf16.msra.mxu0 0
    %10602 = vmatprep.subr.bf16.mxu0 0
    %10603 = vmatpush1.bf16.msra.mxu0 0
    %10604 = vmatprep.subr.bf16.mxu0 0
    %10605 = vmatpush1.bf16.msra.mxu0 0
    %10606 = vmatprep.subr.bf16.mxu0 0
    %10607 = vmatpush1.bf16.msra.mxu0 0
    %10608 = vmatprep.subr.bf16.mxu0 0
    %10609 = vmatpush1.bf16.msra.mxu0 0
    %10610 = vmatprep.subr.bf16.mxu0 0
    %10611 = vmatpush1.bf16.msra.mxu0 0
    %10612 = vmatprep.subr.bf16.mxu0 0
    %10613 = vmatpush1.bf16.msra.mxu0 0
    %10614 = vmatprep.subr.bf16.mxu0 0
    %10615 = vmatpush1.bf16.msra.mxu0 0
    %10616 = vmatprep.subr.bf16.mxu0 0
    %10617 = vmatpush1.bf16.msra.mxu0 0
    %10618 = vmatprep.subr.bf16.mxu0 0
    %10619 = vmatpush1.bf16.msra.mxu0 0
    %10620 = vmatprep.subr.bf16.mxu0 0
    %10621 = vmatpush1.bf16.msra.mxu0 0
    %10622 = vmatprep.subr.bf16.mxu0 0
    %10623 = vmatpush1.bf16.msra.mxu0 0
    %10624 = vmatprep.subr.bf16.mxu0 0
    %10625 = vmatpush1.bf16.msra.mxu0 0
    %10626 = vmatprep.mubr.bf16.mxu0 0
    %10627 = vmatmul.mubr.bf16.gmra.mrb[0].mxu0 %v10592
    %v10628 = vpop.f32.mrb[0].mxu0
    %v10629 = vadd.f32 0.0, %v10628
    %v10630 = vpop.f32.mrb[0].mxu0
    %v10631 = vpop.f32.mrb[0].mxu0
    %v10632 = vpop.f32.mrb[0].mxu0
    %10633 = vdwg.mxu0
    %v10635 = vunpack.c.l.b16 %v10574
    %10636 = vset.pattern.permute.xlu0 0
    %10637 = vperm.xlu0 %10636, %v10635
    %v10638 = vpop.permute.xlu0 %10637
    %v10639 = vlaneseq
    %v10640 = vshrl.u32 %v10639, 7
    %v10641 = vsub.s32 %v817, %v10640
    %v10642 = vrot.slane %v10638, %v10641
    %v10643 = vpack.c.b16 %v10642, %v10642
    %v10645 = vsel %vm865, %v10643, 0
    %10647 = vmatprep.subr.bf16.mxu0 0
    %10648 = vmatpush1.bf16.msra.mxu0 %v1138
    %10649 = vmatprep.subr.bf16.mxu0 0
    %10650 = vmatpush1.bf16.msra.mxu0 0
    %10651 = vmatprep.subr.bf16.mxu0 0
    %10652 = vmatpush1.bf16.msra.mxu0 0
    %10653 = vmatprep.subr.bf16.mxu0 0
    %10654 = vmatpush1.bf16.msra.mxu0 0
    %10655 = vmatprep.subr.bf16.mxu0 0
    %10656 = vmatpush1.bf16.msra.mxu0 0
    %10657 = vmatprep.subr.bf16.mxu0 0
    %10658 = vmatpush1.bf16.msra.mxu0 0
    %10659 = vmatprep.subr.bf16.mxu0 0
    %10660 = vmatpush1.bf16.msra.mxu0 0
    %10661 = vmatprep.subr.bf16.mxu0 0
    %10662 = vmatpush1.bf16.msra.mxu0 0
    %10663 = vmatprep.subr.bf16.mxu0 0
    %10664 = vmatpush1.bf16.msra.mxu0 0
    %10665 = vmatprep.subr.bf16.mxu0 0
    %10666 = vmatpush1.bf16.msra.mxu0 0
    %10667 = vmatprep.subr.bf16.mxu0 0
    %10668 = vmatpush1.bf16.msra.mxu0 0
    %10669 = vmatprep.subr.bf16.mxu0 0
    %10670 = vmatpush1.bf16.msra.mxu0 0
    %10671 = vmatprep.subr.bf16.mxu0 0
    %10672 = vmatpush1.bf16.msra.mxu0 0
    %10673 = vmatprep.subr.bf16.mxu0 0
    %10674 = vmatpush1.bf16.msra.mxu0 0
    %10675 = vmatprep.subr.bf16.mxu0 0
    %10676 = vmatpush1.bf16.msra.mxu0 0
    %10677 = vmatprep.subr.bf16.mxu0 0
    %10678 = vmatpush1.bf16.msra.mxu0 0
    %10679 = vmatprep.mubr.bf16.mxu0 0
    %10680 = vmatmul.mubr.bf16.gmra.mrb[0].mxu0 %v10645
    %v10681 = vpop.f32.mrb[0].mxu0
    %v10682 = vadd.f32 0.0, %v10681
    %v10683 = vpop.f32.mrb[0].mxu0
    %v10684 = vpop.f32.mrb[0].mxu0
    %v10685 = vpop.f32.mrb[0].mxu0
    %10686 = vdwg.mxu0
    %v10688 = vunpack.c.l.b16 %v10575
    %10689 = vset.pattern.permute.xlu0 0
    %10690 = vperm.xlu0 %10689, %v10688
    %v10691 = vpop.permute.xlu0 %10690
    %v10692 = vlaneseq
    %v10693 = vshrl.u32 %v10692, 7
    %v10694 = vsub.s32 %v817, %v10693
    %v10695 = vrot.slane %v10691, %v10694
    %v10696 = vpack.c.b16 %v10695, %v10695
    %v10698 = vsel %vm865, %v10696, 0
    %10700 = vmatprep.subr.bf16.mxu0 0
    %10701 = vmatpush1.bf16.msra.mxu0 %v1194
    %10702 = vmatprep.subr.bf16.mxu0 0
    %10703 = vmatpush1.bf16.msra.mxu0 0
    %10704 = vmatprep.subr.bf16.mxu0 0
    %10705 = vmatpush1.bf16.msra.mxu0 0
    %10706 = vmatprep.subr.bf16.mxu0 0
    %10707 = vmatpush1.bf16.msra.mxu0 0
    %10708 = vmatprep.subr.bf16.mxu0 0
    %10709 = vmatpush1.bf16.msra.mxu0 0
    %10710 = vmatprep.subr.bf16.mxu0 0
    %10711 = vmatpush1.bf16.msra.mxu0 0
    %10712 = vmatprep.subr.bf16.mxu0 0
    %10713 = vmatpush1.bf16.msra.mxu0 0
    %10714 = vmatprep.subr.bf16.mxu0 0
    %10715 = vmatpush1.bf16.msra.mxu0 0
    %10716 = vmatprep.subr.bf16.mxu0 0
    %10717 = vmatpush1.bf16.msra.mxu0 0
    %10718 = vmatprep.subr.bf16.mxu0 0
    %10719 = vmatpush1.bf16.msra.mxu0 0
    %10720 = vmatprep.subr.bf16.mxu0 0
    %10721 = vmatpush1.bf16.msra.mxu0 0
    %10722 = vmatprep.subr.bf16.mxu0 0
    %10723 = vmatpush1.bf16.msra.mxu0 0
    %10724 = vmatprep.subr.bf16.mxu0 0
    %10725 = vmatpush1.bf16.msra.mxu0 0
    %10726 = vmatprep.subr.bf16.mxu0 0
    %10727 = vmatpush1.bf16.msra.mxu0 0
    %10728 = vmatprep.subr.bf16.mxu0 0
    %10729 = vmatpush1.bf16.msra.mxu0 0
    %10730 = vmatprep.subr.bf16.mxu0 0
    %10731 = vmatpush1.bf16.msra.mxu0 0
    %10732 = vmatprep.mubr.bf16.mxu0 0
    %10733 = vmatmul.mubr.bf16.gmra.mrb[0].mxu0 %v10698
    %v10734 = vpop.f32.mrb[0].mxu0
    %v10735 = vadd.f32 0.0, %v10734
    %v10736 = vpop.f32.mrb[0].mxu0
    %v10737 = vpop.f32.mrb[0].mxu0
    %v10738 = vpop.f32.mrb[0].mxu0
    %10739 = vdwg.mxu0
    %v10741 = vunpack.c.l.b16 %v10576
    %10742 = vset.pattern.permute.xlu0 0
    %10743 = vperm.xlu0 %10742, %v10741
    %v10744 = vpop.permute.xlu0 %10743
    %v10745 = vlaneseq
    %v10746 = vshrl.u32 %v10745, 7
    %v10747 = vsub.s32 %v817, %v10746
    %v10748 = vrot.slane %v10744, %v10747
    %v10749 = vpack.c.b16 %v10748, %v10748
    %v10751 = vsel %vm865, %v10749, 0
    %10753 = vmatprep.subr.bf16.mxu0 0
    %10754 = vmatpush1.bf16.msra.mxu0 %v1250
    %10755 = vmatprep.subr.bf16.mxu0 0
    %10756 = vmatpush1.bf16.msra.mxu0 0
    %10757 = vmatprep.subr.bf16.mxu0 0
    %10758 = vmatpush1.bf16.msra.mxu0 0
    %10759 = vmatprep.subr.bf16.mxu0 0
    %10760 = vmatpush1.bf16.msra.mxu0 0
    %10761 = vmatprep.subr.bf16.mxu0 0
    %10762 = vmatpush1.bf16.msra.mxu0 0
    %10763 = vmatprep.subr.bf16.mxu0 0
    %10764 = vmatpush1.bf16.msra.mxu0 0
    %10765 = vmatprep.subr.bf16.mxu0 0
    %10766 = vmatpush1.bf16.msra.mxu0 0
    %10767 = vmatprep.subr.bf16.mxu0 0
    %10768 = vmatpush1.bf16.msra.mxu0 0
    %10769 = vmatprep.subr.bf16.mxu0 0
    %10770 = vmatpush1.bf16.msra.mxu0 0
    %10771 = vmatprep.subr.bf16.mxu0 0
    %10772 = vmatpush1.bf16.msra.mxu0 0
    %10773 = vmatprep.subr.bf16.mxu0 0
    %10774 = vmatpush1.bf16.msra.mxu0 0
    %10775 = vmatprep.subr.bf16.mxu0 0
    %10776 = vmatpush1.bf16.msra.mxu0 0
    %10777 = vmatprep.subr.bf16.mxu0 0
    %10778 = vmatpush1.bf16.msra.mxu0 0
    %10779 = vmatprep.subr.bf16.mxu0 0
    %10780 = vmatpush1.bf16.msra.mxu0 0
    %10781 = vmatprep.subr.bf16.mxu0 0
    %10782 = vmatpush1.bf16.msra.mxu0 0
    %10783 = vmatprep.subr.bf16.mxu0 0
    %10784 = vmatpush1.bf16.msra.mxu0 0
    %10785 = vmatprep.mubr.bf16.mxu0 0
    %10786 = vmatmul.mubr.bf16.gmra.mrb[0].mxu0 %v10751
    %v10787 = vpop.f32.mrb[0].mxu0
    %v10788 = vadd.f32 0.0, %v10787
    %v10789 = vpop.f32.mrb[0].mxu0
    %v10790 = vpop.f32.mrb[0].mxu0
    %v10791 = vpop.f32.mrb[0].mxu0
    %10792 = vdwg.mxu0
    %v10794 = vunpack.c.l.b16 %v10577
    %10795 = vset.pattern.permute.xlu0 0
    %10796 = vperm.xlu0 %10795, %v10794
    %v10797 = vpop.permute.xlu0 %10796
    %v10798 = vlaneseq
    %v10799 = vshrl.u32 %v10798, 7
    %v10800 = vsub.s32 %v817, %v10799
    %v10801 = vrot.slane %v10797, %v10800
    %v10802 = vpack.c.b16 %v10801, %v10801
    %v10804 = vsel %vm865, %v10802, 0
    %10806 = vmatprep.subr.bf16.mxu0 0
    %10807 = vmatpush1.bf16.msra.mxu0 %v1306
    %10808 = vmatprep.subr.bf16.mxu0 0
    %10809 = vmatpush1.bf16.msra.mxu0 0
    %10810 = vmatprep.subr.bf16.mxu0 0
    %10811 = vmatpush1.bf16.msra.mxu0 0
    %10812 = vmatprep.subr.bf16.mxu0 0
    %10813 = vmatpush1.bf16.msra.mxu0 0
    %10814 = vmatprep.subr.bf16.mxu0 0
    %10815 = vmatpush1.bf16.msra.mxu0 0
    %10816 = vmatprep.subr.bf16.mxu0 0
    %10817 = vmatpush1.bf16.msra.mxu0 0
    %10818 = vmatprep.subr.bf16.mxu0 0
    %10819 = vmatpush1.bf16.msra.mxu0 0
    %10820 = vmatprep.subr.bf16.mxu0 0
    %10821 = vmatpush1.bf16.msra.mxu0 0
    %10822 = vmatprep.subr.bf16.mxu0 0
    %10823 = vmatpush1.bf16.msra.mxu0 0
    %10824 = vmatprep.subr.bf16.mxu0 0
    %10825 = vmatpush1.bf16.msra.mxu0 0
    %10826 = vmatprep.subr.bf16.mxu0 0
    %10827 = vmatpush1.bf16.msra.mxu0 0
    %10828 = vmatprep.subr.bf16.mxu0 0
    %10829 = vmatpush1.bf16.msra.mxu0 0
    %10830 = vmatprep.subr.bf16.mxu0 0
    %10831 = vmatpush1.bf16.msra.mxu0 0
    %10832 = vmatprep.subr.bf16.mxu0 0
    %10833 = vmatpush1.bf16.msra.mxu0 0
    %10834 = vmatprep.subr.bf16.mxu0 0
    %10835 = vmatpush1.bf16.msra.mxu0 0
    %10836 = vmatprep.subr.bf16.mxu0 0
    %10837 = vmatpush1.bf16.msra.mxu0 0
    %10838 = vmatprep.mubr.bf16.mxu0 0
    %10839 = vmatmul.mubr.bf16.gmra.mrb[0].mxu0 %v10804
    %v10840 = vpop.f32.mrb[0].mxu0
    %v10841 = vadd.f32 0.0, %v10840
    %v10842 = vpop.f32.mrb[0].mxu0
    %v10843 = vpop.f32.mrb[0].mxu0
    %v10844 = vpop.f32.mrb[0].mxu0
    %10845 = vdwg.mxu0
    %v10847 = vunpack.c.l.b16 %v10578
    %10848 = vset.pattern.permute.xlu0 0
    %10849 = vperm.xlu0 %10848, %v10847
    %v10850 = vpop.permute.xlu0 %10849
    %v10851 = vlaneseq
    %v10852 = vshrl.u32 %v10851, 7
    %v10853 = vsub.s32 %v817, %v10852
    %v10854 = vrot.slane %v10850, %v10853
    %v10855 = vpack.c.b16 %v10854, %v10854
    %v10857 = vsel %vm865, %v10855, 0
    %10859 = vmatprep.subr.bf16.mxu0 0
    %10860 = vmatpush1.bf16.msra.mxu0 %v1362
    %10861 = vmatprep.subr.bf16.mxu0 0
    %10862 = vmatpush1.bf16.msra.mxu0 0
    %10863 = vmatprep.subr.bf16.mxu0 0
    %10864 = vmatpush1.bf16.msra.mxu0 0
    %10865 = vmatprep.subr.bf16.mxu0 0
    %10866 = vmatpush1.bf16.msra.mxu0 0
    %10867 = vmatprep.subr.bf16.mxu0 0
    %10868 = vmatpush1.bf16.msra.mxu0 0
    %10869 = vmatprep.subr.bf16.mxu0 0
    %10870 = vmatpush1.bf16.msra.mxu0 0
    %10871 = vmatprep.subr.bf16.mxu0 0
    %10872 = vmatpush1.bf16.msra.mxu0 0
    %10873 = vmatprep.subr.bf16.mxu0 0
    %10874 = vmatpush1.bf16.msra.mxu0 0
    %10875 = vmatprep.subr.bf16.mxu0 0
    %10876 = vmatpush1.bf16.msra.mxu0 0
    %10877 = vmatprep.subr.bf16.mxu0 0
    %10878 = vmatpush1.bf16.msra.mxu0 0
    %10879 = vmatprep.subr.bf16.mxu0 0
    %10880 = vmatpush1.bf16.msra.mxu0 0
    %10881 = vmatprep.subr.bf16.mxu0 0
    %10882 = vmatpush1.bf16.msra.mxu0 0
    %10883 = vmatprep.subr.bf16.mxu0 0
    %10884 = vmatpush1.bf16.msra.mxu0 0
    %10885 = vmatprep.subr.bf16.mxu0 0
    %10886 = vmatpush1.bf16.msra.mxu0 0
    %10887 = vmatprep.subr.bf16.mxu0 0
    %10888 = vmatpush1.bf16.msra.mxu0 0
    %10889 = vmatprep.subr.bf16.mxu0 0
    %10890 = vmatpush1.bf16.msra.mxu0 0
    %10891 = vmatprep.mubr.bf16.mxu0 0
    %10892 = vmatmul.mubr.bf16.gmra.mrb[0].mxu0 %v10857
    %v10893 = vpop.f32.mrb[0].mxu0
    %v10894 = vadd.f32 0.0, %v10893
    %v10895 = vpop.f32.mrb[0].mxu0
    %v10896 = vpop.f32.mrb[0].mxu0
    %v10897 = vpop.f32.mrb[0].mxu0
    %10898 = vdwg.mxu0
    %v10900 = vunpack.c.l.b16 %v10579
    %10901 = vset.pattern.permute.xlu0 0
    %10902 = vperm.xlu0 %10901, %v10900
    %v10903 = vpop.permute.xlu0 %10902
    %v10904 = vlaneseq
    %v10905 = vshrl.u32 %v10904, 7
    %v10906 = vsub.s32 %v817, %v10905
    %v10907 = vrot.slane %v10903, %v10906
    %v10908 = vpack.c.b16 %v10907, %v10907
    %v10910 = vsel %vm865, %v10908, 0
    %10912 = vmatprep.subr.bf16.mxu0 0
    %10913 = vmatpush1.bf16.msra.mxu0 %v1418
    %10914 = vmatprep.subr.bf16.mxu0 0
    %10915 = vmatpush1.bf16.msra.mxu0 0
    %10916 = vmatprep.subr.bf16.mxu0 0
    %10917 = vmatpush1.bf16.msra.mxu0 0
    %10918 = vmatprep.subr.bf16.mxu0 0
    %10919 = vmatpush1.bf16.msra.mxu0 0
    %10920 = vmatprep.subr.bf16.mxu0 0
    %10921 = vmatpush1.bf16.msra.mxu0 0
    %10922 = vmatprep.subr.bf16.mxu0 0
    %10923 = vmatpush1.bf16.msra.mxu0 0
    %10924 = vmatprep.subr.bf16.mxu0 0
    %10925 = vmatpush1.bf16.msra.mxu0 0
    %10926 = vmatprep.subr.bf16.mxu0 0
    %10927 = vmatpush1.bf16.msra.mxu0 0
    %10928 = vmatprep.subr.bf16.mxu0 0
    %10929 = vmatpush1.bf16.msra.mxu0 0
    %10930 = vmatprep.subr.bf16.mxu0 0
    %10931 = vmatpush1.bf16.msra.mxu0 0
    %10932 = vmatprep.subr.bf16.mxu0 0
    %10933 = vmatpush1.bf16.msra.mxu0 0
    %10934 = vmatprep.subr.bf16.mxu0 0
    %10935 = vmatpush1.bf16.msra.mxu0 0
    %10936 = vmatprep.subr.bf16.mxu0 0
    %10937 = vmatpush1.bf16.msra.mxu0 0
    %10938 = vmatprep.subr.bf16.mxu0 0
    %10939 = vmatpush1.bf16.msra.mxu0 0
    %10940 = vmatprep.subr.bf16.mxu0 0
    %10941 = vmatpush1.bf16.msra.mxu0 0
    %10942 = vmatprep.subr.bf16.mxu0 0
    %10943 = vmatpush1.bf16.msra.mxu0 0
    %10944 = vmatprep.mubr.bf16.mxu0 0
    %10945 = vmatmul.mubr.bf16.gmra.mrb[0].mxu0 %v10910
    %v10946 = vpop.f32.mrb[0].mxu0
    %v10947 = vadd.f32 0.0, %v10946
    %v10948 = vpop.f32.mrb[0].mxu0
    %v10949 = vpop.f32.mrb[0].mxu0
    %v10950 = vpop.f32.mrb[0].mxu0
    %10951 = vdwg.mxu0
    %v10953 = vunpack.c.l.b16 %v10580
    %10954 = vset.pattern.permute.xlu0 0
    %10955 = vperm.xlu0 %10954, %v10953
    %v10956 = vpop.permute.xlu0 %10955
    %v10957 = vlaneseq
    %v10958 = vshrl.u32 %v10957, 7
    %v10959 = vsub.s32 %v817, %v10958
    %v10960 = vrot.slane %v10956, %v10959
    %v10961 = vpack.c.b16 %v10960, %v10960
    %v10963 = vsel %vm865, %v10961, 0
    %10965 = vmatprep.subr.bf16.mxu0 0
    %10966 = vmatpush1.bf16.msra.mxu0 %v1474
    %10967 = vmatprep.subr.bf16.mxu0 0
    %10968 = vmatpush1.bf16.msra.mxu0 0
    %10969 = vmatprep.subr.bf16.mxu0 0
    %10970 = vmatpush1.bf16.msra.mxu0 0
    %10971 = vmatprep.subr.bf16.mxu0 0
    %10972 = vmatpush1.bf16.msra.mxu0 0
    %10973 = vmatprep.subr.bf16.mxu0 0
    %10974 = vmatpush1.bf16.msra.mxu0 0
    %10975 = vmatprep.subr.bf16.mxu0 0
    %10976 = vmatpush1.bf16.msra.mxu0 0
    %10977 = vmatprep.subr.bf16.mxu0 0
    %10978 = vmatpush1.bf16.msra.mxu0 0
    %10979 = vmatprep.subr.bf16.mxu0 0
    %10980 = vmatpush1.bf16.msra.mxu0 0
    %10981 = vmatprep.subr.bf16.mxu0 0
    %10982 = vmatpush1.bf16.msra.mxu0 0
    %10983 = vmatprep.subr.bf16.mxu0 0
    %10984 = vmatpush1.bf16.msra.mxu0 0
    %10985 = vmatprep.subr.bf16.mxu0 0
    %10986 = vmatpush1.bf16.msra.mxu0 0
    %10987 = vmatprep.subr.bf16.mxu0 0
    %10988 = vmatpush1.bf16.msra.mxu0 0
    %10989 = vmatprep.subr.bf16.mxu0 0
    %10990 = vmatpush1.bf16.msra.mxu0 0
    %10991 = vmatprep.subr.bf16.mxu0 0
    %10992 = vmatpush1.bf16.msra.mxu0 0
    %10993 = vmatprep.subr.bf16.mxu0 0
    %10994 = vmatpush1.bf16.msra.mxu0 0
    %10995 = vmatprep.subr.bf16.mxu0 0
    %10996 = vmatpush1.bf16.msra.mxu0 0
    %10997 = vmatprep.mubr.bf16.mxu0 0
    %10998 = vmatmul.mubr.bf16.gmra.mrb[0].mxu0 %v10963
    %v10999 = vpop.f32.mrb[0].mxu0
    %v11000 = vadd.f32 0.0, %v10999
    %v11001 = vpop.f32.mrb[0].mxu0
    %v11002 = vpop.f32.mrb[0].mxu0
    %v11003 = vpop.f32.mrb[0].mxu0
    %11004 = vdwg.mxu0
    %v11013 = vrot.slane %v10682, 7
    %v11014 = vsel %vm850, %v11013, %v10629
    %v11015 = vrot.slane %v10735, 6
    %v11016 = vsel %vm852, %v11015, %v11014
    %v11017 = vrot.slane %v10788, 5
    %v11018 = vsel %vm854, %v11017, %v11016
    %v11019 = vrot.slane %v10841, 4
    %v11020 = vsel %vm856, %v11019, %v11018
    %v11021 = vrot.slane %v10894, 3
    %v11022 = vsel %vm858, %v11021, %v11020
    %v11023 = vrot.slane %v10947, 2
    %v11024 = vsel %vm860, %v11023, %v11022
    %v11025 = vrot.slane %v11000, 1
    %v11026 = vsel %vm862, %v11025, %v11024
    %11027 = vrot.lane.b32.xlu0 %v11026, 32
    %v11028 = vpop.permute.xlu0 %11027
    %11031 = vrot.lane.b32.xlu0 %v10114, 32
    %v11032 = vpop.permute.xlu0 %11031
    %v11034 = vsel %vm357, %v10003, %v11028
    %v11035 = vsel %vm384, %v11034, %v11032
    %v11036 = vpack.c.bf16 %v11035, %v11035
    %v11038 = vsel %vm1584, %v11036, 0
    %11040 = vmatprep.subr.bf16.mxu0 0
    %11041 = vmatpush1.bf16.msra.mxu0 %v1572
    %11042 = vmatprep.subr.bf16.mxu0 0
    %11043 = vmatpush1.bf16.msra.mxu0 %v1573
    %11044 = vmatprep.subr.bf16.mxu0 0
    %11045 = vmatpush1.bf16.msra.mxu0 %v1574
    %11046 = vmatprep.subr.bf16.mxu0 0
    %11047 = vmatpush1.bf16.msra.mxu0 %v1575
    %11048 = vmatprep.subr.bf16.mxu0 0
    %11049 = vmatpush1.bf16.msra.mxu0 %v1576
    %11050 = vmatprep.subr.bf16.mxu0 0
    %11051 = vmatpush1.bf16.msra.mxu0 %v1577
    %11052 = vmatprep.subr.bf16.mxu0 0
    %11053 = vmatpush1.bf16.msra.mxu0 0
    %11054 = vmatprep.subr.bf16.mxu0 0
    %11055 = vmatpush1.bf16.msra.mxu0 0
    %11056 = vmatprep.subr.bf16.mxu0 0
    %11057 = vmatpush1.bf16.msra.mxu0 0
    %11058 = vmatprep.subr.bf16.mxu0 0
    %11059 = vmatpush1.bf16.msra.mxu0 0
    %11060 = vmatprep.subr.bf16.mxu0 0
    %11061 = vmatpush1.bf16.msra.mxu0 0
    %11062 = vmatprep.subr.bf16.mxu0 0
    %11063 = vmatpush1.bf16.msra.mxu0 0
    %11064 = vmatprep.subr.bf16.mxu0 0
    %11065 = vmatpush1.bf16.msra.mxu0 0
    %11066 = vmatprep.subr.bf16.mxu0 0
    %11067 = vmatpush1.bf16.msra.mxu0 0
    %11068 = vmatprep.subr.bf16.mxu0 0
    %11069 = vmatpush1.bf16.msra.mxu0 0
    %11070 = vmatprep.subr.bf16.mxu0 0
    %11071 = vmatpush1.bf16.msra.mxu0 0
    %11072 = vmatprep.mubr.bf16.mxu0 0
    %11073 = vmatmul.mubr.bf16.gmra.mrb[0].mxu0 %v11038
    %v11074 = vpop.f32.mrb[0].mxu0
    %v11075 = vadd.f32 %v327, %v11074
    %v11076 = vpop.f32.mrb[0].mxu0
    %v11077 = vpop.f32.mrb[0].mxu0
    %v11078 = vpop.f32.mrb[0].mxu0
    %11079 = vdwg.mxu0
    %v11080 = vxor.u32 %v11075, 2147483648
    %v11081 = vmul.f32 %v11080, 1.442695
    %v11082 = vpow.pop %v11081
    %v11083 = vadd.f32 %v11082, 1.0
    %v11084 = vrcp.pop %v11083
    %v11085 = vmul.f32 1.0, %v11084
    %11086 = vmatprep.subr.bf16.mxu0 0
    %11087 = vmatpush1.bf16.msra.mxu0 %v1658
    %11088 = vmatprep.subr.bf16.mxu0 0
    %11089 = vmatpush1.bf16.msra.mxu0 %v1659
    %11090 = vmatprep.subr.bf16.mxu0 0
    %11091 = vmatpush1.bf16.msra.mxu0 %v1660
    %11092 = vmatprep.subr.bf16.mxu0 0
    %11093 = vmatpush1.bf16.msra.mxu0 %v1661
    %11094 = vmatprep.subr.bf16.mxu0 0
    %11095 = vmatpush1.bf16.msra.mxu0 %v1662
    %11096 = vmatprep.subr.bf16.mxu0 0
    %11097 = vmatpush1.bf16.msra.mxu0 %v1663
    %11098 = vmatprep.subr.bf16.mxu0 0
    %11099 = vmatpush1.bf16.msra.mxu0 0
    %11100 = vmatprep.subr.bf16.mxu0 0
    %11101 = vmatpush1.bf16.msra.mxu0 0
    %11102 = vmatprep.subr.bf16.mxu0 0
    %11103 = vmatpush1.bf16.msra.mxu0 0
    %11104 = vmatprep.subr.bf16.mxu0 0
    %11105 = vmatpush1.bf16.msra.mxu0 0
    %11106 = vmatprep.subr.bf16.mxu0 0
    %11107 = vmatpush1.bf16.msra.mxu0 0
    %11108 = vmatprep.subr.bf16.mxu0 0
    %11109 = vmatpush1.bf16.msra.mxu0 0
    %11110 = vmatprep.subr.bf16.mxu0 0
    %11111 = vmatpush1.bf16.msra.mxu0 0
    %11112 = vmatprep.subr.bf16.mxu0 0
    %11113 = vmatpush1.bf16.msra.mxu0 0
    %11114 = vmatprep.subr.bf16.mxu0 0
    %11115 = vmatpush1.bf16.msra.mxu0 0
    %11116 = vmatprep.subr.bf16.mxu0 0
    %11117 = vmatpush1.bf16.msra.mxu0 0
    %11118 = vmatprep.mubr.bf16.mxu0 0
    %11119 = vmatmul.mubr.bf16.gmra.mrb[0].mxu0 %v11038
    %v11120 = vpop.f32.mrb[0].mxu0
    %v11121 = vadd.f32 %v346, %v11120
    %v11122 = vpop.f32.mrb[0].mxu0
    %v11123 = vpop.f32.mrb[0].mxu0
    %v11124 = vpop.f32.mrb[0].mxu0
    %11125 = vdwg.mxu0
    %11127 = vrot.lane.b32.xlu0 %v11121, 112
    %v11128 = vpop.permute.xlu0 %11127
    %v11130 = vmax.f32 %v11121, %v11128
    %v11131 = vpack.c.bf16 %v11130, %v11130
    %v11133 = vsel %vm1722, %v11131, 0
    %11135 = vmatprep.subr.bf16.mxu0 0
    %11136 = vmatpush1.bf16.msra.mxu0 %v1720
    %11137 = vmatprep.subr.bf16.mxu0 0
    %11138 = vmatpush1.bf16.msra.mxu0 0
    %11139 = vmatprep.subr.bf16.mxu0 0
    %11140 = vmatpush1.bf16.msra.mxu0 0
    %11141 = vmatprep.subr.bf16.mxu0 0
    %11142 = vmatpush1.bf16.msra.mxu0 0
    %11143 = vmatprep.subr.bf16.mxu0 0
    %11144 = vmatpush1.bf16.msra.mxu0 0
    %11145 = vmatprep.subr.bf16.mxu0 0
    %11146 = vmatpush1.bf16.msra.mxu0 0
    %11147 = vmatprep.subr.bf16.mxu0 0
    %11148 = vmatpush1.bf16.msra.mxu0 0
    %11149 = vmatprep.subr.bf16.mxu0 0
    %11150 = vmatpush1.bf16.msra.mxu0 0
    %11151 = vmatprep.subr.bf16.mxu0 0
    %11152 = vmatpush1.bf16.msra.mxu0 0
    %11153 = vmatprep.subr.bf16.mxu0 0
    %11154 = vmatpush1.bf16.msra.mxu0 0
    %11155 = vmatprep.subr.bf16.mxu0 0
    %11156 = vmatpush1.bf16.msra.mxu0 0
    %11157 = vmatprep.subr.bf16.mxu0 0
    %11158 = vmatpush1.bf16.msra.mxu0 0
    %11159 = vmatprep.subr.bf16.mxu0 0
    %11160 = vmatpush1.bf16.msra.mxu0 0
    %11161 = vmatprep.subr.bf16.mxu0 0
    %11162 = vmatpush1.bf16.msra.mxu0 0
    %11163 = vmatprep.subr.bf16.mxu0 0
    %11164 = vmatpush1.bf16.msra.mxu0 0
    %11165 = vmatprep.subr.bf16.mxu0 0
    %11166 = vmatpush1.bf16.msra.mxu0 0
    %11167 = vmatprep.mubr.bf16.mxu0 0
    %11168 = vmatmul.mubr.bf16.gmra.mrb[0].mxu0 %v11133
    %v11169 = vpop.f32.mrb[0].mxu0
    %v11170 = vadd.f32 0.0, %v11169
    %v11171 = vpop.f32.mrb[0].mxu0
    %v11172 = vpop.f32.mrb[0].mxu0
    %v11173 = vpop.f32.mrb[0].mxu0
    %11174 = vdwg.mxu0
    %v11175 = vsel %vm384, %v11170, -inf
    %11176 = vmax.xlane.f32.xlu0 %v11175
    %v11177 = vpop.xlane.xlu0 %11176
    %v11178 = vsub.f32 %v11170, %v11177
    %v11179 = vmul.f32 %v11178, 1.442695
    %v11180 = vpow.pop %v11179
    %v11181 = vsel %vm384, %v11180, 0.0
    %11182 = vadd.xlane.f32.xlu0 %v11181
    %v11183 = vpop.xlane.xlu0 %11182
    %v11184 = vrcp.pop %v11183
    %v11185 = vmul.f32 %v11180, %v11184
    %v11186 = vsub.f32 1.0, %v11085
    %11188 = vset.pattern.permute.xlu0 0
    %11189 = vperm.xlu0 %11188, %v11186
    %v11190 = vpop.permute.xlu0 %11189
    %v11192 = vmul.f32 %v11190, %v11185
    %11194 = vset.pattern.permute.xlu0 0
    %11195 = vperm.xlu0 %11194, %v11085
    %v11196 = vpop.permute.xlu0 %11195
    %11206 = vset.pattern.permute.xlu0 0
    %11207 = vperm.xlu0 %11206, %v10565
    %v11208 = vpop.permute.xlu0 %11207
    %11209 = vset.pattern.permute.xlu0 0
    %11210 = vperm.xlu0 %11209, %v10566
    %v11211 = vpop.permute.xlu0 %11210
    %11212 = vset.pattern.permute.xlu0 0
    %11213 = vperm.xlu0 %11212, %v10567
    %v11214 = vpop.permute.xlu0 %11213
    %11215 = vset.pattern.permute.xlu0 0
    %11216 = vperm.xlu0 %11215, %v10568
    %v11217 = vpop.permute.xlu0 %11216
    %11218 = vset.pattern.permute.xlu0 0
    %11219 = vperm.xlu0 %11218, %v10569
    %v11220 = vpop.permute.xlu0 %11219
    %11221 = vset.pattern.permute.xlu0 0
    %11222 = vperm.xlu0 %11221, %v10570
    %v11223 = vpop.permute.xlu0 %11222
    %11224 = vset.pattern.permute.xlu0 0
    %11225 = vperm.xlu0 %11224, %v10571
    %v11226 = vpop.permute.xlu0 %11225
    %11227 = vset.pattern.permute.xlu0 0
    %11228 = vperm.xlu0 %11227, %v10572
    %v11229 = vpop.permute.xlu0 %11228
    %v11230 = vlaneseq
    %v11231 = vshrl.u32 %v11230, 7
    %v11232 = vsub.s32 %v817, %v11231
    %v11233 = vrot.slane %v11208, %v11232
    %v11234 = vlaneseq
    %v11235 = vshrl.u32 %v11234, 7
    %v11236 = vsub.s32 %v817, %v11235
    %v11237 = vrot.slane %v11211, %v11236
    %v11238 = vlaneseq
    %v11239 = vshrl.u32 %v11238, 7
    %v11240 = vsub.s32 %v817, %v11239
    %v11241 = vrot.slane %v11214, %v11240
    %v11242 = vlaneseq
    %v11243 = vshrl.u32 %v11242, 7
    %v11244 = vsub.s32 %v817, %v11243
    %v11245 = vrot.slane %v11217, %v11244
    %v11246 = vlaneseq
    %v11247 = vshrl.u32 %v11246, 7
    %v11248 = vsub.s32 %v817, %v11247
    %v11249 = vrot.slane %v11220, %v11248
    %v11250 = vlaneseq
    %v11251 = vshrl.u32 %v11250, 7
    %v11252 = vsub.s32 %v817, %v11251
    %v11253 = vrot.slane %v11223, %v11252
    %v11254 = vlaneseq
    %v11255 = vshrl.u32 %v11254, 7
    %v11256 = vsub.s32 %v817, %v11255
    %v11257 = vrot.slane %v11226, %v11256
    %v11258 = vlaneseq
    %v11259 = vshrl.u32 %v11258, 7
    %v11260 = vsub.s32 %v817, %v11259
    %v11261 = vrot.slane %v11229, %v11260
    %v11262 = vsel %vm850, %v11237, %v11233
    %v11263 = vsel %vm852, %v11241, %v11262
    %v11264 = vsel %vm854, %v11245, %v11263
    %v11265 = vsel %vm856, %v11249, %v11264
    %v11266 = vsel %vm858, %v11253, %v11265
    %v11267 = vsel %vm860, %v11257, %v11266
    %v11268 = vsel %vm862, %v11261, %v11267
    %v11270 = vmul.f32 %v11196, %v11268
    %11272 = vrot.lane.b32.xlu0 %v11270, 64
    %v11273 = vpop.permute.xlu0 %11272
    %v11275 = vsel %vm384, %v11192, %v11273
    %v11276 = vsel %vm1867, %v11275, 0.0
    %v11277 = vadd.f32 %v11276, 1e-12
    %v11278 = vlog2.pop %v11277
    %v11279 = vmul.f32 %v11278, 0.6931472
    %v11281 = vcombine.high %v11279, %v11279
    %v11283 = vunpack.c.l.s4 1966171168
    %v11284 = vunpack.c.0.s8 %v11283
    %v11285 = vlaneseq
    %v11286 = vshrl.u32 %v11285, 7
    %v11287 = vsub.s32 %v11284, %v11286
    %v11288 = vrot.slane %v11279, %v11287
    %v11290 = vunpack.c.l.s4 1966171168
    %v11291 = vunpack.c.0.s8 %v11290
    %v11292 = vlaneseq
    %v11293 = vshrl.u32 %v11292, 7
    %v11294 = vsub.s32 %v11291, %v11293
    %v11295 = vrot.slane %v11281, %v11294
    %v11296 = vcombine.high %v11288, %v11288
    %v11297 = vcombine.high %v11295, %v11295
    %v11299 = vunpack.c.l.s4 1966171168
    %v11300 = vunpack.c.0.s8 %v11299
    %v11301 = vlaneseq
    %v11302 = vshrl.u32 %v11301, 7
    %v11303 = vsub.s32 %v11300, %v11302
    %v11304 = vrot.slane %v11288, %v11303
    %v11306 = vunpack.c.l.s4 1966171168
    %v11307 = vunpack.c.0.s8 %v11306
    %v11308 = vlaneseq
    %v11309 = vshrl.u32 %v11308, 7
    %v11310 = vsub.s32 %v11307, %v11309
    %v11311 = vrot.slane %v11295, %v11310
    %v11313 = vunpack.c.l.s4 1966171168
    %v11314 = vunpack.c.0.s8 %v11313
    %v11315 = vlaneseq
    %v11316 = vshrl.u32 %v11315, 7
    %v11317 = vsub.s32 %v11314, %v11316
    %v11318 = vrot.slane %v11296, %v11317
    %v11320 = vunpack.c.l.s4 1966171168
    %v11321 = vunpack.c.0.s8 %v11320
    %v11322 = vlaneseq
    %v11323 = vshrl.u32 %v11322, 7
    %v11324 = vsub.s32 %v11321, %v11323
    %v11325 = vrot.slane %v11297, %v11324
    %v11326 = vcombine.high %v11304, %v11304
    %v11327 = vcombine.high %v11311, %v11311
    %v11328 = vcombine.high %v11318, %v11318
    %v11329 = vcombine.high %v11325, %v11325
    %11338 = vst [vmem:[#allocation29 + $0x7] sm:$0x1] %v11304
    %11339 = vst [vmem:[#allocation29 + $0xf] sm:$0x1] %v11318
    %11340 = vst [vmem:[#allocation29 + $0x17] sm:$0x1] %v11326
    %11341 = vst [vmem:[#allocation29 + $0x1f] sm:$0x1] %v11328
    %11342 = vst [vmem:[#allocation29 + $0x27] sm:$0x1] %v11311
    %11343 = vst [vmem:[#allocation29 + $0x2f] sm:$0x1] %v11325
    %11344 = vst [vmem:[#allocation29 + $0x37] sm:$0x1] %v11327
    %11345 = vst [vmem:[#allocation29 + $0x3f] sm:$0x1] %v11329
    %11346 = vrot.lane.b32.xlu0 %v10114, 96
    %v11347 = vpop.permute.xlu0 %11346
    %11349 = vst.msk [vmem:[#allocation2] sm:$0xff] %vm357, %v11347
    %11351 = vst.msk [vmem:[#allocation3] sm:$0xff] %vm357, %v11026
    // Predicated region
    $region130: #{tpu_custom_call.1} parent=1 // pred_check
      _
    $region131: #{tpu_custom_call.1} parent=1 // pred_check_branch
      %11353 = sbr.rel (0) target = $region133
    $region132: #{tpu_custom_call.1} parent=1 // pred_region
      %s11355 = ssub.s32 1024, 1024
      %11356 = vsyncadd [#allocation7], %s11355
      %s11357 = sshll.u32 [#allocation29], 4
      %s11358 = int_to_ptr.vmem [resolvable:$true] %s11357
      %11363 = dma.vmem_to_hbm [thread:$0]  %s11358, 1024, %s16, [#allocation7], 128, 128, 8
    $region133: #{tpu_custom_call.1} parent=1 // pred_fallthru
      _
    // Predicated region
    $region134: #{tpu_custom_call.1} parent=1 // pred_check
      _
    $region135: #{tpu_custom_call.1} parent=1 // pred_check_branch
      %11365 = sbr.rel (0) target = $region137
    $region136: #{tpu_custom_call.1} parent=1 // pred_region
      %11366 = dma.done [#allocation7], 1024
    $region137: #{tpu_custom_call.1} parent=1 // pred_fallthru
      _
    %11367 = vsyncpa [#allocation6], 1
    %11368 = vsyncpa [#allocation9], 1
    %11369 = vsyncpa [#allocation12], 1
    %11370 = vsyncpa [#allocation15], 1
    %11371 = vsyncpa [#allocation18], 1
    %11372 = vsyncpa [#allocation21], 1
    %11373 = vsyncpa [#allocation24], 1
    %11374 = vsyncpa [#allocation27], 1
    %11375 = vsyncpa [#allocation7], 1

</llo_original>
